<compile_context>
chip_gen: v7x
topology: tpu7x:2x2x1
jax: 0.10.0
libtpu: 0.0.40
codegen_flags: <defaults>
</compile_context>

<pallas_src>
import jax
import jax.numpy as jnp
import numpy as np
from jax.experimental import pallas as pl
from jax.experimental.pallas import tpu as pltpu


_TB = 8                               # images per grid step (fixed batch tile)
_CONV_W_IN = (64, 16, 8, 4, 2)        # input width (= height) of conv1..conv5
_CONV_STRIDE = (2, 1, 1, 1, 1)
_CONV_CIN = (1, 8, 16, 32, 64)
_CONV_COUT = (8, 16, 32, 64, 64)


# ---------------------------------------------------------------------------
# Fused forward-pass kernel (one batch tile of _TB images per grid step)
# ---------------------------------------------------------------------------
def _cnn_kernel(x_ref, w1, b1, w2, b2, w3, b3, w4, b4, w5, b5,
                wf1, bf1, wf2, bf2, o_ref,
                p1, p2, p3, p4, p5, fs, a_s):
    TB = _TB

    # Zero only the halo (zero-pad) rows; interior rows are fully overwritten.
    z64 = jnp.zeros((1, 64), jnp.float32)
    z128 = jnp.zeros((1, 128), jnp.float32)
    for b in range(TB):
        p1[pl.ds(b * 66, 1), :] = z64          # conv1 (stride 2) only reads the top pad
    for p, ir in ((p2, 18), (p3, 10), (p4, 6), (p5, 4)):
        for b in range(TB):
            p[pl.ds(b * ir, 1), :] = z128
            p[pl.ds(b * ir + ir - 1, 1), :] = z128

    # Input image rows -> interior rows of the layer-1 buffer (C=1, lanes = W).
    for b in range(TB):
        p1[pl.ds(b * 66 + 1, 64), :] = x_ref[pl.ds(b * 64, 64), :]

    def rows(start, size, stride=1):
        if stride == 1 or size == 1:
            return pl.ds(start, size)
        return pl.ds(start, size, stride=stride)

    def conv_relu_pool(p_in, w_ref, b_ref, p_out, *, rq, in_stride, img_q,
                       h_out, out_img_rows, out_row_off):
        # 3 banded (kernel-row) matmuls with N=256 = [even | odd] output columns.
        v = None
        for kh in range(3):
            s = p_in[rows(kh, rq, in_stride), :].astype(jnp.bfloat16)
            d = jnp.dot(s, w_ref[kh], preferred_element_type=jnp.float32)
            v = d if v is None else v + d
        half = w_ref.shape[-1] // 2            # 128
        # Lane-half max == 2x1 max-pool along W; then bias + ReLU (f32 epilogue).
        a = jnp.maximum(jnp.maximum(v[:, :half], v[:, half:]) + b_ref[...], 0.0)
        a_s[pl.ds(0, rq), :] = a
        # 2x1 max-pool along H + scatter rows into the next row-padded buffer.
        for b in range(TB):
            ev = a_s[rows(b * img_q, h_out, 2), :]
            od = a_s[rows(b * img_q + 1, h_out, 2), :]
            p_out[pl.ds(b * out_img_rows + out_row_off, h_out), :] = (
                jnp.maximum(ev, od))

    # conv1: 64x64x1 --(stride 2)--> 32x32x8 --pool--> 16x16x8
    conv_relu_pool(p1, w1, b1, p2, rq=TB * 33, in_stride=2, img_q=33,
                   h_out=16, out_img_rows=18, out_row_off=1)
    # conv2: 16x16x8 -> 16x16x16 -> 8x8x16
    conv_relu_pool(p2, w2, b2, p3, rq=TB * 18 - 2, in_stride=1, img_q=18,
                   h_out=8, out_img_rows=10, out_row_off=1)
    # conv3: 8x8x16 -> 8x8x32 -> 4x4x32
    conv_relu_pool(p3, w3, b3, p4, rq=TB * 10 - 2, in_stride=1, img_q=10,
                   h_out=4, out_img_rows=6, out_row_off=1)
    # conv4: 4x4x32 -> 4x4x64 -> 2x2x64
    conv_relu_pool(p4, w4, b4, p5, rq=TB * 6 - 2, in_stride=1, img_q=6,
                   h_out=2, out_img_rows=4, out_row_off=1)
    # conv5: 2x2x64 -> 2x2x64 -> 1x1x64 (feature lanes 64..127 zero-padded)
    conv_relu_pool(p5, w5, b5, fs, rq=TB * 4 - 2, in_stride=1, img_q=4,
                   h_out=1, out_img_rows=1, out_row_off=0)

    # FC head (flatten is trivial: spatial is 1x1, feature index == channel).
    feat = fs[...].astype(jnp.bfloat16)                       # (TB, 128)
    h = jnp.maximum(
        jnp.dot(feat, wf1[...], preferred_element_type=jnp.float32) + bf1[...],
        0.0)
    # TODO(synk): nn.Dropout(p=0.5) treated as identity (inference mode); the
    # PyTorch training-mode RNG mask is not reproduced.
    logits = (jnp.dot(h.astype(jnp.bfloat16), wf2[...],
                      preferred_element_type=jnp.float32) + bf2[...])
    o_ref[...] = logits.astype(o_ref.dtype)                   # lane-dense (TB, 128)


def cnn_forward(x_nchw, ops):
    """Fused forward pass.  x_nchw: (B, 1, 64, 64) float32 -> (B, 2) logits."""
    B = x_nchw.shape[0]
    n_tiles = -(-B // _TB)
    B_pad = n_tiles * _TB
    x2d = x_nchw.reshape(B * 64, 64).astype(jnp.float32)   # rows = (b, h), lanes = w
    if B_pad != B:
        x2d = jnp.pad(x2d, ((0, (B_pad - B) * 64), (0, 0)))

    def resident(arr):                 # whole array, constant block index -> stays in VMEM
        return pl.BlockSpec(arr.shape, lambda i, _z=(0,) * arr.ndim: _z)

    weight_keys = ("w1", "b1", "w2", "b2", "w3", "b3", "w4", "b4", "w5", "b5",
                   "wf1", "bf1", "wf2", "bf2")
    weights = [ops[k] for k in weight_keys]

    out = pl.pallas_call(
        _cnn_kernel,
        out_shape=jax.ShapeDtypeStruct((B_pad, 128), jnp.float32),
        grid=(n_tiles,),
        in_specs=[pl.BlockSpec((_TB * 64, 64), lambda i: (i, 0))]
                 + [resident(w) for w in weights],
        out_specs=pl.BlockSpec((_TB, 128), lambda i: (i, 0)),
        scratch_shapes=[
            pltpu.VMEM((_TB * 66 + 2, 64), jnp.float32),   # p1: row-padded 64x64x1
            pltpu.VMEM((_TB * 18, 128), jnp.float32),      # p2: row-padded 16x16x8
            pltpu.VMEM((_TB * 10, 128), jnp.float32),      # p3: row-padded 8x8x16
            pltpu.VMEM((_TB * 6, 128), jnp.float32),       # p4: row-padded 4x4x32
            pltpu.VMEM((_TB * 4, 128), jnp.float32),       # p5: row-padded 2x2x64
            pltpu.VMEM((_TB, 128), jnp.float32),           # fs: per-image feature rows
            pltpu.VMEM((_TB * 33, 128), jnp.float32),      # a_s: conv epilogue scratch
        ],
        compiler_params=pltpu.CompilerParams(
            dimension_semantics=("parallel",),
            vmem_limit_bytes=32 * 1024 * 1024),
    )(x2d, *weights)
    return out[:B, :2]


# ---------------------------------------------------------------------------
# Parameters (PyTorch layouts) and host-side packing into kernel operands
# ---------------------------------------------------------------------------
def init_params(key):
    """Synthetic parameters in PyTorch layouts: Conv2d (Cout,Cin,3,3), Linear (out,in)."""
    ks = jax.random.split(key, 14)
    p = {}
    for i in range(5):
        cin, cout = _CONV_CIN[i], _CONV_COUT[i]
        fan_in = 9 * cin
        p[f"conv{i+1}_w"] = (jax.random.normal(ks[2 * i], (cout, cin, 3, 3), jnp.float32)
                             * (2.0 / fan_in) ** 0.5)
        p[f"conv{i+1}_b"] = jax.random.normal(ks[2 * i + 1], (cout,), jnp.float32) * 0.01
    p["fc1_w"] = jax.random.normal(ks[10], (128, 64), jnp.float32) * (2.0 / 64) ** 0.5
    p["fc1_b"] = jax.random.normal(ks[11], (128,), jnp.float32) * 0.01
    p["fc2_w"] = jax.random.normal(ks[12], (2, 128), jnp.float32) * (2.0 / 128) ** 0.5
    p["fc2_b"] = jax.random.normal(ks[13], (2,), jnp.float32) * 0.01
    return p


def _banded_conv_mats(w_oihw, bias, w_in, stride, half_pad=128):
    """Fold kw-shifts, zero W-padding and the 2x1 W-max-pool into matmul weights.

    Activation lane layout is (column, channel): lane = x*Cin + c.
    Returns
      wmat: (3, w_in*Cin, 2*half_pad)  [even output cols in lanes [0,half_pad),
                                        odd output cols in [half_pad, 2*half_pad)]
      brow: (1, half_pad)
    """
    w = np.asarray(w_oihw, np.float32)
    cout, cin, _, _ = w.shape
    w_out = (w_in + 2 - 3) // stride + 1
    w_half = w_out // 2
    half = w_half * cout
    big = np.zeros((3, w_in * cin, w_out * cout), np.float32)
    for kh in range(3):
        for j in range(w_out):
            for kw in range(3):
                x = j * stride + kw - 1
                if 0 <= x < w_in:
                    big[kh, x * cin:(x + 1) * cin, j * cout:(j + 1) * cout] = \
                        w[:, :, kh, kw].T
    big = big.reshape(3, w_in * cin, w_out, cout)
    even = big[:, :, 0::2, :].reshape(3, w_in * cin, half)
    odd = big[:, :, 1::2, :].reshape(3, w_in * cin, half)
    if half < half_pad:
        pad = half_pad - half
        even = np.pad(even, ((0, 0), (0, 0), (0, pad)))
        odd = np.pad(odd, ((0, 0), (0, 0), (0, pad)))
    wmat = np.concatenate([even, odd], axis=-1)
    brow = np.pad(np.tile(np.asarray(bias, np.float32), w_half),
                  (0, half_pad - half))[None, :]
    return wmat, brow


def pack_params(params):
    """PyTorch-layout parameters -> fused-kernel operands (done once, on host)."""
    ops = {}
    for i in range(5):
        wm, br = _banded_conv_mats(params[f"conv{i+1}_w"], params[f"conv{i+1}_b"],
                                   _CONV_W_IN[i], _CONV_STRIDE[i], half_pad=128)
        ops[f"w{i+1}"] = jnp.asarray(wm, dtype=jnp.bfloat16)    # bf16 MXU weights
        ops[f"b{i+1}"] = jnp.asarray(br, dtype=jnp.float32)     # f32 epilogue bias
    wf1 = np.asarray(params["fc1_w"], np.float32).T            # (64, 128)
    wf1 = np.pad(wf1, ((0, 64), (0, 0)))                       # zero rows for padded lanes
    ops["wf1"] = jnp.asarray(wf1, dtype=jnp.bfloat16)
    ops["bf1"] = jnp.asarray(np.asarray(params["fc1_b"], np.float32)[None, :])
    wf2 = np.asarray(params["fc2_w"], np.float32).T            # (128, 2)
    wf2 = np.pad(wf2, ((0, 0), (0, 128 - wf2.shape[1])))       # lane-dense output: 128 cols
    ops["wf2"] = jnp.asarray(wf2, dtype=jnp.bfloat16)
    bf2 = np.pad(np.asarray(params["fc2_b"], np.float32), (0, 126))[None, :]
    ops["bf2"] = jnp.asarray(bf2)
    return ops


# ---------------------------------------------------------------------------
# Plain-JAX reference (mirrors the PyTorch module, inference mode)
# ---------------------------------------------------------------------------
def reference_forward(x, params):
    hi = jax.lax.Precision.HIGHEST

    def block(y, w, b, stride):
        y = jax.lax.conv_general_dilated(
            y, w, window_strides=(stride, stride), padding=((1, 1), (1, 1)),
            dimension_numbers=("NCHW", "OIHW", "NCHW"), precision=hi)
        y = jnp.maximum(y + b[None, :, None, None], 0.0)
        n, c, hh, ww = y.shape
        return y.reshape(n, c, hh // 2, 2, ww // 2, 2).max(axis=(3, 5))

    y = block(x, params["conv1_w"], params["conv1_b"], 2)
    y = block(y, params["conv2_w"], params["conv2_b"], 1)
    y = block(y, params["conv3_w"], params["conv3_b"], 1)
    y = block(y, params["conv4_w"], params["conv4_b"], 1)
    y = block(y, params["conv5_w"], params["conv5_b"], 1)
    y = y.reshape(y.shape[0], -1)
    y = jnp.maximum(jnp.dot(y, params["fc1_w"].T, precision=hi) + params["fc1_b"], 0.0)
    return jnp.dot(y, params["fc2_w"].T, precision=hi) + params["fc2_b"]


if __name__ == "__main__":
    key = jax.random.PRNGKey(0)
    pkey, xkey = jax.random.split(key)
    params = init_params(pkey)
    ops = pack_params(params)

    # fc1 expects 64*1*1 features => 64x64 single-channel input, batch=2.
    x = jax.random.normal(xkey, (2, 1, 64, 64), dtype=jnp.float32)

    fwd = jax.jit(lambda inp: cnn_forward(inp, ops))
    out = jax.block_until_ready(fwd(x))
    assert out.shape == (2, 2) and out.dtype == jnp.float32

    # Cross-check the fused kernel against a plain-JAX reference of the module.
    # (Tolerance accounts for bf16 MXU inputs with f32 accumulation.)
    ref = jax.block_until_ready(jax.jit(lambda inp: reference_forward(inp, params))(x))
    np.testing.assert_allclose(np.asarray(out), np.asarray(ref), rtol=5e-2, atol=5e-2)

    print("KERNEL_OK")
</pallas_src>

<mosaic_0001>
module attributes {stable_mosaic.version = 11 : i64} {
  func.func @_cnn_kernel(%arg0: i32, %arg1: memref<512x64xf32, #tpu.memory_space<vmem>>, %arg2: memref<3x64x256xbf16, #tpu.memory_space<vmem>>, %arg3: memref<1x128xf32, #tpu.memory_space<vmem>>, %arg4: memref<3x128x256xbf16, #tpu.memory_space<vmem>>, %arg5: memref<1x128xf32, #tpu.memory_space<vmem>>, %arg6: memref<3x128x256xbf16, #tpu.memory_space<vmem>>, %arg7: memref<1x128xf32, #tpu.memory_space<vmem>>, %arg8: memref<3x128x256xbf16, #tpu.memory_space<vmem>>, %arg9: memref<1x128xf32, #tpu.memory_space<vmem>>, %arg10: memref<3x128x256xbf16, #tpu.memory_space<vmem>>, %arg11: memref<1x128xf32, #tpu.memory_space<vmem>>, %arg12: memref<128x128xbf16, #tpu.memory_space<vmem>>, %arg13: memref<1x128xf32, #tpu.memory_space<vmem>>, %arg14: memref<128x128xbf16, #tpu.memory_space<vmem>>, %arg15: memref<1x128xf32, #tpu.memory_space<vmem>>, %arg16: memref<8x128xf32, #tpu.memory_space<vmem>>, %arg17: memref<530x64xf32, #tpu.memory_space<vmem>>, %arg18: memref<144x128xf32, #tpu.memory_space<vmem>>, %arg19: memref<80x128xf32, #tpu.memory_space<vmem>>, %arg20: memref<48x128xf32, #tpu.memory_space<vmem>>, %arg21: memref<32x128xf32, #tpu.memory_space<vmem>>, %arg22: memref<8x128xf32, #tpu.memory_space<vmem>>, %arg23: memref<264x128xf32, #tpu.memory_space<vmem>>) attributes {dimension_semantics = [#tpu.dimension_semantics<parallel>], iteration_bounds = array<i64: 1>, scalar_prefetch = 0 : i64, scratch_operands = 7 : i64, tpu.core_type = #tpu.core_type<tc>, window_params = [{transform_indices = @transform_0, window_bounds = array<i64: 512, 64>}, {pipeline_mode = #tpu.pipeline_mode<synchronous>, transform_indices = @transform_1, window_bounds = array<i64: 3, 64, 256>}, {pipeline_mode = #tpu.pipeline_mode<synchronous>, transform_indices = @transform_2, window_bounds = array<i64: 1, 128>}, {pipeline_mode = #tpu.pipeline_mode<synchronous>, transform_indices = @transform_3, window_bounds = array<i64: 3, 128, 256>}, {pipeline_mode = #tpu.pipeline_mode<synchronous>, transform_indices = @transform_4, window_bounds = array<i64: 1, 128>}, {pipeline_mode = #tpu.pipeline_mode<synchronous>, transform_indices = @transform_5, window_bounds = array<i64: 3, 128, 256>}, {pipeline_mode = #tpu.pipeline_mode<synchronous>, transform_indices = @transform_6, window_bounds = array<i64: 1, 128>}, {pipeline_mode = #tpu.pipeline_mode<synchronous>, transform_indices = @transform_7, window_bounds = array<i64: 3, 128, 256>}, {pipeline_mode = #tpu.pipeline_mode<synchronous>, transform_indices = @transform_8, window_bounds = array<i64: 1, 128>}, {pipeline_mode = #tpu.pipeline_mode<synchronous>, transform_indices = @transform_9, window_bounds = array<i64: 3, 128, 256>}, {pipeline_mode = #tpu.pipeline_mode<synchronous>, transform_indices = @transform_10, window_bounds = array<i64: 1, 128>}, {pipeline_mode = #tpu.pipeline_mode<synchronous>, transform_indices = @transform_11, window_bounds = array<i64: 128, 128>}, {pipeline_mode = #tpu.pipeline_mode<synchronous>, transform_indices = @transform_12, window_bounds = array<i64: 1, 128>}, {pipeline_mode = #tpu.pipeline_mode<synchronous>, transform_indices = @transform_13, window_bounds = array<i64: 128, 128>}, {pipeline_mode = #tpu.pipeline_mode<synchronous>, transform_indices = @transform_14, window_bounds = array<i64: 1, 128>}, {transform_indices = @transform_15, window_bounds = array<i64: 8, 128>}]} {
    %cst = arith.constant 0.000000e+00 : f32
    %0 = vector.broadcast %cst : f32 to vector<1x64xf32>
    %cst_0 = arith.constant 0.000000e+00 : f32
    %1 = vector.broadcast %cst_0 : f32 to vector<1x128xf32>
    %c0 = arith.constant 0 : index
    %c0_1 = arith.constant 0 : index
    %2 = vector.load %arg17[%c0, %c0_1] : memref<530x64xf32, #tpu.memory_space<vmem>>, vector<1x64xf32>
    tpu.vector_store %arg17[%c0, %c0_1], %0 {strides = array<i32>} : memref<530x64xf32, #tpu.memory_space<vmem>>, vector<1x64xf32>,
    %c66 = arith.constant 66 : index
    %c0_2 = arith.constant 0 : index
    %3 = vector.load %arg17[%c66, %c0_2] : memref<530x64xf32, #tpu.memory_space<vmem>>, vector<1x64xf32>
    tpu.vector_store %arg17[%c66, %c0_2], %0 {strides = array<i32>} : memref<530x64xf32, #tpu.memory_space<vmem>>, vector<1x64xf32>,
    %c132 = arith.constant 132 : index
    %c0_3 = arith.constant 0 : index
    %4 = vector.load %arg17[%c132, %c0_3] : memref<530x64xf32, #tpu.memory_space<vmem>>, vector<1x64xf32>
    tpu.vector_store %arg17[%c132, %c0_3], %0 {strides = array<i32>} : memref<530x64xf32, #tpu.memory_space<vmem>>, vector<1x64xf32>,
    %c198 = arith.constant 198 : index
    %c0_4 = arith.constant 0 : index
    %5 = vector.load %arg17[%c198, %c0_4] : memref<530x64xf32, #tpu.memory_space<vmem>>, vector<1x64xf32>
    tpu.vector_store %arg17[%c198, %c0_4], %0 {strides = array<i32>} : memref<530x64xf32, #tpu.memory_space<vmem>>, vector<1x64xf32>,
    %c264 = arith.constant 264 : index
    %c0_5 = arith.constant 0 : index
    %6 = vector.load %arg17[%c264, %c0_5] : memref<530x64xf32, #tpu.memory_space<vmem>>, vector<1x64xf32>
    tpu.vector_store %arg17[%c264, %c0_5], %0 {strides = array<i32>} : memref<530x64xf32, #tpu.memory_space<vmem>>, vector<1x64xf32>,
    %c330 = arith.constant 330 : index
    %c0_6 = arith.constant 0 : index
    %7 = vector.load %arg17[%c330, %c0_6] : memref<530x64xf32, #tpu.memory_space<vmem>>, vector<1x64xf32>
    tpu.vector_store %arg17[%c330, %c0_6], %0 {strides = array<i32>} : memref<530x64xf32, #tpu.memory_space<vmem>>, vector<1x64xf32>,
    %c396 = arith.constant 396 : index
    %c0_7 = arith.constant 0 : index
    %8 = vector.load %arg17[%c396, %c0_7] : memref<530x64xf32, #tpu.memory_space<vmem>>, vector<1x64xf32>
    tpu.vector_store %arg17[%c396, %c0_7], %0 {strides = array<i32>} : memref<530x64xf32, #tpu.memory_space<vmem>>, vector<1x64xf32>,
    %c462 = arith.constant 462 : index
    %c0_8 = arith.constant 0 : index
    %9 = vector.load %arg17[%c462, %c0_8] : memref<530x64xf32, #tpu.memory_space<vmem>>, vector<1x64xf32>
    tpu.vector_store %arg17[%c462, %c0_8], %0 {strides = array<i32>} : memref<530x64xf32, #tpu.memory_space<vmem>>, vector<1x64xf32>,
    %c0_9 = arith.constant 0 : index
    %c0_10 = arith.constant 0 : index
    %10 = vector.load %arg18[%c0_9, %c0_10] : memref<144x128xf32, #tpu.memory_space<vmem>>, vector<1x128xf32>
    tpu.vector_store %arg18[%c0_9, %c0_10], %1 {strides = array<i32>} : memref<144x128xf32, #tpu.memory_space<vmem>>, vector<1x128xf32>,
    %c17 = arith.constant 17 : index
    %c0_11 = arith.constant 0 : index
    %11 = vector.load %arg18[%c17, %c0_11] : memref<144x128xf32, #tpu.memory_space<vmem>>, vector<1x128xf32>
    tpu.vector_store %arg18[%c17, %c0_11], %1 {strides = array<i32>} : memref<144x128xf32, #tpu.memory_space<vmem>>, vector<1x128xf32>,
    %c18 = arith.constant 18 : index
    %c0_12 = arith.constant 0 : index
    %12 = vector.load %arg18[%c18, %c0_12] : memref<144x128xf32, #tpu.memory_space<vmem>>, vector<1x128xf32>
    tpu.vector_store %arg18[%c18, %c0_12], %1 {strides = array<i32>} : memref<144x128xf32, #tpu.memory_space<vmem>>, vector<1x128xf32>,
    %c35 = arith.constant 35 : index
    %c0_13 = arith.constant 0 : index
    %13 = vector.load %arg18[%c35, %c0_13] : memref<144x128xf32, #tpu.memory_space<vmem>>, vector<1x128xf32>
    tpu.vector_store %arg18[%c35, %c0_13], %1 {strides = array<i32>} : memref<144x128xf32, #tpu.memory_space<vmem>>, vector<1x128xf32>,
    %c36 = arith.constant 36 : index
    %c0_14 = arith.constant 0 : index
    %14 = vector.load %arg18[%c36, %c0_14] : memref<144x128xf32, #tpu.memory_space<vmem>>, vector<1x128xf32>
    tpu.vector_store %arg18[%c36, %c0_14], %1 {strides = array<i32>} : memref<144x128xf32, #tpu.memory_space<vmem>>, vector<1x128xf32>,
    %c53 = arith.constant 53 : index
    %c0_15 = arith.constant 0 : index
    %15 = vector.load %arg18[%c53, %c0_15] : memref<144x128xf32, #tpu.memory_space<vmem>>, vector<1x128xf32>
    tpu.vector_store %arg18[%c53, %c0_15], %1 {strides = array<i32>} : memref<144x128xf32, #tpu.memory_space<vmem>>, vector<1x128xf32>,
    %c54 = arith.constant 54 : index
    %c0_16 = arith.constant 0 : index
    %16 = vector.load %arg18[%c54, %c0_16] : memref<144x128xf32, #tpu.memory_space<vmem>>, vector<1x128xf32>
    tpu.vector_store %arg18[%c54, %c0_16], %1 {strides = array<i32>} : memref<144x128xf32, #tpu.memory_space<vmem>>, vector<1x128xf32>,
    %c71 = arith.constant 71 : index
    %c0_17 = arith.constant 0 : index
    %17 = vector.load %arg18[%c71, %c0_17] : memref<144x128xf32, #tpu.memory_space<vmem>>, vector<1x128xf32>
    tpu.vector_store %arg18[%c71, %c0_17], %1 {strides = array<i32>} : memref<144x128xf32, #tpu.memory_space<vmem>>, vector<1x128xf32>,
    %c72 = arith.constant 72 : index
    %c0_18 = arith.constant 0 : index
    %18 = vector.load %arg18[%c72, %c0_18] : memref<144x128xf32, #tpu.memory_space<vmem>>, vector<1x128xf32>
    tpu.vector_store %arg18[%c72, %c0_18], %1 {strides = array<i32>} : memref<144x128xf32, #tpu.memory_space<vmem>>, vector<1x128xf32>,
    %c89 = arith.constant 89 : index
    %c0_19 = arith.constant 0 : index
    %19 = vector.load %arg18[%c89, %c0_19] : memref<144x128xf32, #tpu.memory_space<vmem>>, vector<1x128xf32>
    tpu.vector_store %arg18[%c89, %c0_19], %1 {strides = array<i32>} : memref<144x128xf32, #tpu.memory_space<vmem>>, vector<1x128xf32>,
    %c90 = arith.constant 90 : index
    %c0_20 = arith.constant 0 : index
    %20 = vector.load %arg18[%c90, %c0_20] : memref<144x128xf32, #tpu.memory_space<vmem>>, vector<1x128xf32>
    tpu.vector_store %arg18[%c90, %c0_20], %1 {strides = array<i32>} : memref<144x128xf32, #tpu.memory_space<vmem>>, vector<1x128xf32>,
    %c107 = arith.constant 107 : index
    %c0_21 = arith.constant 0 : index
    %21 = vector.load %arg18[%c107, %c0_21] : memref<144x128xf32, #tpu.memory_space<vmem>>, vector<1x128xf32>
    tpu.vector_store %arg18[%c107, %c0_21], %1 {strides = array<i32>} : memref<144x128xf32, #tpu.memory_space<vmem>>, vector<1x128xf32>,
    %c108 = arith.constant 108 : index
    %c0_22 = arith.constant 0 : index
    %22 = vector.load %arg18[%c108, %c0_22] : memref<144x128xf32, #tpu.memory_space<vmem>>, vector<1x128xf32>
    tpu.vector_store %arg18[%c108, %c0_22], %1 {strides = array<i32>} : memref<144x128xf32, #tpu.memory_space<vmem>>, vector<1x128xf32>,
    %c125 = arith.constant 125 : index
    %c0_23 = arith.constant 0 : index
    %23 = vector.load %arg18[%c125, %c0_23] : memref<144x128xf32, #tpu.memory_space<vmem>>, vector<1x128xf32>
    tpu.vector_store %arg18[%c125, %c0_23], %1 {strides = array<i32>} : memref<144x128xf32, #tpu.memory_space<vmem>>, vector<1x128xf32>,
    %c126 = arith.constant 126 : index
    %c0_24 = arith.constant 0 : index
    %24 = vector.load %arg18[%c126, %c0_24] : memref<144x128xf32, #tpu.memory_space<vmem>>, vector<1x128xf32>
    tpu.vector_store %arg18[%c126, %c0_24], %1 {strides = array<i32>} : memref<144x128xf32, #tpu.memory_space<vmem>>, vector<1x128xf32>,
    %c143 = arith.constant 143 : index
    %c0_25 = arith.constant 0 : index
    %25 = vector.load %arg18[%c143, %c0_25] : memref<144x128xf32, #tpu.memory_space<vmem>>, vector<1x128xf32>
    tpu.vector_store %arg18[%c143, %c0_25], %1 {strides = array<i32>} : memref<144x128xf32, #tpu.memory_space<vmem>>, vector<1x128xf32>,
    %c0_26 = arith.constant 0 : index
    %c0_27 = arith.constant 0 : index
    %26 = vector.load %arg19[%c0_26, %c0_27] : memref<80x128xf32, #tpu.memory_space<vmem>>, vector<1x128xf32>
    tpu.vector_store %arg19[%c0_26, %c0_27], %1 {strides = array<i32>} : memref<80x128xf32, #tpu.memory_space<vmem>>, vector<1x128xf32>,
    %c9 = arith.constant 9 : index
    %c0_28 = arith.constant 0 : index
    %27 = vector.load %arg19[%c9, %c0_28] : memref<80x128xf32, #tpu.memory_space<vmem>>, vector<1x128xf32>
    tpu.vector_store %arg19[%c9, %c0_28], %1 {strides = array<i32>} : memref<80x128xf32, #tpu.memory_space<vmem>>, vector<1x128xf32>,
    %c10 = arith.constant 10 : index
    %c0_29 = arith.constant 0 : index
    %28 = vector.load %arg19[%c10, %c0_29] : memref<80x128xf32, #tpu.memory_space<vmem>>, vector<1x128xf32>
    tpu.vector_store %arg19[%c10, %c0_29], %1 {strides = array<i32>} : memref<80x128xf32, #tpu.memory_space<vmem>>, vector<1x128xf32>,
    %c19 = arith.constant 19 : index
    %c0_30 = arith.constant 0 : index
    %29 = vector.load %arg19[%c19, %c0_30] : memref<80x128xf32, #tpu.memory_space<vmem>>, vector<1x128xf32>
    tpu.vector_store %arg19[%c19, %c0_30], %1 {strides = array<i32>} : memref<80x128xf32, #tpu.memory_space<vmem>>, vector<1x128xf32>,
    %c20 = arith.constant 20 : index
    %c0_31 = arith.constant 0 : index
    %30 = vector.load %arg19[%c20, %c0_31] : memref<80x128xf32, #tpu.memory_space<vmem>>, vector<1x128xf32>
    tpu.vector_store %arg19[%c20, %c0_31], %1 {strides = array<i32>} : memref<80x128xf32, #tpu.memory_space<vmem>>, vector<1x128xf32>,
    %c29 = arith.constant 29 : index
    %c0_32 = arith.constant 0 : index
    %31 = vector.load %arg19[%c29, %c0_32] : memref<80x128xf32, #tpu.memory_space<vmem>>, vector<1x128xf32>
    tpu.vector_store %arg19[%c29, %c0_32], %1 {strides = array<i32>} : memref<80x128xf32, #tpu.memory_space<vmem>>, vector<1x128xf32>,
    %c30 = arith.constant 30 : index
    %c0_33 = arith.constant 0 : index
    %32 = vector.load %arg19[%c30, %c0_33] : memref<80x128xf32, #tpu.memory_space<vmem>>, vector<1x128xf32>
    tpu.vector_store %arg19[%c30, %c0_33], %1 {strides = array<i32>} : memref<80x128xf32, #tpu.memory_space<vmem>>, vector<1x128xf32>,
    %c39 = arith.constant 39 : index
    %c0_34 = arith.constant 0 : index
    %33 = vector.load %arg19[%c39, %c0_34] : memref<80x128xf32, #tpu.memory_space<vmem>>, vector<1x128xf32>
    tpu.vector_store %arg19[%c39, %c0_34], %1 {strides = array<i32>} : memref<80x128xf32, #tpu.memory_space<vmem>>, vector<1x128xf32>,
    %c40 = arith.constant 40 : index
    %c0_35 = arith.constant 0 : index
    %34 = vector.load %arg19[%c40, %c0_35] : memref<80x128xf32, #tpu.memory_space<vmem>>, vector<1x128xf32>
    tpu.vector_store %arg19[%c40, %c0_35], %1 {strides = array<i32>} : memref<80x128xf32, #tpu.memory_space<vmem>>, vector<1x128xf32>,
    %c49 = arith.constant 49 : index
    %c0_36 = arith.constant 0 : index
    %35 = vector.load %arg19[%c49, %c0_36] : memref<80x128xf32, #tpu.memory_space<vmem>>, vector<1x128xf32>
    tpu.vector_store %arg19[%c49, %c0_36], %1 {strides = array<i32>} : memref<80x128xf32, #tpu.memory_space<vmem>>, vector<1x128xf32>,
    %c50 = arith.constant 50 : index
    %c0_37 = arith.constant 0 : index
    %36 = vector.load %arg19[%c50, %c0_37] : memref<80x128xf32, #tpu.memory_space<vmem>>, vector<1x128xf32>
    tpu.vector_store %arg19[%c50, %c0_37], %1 {strides = array<i32>} : memref<80x128xf32, #tpu.memory_space<vmem>>, vector<1x128xf32>,
    %c59 = arith.constant 59 : index
    %c0_38 = arith.constant 0 : index
    %37 = vector.load %arg19[%c59, %c0_38] : memref<80x128xf32, #tpu.memory_space<vmem>>, vector<1x128xf32>
    tpu.vector_store %arg19[%c59, %c0_38], %1 {strides = array<i32>} : memref<80x128xf32, #tpu.memory_space<vmem>>, vector<1x128xf32>,
    %c60 = arith.constant 60 : index
    %c0_39 = arith.constant 0 : index
    %38 = vector.load %arg19[%c60, %c0_39] : memref<80x128xf32, #tpu.memory_space<vmem>>, vector<1x128xf32>
    tpu.vector_store %arg19[%c60, %c0_39], %1 {strides = array<i32>} : memref<80x128xf32, #tpu.memory_space<vmem>>, vector<1x128xf32>,
    %c69 = arith.constant 69 : index
    %c0_40 = arith.constant 0 : index
    %39 = vector.load %arg19[%c69, %c0_40] : memref<80x128xf32, #tpu.memory_space<vmem>>, vector<1x128xf32>
    tpu.vector_store %arg19[%c69, %c0_40], %1 {strides = array<i32>} : memref<80x128xf32, #tpu.memory_space<vmem>>, vector<1x128xf32>,
    %c70 = arith.constant 70 : index
    %c0_41 = arith.constant 0 : index
    %40 = vector.load %arg19[%c70, %c0_41] : memref<80x128xf32, #tpu.memory_space<vmem>>, vector<1x128xf32>
    tpu.vector_store %arg19[%c70, %c0_41], %1 {strides = array<i32>} : memref<80x128xf32, #tpu.memory_space<vmem>>, vector<1x128xf32>,
    %c79 = arith.constant 79 : index
    %c0_42 = arith.constant 0 : index
    %41 = vector.load %arg19[%c79, %c0_42] : memref<80x128xf32, #tpu.memory_space<vmem>>, vector<1x128xf32>
    tpu.vector_store %arg19[%c79, %c0_42], %1 {strides = array<i32>} : memref<80x128xf32, #tpu.memory_space<vmem>>, vector<1x128xf32>,
    %c0_43 = arith.constant 0 : index
    %c0_44 = arith.constant 0 : index
    %42 = vector.load %arg20[%c0_43, %c0_44] : memref<48x128xf32, #tpu.memory_space<vmem>>, vector<1x128xf32>
    tpu.vector_store %arg20[%c0_43, %c0_44], %1 {strides = array<i32>} : memref<48x128xf32, #tpu.memory_space<vmem>>, vector<1x128xf32>,
    %c5 = arith.constant 5 : index
    %c0_45 = arith.constant 0 : index
    %43 = vector.load %arg20[%c5, %c0_45] : memref<48x128xf32, #tpu.memory_space<vmem>>, vector<1x128xf32>
    tpu.vector_store %arg20[%c5, %c0_45], %1 {strides = array<i32>} : memref<48x128xf32, #tpu.memory_space<vmem>>, vector<1x128xf32>,
    %c6 = arith.constant 6 : index
    %c0_46 = arith.constant 0 : index
    %44 = vector.load %arg20[%c6, %c0_46] : memref<48x128xf32, #tpu.memory_space<vmem>>, vector<1x128xf32>
    tpu.vector_store %arg20[%c6, %c0_46], %1 {strides = array<i32>} : memref<48x128xf32, #tpu.memory_space<vmem>>, vector<1x128xf32>,
    %c11 = arith.constant 11 : index
    %c0_47 = arith.constant 0 : index
    %45 = vector.load %arg20[%c11, %c0_47] : memref<48x128xf32, #tpu.memory_space<vmem>>, vector<1x128xf32>
    tpu.vector_store %arg20[%c11, %c0_47], %1 {strides = array<i32>} : memref<48x128xf32, #tpu.memory_space<vmem>>, vector<1x128xf32>,
    %c12 = arith.constant 12 : index
    %c0_48 = arith.constant 0 : index
    %46 = vector.load %arg20[%c12, %c0_48] : memref<48x128xf32, #tpu.memory_space<vmem>>, vector<1x128xf32>
    tpu.vector_store %arg20[%c12, %c0_48], %1 {strides = array<i32>} : memref<48x128xf32, #tpu.memory_space<vmem>>, vector<1x128xf32>,
    %c17_49 = arith.constant 17 : index
    %c0_50 = arith.constant 0 : index
    %47 = vector.load %arg20[%c17_49, %c0_50] : memref<48x128xf32, #tpu.memory_space<vmem>>, vector<1x128xf32>
    tpu.vector_store %arg20[%c17_49, %c0_50], %1 {strides = array<i32>} : memref<48x128xf32, #tpu.memory_space<vmem>>, vector<1x128xf32>,
    %c18_51 = arith.constant 18 : index
    %c0_52 = arith.constant 0 : index
    %48 = vector.load %arg20[%c18_51, %c0_52] : memref<48x128xf32, #tpu.memory_space<vmem>>, vector<1x128xf32>
    tpu.vector_store %arg20[%c18_51, %c0_52], %1 {strides = array<i32>} : memref<48x128xf32, #tpu.memory_space<vmem>>, vector<1x128xf32>,
    %c23 = arith.constant 23 : index
    %c0_53 = arith.constant 0 : index
    %49 = vector.load %arg20[%c23, %c0_53] : memref<48x128xf32, #tpu.memory_space<vmem>>, vector<1x128xf32>
    tpu.vector_store %arg20[%c23, %c0_53], %1 {strides = array<i32>} : memref<48x128xf32, #tpu.memory_space<vmem>>, vector<1x128xf32>,
    %c24 = arith.constant 24 : index
    %c0_54 = arith.constant 0 : index
    %50 = vector.load %arg20[%c24, %c0_54] : memref<48x128xf32, #tpu.memory_space<vmem>>, vector<1x128xf32>
    tpu.vector_store %arg20[%c24, %c0_54], %1 {strides = array<i32>} : memref<48x128xf32, #tpu.memory_space<vmem>>, vector<1x128xf32>,
    %c29_55 = arith.constant 29 : index
    %c0_56 = arith.constant 0 : index
    %51 = vector.load %arg20[%c29_55, %c0_56] : memref<48x128xf32, #tpu.memory_space<vmem>>, vector<1x128xf32>
    tpu.vector_store %arg20[%c29_55, %c0_56], %1 {strides = array<i32>} : memref<48x128xf32, #tpu.memory_space<vmem>>, vector<1x128xf32>,
    %c30_57 = arith.constant 30 : index
    %c0_58 = arith.constant 0 : index
    %52 = vector.load %arg20[%c30_57, %c0_58] : memref<48x128xf32, #tpu.memory_space<vmem>>, vector<1x128xf32>
    tpu.vector_store %arg20[%c30_57, %c0_58], %1 {strides = array<i32>} : memref<48x128xf32, #tpu.memory_space<vmem>>, vector<1x128xf32>,
    %c35_59 = arith.constant 35 : index
    %c0_60 = arith.constant 0 : index
    %53 = vector.load %arg20[%c35_59, %c0_60] : memref<48x128xf32, #tpu.memory_space<vmem>>, vector<1x128xf32>
    tpu.vector_store %arg20[%c35_59, %c0_60], %1 {strides = array<i32>} : memref<48x128xf32, #tpu.memory_space<vmem>>, vector<1x128xf32>,
    %c36_61 = arith.constant 36 : index
    %c0_62 = arith.constant 0 : index
    %54 = vector.load %arg20[%c36_61, %c0_62] : memref<48x128xf32, #tpu.memory_space<vmem>>, vector<1x128xf32>
    tpu.vector_store %arg20[%c36_61, %c0_62], %1 {strides = array<i32>} : memref<48x128xf32, #tpu.memory_space<vmem>>, vector<1x128xf32>,
    %c41 = arith.constant 41 : index
    %c0_63 = arith.constant 0 : index
    %55 = vector.load %arg20[%c41, %c0_63] : memref<48x128xf32, #tpu.memory_space<vmem>>, vector<1x128xf32>
    tpu.vector_store %arg20[%c41, %c0_63], %1 {strides = array<i32>} : memref<48x128xf32, #tpu.memory_space<vmem>>, vector<1x128xf32>,
    %c42 = arith.constant 42 : index
    %c0_64 = arith.constant 0 : index
    %56 = vector.load %arg20[%c42, %c0_64] : memref<48x128xf32, #tpu.memory_space<vmem>>, vector<1x128xf32>
    tpu.vector_store %arg20[%c42, %c0_64], %1 {strides = array<i32>} : memref<48x128xf32, #tpu.memory_space<vmem>>, vector<1x128xf32>,
    %c47 = arith.constant 47 : index
    %c0_65 = arith.constant 0 : index
    %57 = vector.load %arg20[%c47, %c0_65] : memref<48x128xf32, #tpu.memory_space<vmem>>, vector<1x128xf32>
    tpu.vector_store %arg20[%c47, %c0_65], %1 {strides = array<i32>} : memref<48x128xf32, #tpu.memory_space<vmem>>, vector<1x128xf32>,
    %c0_66 = arith.constant 0 : index
    %c0_67 = arith.constant 0 : index
    %58 = vector.load %arg21[%c0_66, %c0_67] : memref<32x128xf32, #tpu.memory_space<vmem>>, vector<1x128xf32>
    tpu.vector_store %arg21[%c0_66, %c0_67], %1 {strides = array<i32>} : memref<32x128xf32, #tpu.memory_space<vmem>>, vector<1x128xf32>,
    %c3 = arith.constant 3 : index
    %c0_68 = arith.constant 0 : index
    %59 = vector.load %arg21[%c3, %c0_68] : memref<32x128xf32, #tpu.memory_space<vmem>>, vector<1x128xf32>
    tpu.vector_store %arg21[%c3, %c0_68], %1 {strides = array<i32>} : memref<32x128xf32, #tpu.memory_space<vmem>>, vector<1x128xf32>,
    %c4 = arith.constant 4 : index
    %c0_69 = arith.constant 0 : index
    %60 = vector.load %arg21[%c4, %c0_69] : memref<32x128xf32, #tpu.memory_space<vmem>>, vector<1x128xf32>
    tpu.vector_store %arg21[%c4, %c0_69], %1 {strides = array<i32>} : memref<32x128xf32, #tpu.memory_space<vmem>>, vector<1x128xf32>,
    %c7 = arith.constant 7 : index
    %c0_70 = arith.constant 0 : index
    %61 = vector.load %arg21[%c7, %c0_70] : memref<32x128xf32, #tpu.memory_space<vmem>>, vector<1x128xf32>
    tpu.vector_store %arg21[%c7, %c0_70], %1 {strides = array<i32>} : memref<32x128xf32, #tpu.memory_space<vmem>>, vector<1x128xf32>,
    %c8 = arith.constant 8 : index
    %c0_71 = arith.constant 0 : index
    %62 = vector.load %arg21[%c8, %c0_71] : memref<32x128xf32, #tpu.memory_space<vmem>>, vector<1x128xf32>
    tpu.vector_store %arg21[%c8, %c0_71], %1 {strides = array<i32>} : memref<32x128xf32, #tpu.memory_space<vmem>>, vector<1x128xf32>,
    %c11_72 = arith.constant 11 : index
    %c0_73 = arith.constant 0 : index
    %63 = vector.load %arg21[%c11_72, %c0_73] : memref<32x128xf32, #tpu.memory_space<vmem>>, vector<1x128xf32>
    tpu.vector_store %arg21[%c11_72, %c0_73], %1 {strides = array<i32>} : memref<32x128xf32, #tpu.memory_space<vmem>>, vector<1x128xf32>,
    %c12_74 = arith.constant 12 : index
    %c0_75 = arith.constant 0 : index
    %64 = vector.load %arg21[%c12_74, %c0_75] : memref<32x128xf32, #tpu.memory_space<vmem>>, vector<1x128xf32>
    tpu.vector_store %arg21[%c12_74, %c0_75], %1 {strides = array<i32>} : memref<32x128xf32, #tpu.memory_space<vmem>>, vector<1x128xf32>,
    %c15 = arith.constant 15 : index
    %c0_76 = arith.constant 0 : index
    %65 = vector.load %arg21[%c15, %c0_76] : memref<32x128xf32, #tpu.memory_space<vmem>>, vector<1x128xf32>
    tpu.vector_store %arg21[%c15, %c0_76], %1 {strides = array<i32>} : memref<32x128xf32, #tpu.memory_space<vmem>>, vector<1x128xf32>,
    %c16 = arith.constant 16 : index
    %c0_77 = arith.constant 0 : index
    %66 = vector.load %arg21[%c16, %c0_77] : memref<32x128xf32, #tpu.memory_space<vmem>>, vector<1x128xf32>
    tpu.vector_store %arg21[%c16, %c0_77], %1 {strides = array<i32>} : memref<32x128xf32, #tpu.memory_space<vmem>>, vector<1x128xf32>,
    %c19_78 = arith.constant 19 : index
    %c0_79 = arith.constant 0 : index
    %67 = vector.load %arg21[%c19_78, %c0_79] : memref<32x128xf32, #tpu.memory_space<vmem>>, vector<1x128xf32>
    tpu.vector_store %arg21[%c19_78, %c0_79], %1 {strides = array<i32>} : memref<32x128xf32, #tpu.memory_space<vmem>>, vector<1x128xf32>,
    %c20_80 = arith.constant 20 : index
    %c0_81 = arith.constant 0 : index
    %68 = vector.load %arg21[%c20_80, %c0_81] : memref<32x128xf32, #tpu.memory_space<vmem>>, vector<1x128xf32>
    tpu.vector_store %arg21[%c20_80, %c0_81], %1 {strides = array<i32>} : memref<32x128xf32, #tpu.memory_space<vmem>>, vector<1x128xf32>,
    %c23_82 = arith.constant 23 : index
    %c0_83 = arith.constant 0 : index
    %69 = vector.load %arg21[%c23_82, %c0_83] : memref<32x128xf32, #tpu.memory_space<vmem>>, vector<1x128xf32>
    tpu.vector_store %arg21[%c23_82, %c0_83], %1 {strides = array<i32>} : memref<32x128xf32, #tpu.memory_space<vmem>>, vector<1x128xf32>,
    %c24_84 = arith.constant 24 : index
    %c0_85 = arith.constant 0 : index
    %70 = vector.load %arg21[%c24_84, %c0_85] : memref<32x128xf32, #tpu.memory_space<vmem>>, vector<1x128xf32>
    tpu.vector_store %arg21[%c24_84, %c0_85], %1 {strides = array<i32>} : memref<32x128xf32, #tpu.memory_space<vmem>>, vector<1x128xf32>,
    %c27 = arith.constant 27 : index
    %c0_86 = arith.constant 0 : index
    %71 = vector.load %arg21[%c27, %c0_86] : memref<32x128xf32, #tpu.memory_space<vmem>>, vector<1x128xf32>
    tpu.vector_store %arg21[%c27, %c0_86], %1 {strides = array<i32>} : memref<32x128xf32, #tpu.memory_space<vmem>>, vector<1x128xf32>,
    %c28 = arith.constant 28 : index
    %c0_87 = arith.constant 0 : index
    %72 = vector.load %arg21[%c28, %c0_87] : memref<32x128xf32, #tpu.memory_space<vmem>>, vector<1x128xf32>
    tpu.vector_store %arg21[%c28, %c0_87], %1 {strides = array<i32>} : memref<32x128xf32, #tpu.memory_space<vmem>>, vector<1x128xf32>,
    %c31 = arith.constant 31 : index
    %c0_88 = arith.constant 0 : index
    %73 = vector.load %arg21[%c31, %c0_88] : memref<32x128xf32, #tpu.memory_space<vmem>>, vector<1x128xf32>
    tpu.vector_store %arg21[%c31, %c0_88], %1 {strides = array<i32>} : memref<32x128xf32, #tpu.memory_space<vmem>>, vector<1x128xf32>,
    %c0_89 = arith.constant 0 : index
    %c0_90 = arith.constant 0 : index
    %74 = vector.load %arg1[%c0_89, %c0_90] : memref<512x64xf32, #tpu.memory_space<vmem>>, vector<64x64xf32>
    %c1 = arith.constant 1 : index
    %c0_91 = arith.constant 0 : index
    %75 = vector.load %arg17[%c1, %c0_91] : memref<530x64xf32, #tpu.memory_space<vmem>>, vector<64x64xf32>
    tpu.vector_store %arg17[%c1, %c0_91], %74 {strides = array<i32>} : memref<530x64xf32, #tpu.memory_space<vmem>>, vector<64x64xf32>,
    %c64 = arith.constant 64 : index
    %c0_92 = arith.constant 0 : index
    %76 = vector.load %arg1[%c64, %c0_92] : memref<512x64xf32, #tpu.memory_space<vmem>>, vector<64x64xf32>
    %c67 = arith.constant 67 : index
    %c0_93 = arith.constant 0 : index
    %77 = vector.load %arg17[%c67, %c0_93] : memref<530x64xf32, #tpu.memory_space<vmem>>, vector<64x64xf32>
    tpu.vector_store %arg17[%c67, %c0_93], %76 {strides = array<i32>} : memref<530x64xf32, #tpu.memory_space<vmem>>, vector<64x64xf32>,
    %c128 = arith.constant 128 : index
    %c0_94 = arith.constant 0 : index
    %78 = vector.load %arg1[%c128, %c0_94] : memref<512x64xf32, #tpu.memory_space<vmem>>, vector<64x64xf32>
    %c133 = arith.constant 133 : index
    %c0_95 = arith.constant 0 : index
    %79 = vector.load %arg17[%c133, %c0_95] : memref<530x64xf32, #tpu.memory_space<vmem>>, vector<64x64xf32>
    tpu.vector_store %arg17[%c133, %c0_95], %78 {strides = array<i32>} : memref<530x64xf32, #tpu.memory_space<vmem>>, vector<64x64xf32>,
    %c192 = arith.constant 192 : index
    %c0_96 = arith.constant 0 : index
    %80 = vector.load %arg1[%c192, %c0_96] : memref<512x64xf32, #tpu.memory_space<vmem>>, vector<64x64xf32>
    %c199 = arith.constant 199 : index
    %c0_97 = arith.constant 0 : index
    %81 = vector.load %arg17[%c199, %c0_97] : memref<530x64xf32, #tpu.memory_space<vmem>>, vector<64x64xf32>
    tpu.vector_store %arg17[%c199, %c0_97], %80 {strides = array<i32>} : memref<530x64xf32, #tpu.memory_space<vmem>>, vector<64x64xf32>,
    %c256 = arith.constant 256 : index
    %c0_98 = arith.constant 0 : index
    %82 = vector.load %arg1[%c256, %c0_98] : memref<512x64xf32, #tpu.memory_space<vmem>>, vector<64x64xf32>
    %c265 = arith.constant 265 : index
    %c0_99 = arith.constant 0 : index
    %83 = vector.load %arg17[%c265, %c0_99] : memref<530x64xf32, #tpu.memory_space<vmem>>, vector<64x64xf32>
    tpu.vector_store %arg17[%c265, %c0_99], %82 {strides = array<i32>} : memref<530x64xf32, #tpu.memory_space<vmem>>, vector<64x64xf32>,
    %c320 = arith.constant 320 : index
    %c0_100 = arith.constant 0 : index
    %84 = vector.load %arg1[%c320, %c0_100] : memref<512x64xf32, #tpu.memory_space<vmem>>, vector<64x64xf32>
    %c331 = arith.constant 331 : index
    %c0_101 = arith.constant 0 : index
    %85 = vector.load %arg17[%c331, %c0_101] : memref<530x64xf32, #tpu.memory_space<vmem>>, vector<64x64xf32>
    tpu.vector_store %arg17[%c331, %c0_101], %84 {strides = array<i32>} : memref<530x64xf32, #tpu.memory_space<vmem>>, vector<64x64xf32>,
    %c384 = arith.constant 384 : index
    %c0_102 = arith.constant 0 : index
    %86 = vector.load %arg1[%c384, %c0_102] : memref<512x64xf32, #tpu.memory_space<vmem>>, vector<64x64xf32>
    %c397 = arith.constant 397 : index
    %c0_103 = arith.constant 0 : index
    %87 = vector.load %arg17[%c397, %c0_103] : memref<530x64xf32, #tpu.memory_space<vmem>>, vector<64x64xf32>
    tpu.vector_store %arg17[%c397, %c0_103], %86 {strides = array<i32>} : memref<530x64xf32, #tpu.memory_space<vmem>>, vector<64x64xf32>,
    %c448 = arith.constant 448 : index
    %c0_104 = arith.constant 0 : index
    %88 = vector.load %arg1[%c448, %c0_104] : memref<512x64xf32, #tpu.memory_space<vmem>>, vector<64x64xf32>
    %c463 = arith.constant 463 : index
    %c0_105 = arith.constant 0 : index
    %89 = vector.load %arg17[%c463, %c0_105] : memref<530x64xf32, #tpu.memory_space<vmem>>, vector<64x64xf32>
    tpu.vector_store %arg17[%c463, %c0_105], %88 {strides = array<i32>} : memref<530x64xf32, #tpu.memory_space<vmem>>, vector<64x64xf32>,
    %c0_106 = arith.constant 0 : index
    %c0_107 = arith.constant 0 : index
    %90 = tpu.strided_load %arg17[%c0_106, %c0_107] {strides = array<i32: 2, 1>} : memref<530x64xf32, #tpu.memory_space<vmem>>, vector<264x64xf32>
    %91 = arith.truncf %90 : vector<264x64xf32> to vector<264x64xbf16>
    %c0_108 = arith.constant 0 : index
    %c0_109 = arith.constant 0 : index
    %c0_110 = arith.constant 0 : index
    %92 = vector.load %arg2[%c0_108, %c0_109, %c0_110] : memref<3x64x256xbf16, #tpu.memory_space<vmem>>, vector<1x64x256xbf16>
    %93 = vector.shape_cast %92 : vector<1x64x256xbf16> to vector<64x256xbf16>
    %cst_111 = arith.constant dense<0.000000e+00> : vector<264x256xf32>
    %94 = tpu.matmul %91, %93, %cst_111 {dimension_numbers = #tpu.dot_dimension_numbers<[1], [0], [0], [1], [0, 0, 1, 1], [], []>} : vector<264x64xbf16>, vector<64x256xbf16>, vector<264x256xf32> -> vector<264x256xf32>
    %c1_112 = arith.constant 1 : index
    %c0_113 = arith.constant 0 : index
    %95 = tpu.strided_load %arg17[%c1_112, %c0_113] {strides = array<i32: 2, 1>} : memref<530x64xf32, #tpu.memory_space<vmem>>, vector<264x64xf32>
    %96 = arith.truncf %95 : vector<264x64xf32> to vector<264x64xbf16>
    %c1_114 = arith.constant 1 : index
    %c0_115 = arith.constant 0 : index
    %c0_116 = arith.constant 0 : index
    %97 = vector.load %arg2[%c1_114, %c0_115, %c0_116] : memref<3x64x256xbf16, #tpu.memory_space<vmem>>, vector<1x64x256xbf16>
    %98 = vector.shape_cast %97 : vector<1x64x256xbf16> to vector<64x256xbf16>
    %cst_117 = arith.constant dense<0.000000e+00> : vector<264x256xf32>
    %99 = tpu.matmul %96, %98, %cst_117 {dimension_numbers = #tpu.dot_dimension_numbers<[1], [0], [0], [1], [0, 0, 1, 1], [], []>} : vector<264x64xbf16>, vector<64x256xbf16>, vector<264x256xf32> -> vector<264x256xf32>
    %100 = arith.addf %94, %99 : vector<264x256xf32>
    %c2 = arith.constant 2 : index
    %c0_118 = arith.constant 0 : index
    %101 = tpu.strided_load %arg17[%c2, %c0_118] {strides = array<i32: 2, 1>} : memref<530x64xf32, #tpu.memory_space<vmem>>, vector<264x64xf32>
    %102 = arith.truncf %101 : vector<264x64xf32> to vector<264x64xbf16>
    %c2_119 = arith.constant 2 : index
    %c0_120 = arith.constant 0 : index
    %c0_121 = arith.constant 0 : index
    %103 = vector.load %arg2[%c2_119, %c0_120, %c0_121] : memref<3x64x256xbf16, #tpu.memory_space<vmem>>, vector<1x64x256xbf16>
    %104 = vector.shape_cast %103 : vector<1x64x256xbf16> to vector<64x256xbf16>
    %cst_122 = arith.constant dense<0.000000e+00> : vector<264x256xf32>
    %105 = tpu.matmul %102, %104, %cst_122 {dimension_numbers = #tpu.dot_dimension_numbers<[1], [0], [0], [1], [0, 0, 1, 1], [], []>} : vector<264x64xbf16>, vector<64x256xbf16>, vector<264x256xf32> -> vector<264x256xf32>
    %106 = arith.addf %100, %105 : vector<264x256xf32>
    %107 = vector.extract_strided_slice %106 {offsets = [0, 0], sizes = [264, 128], strides = [1, 1]} : vector<264x256xf32> to vector<264x128xf32>
    %108 = vector.extract_strided_slice %106 {offsets = [0, 128], sizes = [264, 128], strides = [1, 1]} : vector<264x256xf32> to vector<264x128xf32>
    %109 = arith.maximumf %107, %108 : vector<264x128xf32>
    %c0_123 = arith.constant 0 : index
    %c0_124 = arith.constant 0 : index
    %110 = vector.load %arg3[%c0_123, %c0_124] : memref<1x128xf32, #tpu.memory_space<vmem>>, vector<1x128xf32>
    %111 = vector.broadcast %110 : vector<1x128xf32> to vector<264x128xf32>
    %112 = arith.addf %109, %111 : vector<264x128xf32>
    %cst_125 = arith.constant 0.000000e+00 : f32
    %113 = vector.broadcast %cst_125 : f32 to vector<264x128xf32>
    %114 = arith.maximumf %112, %113 : vector<264x128xf32>
    %c0_126 = arith.constant 0 : index
    %c0_127 = arith.constant 0 : index
    %115 = vector.load %arg23[%c0_126, %c0_127] : memref<264x128xf32, #tpu.memory_space<vmem>>, vector<264x128xf32>
    tpu.vector_store %arg23[%c0_126, %c0_127], %114 {strides = array<i32>} : memref<264x128xf32, #tpu.memory_space<vmem>>, vector<264x128xf32>,
    %c0_128 = arith.constant 0 : index
    %c0_129 = arith.constant 0 : index
    %116 = tpu.strided_load %arg23[%c0_128, %c0_129] {strides = array<i32: 2, 1>} : memref<264x128xf32, #tpu.memory_space<vmem>>, vector<16x128xf32>
    %c1_130 = arith.constant 1 : index
    %c0_131 = arith.constant 0 : index
    %117 = tpu.strided_load %arg23[%c1_130, %c0_131] {strides = array<i32: 2, 1>} : memref<264x128xf32, #tpu.memory_space<vmem>>, vector<16x128xf32>
    %118 = arith.maximumf %116, %117 : vector<16x128xf32>
    %c1_132 = arith.constant 1 : index
    %c0_133 = arith.constant 0 : index
    %119 = vector.load %arg18[%c1_132, %c0_133] : memref<144x128xf32, #tpu.memory_space<vmem>>, vector<16x128xf32>
    tpu.vector_store %arg18[%c1_132, %c0_133], %118 {strides = array<i32>} : memref<144x128xf32, #tpu.memory_space<vmem>>, vector<16x128xf32>,
    %c33 = arith.constant 33 : index
    %c0_134 = arith.constant 0 : index
    %120 = tpu.strided_load %arg23[%c33, %c0_134] {strides = array<i32: 2, 1>} : memref<264x128xf32, #tpu.memory_space<vmem>>, vector<16x128xf32>
    %c34 = arith.constant 34 : index
    %c0_135 = arith.constant 0 : index
    %121 = tpu.strided_load %arg23[%c34, %c0_135] {strides = array<i32: 2, 1>} : memref<264x128xf32, #tpu.memory_space<vmem>>, vector<16x128xf32>
    %122 = arith.maximumf %120, %121 : vector<16x128xf32>
    %c19_136 = arith.constant 19 : index
    %c0_137 = arith.constant 0 : index
    %123 = vector.load %arg18[%c19_136, %c0_137] : memref<144x128xf32, #tpu.memory_space<vmem>>, vector<16x128xf32>
    tpu.vector_store %arg18[%c19_136, %c0_137], %122 {strides = array<i32>} : memref<144x128xf32, #tpu.memory_space<vmem>>, vector<16x128xf32>,
    %c66_138 = arith.constant 66 : index
    %c0_139 = arith.constant 0 : index
    %124 = tpu.strided_load %arg23[%c66_138, %c0_139] {strides = array<i32: 2, 1>} : memref<264x128xf32, #tpu.memory_space<vmem>>, vector<16x128xf32>
    %c67_140 = arith.constant 67 : index
    %c0_141 = arith.constant 0 : index
    %125 = tpu.strided_load %arg23[%c67_140, %c0_141] {strides = array<i32: 2, 1>} : memref<264x128xf32, #tpu.memory_space<vmem>>, vector<16x128xf32>
    %126 = arith.maximumf %124, %125 : vector<16x128xf32>
    %c37 = arith.constant 37 : index
    %c0_142 = arith.constant 0 : index
    %127 = vector.load %arg18[%c37, %c0_142] : memref<144x128xf32, #tpu.memory_space<vmem>>, vector<16x128xf32>
    tpu.vector_store %arg18[%c37, %c0_142], %126 {strides = array<i32>} : memref<144x128xf32, #tpu.memory_space<vmem>>, vector<16x128xf32>,
    %c99 = arith.constant 99 : index
    %c0_143 = arith.constant 0 : index
    %128 = tpu.strided_load %arg23[%c99, %c0_143] {strides = array<i32: 2, 1>} : memref<264x128xf32, #tpu.memory_space<vmem>>, vector<16x128xf32>
    %c100 = arith.constant 100 : index
    %c0_144 = arith.constant 0 : index
    %129 = tpu.strided_load %arg23[%c100, %c0_144] {strides = array<i32: 2, 1>} : memref<264x128xf32, #tpu.memory_space<vmem>>, vector<16x128xf32>
    %130 = arith.maximumf %128, %129 : vector<16x128xf32>
    %c55 = arith.constant 55 : index
    %c0_145 = arith.constant 0 : index
    %131 = vector.load %arg18[%c55, %c0_145] : memref<144x128xf32, #tpu.memory_space<vmem>>, vector<16x128xf32>
    tpu.vector_store %arg18[%c55, %c0_145], %130 {strides = array<i32>} : memref<144x128xf32, #tpu.memory_space<vmem>>, vector<16x128xf32>,
    %c132_146 = arith.constant 132 : index
    %c0_147 = arith.constant 0 : index
    %132 = tpu.strided_load %arg23[%c132_146, %c0_147] {strides = array<i32: 2, 1>} : memref<264x128xf32, #tpu.memory_space<vmem>>, vector<16x128xf32>
    %c133_148 = arith.constant 133 : index
    %c0_149 = arith.constant 0 : index
    %133 = tpu.strided_load %arg23[%c133_148, %c0_149] {strides = array<i32: 2, 1>} : memref<264x128xf32, #tpu.memory_space<vmem>>, vector<16x128xf32>
    %134 = arith.maximumf %132, %133 : vector<16x128xf32>
    %c73 = arith.constant 73 : index
    %c0_150 = arith.constant 0 : index
    %135 = vector.load %arg18[%c73, %c0_150] : memref<144x128xf32, #tpu.memory_space<vmem>>, vector<16x128xf32>
    tpu.vector_store %arg18[%c73, %c0_150], %134 {strides = array<i32>} : memref<144x128xf32, #tpu.memory_space<vmem>>, vector<16x128xf32>,
    %c165 = arith.constant 165 : index
    %c0_151 = arith.constant 0 : index
    %136 = tpu.strided_load %arg23[%c165, %c0_151] {strides = array<i32: 2, 1>} : memref<264x128xf32, #tpu.memory_space<vmem>>, vector<16x128xf32>
    %c166 = arith.constant 166 : index
    %c0_152 = arith.constant 0 : index
    %137 = tpu.strided_load %arg23[%c166, %c0_152] {strides = array<i32: 2, 1>} : memref<264x128xf32, #tpu.memory_space<vmem>>, vector<16x128xf32>
    %138 = arith.maximumf %136, %137 : vector<16x128xf32>
    %c91 = arith.constant 91 : index
    %c0_153 = arith.constant 0 : index
    %139 = vector.load %arg18[%c91, %c0_153] : memref<144x128xf32, #tpu.memory_space<vmem>>, vector<16x128xf32>
    tpu.vector_store %arg18[%c91, %c0_153], %138 {strides = array<i32>} : memref<144x128xf32, #tpu.memory_space<vmem>>, vector<16x128xf32>,
    %c198_154 = arith.constant 198 : index
    %c0_155 = arith.constant 0 : index
    %140 = tpu.strided_load %arg23[%c198_154, %c0_155] {strides = array<i32: 2, 1>} : memref<264x128xf32, #tpu.memory_space<vmem>>, vector<16x128xf32>
    %c199_156 = arith.constant 199 : index
    %c0_157 = arith.constant 0 : index
    %141 = tpu.strided_load %arg23[%c199_156, %c0_157] {strides = array<i32: 2, 1>} : memref<264x128xf32, #tpu.memory_space<vmem>>, vector<16x128xf32>
    %142 = arith.maximumf %140, %141 : vector<16x128xf32>
    %c109 = arith.constant 109 : index
    %c0_158 = arith.constant 0 : index
    %143 = vector.load %arg18[%c109, %c0_158] : memref<144x128xf32, #tpu.memory_space<vmem>>, vector<16x128xf32>
    tpu.vector_store %arg18[%c109, %c0_158], %142 {strides = array<i32>} : memref<144x128xf32, #tpu.memory_space<vmem>>, vector<16x128xf32>,
    %c231 = arith.constant 231 : index
    %c0_159 = arith.constant 0 : index
    %144 = tpu.strided_load %arg23[%c231, %c0_159] {strides = array<i32: 2, 1>} : memref<264x128xf32, #tpu.memory_space<vmem>>, vector<16x128xf32>
    %c232 = arith.constant 232 : index
    %c0_160 = arith.constant 0 : index
    %145 = tpu.strided_load %arg23[%c232, %c0_160] {strides = array<i32: 2, 1>} : memref<264x128xf32, #tpu.memory_space<vmem>>, vector<16x128xf32>
    %146 = arith.maximumf %144, %145 : vector<16x128xf32>
    %c127 = arith.constant 127 : index
    %c0_161 = arith.constant 0 : index
    %147 = vector.load %arg18[%c127, %c0_161] : memref<144x128xf32, #tpu.memory_space<vmem>>, vector<16x128xf32>
    tpu.vector_store %arg18[%c127, %c0_161], %146 {strides = array<i32>} : memref<144x128xf32, #tpu.memory_space<vmem>>, vector<16x128xf32>,
    %c0_162 = arith.constant 0 : index
    %c0_163 = arith.constant 0 : index
    %148 = vector.load %arg18[%c0_162, %c0_163] : memref<144x128xf32, #tpu.memory_space<vmem>>, vector<142x128xf32>
    %149 = arith.truncf %148 : vector<142x128xf32> to vector<142x128xbf16>
    %c0_164 = arith.constant 0 : index
    %c0_165 = arith.constant 0 : index
    %c0_166 = arith.constant 0 : index
    %150 = vector.load %arg4[%c0_164, %c0_165, %c0_166] : memref<3x128x256xbf16, #tpu.memory_space<vmem>>, vector<1x128x256xbf16>
    %151 = vector.shape_cast %150 : vector<1x128x256xbf16> to vector<128x256xbf16>
    %cst_167 = arith.constant dense<0.000000e+00> : vector<142x256xf32>
    %152 = tpu.matmul %149, %151, %cst_167 {dimension_numbers = #tpu.dot_dimension_numbers<[1], [0], [0], [1], [0, 0, 1, 1], [], []>} : vector<142x128xbf16>, vector<128x256xbf16>, vector<142x256xf32> -> vector<142x256xf32>
    %c1_168 = arith.constant 1 : index
    %c0_169 = arith.constant 0 : index
    %153 = vector.load %arg18[%c1_168, %c0_169] : memref<144x128xf32, #tpu.memory_space<vmem>>, vector<142x128xf32>
    %154 = arith.truncf %153 : vector<142x128xf32> to vector<142x128xbf16>
    %c1_170 = arith.constant 1 : index
    %c0_171 = arith.constant 0 : index
    %c0_172 = arith.constant 0 : index
    %155 = vector.load %arg4[%c1_170, %c0_171, %c0_172] : memref<3x128x256xbf16, #tpu.memory_space<vmem>>, vector<1x128x256xbf16>
    %156 = vector.shape_cast %155 : vector<1x128x256xbf16> to vector<128x256xbf16>
    %cst_173 = arith.constant dense<0.000000e+00> : vector<142x256xf32>
    %157 = tpu.matmul %154, %156, %cst_173 {dimension_numbers = #tpu.dot_dimension_numbers<[1], [0], [0], [1], [0, 0, 1, 1], [], []>} : vector<142x128xbf16>, vector<128x256xbf16>, vector<142x256xf32> -> vector<142x256xf32>
    %158 = arith.addf %152, %157 : vector<142x256xf32>
    %c2_174 = arith.constant 2 : index
    %c0_175 = arith.constant 0 : index
    %159 = vector.load %arg18[%c2_174, %c0_175] : memref<144x128xf32, #tpu.memory_space<vmem>>, vector<142x128xf32>
    %160 = arith.truncf %159 : vector<142x128xf32> to vector<142x128xbf16>
    %c2_176 = arith.constant 2 : index
    %c0_177 = arith.constant 0 : index
    %c0_178 = arith.constant 0 : index
    %161 = vector.load %arg4[%c2_176, %c0_177, %c0_178] : memref<3x128x256xbf16, #tpu.memory_space<vmem>>, vector<1x128x256xbf16>
    %162 = vector.shape_cast %161 : vector<1x128x256xbf16> to vector<128x256xbf16>
    %cst_179 = arith.constant dense<0.000000e+00> : vector<142x256xf32>
    %163 = tpu.matmul %160, %162, %cst_179 {dimension_numbers = #tpu.dot_dimension_numbers<[1], [0], [0], [1], [0, 0, 1, 1], [], []>} : vector<142x128xbf16>, vector<128x256xbf16>, vector<142x256xf32> -> vector<142x256xf32>
    %164 = arith.addf %158, %163 : vector<142x256xf32>
    %165 = vector.extract_strided_slice %164 {offsets = [0, 0], sizes = [142, 128], strides = [1, 1]} : vector<142x256xf32> to vector<142x128xf32>
    %166 = vector.extract_strided_slice %164 {offsets = [0, 128], sizes = [142, 128], strides = [1, 1]} : vector<142x256xf32> to vector<142x128xf32>
    %167 = arith.maximumf %165, %166 : vector<142x128xf32>
    %c0_180 = arith.constant 0 : index
    %c0_181 = arith.constant 0 : index
    %168 = vector.load %arg5[%c0_180, %c0_181] : memref<1x128xf32, #tpu.memory_space<vmem>>, vector<1x128xf32>
    %169 = vector.broadcast %168 : vector<1x128xf32> to vector<142x128xf32>
    %170 = arith.addf %167, %169 : vector<142x128xf32>
    %cst_182 = arith.constant 0.000000e+00 : f32
    %171 = vector.broadcast %cst_182 : f32 to vector<142x128xf32>
    %172 = arith.maximumf %170, %171 : vector<142x128xf32>
    %c0_183 = arith.constant 0 : index
    %c0_184 = arith.constant 0 : index
    %173 = vector.load %arg23[%c0_183, %c0_184] : memref<264x128xf32, #tpu.memory_space<vmem>>, vector<142x128xf32>
    tpu.vector_store %arg23[%c0_183, %c0_184], %172 {strides = array<i32>} : memref<264x128xf32, #tpu.memory_space<vmem>>, vector<142x128xf32>,
    %c0_185 = arith.constant 0 : index
    %c0_186 = arith.constant 0 : index
    %174 = tpu.strided_load %arg23[%c0_185, %c0_186] {strides = array<i32: 2, 1>} : memref<264x128xf32, #tpu.memory_space<vmem>>, vector<8x128xf32>
    %c1_187 = arith.constant 1 : index
    %c0_188 = arith.constant 0 : index
    %175 = tpu.strided_load %arg23[%c1_187, %c0_188] {strides = array<i32: 2, 1>} : memref<264x128xf32, #tpu.memory_space<vmem>>, vector<8x128xf32>
    %176 = arith.maximumf %174, %175 : vector<8x128xf32>
    %c1_189 = arith.constant 1 : index
    %c0_190 = arith.constant 0 : index
    %177 = vector.load %arg19[%c1_189, %c0_190] : memref<80x128xf32, #tpu.memory_space<vmem>>, vector<8x128xf32>
    tpu.vector_store %arg19[%c1_189, %c0_190], %176 {strides = array<i32>} : memref<80x128xf32, #tpu.memory_space<vmem>>, vector<8x128xf32>,
    %c18_191 = arith.constant 18 : index
    %c0_192 = arith.constant 0 : index
    %178 = tpu.strided_load %arg23[%c18_191, %c0_192] {strides = array<i32: 2, 1>} : memref<264x128xf32, #tpu.memory_space<vmem>>, vector<8x128xf32>
    %c19_193 = arith.constant 19 : index
    %c0_194 = arith.constant 0 : index
    %179 = tpu.strided_load %arg23[%c19_193, %c0_194] {strides = array<i32: 2, 1>} : memref<264x128xf32, #tpu.memory_space<vmem>>, vector<8x128xf32>
    %180 = arith.maximumf %178, %179 : vector<8x128xf32>
    %c11_195 = arith.constant 11 : index
    %c0_196 = arith.constant 0 : index
    %181 = vector.load %arg19[%c11_195, %c0_196] : memref<80x128xf32, #tpu.memory_space<vmem>>, vector<8x128xf32>
    tpu.vector_store %arg19[%c11_195, %c0_196], %180 {strides = array<i32>} : memref<80x128xf32, #tpu.memory_space<vmem>>, vector<8x128xf32>,
    %c36_197 = arith.constant 36 : index
    %c0_198 = arith.constant 0 : index
    %182 = tpu.strided_load %arg23[%c36_197, %c0_198] {strides = array<i32: 2, 1>} : memref<264x128xf32, #tpu.memory_space<vmem>>, vector<8x128xf32>
    %c37_199 = arith.constant 37 : index
    %c0_200 = arith.constant 0 : index
    %183 = tpu.strided_load %arg23[%c37_199, %c0_200] {strides = array<i32: 2, 1>} : memref<264x128xf32, #tpu.memory_space<vmem>>, vector<8x128xf32>
    %184 = arith.maximumf %182, %183 : vector<8x128xf32>
    %c21 = arith.constant 21 : index
    %c0_201 = arith.constant 0 : index
    %185 = vector.load %arg19[%c21, %c0_201] : memref<80x128xf32, #tpu.memory_space<vmem>>, vector<8x128xf32>
    tpu.vector_store %arg19[%c21, %c0_201], %184 {strides = array<i32>} : memref<80x128xf32, #tpu.memory_space<vmem>>, vector<8x128xf32>,
    %c54_202 = arith.constant 54 : index
    %c0_203 = arith.constant 0 : index
    %186 = tpu.strided_load %arg23[%c54_202, %c0_203] {strides = array<i32: 2, 1>} : memref<264x128xf32, #tpu.memory_space<vmem>>, vector<8x128xf32>
    %c55_204 = arith.constant 55 : index
    %c0_205 = arith.constant 0 : index
    %187 = tpu.strided_load %arg23[%c55_204, %c0_205] {strides = array<i32: 2, 1>} : memref<264x128xf32, #tpu.memory_space<vmem>>, vector<8x128xf32>
    %188 = arith.maximumf %186, %187 : vector<8x128xf32>
    %c31_206 = arith.constant 31 : index
    %c0_207 = arith.constant 0 : index
    %189 = vector.load %arg19[%c31_206, %c0_207] : memref<80x128xf32, #tpu.memory_space<vmem>>, vector<8x128xf32>
    tpu.vector_store %arg19[%c31_206, %c0_207], %188 {strides = array<i32>} : memref<80x128xf32, #tpu.memory_space<vmem>>, vector<8x128xf32>,
    %c72_208 = arith.constant 72 : index
    %c0_209 = arith.constant 0 : index
    %190 = tpu.strided_load %arg23[%c72_208, %c0_209] {strides = array<i32: 2, 1>} : memref<264x128xf32, #tpu.memory_space<vmem>>, vector<8x128xf32>
    %c73_210 = arith.constant 73 : index
    %c0_211 = arith.constant 0 : index
    %191 = tpu.strided_load %arg23[%c73_210, %c0_211] {strides = array<i32: 2, 1>} : memref<264x128xf32, #tpu.memory_space<vmem>>, vector<8x128xf32>
    %192 = arith.maximumf %190, %191 : vector<8x128xf32>
    %c41_212 = arith.constant 41 : index
    %c0_213 = arith.constant 0 : index
    %193 = vector.load %arg19[%c41_212, %c0_213] : memref<80x128xf32, #tpu.memory_space<vmem>>, vector<8x128xf32>
    tpu.vector_store %arg19[%c41_212, %c0_213], %192 {strides = array<i32>} : memref<80x128xf32, #tpu.memory_space<vmem>>, vector<8x128xf32>,
    %c90_214 = arith.constant 90 : index
    %c0_215 = arith.constant 0 : index
    %194 = tpu.strided_load %arg23[%c90_214, %c0_215] {strides = array<i32: 2, 1>} : memref<264x128xf32, #tpu.memory_space<vmem>>, vector<8x128xf32>
    %c91_216 = arith.constant 91 : index
    %c0_217 = arith.constant 0 : index
    %195 = tpu.strided_load %arg23[%c91_216, %c0_217] {strides = array<i32: 2, 1>} : memref<264x128xf32, #tpu.memory_space<vmem>>, vector<8x128xf32>
    %196 = arith.maximumf %194, %195 : vector<8x128xf32>
    %c51 = arith.constant 51 : index
    %c0_218 = arith.constant 0 : index
    %197 = vector.load %arg19[%c51, %c0_218] : memref<80x128xf32, #tpu.memory_space<vmem>>, vector<8x128xf32>
    tpu.vector_store %arg19[%c51, %c0_218], %196 {strides = array<i32>} : memref<80x128xf32, #tpu.memory_space<vmem>>, vector<8x128xf32>,
    %c108_219 = arith.constant 108 : index
    %c0_220 = arith.constant 0 : index
    %198 = tpu.strided_load %arg23[%c108_219, %c0_220] {strides = array<i32: 2, 1>} : memref<264x128xf32, #tpu.memory_space<vmem>>, vector<8x128xf32>
    %c109_221 = arith.constant 109 : index
    %c0_222 = arith.constant 0 : index
    %199 = tpu.strided_load %arg23[%c109_221, %c0_222] {strides = array<i32: 2, 1>} : memref<264x128xf32, #tpu.memory_space<vmem>>, vector<8x128xf32>
    %200 = arith.maximumf %198, %199 : vector<8x128xf32>
    %c61 = arith.constant 61 : index
    %c0_223 = arith.constant 0 : index
    %201 = vector.load %arg19[%c61, %c0_223] : memref<80x128xf32, #tpu.memory_space<vmem>>, vector<8x128xf32>
    tpu.vector_store %arg19[%c61, %c0_223], %200 {strides = array<i32>} : memref<80x128xf32, #tpu.memory_space<vmem>>, vector<8x128xf32>,
    %c126_224 = arith.constant 126 : index
    %c0_225 = arith.constant 0 : index
    %202 = tpu.strided_load %arg23[%c126_224, %c0_225] {strides = array<i32: 2, 1>} : memref<264x128xf32, #tpu.memory_space<vmem>>, vector<8x128xf32>
    %c127_226 = arith.constant 127 : index
    %c0_227 = arith.constant 0 : index
    %203 = tpu.strided_load %arg23[%c127_226, %c0_227] {strides = array<i32: 2, 1>} : memref<264x128xf32, #tpu.memory_space<vmem>>, vector<8x128xf32>
    %204 = arith.maximumf %202, %203 : vector<8x128xf32>
    %c71_228 = arith.constant 71 : index
    %c0_229 = arith.constant 0 : index
    %205 = vector.load %arg19[%c71_228, %c0_229] : memref<80x128xf32, #tpu.memory_space<vmem>>, vector<8x128xf32>
    tpu.vector_store %arg19[%c71_228, %c0_229], %204 {strides = array<i32>} : memref<80x128xf32, #tpu.memory_space<vmem>>, vector<8x128xf32>,
    %c0_230 = arith.constant 0 : index
    %c0_231 = arith.constant 0 : index
    %206 = vector.load %arg19[%c0_230, %c0_231] : memref<80x128xf32, #tpu.memory_space<vmem>>, vector<78x128xf32>
    %207 = arith.truncf %206 : vector<78x128xf32> to vector<78x128xbf16>
    %c0_232 = arith.constant 0 : index
    %c0_233 = arith.constant 0 : index
    %c0_234 = arith.constant 0 : index
    %208 = vector.load %arg6[%c0_232, %c0_233, %c0_234] : memref<3x128x256xbf16, #tpu.memory_space<vmem>>, vector<1x128x256xbf16>
    %209 = vector.shape_cast %208 : vector<1x128x256xbf16> to vector<128x256xbf16>
    %cst_235 = arith.constant dense<0.000000e+00> : vector<78x256xf32>
    %210 = tpu.matmul %207, %209, %cst_235 {dimension_numbers = #tpu.dot_dimension_numbers<[1], [0], [0], [1], [0, 0, 1, 1], [], []>} : vector<78x128xbf16>, vector<128x256xbf16>, vector<78x256xf32> -> vector<78x256xf32>
    %c1_236 = arith.constant 1 : index
    %c0_237 = arith.constant 0 : index
    %211 = vector.load %arg19[%c1_236, %c0_237] : memref<80x128xf32, #tpu.memory_space<vmem>>, vector<78x128xf32>
    %212 = arith.truncf %211 : vector<78x128xf32> to vector<78x128xbf16>
    %c1_238 = arith.constant 1 : index
    %c0_239 = arith.constant 0 : index
    %c0_240 = arith.constant 0 : index
    %213 = vector.load %arg6[%c1_238, %c0_239, %c0_240] : memref<3x128x256xbf16, #tpu.memory_space<vmem>>, vector<1x128x256xbf16>
    %214 = vector.shape_cast %213 : vector<1x128x256xbf16> to vector<128x256xbf16>
    %cst_241 = arith.constant dense<0.000000e+00> : vector<78x256xf32>
    %215 = tpu.matmul %212, %214, %cst_241 {dimension_numbers = #tpu.dot_dimension_numbers<[1], [0], [0], [1], [0, 0, 1, 1], [], []>} : vector<78x128xbf16>, vector<128x256xbf16>, vector<78x256xf32> -> vector<78x256xf32>
    %216 = arith.addf %210, %215 : vector<78x256xf32>
    %c2_242 = arith.constant 2 : index
    %c0_243 = arith.constant 0 : index
    %217 = vector.load %arg19[%c2_242, %c0_243] : memref<80x128xf32, #tpu.memory_space<vmem>>, vector<78x128xf32>
    %218 = arith.truncf %217 : vector<78x128xf32> to vector<78x128xbf16>
    %c2_244 = arith.constant 2 : index
    %c0_245 = arith.constant 0 : index
    %c0_246 = arith.constant 0 : index
    %219 = vector.load %arg6[%c2_244, %c0_245, %c0_246] : memref<3x128x256xbf16, #tpu.memory_space<vmem>>, vector<1x128x256xbf16>
    %220 = vector.shape_cast %219 : vector<1x128x256xbf16> to vector<128x256xbf16>
    %cst_247 = arith.constant dense<0.000000e+00> : vector<78x256xf32>
    %221 = tpu.matmul %218, %220, %cst_247 {dimension_numbers = #tpu.dot_dimension_numbers<[1], [0], [0], [1], [0, 0, 1, 1], [], []>} : vector<78x128xbf16>, vector<128x256xbf16>, vector<78x256xf32> -> vector<78x256xf32>
    %222 = arith.addf %216, %221 : vector<78x256xf32>
    %223 = vector.extract_strided_slice %222 {offsets = [0, 0], sizes = [78, 128], strides = [1, 1]} : vector<78x256xf32> to vector<78x128xf32>
    %224 = vector.extract_strided_slice %222 {offsets = [0, 128], sizes = [78, 128], strides = [1, 1]} : vector<78x256xf32> to vector<78x128xf32>
    %225 = arith.maximumf %223, %224 : vector<78x128xf32>
    %c0_248 = arith.constant 0 : index
    %c0_249 = arith.constant 0 : index
    %226 = vector.load %arg7[%c0_248, %c0_249] : memref<1x128xf32, #tpu.memory_space<vmem>>, vector<1x128xf32>
    %227 = vector.broadcast %226 : vector<1x128xf32> to vector<78x128xf32>
    %228 = arith.addf %225, %227 : vector<78x128xf32>
    %cst_250 = arith.constant 0.000000e+00 : f32
    %229 = vector.broadcast %cst_250 : f32 to vector<78x128xf32>
    %230 = arith.maximumf %228, %229 : vector<78x128xf32>
    %c0_251 = arith.constant 0 : index
    %c0_252 = arith.constant 0 : index
    %231 = vector.load %arg23[%c0_251, %c0_252] : memref<264x128xf32, #tpu.memory_space<vmem>>, vector<78x128xf32>
    tpu.vector_store %arg23[%c0_251, %c0_252], %230 {strides = array<i32>} : memref<264x128xf32, #tpu.memory_space<vmem>>, vector<78x128xf32>,
    %c0_253 = arith.constant 0 : index
    %c0_254 = arith.constant 0 : index
    %232 = tpu.strided_load %arg23[%c0_253, %c0_254] {strides = array<i32: 2, 1>} : memref<264x128xf32, #tpu.memory_space<vmem>>, vector<4x128xf32>
    %c1_255 = arith.constant 1 : index
    %c0_256 = arith.constant 0 : index
    %233 = tpu.strided_load %arg23[%c1_255, %c0_256] {strides = array<i32: 2, 1>} : memref<264x128xf32, #tpu.memory_space<vmem>>, vector<4x128xf32>
    %234 = arith.maximumf %232, %233 : vector<4x128xf32>
    %c1_257 = arith.constant 1 : index
    %c0_258 = arith.constant 0 : index
    %235 = vector.load %arg20[%c1_257, %c0_258] : memref<48x128xf32, #tpu.memory_space<vmem>>, vector<4x128xf32>
    tpu.vector_store %arg20[%c1_257, %c0_258], %234 {strides = array<i32>} : memref<48x128xf32, #tpu.memory_space<vmem>>, vector<4x128xf32>,
    %c10_259 = arith.constant 10 : index
    %c0_260 = arith.constant 0 : index
    %236 = tpu.strided_load %arg23[%c10_259, %c0_260] {strides = array<i32: 2, 1>} : memref<264x128xf32, #tpu.memory_space<vmem>>, vector<4x128xf32>
    %c11_261 = arith.constant 11 : index
    %c0_262 = arith.constant 0 : index
    %237 = tpu.strided_load %arg23[%c11_261, %c0_262] {strides = array<i32: 2, 1>} : memref<264x128xf32, #tpu.memory_space<vmem>>, vector<4x128xf32>
    %238 = arith.maximumf %236, %237 : vector<4x128xf32>
    %c7_263 = arith.constant 7 : index
    %c0_264 = arith.constant 0 : index
    %239 = vector.load %arg20[%c7_263, %c0_264] : memref<48x128xf32, #tpu.memory_space<vmem>>, vector<4x128xf32>
    tpu.vector_store %arg20[%c7_263, %c0_264], %238 {strides = array<i32>} : memref<48x128xf32, #tpu.memory_space<vmem>>, vector<4x128xf32>,
    %c20_265 = arith.constant 20 : index
    %c0_266 = arith.constant 0 : index
    %240 = tpu.strided_load %arg23[%c20_265, %c0_266] {strides = array<i32: 2, 1>} : memref<264x128xf32, #tpu.memory_space<vmem>>, vector<4x128xf32>
    %c21_267 = arith.constant 21 : index
    %c0_268 = arith.constant 0 : index
    %241 = tpu.strided_load %arg23[%c21_267, %c0_268] {strides = array<i32: 2, 1>} : memref<264x128xf32, #tpu.memory_space<vmem>>, vector<4x128xf32>
    %242 = arith.maximumf %240, %241 : vector<4x128xf32>
    %c13 = arith.constant 13 : index
    %c0_269 = arith.constant 0 : index
    %243 = vector.load %arg20[%c13, %c0_269] : memref<48x128xf32, #tpu.memory_space<vmem>>, vector<4x128xf32>
    tpu.vector_store %arg20[%c13, %c0_269], %242 {strides = array<i32>} : memref<48x128xf32, #tpu.memory_space<vmem>>, vector<4x128xf32>,
    %c30_270 = arith.constant 30 : index
    %c0_271 = arith.constant 0 : index
    %244 = tpu.strided_load %arg23[%c30_270, %c0_271] {strides = array<i32: 2, 1>} : memref<264x128xf32, #tpu.memory_space<vmem>>, vector<4x128xf32>
    %c31_272 = arith.constant 31 : index
    %c0_273 = arith.constant 0 : index
    %245 = tpu.strided_load %arg23[%c31_272, %c0_273] {strides = array<i32: 2, 1>} : memref<264x128xf32, #tpu.memory_space<vmem>>, vector<4x128xf32>
    %246 = arith.maximumf %244, %245 : vector<4x128xf32>
    %c19_274 = arith.constant 19 : index
    %c0_275 = arith.constant 0 : index
    %247 = vector.load %arg20[%c19_274, %c0_275] : memref<48x128xf32, #tpu.memory_space<vmem>>, vector<4x128xf32>
    tpu.vector_store %arg20[%c19_274, %c0_275], %246 {strides = array<i32>} : memref<48x128xf32, #tpu.memory_space<vmem>>, vector<4x128xf32>,
    %c40_276 = arith.constant 40 : index
    %c0_277 = arith.constant 0 : index
    %248 = tpu.strided_load %arg23[%c40_276, %c0_277] {strides = array<i32: 2, 1>} : memref<264x128xf32, #tpu.memory_space<vmem>>, vector<4x128xf32>
    %c41_278 = arith.constant 41 : index
    %c0_279 = arith.constant 0 : index
    %249 = tpu.strided_load %arg23[%c41_278, %c0_279] {strides = array<i32: 2, 1>} : memref<264x128xf32, #tpu.memory_space<vmem>>, vector<4x128xf32>
    %250 = arith.maximumf %248, %249 : vector<4x128xf32>
    %c25 = arith.constant 25 : index
    %c0_280 = arith.constant 0 : index
    %251 = vector.load %arg20[%c25, %c0_280] : memref<48x128xf32, #tpu.memory_space<vmem>>, vector<4x128xf32>
    tpu.vector_store %arg20[%c25, %c0_280], %250 {strides = array<i32>} : memref<48x128xf32, #tpu.memory_space<vmem>>, vector<4x128xf32>,
    %c50_281 = arith.constant 50 : index
    %c0_282 = arith.constant 0 : index
    %252 = tpu.strided_load %arg23[%c50_281, %c0_282] {strides = array<i32: 2, 1>} : memref<264x128xf32, #tpu.memory_space<vmem>>, vector<4x128xf32>
    %c51_283 = arith.constant 51 : index
    %c0_284 = arith.constant 0 : index
    %253 = tpu.strided_load %arg23[%c51_283, %c0_284] {strides = array<i32: 2, 1>} : memref<264x128xf32, #tpu.memory_space<vmem>>, vector<4x128xf32>
    %254 = arith.maximumf %252, %253 : vector<4x128xf32>
    %c31_285 = arith.constant 31 : index
    %c0_286 = arith.constant 0 : index
    %255 = vector.load %arg20[%c31_285, %c0_286] : memref<48x128xf32, #tpu.memory_space<vmem>>, vector<4x128xf32>
    tpu.vector_store %arg20[%c31_285, %c0_286], %254 {strides = array<i32>} : memref<48x128xf32, #tpu.memory_space<vmem>>, vector<4x128xf32>,
    %c60_287 = arith.constant 60 : index
    %c0_288 = arith.constant 0 : index
    %256 = tpu.strided_load %arg23[%c60_287, %c0_288] {strides = array<i32: 2, 1>} : memref<264x128xf32, #tpu.memory_space<vmem>>, vector<4x128xf32>
    %c61_289 = arith.constant 61 : index
    %c0_290 = arith.constant 0 : index
    %257 = tpu.strided_load %arg23[%c61_289, %c0_290] {strides = array<i32: 2, 1>} : memref<264x128xf32, #tpu.memory_space<vmem>>, vector<4x128xf32>
    %258 = arith.maximumf %256, %257 : vector<4x128xf32>
    %c37_291 = arith.constant 37 : index
    %c0_292 = arith.constant 0 : index
    %259 = vector.load %arg20[%c37_291, %c0_292] : memref<48x128xf32, #tpu.memory_space<vmem>>, vector<4x128xf32>
    tpu.vector_store %arg20[%c37_291, %c0_292], %258 {strides = array<i32>} : memref<48x128xf32, #tpu.memory_space<vmem>>, vector<4x128xf32>,
    %c70_293 = arith.constant 70 : index
    %c0_294 = arith.constant 0 : index
    %260 = tpu.strided_load %arg23[%c70_293, %c0_294] {strides = array<i32: 2, 1>} : memref<264x128xf32, #tpu.memory_space<vmem>>, vector<4x128xf32>
    %c71_295 = arith.constant 71 : index
    %c0_296 = arith.constant 0 : index
    %261 = tpu.strided_load %arg23[%c71_295, %c0_296] {strides = array<i32: 2, 1>} : memref<264x128xf32, #tpu.memory_space<vmem>>, vector<4x128xf32>
    %262 = arith.maximumf %260, %261 : vector<4x128xf32>
    %c43 = arith.constant 43 : index
    %c0_297 = arith.constant 0 : index
    %263 = vector.load %arg20[%c43, %c0_297] : memref<48x128xf32, #tpu.memory_space<vmem>>, vector<4x128xf32>
    tpu.vector_store %arg20[%c43, %c0_297], %262 {strides = array<i32>} : memref<48x128xf32, #tpu.memory_space<vmem>>, vector<4x128xf32>,
    %c0_298 = arith.constant 0 : index
    %c0_299 = arith.constant 0 : index
    %264 = vector.load %arg20[%c0_298, %c0_299] : memref<48x128xf32, #tpu.memory_space<vmem>>, vector<46x128xf32>
    %265 = arith.truncf %264 : vector<46x128xf32> to vector<46x128xbf16>
    %c0_300 = arith.constant 0 : index
    %c0_301 = arith.constant 0 : index
    %c0_302 = arith.constant 0 : index
    %266 = vector.load %arg8[%c0_300, %c0_301, %c0_302] : memref<3x128x256xbf16, #tpu.memory_space<vmem>>, vector<1x128x256xbf16>
    %267 = vector.shape_cast %266 : vector<1x128x256xbf16> to vector<128x256xbf16>
    %cst_303 = arith.constant dense<0.000000e+00> : vector<46x256xf32>
    %268 = tpu.matmul %265, %267, %cst_303 {dimension_numbers = #tpu.dot_dimension_numbers<[1], [0], [0], [1], [0, 0, 1, 1], [], []>} : vector<46x128xbf16>, vector<128x256xbf16>, vector<46x256xf32> -> vector<46x256xf32>
    %c1_304 = arith.constant 1 : index
    %c0_305 = arith.constant 0 : index
    %269 = vector.load %arg20[%c1_304, %c0_305] : memref<48x128xf32, #tpu.memory_space<vmem>>, vector<46x128xf32>
    %270 = arith.truncf %269 : vector<46x128xf32> to vector<46x128xbf16>
    %c1_306 = arith.constant 1 : index
    %c0_307 = arith.constant 0 : index
    %c0_308 = arith.constant 0 : index
    %271 = vector.load %arg8[%c1_306, %c0_307, %c0_308] : memref<3x128x256xbf16, #tpu.memory_space<vmem>>, vector<1x128x256xbf16>
    %272 = vector.shape_cast %271 : vector<1x128x256xbf16> to vector<128x256xbf16>
    %cst_309 = arith.constant dense<0.000000e+00> : vector<46x256xf32>
    %273 = tpu.matmul %270, %272, %cst_309 {dimension_numbers = #tpu.dot_dimension_numbers<[1], [0], [0], [1], [0, 0, 1, 1], [], []>} : vector<46x128xbf16>, vector<128x256xbf16>, vector<46x256xf32> -> vector<46x256xf32>
    %274 = arith.addf %268, %273 : vector<46x256xf32>
    %c2_310 = arith.constant 2 : index
    %c0_311 = arith.constant 0 : index
    %275 = vector.load %arg20[%c2_310, %c0_311] : memref<48x128xf32, #tpu.memory_space<vmem>>, vector<46x128xf32>
    %276 = arith.truncf %275 : vector<46x128xf32> to vector<46x128xbf16>
    %c2_312 = arith.constant 2 : index
    %c0_313 = arith.constant 0 : index
    %c0_314 = arith.constant 0 : index
    %277 = vector.load %arg8[%c2_312, %c0_313, %c0_314] : memref<3x128x256xbf16, #tpu.memory_space<vmem>>, vector<1x128x256xbf16>
    %278 = vector.shape_cast %277 : vector<1x128x256xbf16> to vector<128x256xbf16>
    %cst_315 = arith.constant dense<0.000000e+00> : vector<46x256xf32>
    %279 = tpu.matmul %276, %278, %cst_315 {dimension_numbers = #tpu.dot_dimension_numbers<[1], [0], [0], [1], [0, 0, 1, 1], [], []>} : vector<46x128xbf16>, vector<128x256xbf16>, vector<46x256xf32> -> vector<46x256xf32>
    %280 = arith.addf %274, %279 : vector<46x256xf32>
    %281 = vector.extract_strided_slice %280 {offsets = [0, 0], sizes = [46, 128], strides = [1, 1]} : vector<46x256xf32> to vector<46x128xf32>
    %282 = vector.extract_strided_slice %280 {offsets = [0, 128], sizes = [46, 128], strides = [1, 1]} : vector<46x256xf32> to vector<46x128xf32>
    %283 = arith.maximumf %281, %282 : vector<46x128xf32>
    %c0_316 = arith.constant 0 : index
    %c0_317 = arith.constant 0 : index
    %284 = vector.load %arg9[%c0_316, %c0_317] : memref<1x128xf32, #tpu.memory_space<vmem>>, vector<1x128xf32>
    %285 = vector.broadcast %284 : vector<1x128xf32> to vector<46x128xf32>
    %286 = arith.addf %283, %285 : vector<46x128xf32>
    %cst_318 = arith.constant 0.000000e+00 : f32
    %287 = vector.broadcast %cst_318 : f32 to vector<46x128xf32>
    %288 = arith.maximumf %286, %287 : vector<46x128xf32>
    %c0_319 = arith.constant 0 : index
    %c0_320 = arith.constant 0 : index
    %289 = vector.load %arg23[%c0_319, %c0_320] : memref<264x128xf32, #tpu.memory_space<vmem>>, vector<46x128xf32>
    tpu.vector_store %arg23[%c0_319, %c0_320], %288 {strides = array<i32>} : memref<264x128xf32, #tpu.memory_space<vmem>>, vector<46x128xf32>,
    %c0_321 = arith.constant 0 : index
    %c0_322 = arith.constant 0 : index
    %290 = tpu.strided_load %arg23[%c0_321, %c0_322] {strides = array<i32: 2, 1>} : memref<264x128xf32, #tpu.memory_space<vmem>>, vector<2x128xf32>
    %c1_323 = arith.constant 1 : index
    %c0_324 = arith.constant 0 : index
    %291 = tpu.strided_load %arg23[%c1_323, %c0_324] {strides = array<i32: 2, 1>} : memref<264x128xf32, #tpu.memory_space<vmem>>, vector<2x128xf32>
    %292 = arith.maximumf %290, %291 : vector<2x128xf32>
    %c1_325 = arith.constant 1 : index
    %c0_326 = arith.constant 0 : index
    %293 = vector.load %arg21[%c1_325, %c0_326] : memref<32x128xf32, #tpu.memory_space<vmem>>, vector<2x128xf32>
    tpu.vector_store %arg21[%c1_325, %c0_326], %292 {strides = array<i32>} : memref<32x128xf32, #tpu.memory_space<vmem>>, vector<2x128xf32>,
    %c6_327 = arith.constant 6 : index
    %c0_328 = arith.constant 0 : index
    %294 = tpu.strided_load %arg23[%c6_327, %c0_328] {strides = array<i32: 2, 1>} : memref<264x128xf32, #tpu.memory_space<vmem>>, vector<2x128xf32>
    %c7_329 = arith.constant 7 : index
    %c0_330 = arith.constant 0 : index
    %295 = tpu.strided_load %arg23[%c7_329, %c0_330] {strides = array<i32: 2, 1>} : memref<264x128xf32, #tpu.memory_space<vmem>>, vector<2x128xf32>
    %296 = arith.maximumf %294, %295 : vector<2x128xf32>
    %c5_331 = arith.constant 5 : index
    %c0_332 = arith.constant 0 : index
    %297 = vector.load %arg21[%c5_331, %c0_332] : memref<32x128xf32, #tpu.memory_space<vmem>>, vector<2x128xf32>
    tpu.vector_store %arg21[%c5_331, %c0_332], %296 {strides = array<i32>} : memref<32x128xf32, #tpu.memory_space<vmem>>, vector<2x128xf32>,
    %c12_333 = arith.constant 12 : index
    %c0_334 = arith.constant 0 : index
    %298 = tpu.strided_load %arg23[%c12_333, %c0_334] {strides = array<i32: 2, 1>} : memref<264x128xf32, #tpu.memory_space<vmem>>, vector<2x128xf32>
    %c13_335 = arith.constant 13 : index
    %c0_336 = arith.constant 0 : index
    %299 = tpu.strided_load %arg23[%c13_335, %c0_336] {strides = array<i32: 2, 1>} : memref<264x128xf32, #tpu.memory_space<vmem>>, vector<2x128xf32>
    %300 = arith.maximumf %298, %299 : vector<2x128xf32>
    %c9_337 = arith.constant 9 : index
    %c0_338 = arith.constant 0 : index
    %301 = vector.load %arg21[%c9_337, %c0_338] : memref<32x128xf32, #tpu.memory_space<vmem>>, vector<2x128xf32>
    tpu.vector_store %arg21[%c9_337, %c0_338], %300 {strides = array<i32>} : memref<32x128xf32, #tpu.memory_space<vmem>>, vector<2x128xf32>,
    %c18_339 = arith.constant 18 : index
    %c0_340 = arith.constant 0 : index
    %302 = tpu.strided_load %arg23[%c18_339, %c0_340] {strides = array<i32: 2, 1>} : memref<264x128xf32, #tpu.memory_space<vmem>>, vector<2x128xf32>
    %c19_341 = arith.constant 19 : index
    %c0_342 = arith.constant 0 : index
    %303 = tpu.strided_load %arg23[%c19_341, %c0_342] {strides = array<i32: 2, 1>} : memref<264x128xf32, #tpu.memory_space<vmem>>, vector<2x128xf32>
    %304 = arith.maximumf %302, %303 : vector<2x128xf32>
    %c13_343 = arith.constant 13 : index
    %c0_344 = arith.constant 0 : index
    %305 = vector.load %arg21[%c13_343, %c0_344] : memref<32x128xf32, #tpu.memory_space<vmem>>, vector<2x128xf32>
    tpu.vector_store %arg21[%c13_343, %c0_344], %304 {strides = array<i32>} : memref<32x128xf32, #tpu.memory_space<vmem>>, vector<2x128xf32>,
    %c24_345 = arith.constant 24 : index
    %c0_346 = arith.constant 0 : index
    %306 = tpu.strided_load %arg23[%c24_345, %c0_346] {strides = array<i32: 2, 1>} : memref<264x128xf32, #tpu.memory_space<vmem>>, vector<2x128xf32>
    %c25_347 = arith.constant 25 : index
    %c0_348 = arith.constant 0 : index
    %307 = tpu.strided_load %arg23[%c25_347, %c0_348] {strides = array<i32: 2, 1>} : memref<264x128xf32, #tpu.memory_space<vmem>>, vector<2x128xf32>
    %308 = arith.maximumf %306, %307 : vector<2x128xf32>
    %c17_349 = arith.constant 17 : index
    %c0_350 = arith.constant 0 : index
    %309 = vector.load %arg21[%c17_349, %c0_350] : memref<32x128xf32, #tpu.memory_space<vmem>>, vector<2x128xf32>
    tpu.vector_store %arg21[%c17_349, %c0_350], %308 {strides = array<i32>} : memref<32x128xf32, #tpu.memory_space<vmem>>, vector<2x128xf32>,
    %c30_351 = arith.constant 30 : index
    %c0_352 = arith.constant 0 : index
    %310 = tpu.strided_load %arg23[%c30_351, %c0_352] {strides = array<i32: 2, 1>} : memref<264x128xf32, #tpu.memory_space<vmem>>, vector<2x128xf32>
    %c31_353 = arith.constant 31 : index
    %c0_354 = arith.constant 0 : index
    %311 = tpu.strided_load %arg23[%c31_353, %c0_354] {strides = array<i32: 2, 1>} : memref<264x128xf32, #tpu.memory_space<vmem>>, vector<2x128xf32>
    %312 = arith.maximumf %310, %311 : vector<2x128xf32>
    %c21_355 = arith.constant 21 : index
    %c0_356 = arith.constant 0 : index
    %313 = vector.load %arg21[%c21_355, %c0_356] : memref<32x128xf32, #tpu.memory_space<vmem>>, vector<2x128xf32>
    tpu.vector_store %arg21[%c21_355, %c0_356], %312 {strides = array<i32>} : memref<32x128xf32, #tpu.memory_space<vmem>>, vector<2x128xf32>,
    %c36_357 = arith.constant 36 : index
    %c0_358 = arith.constant 0 : index
    %314 = tpu.strided_load %arg23[%c36_357, %c0_358] {strides = array<i32: 2, 1>} : memref<264x128xf32, #tpu.memory_space<vmem>>, vector<2x128xf32>
    %c37_359 = arith.constant 37 : index
    %c0_360 = arith.constant 0 : index
    %315 = tpu.strided_load %arg23[%c37_359, %c0_360] {strides = array<i32: 2, 1>} : memref<264x128xf32, #tpu.memory_space<vmem>>, vector<2x128xf32>
    %316 = arith.maximumf %314, %315 : vector<2x128xf32>
    %c25_361 = arith.constant 25 : index
    %c0_362 = arith.constant 0 : index
    %317 = vector.load %arg21[%c25_361, %c0_362] : memref<32x128xf32, #tpu.memory_space<vmem>>, vector<2x128xf32>
    tpu.vector_store %arg21[%c25_361, %c0_362], %316 {strides = array<i32>} : memref<32x128xf32, #tpu.memory_space<vmem>>, vector<2x128xf32>,
    %c42_363 = arith.constant 42 : index
    %c0_364 = arith.constant 0 : index
    %318 = tpu.strided_load %arg23[%c42_363, %c0_364] {strides = array<i32: 2, 1>} : memref<264x128xf32, #tpu.memory_space<vmem>>, vector<2x128xf32>
    %c43_365 = arith.constant 43 : index
    %c0_366 = arith.constant 0 : index
    %319 = tpu.strided_load %arg23[%c43_365, %c0_366] {strides = array<i32: 2, 1>} : memref<264x128xf32, #tpu.memory_space<vmem>>, vector<2x128xf32>
    %320 = arith.maximumf %318, %319 : vector<2x128xf32>
    %c29_367 = arith.constant 29 : index
    %c0_368 = arith.constant 0 : index
    %321 = vector.load %arg21[%c29_367, %c0_368] : memref<32x128xf32, #tpu.memory_space<vmem>>, vector<2x128xf32>
    tpu.vector_store %arg21[%c29_367, %c0_368], %320 {strides = array<i32>} : memref<32x128xf32, #tpu.memory_space<vmem>>, vector<2x128xf32>,
    %c0_369 = arith.constant 0 : index
    %c0_370 = arith.constant 0 : index
    %322 = vector.load %arg21[%c0_369, %c0_370] : memref<32x128xf32, #tpu.memory_space<vmem>>, vector<30x128xf32>
    %323 = arith.truncf %322 : vector<30x128xf32> to vector<30x128xbf16>
    %c0_371 = arith.constant 0 : index
    %c0_372 = arith.constant 0 : index
    %c0_373 = arith.constant 0 : index
    %324 = vector.load %arg10[%c0_371, %c0_372, %c0_373] : memref<3x128x256xbf16, #tpu.memory_space<vmem>>, vector<1x128x256xbf16>
    %325 = vector.shape_cast %324 : vector<1x128x256xbf16> to vector<128x256xbf16>
    %cst_374 = arith.constant dense<0.000000e+00> : vector<30x256xf32>
    %326 = tpu.matmul %323, %325, %cst_374 {dimension_numbers = #tpu.dot_dimension_numbers<[1], [0], [0], [1], [0, 0, 1, 1], [], []>} : vector<30x128xbf16>, vector<128x256xbf16>, vector<30x256xf32> -> vector<30x256xf32>
    %c1_375 = arith.constant 1 : index
    %c0_376 = arith.constant 0 : index
    %327 = vector.load %arg21[%c1_375, %c0_376] : memref<32x128xf32, #tpu.memory_space<vmem>>, vector<30x128xf32>
    %328 = arith.truncf %327 : vector<30x128xf32> to vector<30x128xbf16>
    %c1_377 = arith.constant 1 : index
    %c0_378 = arith.constant 0 : index
    %c0_379 = arith.constant 0 : index
    %329 = vector.load %arg10[%c1_377, %c0_378, %c0_379] : memref<3x128x256xbf16, #tpu.memory_space<vmem>>, vector<1x128x256xbf16>
    %330 = vector.shape_cast %329 : vector<1x128x256xbf16> to vector<128x256xbf16>
    %cst_380 = arith.constant dense<0.000000e+00> : vector<30x256xf32>
    %331 = tpu.matmul %328, %330, %cst_380 {dimension_numbers = #tpu.dot_dimension_numbers<[1], [0], [0], [1], [0, 0, 1, 1], [], []>} : vector<30x128xbf16>, vector<128x256xbf16>, vector<30x256xf32> -> vector<30x256xf32>
    %332 = arith.addf %326, %331 : vector<30x256xf32>
    %c2_381 = arith.constant 2 : index
    %c0_382 = arith.constant 0 : index
    %333 = vector.load %arg21[%c2_381, %c0_382] : memref<32x128xf32, #tpu.memory_space<vmem>>, vector<30x128xf32>
    %334 = arith.truncf %333 : vector<30x128xf32> to vector<30x128xbf16>
    %c2_383 = arith.constant 2 : index
    %c0_384 = arith.constant 0 : index
    %c0_385 = arith.constant 0 : index
    %335 = vector.load %arg10[%c2_383, %c0_384, %c0_385] : memref<3x128x256xbf16, #tpu.memory_space<vmem>>, vector<1x128x256xbf16>
    %336 = vector.shape_cast %335 : vector<1x128x256xbf16> to vector<128x256xbf16>
    %cst_386 = arith.constant dense<0.000000e+00> : vector<30x256xf32>
    %337 = tpu.matmul %334, %336, %cst_386 {dimension_numbers = #tpu.dot_dimension_numbers<[1], [0], [0], [1], [0, 0, 1, 1], [], []>} : vector<30x128xbf16>, vector<128x256xbf16>, vector<30x256xf32> -> vector<30x256xf32>
    %338 = arith.addf %332, %337 : vector<30x256xf32>
    %339 = vector.extract_strided_slice %338 {offsets = [0, 0], sizes = [30, 128], strides = [1, 1]} : vector<30x256xf32> to vector<30x128xf32>
    %340 = vector.extract_strided_slice %338 {offsets = [0, 128], sizes = [30, 128], strides = [1, 1]} : vector<30x256xf32> to vector<30x128xf32>
    %341 = arith.maximumf %339, %340 : vector<30x128xf32>
    %c0_387 = arith.constant 0 : index
    %c0_388 = arith.constant 0 : index
    %342 = vector.load %arg11[%c0_387, %c0_388] : memref<1x128xf32, #tpu.memory_space<vmem>>, vector<1x128xf32>
    %343 = vector.broadcast %342 : vector<1x128xf32> to vector<30x128xf32>
    %344 = arith.addf %341, %343 : vector<30x128xf32>
    %cst_389 = arith.constant 0.000000e+00 : f32
    %345 = vector.broadcast %cst_389 : f32 to vector<30x128xf32>
    %346 = arith.maximumf %344, %345 : vector<30x128xf32>
    %c0_390 = arith.constant 0 : index
    %c0_391 = arith.constant 0 : index
    %347 = vector.load %arg23[%c0_390, %c0_391] : memref<264x128xf32, #tpu.memory_space<vmem>>, vector<30x128xf32>
    tpu.vector_store %arg23[%c0_390, %c0_391], %346 {strides = array<i32>} : memref<264x128xf32, #tpu.memory_space<vmem>>, vector<30x128xf32>,
    %c0_392 = arith.constant 0 : index
    %c0_393 = arith.constant 0 : index
    %348 = vector.load %arg23[%c0_392, %c0_393] : memref<264x128xf32, #tpu.memory_space<vmem>>, vector<1x128xf32>
    %c1_394 = arith.constant 1 : index
    %c0_395 = arith.constant 0 : index
    %349 = vector.load %arg23[%c1_394, %c0_395] : memref<264x128xf32, #tpu.memory_space<vmem>>, vector<1x128xf32>
    %350 = arith.maximumf %348, %349 : vector<1x128xf32>
    %c0_396 = arith.constant 0 : index
    %c0_397 = arith.constant 0 : index
    %351 = vector.load %arg22[%c0_396, %c0_397] : memref<8x128xf32, #tpu.memory_space<vmem>>, vector<1x128xf32>
    tpu.vector_store %arg22[%c0_396, %c0_397], %350 {strides = array<i32>} : memref<8x128xf32, #tpu.memory_space<vmem>>, vector<1x128xf32>,
    %c4_398 = arith.constant 4 : index
    %c0_399 = arith.constant 0 : index
    %352 = vector.load %arg23[%c4_398, %c0_399] : memref<264x128xf32, #tpu.memory_space<vmem>>, vector<1x128xf32>
    %c5_400 = arith.constant 5 : index
    %c0_401 = arith.constant 0 : index
    %353 = vector.load %arg23[%c5_400, %c0_401] : memref<264x128xf32, #tpu.memory_space<vmem>>, vector<1x128xf32>
    %354 = arith.maximumf %352, %353 : vector<1x128xf32>
    %c1_402 = arith.constant 1 : index
    %c0_403 = arith.constant 0 : index
    %355 = vector.load %arg22[%c1_402, %c0_403] : memref<8x128xf32, #tpu.memory_space<vmem>>, vector<1x128xf32>
    tpu.vector_store %arg22[%c1_402, %c0_403], %354 {strides = array<i32>} : memref<8x128xf32, #tpu.memory_space<vmem>>, vector<1x128xf32>,
    %c8_404 = arith.constant 8 : index
    %c0_405 = arith.constant 0 : index
    %356 = vector.load %arg23[%c8_404, %c0_405] : memref<264x128xf32, #tpu.memory_space<vmem>>, vector<1x128xf32>
    %c9_406 = arith.constant 9 : index
    %c0_407 = arith.constant 0 : index
    %357 = vector.load %arg23[%c9_406, %c0_407] : memref<264x128xf32, #tpu.memory_space<vmem>>, vector<1x128xf32>
    %358 = arith.maximumf %356, %357 : vector<1x128xf32>
    %c2_408 = arith.constant 2 : index
    %c0_409 = arith.constant 0 : index
    %359 = vector.load %arg22[%c2_408, %c0_409] : memref<8x128xf32, #tpu.memory_space<vmem>>, vector<1x128xf32>
    tpu.vector_store %arg22[%c2_408, %c0_409], %358 {strides = array<i32>} : memref<8x128xf32, #tpu.memory_space<vmem>>, vector<1x128xf32>,
    %c12_410 = arith.constant 12 : index
    %c0_411 = arith.constant 0 : index
    %360 = vector.load %arg23[%c12_410, %c0_411] : memref<264x128xf32, #tpu.memory_space<vmem>>, vector<1x128xf32>
    %c13_412 = arith.constant 13 : index
    %c0_413 = arith.constant 0 : index
    %361 = vector.load %arg23[%c13_412, %c0_413] : memref<264x128xf32, #tpu.memory_space<vmem>>, vector<1x128xf32>
    %362 = arith.maximumf %360, %361 : vector<1x128xf32>
    %c3_414 = arith.constant 3 : index
    %c0_415 = arith.constant 0 : index
    %363 = vector.load %arg22[%c3_414, %c0_415] : memref<8x128xf32, #tpu.memory_space<vmem>>, vector<1x128xf32>
    tpu.vector_store %arg22[%c3_414, %c0_415], %362 {strides = array<i32>} : memref<8x128xf32, #tpu.memory_space<vmem>>, vector<1x128xf32>,
    %c16_416 = arith.constant 16 : index
    %c0_417 = arith.constant 0 : index
    %364 = vector.load %arg23[%c16_416, %c0_417] : memref<264x128xf32, #tpu.memory_space<vmem>>, vector<1x128xf32>
    %c17_418 = arith.constant 17 : index
    %c0_419 = arith.constant 0 : index
    %365 = vector.load %arg23[%c17_418, %c0_419] : memref<264x128xf32, #tpu.memory_space<vmem>>, vector<1x128xf32>
    %366 = arith.maximumf %364, %365 : vector<1x128xf32>
    %c4_420 = arith.constant 4 : index
    %c0_421 = arith.constant 0 : index
    %367 = vector.load %arg22[%c4_420, %c0_421] : memref<8x128xf32, #tpu.memory_space<vmem>>, vector<1x128xf32>
    tpu.vector_store %arg22[%c4_420, %c0_421], %366 {strides = array<i32>} : memref<8x128xf32, #tpu.memory_space<vmem>>, vector<1x128xf32>,
    %c20_422 = arith.constant 20 : index
    %c0_423 = arith.constant 0 : index
    %368 = vector.load %arg23[%c20_422, %c0_423] : memref<264x128xf32, #tpu.memory_space<vmem>>, vector<1x128xf32>
    %c21_424 = arith.constant 21 : index
    %c0_425 = arith.constant 0 : index
    %369 = vector.load %arg23[%c21_424, %c0_425] : memref<264x128xf32, #tpu.memory_space<vmem>>, vector<1x128xf32>
    %370 = arith.maximumf %368, %369 : vector<1x128xf32>
    %c5_426 = arith.constant 5 : index
    %c0_427 = arith.constant 0 : index
    %371 = vector.load %arg22[%c5_426, %c0_427] : memref<8x128xf32, #tpu.memory_space<vmem>>, vector<1x128xf32>
    tpu.vector_store %arg22[%c5_426, %c0_427], %370 {strides = array<i32>} : memref<8x128xf32, #tpu.memory_space<vmem>>, vector<1x128xf32>,
    %c24_428 = arith.constant 24 : index
    %c0_429 = arith.constant 0 : index
    %372 = vector.load %arg23[%c24_428, %c0_429] : memref<264x128xf32, #tpu.memory_space<vmem>>, vector<1x128xf32>
    %c25_430 = arith.constant 25 : index
    %c0_431 = arith.constant 0 : index
    %373 = vector.load %arg23[%c25_430, %c0_431] : memref<264x128xf32, #tpu.memory_space<vmem>>, vector<1x128xf32>
    %374 = arith.maximumf %372, %373 : vector<1x128xf32>
    %c6_432 = arith.constant 6 : index
    %c0_433 = arith.constant 0 : index
    %375 = vector.load %arg22[%c6_432, %c0_433] : memref<8x128xf32, #tpu.memory_space<vmem>>, vector<1x128xf32>
    tpu.vector_store %arg22[%c6_432, %c0_433], %374 {strides = array<i32>} : memref<8x128xf32, #tpu.memory_space<vmem>>, vector<1x128xf32>,
    %c28_434 = arith.constant 28 : index
    %c0_435 = arith.constant 0 : index
    %376 = vector.load %arg23[%c28_434, %c0_435] : memref<264x128xf32, #tpu.memory_space<vmem>>, vector<1x128xf32>
    %c29_436 = arith.constant 29 : index
    %c0_437 = arith.constant 0 : index
    %377 = vector.load %arg23[%c29_436, %c0_437] : memref<264x128xf32, #tpu.memory_space<vmem>>, vector<1x128xf32>
    %378 = arith.maximumf %376, %377 : vector<1x128xf32>
    %c7_438 = arith.constant 7 : index
    %c0_439 = arith.constant 0 : index
    %379 = vector.load %arg22[%c7_438, %c0_439] : memref<8x128xf32, #tpu.memory_space<vmem>>, vector<1x128xf32>
    tpu.vector_store %arg22[%c7_438, %c0_439], %378 {strides = array<i32>} : memref<8x128xf32, #tpu.memory_space<vmem>>, vector<1x128xf32>,
    %c0_440 = arith.constant 0 : index
    %c0_441 = arith.constant 0 : index
    %380 = vector.load %arg22[%c0_440, %c0_441] : memref<8x128xf32, #tpu.memory_space<vmem>>, vector<8x128xf32>
    %381 = arith.truncf %380 : vector<8x128xf32> to vector<8x128xbf16>
    %c0_442 = arith.constant 0 : index
    %c0_443 = arith.constant 0 : index
    %382 = vector.load %arg12[%c0_442, %c0_443] : memref<128x128xbf16, #tpu.memory_space<vmem>>, vector<128x128xbf16>
    %cst_444 = arith.constant dense<0.000000e+00> : vector<8x128xf32>
    %383 = tpu.matmul %381, %382, %cst_444 {dimension_numbers = #tpu.dot_dimension_numbers<[1], [0], [0], [1], [0, 0, 1, 1], [], []>} : vector<8x128xbf16>, vector<128x128xbf16>, vector<8x128xf32> -> vector<8x128xf32>
    %c0_445 = arith.constant 0 : index
    %c0_446 = arith.constant 0 : index
    %384 = vector.load %arg13[%c0_445, %c0_446] : memref<1x128xf32, #tpu.memory_space<vmem>>, vector<1x128xf32>
    %385 = vector.broadcast %384 : vector<1x128xf32> to vector<8x128xf32>
    %386 = arith.addf %383, %385 : vector<8x128xf32>
    %cst_447 = arith.constant 0.000000e+00 : f32
    %387 = vector.broadcast %cst_447 : f32 to vector<8x128xf32>
    %388 = arith.maximumf %386, %387 : vector<8x128xf32>
    %389 = arith.truncf %388 : vector<8x128xf32> to vector<8x128xbf16>
    %c0_448 = arith.constant 0 : index
    %c0_449 = arith.constant 0 : index
    %390 = vector.load %arg14[%c0_448, %c0_449] : memref<128x128xbf16, #tpu.memory_space<vmem>>, vector<128x128xbf16>
    %cst_450 = arith.constant dense<0.000000e+00> : vector<8x128xf32>
    %391 = tpu.matmul %389, %390, %cst_450 {dimension_numbers = #tpu.dot_dimension_numbers<[1], [0], [0], [1], [0, 0, 1, 1], [], []>} : vector<8x128xbf16>, vector<128x128xbf16>, vector<8x128xf32> -> vector<8x128xf32>
    %c0_451 = arith.constant 0 : index
    %c0_452 = arith.constant 0 : index
    %392 = vector.load %arg15[%c0_451, %c0_452] : memref<1x128xf32, #tpu.memory_space<vmem>>, vector<1x128xf32>
    %393 = vector.broadcast %392 : vector<1x128xf32> to vector<8x128xf32>
    %394 = arith.addf %391, %393 : vector<8x128xf32>
    %c0_453 = arith.constant 0 : index
    %c0_454 = arith.constant 0 : index
    %395 = vector.load %arg16[%c0_453, %c0_454] : memref<8x128xf32, #tpu.memory_space<vmem>>, vector<8x128xf32>
    tpu.vector_store %arg16[%c0_453, %c0_454], %394 {strides = array<i32>} : memref<8x128xf32, #tpu.memory_space<vmem>>, vector<8x128xf32>,
    return
  }
  func.func @transform_0(%arg0: i32) -> (i32, i32) {
    %c0_i32 = arith.constant 0 : i32
    %c0_i32_0 = arith.constant 0 : i32
    return %arg0, %c0_i32 : i32, i32
  }
  func.func @transform_1(%arg0: i32) -> (i32, i32, i32) {
    %c0_i32 = arith.constant 0 : i32
    %c0_i32_0 = arith.constant 0 : i32
    %c0_i32_1 = arith.constant 0 : i32
    %c0_i32_2 = arith.constant 0 : i32
    return %c0_i32, %c0_i32_0, %c0_i32_1 : i32, i32, i32
  }
  func.func @transform_2(%arg0: i32) -> (i32, i32) {
    %c0_i32 = arith.constant 0 : i32
    %c0_i32_0 = arith.constant 0 : i32
    %c0_i32_1 = arith.constant 0 : i32
    return %c0_i32, %c0_i32_0 : i32, i32
  }
  func.func @transform_3(%arg0: i32) -> (i32, i32, i32) {
    %c0_i32 = arith.constant 0 : i32
    %c0_i32_0 = arith.constant 0 : i32
    %c0_i32_1 = arith.constant 0 : i32
    %c0_i32_2 = arith.constant 0 : i32
    return %c0_i32, %c0_i32_0, %c0_i32_1 : i32, i32, i32
  }
  func.func @transform_4(%arg0: i32) -> (i32, i32) {
    %c0_i32 = arith.constant 0 : i32
    %c0_i32_0 = arith.constant 0 : i32
    %c0_i32_1 = arith.constant 0 : i32
    return %c0_i32, %c0_i32_0 : i32, i32
  }
  func.func @transform_5(%arg0: i32) -> (i32, i32, i32) {
    %c0_i32 = arith.constant 0 : i32
    %c0_i32_0 = arith.constant 0 : i32
    %c0_i32_1 = arith.constant 0 : i32
    %c0_i32_2 = arith.constant 0 : i32
    return %c0_i32, %c0_i32_0, %c0_i32_1 : i32, i32, i32
  }
  func.func @transform_6(%arg0: i32) -> (i32, i32) {
    %c0_i32 = arith.constant 0 : i32
    %c0_i32_0 = arith.constant 0 : i32
    %c0_i32_1 = arith.constant 0 : i32
    return %c0_i32, %c0_i32_0 : i32, i32
  }
  func.func @transform_7(%arg0: i32) -> (i32, i32, i32) {
    %c0_i32 = arith.constant 0 : i32
    %c0_i32_0 = arith.constant 0 : i32
    %c0_i32_1 = arith.constant 0 : i32
    %c0_i32_2 = arith.constant 0 : i32
    return %c0_i32, %c0_i32_0, %c0_i32_1 : i32, i32, i32
  }
  func.func @transform_8(%arg0: i32) -> (i32, i32) {
    %c0_i32 = arith.constant 0 : i32
    %c0_i32_0 = arith.constant 0 : i32
    %c0_i32_1 = arith.constant 0 : i32
    return %c0_i32, %c0_i32_0 : i32, i32
  }
  func.func @transform_9(%arg0: i32) -> (i32, i32, i32) {
    %c0_i32 = arith.constant 0 : i32
    %c0_i32_0 = arith.constant 0 : i32
    %c0_i32_1 = arith.constant 0 : i32
    %c0_i32_2 = arith.constant 0 : i32
    return %c0_i32, %c0_i32_0, %c0_i32_1 : i32, i32, i32
  }
  func.func @transform_10(%arg0: i32) -> (i32, i32) {
    %c0_i32 = arith.constant 0 : i32
    %c0_i32_0 = arith.constant 0 : i32
    %c0_i32_1 = arith.constant 0 : i32
    return %c0_i32, %c0_i32_0 : i32, i32
  }
  func.func @transform_11(%arg0: i32) -> (i32, i32) {
    %c0_i32 = arith.constant 0 : i32
    %c0_i32_0 = arith.constant 0 : i32
    %c0_i32_1 = arith.constant 0 : i32
    return %c0_i32, %c0_i32_0 : i32, i32
  }
  func.func @transform_12(%arg0: i32) -> (i32, i32) {
    %c0_i32 = arith.constant 0 : i32
    %c0_i32_0 = arith.constant 0 : i32
    %c0_i32_1 = arith.constant 0 : i32
    return %c0_i32, %c0_i32_0 : i32, i32
  }
  func.func @transform_13(%arg0: i32) -> (i32, i32) {
    %c0_i32 = arith.constant 0 : i32
    %c0_i32_0 = arith.constant 0 : i32
    %c0_i32_1 = arith.constant 0 : i32
    return %c0_i32, %c0_i32_0 : i32, i32
  }
  func.func @transform_14(%arg0: i32) -> (i32, i32) {
    %c0_i32 = arith.constant 0 : i32
    %c0_i32_0 = arith.constant 0 : i32
    %c0_i32_1 = arith.constant 0 : i32
    return %c0_i32, %c0_i32_0 : i32, i32
  }
  func.func @transform_15(%arg0: i32) -> (i32, i32) {
    %c0_i32 = arith.constant 0 : i32
    %c0_i32_0 = arith.constant 0 : i32
    return %arg0, %c0_i32 : i32, i32
  }
}

</mosaic_0001>

<llo_original>
// kernel: _lambda_.1
$region0: #{_lambda_.1}
  #allocation0 [shape = 'u32[]', space=smem, size = 0x4, offset = 0x4, fixed_abs, tag = 'smem constant byte address 0x4 - core index']
  #allocation1 [shape = 'u32[144,128]{1,0:T(1,128)}', space=vmem, size = 0x12000, scoped, tag = 'internal scratch']
  #allocation2 [shape = 'f32[530,64]{1,0:T(8,128)}', space=vmem, size = 0x43000, scoped, tag = 'scratch operand']
  #allocation3 [shape = 'f32[144,128]{1,0:T(8,128)}', space=vmem, size = 0x12000, scoped, tag = 'scratch operand']
  #allocation4 [shape = 'f32[80,128]{1,0:T(8,128)}', space=vmem, size = 0xa000, scoped, tag = 'scratch operand']
  #allocation5 [shape = 'f32[48,128]{1,0:T(8,128)}', space=vmem, size = 0x6000, scoped, tag = 'scratch operand']
  #allocation6 [shape = 'f32[32,128]{1,0:T(8,128)}', space=vmem, size = 0x4000, scoped, tag = 'scratch operand']
  #allocation7 [shape = 'f32[8,128]{1,0:T(8,128)}', space=vmem, size = 0x1000, scoped, tag = 'scratch operand']
  #allocation8 [shape = 'f32[264,128]{1,0:T(8,128)}', space=vmem, size = 0x21000, scoped, tag = 'scratch operand']
  %s0 = inlined_call_operand.vmem [shape: f32[512,64], index: 0, kind: input, shape index: {}]
  %s1 = inlined_call_operand.vmem [shape: bf16[3,64,256], index: 1, kind: input, shape index: {}]
  %s2 = inlined_call_operand.vmem [shape: f32[1,128], index: 2, kind: input, shape index: {}]
  %s3 = inlined_call_operand.vmem [shape: bf16[3,128,256], index: 3, kind: input, shape index: {}]
  %s4 = inlined_call_operand.vmem [shape: f32[1,128], index: 4, kind: input, shape index: {}]
  %s5 = inlined_call_operand.vmem [shape: bf16[3,128,256], index: 5, kind: input, shape index: {}]
  %s6 = inlined_call_operand.vmem [shape: f32[1,128], index: 6, kind: input, shape index: {}]
  %s7 = inlined_call_operand.vmem [shape: bf16[3,128,256], index: 7, kind: input, shape index: {}]
  %s8 = inlined_call_operand.vmem [shape: f32[1,128], index: 8, kind: input, shape index: {}]
  %s9 = inlined_call_operand.vmem [shape: bf16[3,128,256], index: 9, kind: input, shape index: {}]
  %s10 = inlined_call_operand.vmem [shape: f32[1,128], index: 10, kind: input, shape index: {}]
  %s11 = inlined_call_operand.vmem [shape: bf16[128,128], index: 11, kind: input, shape index: {}]
  %s12 = inlined_call_operand.vmem [shape: f32[1,128], index: 12, kind: input, shape index: {}]
  %s13 = inlined_call_operand.vmem [shape: bf16[128,128], index: 13, kind: input, shape index: {}]
  %s14 = inlined_call_operand.vmem [shape: f32[1,128], index: 14, kind: input, shape index: {}]
  %s15 = inlined_call_operand.vmem [shape: f32[8,128], index: 15, kind: output, shape index: {}]
  %s16 = sld [smem:[#allocation0]]
  $region70: #{_lambda_.1} parent=0
    _
  %s18 = ssub.s32 1, %s16
  %s19 = scalar_select 0, %s18, %s16
  // Predicated region
  $region2: #{_lambda_.1} parent=0 // pred_check
    _
  $region3: #{_lambda_.1} parent=0 // pred_check_branch
    %21 = sbr.rel (0) target = $region5
  $region4: #{_lambda_.1} parent=0 // pred_region
    _
  $region5: #{_lambda_.1} parent=0 // pred_fallthru
    _
  // Predicated region
  $region6: #{_lambda_.1} parent=0 // pred_check
    _
  $region7: #{_lambda_.1} parent=0 // pred_check_branch
    %23 = sbr.rel (0) target = $region9
  $region8: #{_lambda_.1} parent=0 // pred_region
    _
  $region9: #{_lambda_.1} parent=0 // pred_fallthru
    _
  // Predicated region
  $region10: #{_lambda_.1} parent=0 // pred_check
    _
  $region11: #{_lambda_.1} parent=0 // pred_check_branch
    %25 = sbr.rel (0) target = $region13
  $region12: #{_lambda_.1} parent=0 // pred_region
    _
  $region13: #{_lambda_.1} parent=0 // pred_fallthru
    _
  // Predicated region
  $region14: #{_lambda_.1} parent=0 // pred_check
    _
  $region15: #{_lambda_.1} parent=0 // pred_check_branch
    %27 = sbr.rel (0) target = $region17
  $region16: #{_lambda_.1} parent=0 // pred_region
    _
  $region17: #{_lambda_.1} parent=0 // pred_fallthru
    _
  // Predicated region
  $region18: #{_lambda_.1} parent=0 // pred_check
    _
  $region19: #{_lambda_.1} parent=0 // pred_check_branch
    %29 = sbr.rel (0) target = $region21
  $region20: #{_lambda_.1} parent=0 // pred_region
    _
  $region21: #{_lambda_.1} parent=0 // pred_fallthru
    _
  // Predicated region
  $region22: #{_lambda_.1} parent=0 // pred_check
    _
  $region23: #{_lambda_.1} parent=0 // pred_check_branch
    %31 = sbr.rel (0) target = $region25
  $region24: #{_lambda_.1} parent=0 // pred_region
    _
  $region25: #{_lambda_.1} parent=0 // pred_fallthru
    _
  // Predicated region
  $region26: #{_lambda_.1} parent=0 // pred_check
    _
  $region27: #{_lambda_.1} parent=0 // pred_check_branch
    %33 = sbr.rel (0) target = $region29
  $region28: #{_lambda_.1} parent=0 // pred_region
    _
  $region29: #{_lambda_.1} parent=0 // pred_fallthru
    _
  // Predicated region
  $region30: #{_lambda_.1} parent=0 // pred_check
    _
  $region31: #{_lambda_.1} parent=0 // pred_check_branch
    %35 = sbr.rel (0) target = $region33
  $region32: #{_lambda_.1} parent=0 // pred_region
    _
  $region33: #{_lambda_.1} parent=0 // pred_fallthru
    _
  // Predicated region
  $region34: #{_lambda_.1} parent=0 // pred_check
    _
  $region35: #{_lambda_.1} parent=0 // pred_check_branch
    %37 = sbr.rel (0) target = $region37
  $region36: #{_lambda_.1} parent=0 // pred_region
    _
  $region37: #{_lambda_.1} parent=0 // pred_fallthru
    _
  // Predicated region
  $region38: #{_lambda_.1} parent=0 // pred_check
    _
  $region39: #{_lambda_.1} parent=0 // pred_check_branch
    %39 = sbr.rel (0) target = $region41
  $region40: #{_lambda_.1} parent=0 // pred_region
    _
  $region41: #{_lambda_.1} parent=0 // pred_fallthru
    _
  // Predicated region
  $region42: #{_lambda_.1} parent=0 // pred_check
    _
  $region43: #{_lambda_.1} parent=0 // pred_check_branch
    %41 = sbr.rel (0) target = $region45
  $region44: #{_lambda_.1} parent=0 // pred_region
    _
  $region45: #{_lambda_.1} parent=0 // pred_fallthru
    _
  // Predicated region
  $region46: #{_lambda_.1} parent=0 // pred_check
    _
  $region47: #{_lambda_.1} parent=0 // pred_check_branch
    %43 = sbr.rel (0) target = $region49
  $region48: #{_lambda_.1} parent=0 // pred_region
    _
  $region49: #{_lambda_.1} parent=0 // pred_fallthru
    _
  // Predicated region
  $region50: #{_lambda_.1} parent=0 // pred_check
    _
  $region51: #{_lambda_.1} parent=0 // pred_check_branch
    %45 = sbr.rel (0) target = $region53
  $region52: #{_lambda_.1} parent=0 // pred_region
    _
  $region53: #{_lambda_.1} parent=0 // pred_fallthru
    _
  // Predicated region
  $region54: #{_lambda_.1} parent=0 // pred_check
    _
  $region55: #{_lambda_.1} parent=0 // pred_check_branch
    %47 = sbr.rel (0) target = $region57
  $region56: #{_lambda_.1} parent=0 // pred_region
    _
  $region57: #{_lambda_.1} parent=0 // pred_fallthru
    _
  // Predicated region
  $region58: #{_lambda_.1} parent=0 // pred_check
    _
  $region59: #{_lambda_.1} parent=0 // pred_check_branch
    %49 = sbr.rel (0) target = $region61
  $region60: #{_lambda_.1} parent=0 // pred_region
    _
  $region61: #{_lambda_.1} parent=0 // pred_fallthru
    _
  %vm51 = vcmask 516096
  %52 = vst.msk [vmem:[#allocation2] sm:$0x1] %vm51, 0.0
  %53 = vst.msk [vmem:[#allocation2 + $0x42] sm:$0x1] %vm51, 0.0
  %54 = vst.msk [vmem:[#allocation2 + $0x84] sm:$0x1] %vm51, 0.0
  %55 = vst.msk [vmem:[#allocation2 + $0xc6] sm:$0x1] %vm51, 0.0
  %56 = vst.msk [vmem:[#allocation2 + $0x108] sm:$0x1] %vm51, 0.0
  %57 = vst.msk [vmem:[#allocation2 + $0x14a] sm:$0x1] %vm51, 0.0
  %58 = vst.msk [vmem:[#allocation2 + $0x18c] sm:$0x1] %vm51, 0.0
  %59 = vst.msk [vmem:[#allocation2 + $0x1ce] sm:$0x1] %vm51, 0.0
  %60 = vst [vmem:[#allocation3] sm:$0x1] 0.0
  %61 = vst [vmem:[#allocation3 + $0x11] sm:$0x1] 0.0
  %62 = vst [vmem:[#allocation3 + $0x12] sm:$0x1] 0.0
  %63 = vst [vmem:[#allocation3 + $0x23] sm:$0x1] 0.0
  %64 = vst [vmem:[#allocation3 + $0x24] sm:$0x1] 0.0
  %65 = vst [vmem:[#allocation3 + $0x35] sm:$0x1] 0.0
  %66 = vst [vmem:[#allocation3 + $0x36] sm:$0x1] 0.0
  %67 = vst [vmem:[#allocation3 + $0x47] sm:$0x1] 0.0
  %68 = vst [vmem:[#allocation3 + $0x48] sm:$0x1] 0.0
  %69 = vst [vmem:[#allocation3 + $0x59] sm:$0x1] 0.0
  %70 = vst [vmem:[#allocation3 + $0x5a] sm:$0x1] 0.0
  %71 = vst [vmem:[#allocation3 + $0x6b] sm:$0x1] 0.0
  %72 = vst [vmem:[#allocation3 + $0x6c] sm:$0x1] 0.0
  %73 = vst [vmem:[#allocation3 + $0x7d] sm:$0x1] 0.0
  %74 = vst [vmem:[#allocation3 + $0x7e] sm:$0x1] 0.0
  %75 = vst [vmem:[#allocation3 + $0x8f] sm:$0x1] 0.0
  %76 = vst [vmem:[#allocation4] sm:$0x1] 0.0
  %77 = vst [vmem:[#allocation4 + $0x9] sm:$0x1] 0.0
  %78 = vst [vmem:[#allocation4 + $0xa] sm:$0x1] 0.0
  %79 = vst [vmem:[#allocation4 + $0x13] sm:$0x1] 0.0
  %80 = vst [vmem:[#allocation4 + $0x14] sm:$0x1] 0.0
  %81 = vst [vmem:[#allocation4 + $0x1d] sm:$0x1] 0.0
  %82 = vst [vmem:[#allocation4 + $0x1e] sm:$0x1] 0.0
  %83 = vst [vmem:[#allocation4 + $0x27] sm:$0x1] 0.0
  %84 = vst [vmem:[#allocation4 + $0x28] sm:$0x1] 0.0
  %85 = vst [vmem:[#allocation4 + $0x31] sm:$0x1] 0.0
  %86 = vst [vmem:[#allocation4 + $0x32] sm:$0x1] 0.0
  %87 = vst [vmem:[#allocation4 + $0x3b] sm:$0x1] 0.0
  %88 = vst [vmem:[#allocation4 + $0x3c] sm:$0x1] 0.0
  %89 = vst [vmem:[#allocation4 + $0x45] sm:$0x1] 0.0
  %90 = vst [vmem:[#allocation4 + $0x46] sm:$0x1] 0.0
  %91 = vst [vmem:[#allocation4 + $0x4f] sm:$0x1] 0.0
  %92 = vst [vmem:[#allocation5] sm:$0x1] 0.0
  %93 = vst [vmem:[#allocation5 + $0x5] sm:$0x1] 0.0
  %94 = vst [vmem:[#allocation5 + $0x6] sm:$0x1] 0.0
  %95 = vst [vmem:[#allocation5 + $0xb] sm:$0x1] 0.0
  %96 = vst [vmem:[#allocation5 + $0xc] sm:$0x1] 0.0
  %97 = vst [vmem:[#allocation5 + $0x11] sm:$0x1] 0.0
  %98 = vst [vmem:[#allocation5 + $0x12] sm:$0x1] 0.0
  %99 = vst [vmem:[#allocation5 + $0x17] sm:$0x1] 0.0
  %100 = vst [vmem:[#allocation5 + $0x18] sm:$0x1] 0.0
  %101 = vst [vmem:[#allocation5 + $0x1d] sm:$0x1] 0.0
  %102 = vst [vmem:[#allocation5 + $0x1e] sm:$0x1] 0.0
  %103 = vst [vmem:[#allocation5 + $0x23] sm:$0x1] 0.0
  %104 = vst [vmem:[#allocation5 + $0x24] sm:$0x1] 0.0
  %105 = vst [vmem:[#allocation5 + $0x29] sm:$0x1] 0.0
  %106 = vst [vmem:[#allocation5 + $0x2a] sm:$0x1] 0.0
  %107 = vst [vmem:[#allocation5 + $0x2f] sm:$0x1] 0.0
  %108 = vst [vmem:[#allocation6] sm:$0x1] 0.0
  %109 = vst [vmem:[#allocation6 + $0x3] sm:$0x1] 0.0
  %110 = vst [vmem:[#allocation6 + $0x4] sm:$0x1] 0.0
  %111 = vst [vmem:[#allocation6 + $0x7] sm:$0x1] 0.0
  %112 = vst [vmem:[#allocation6 + $0x8] sm:$0x1] 0.0
  %113 = vst [vmem:[#allocation6 + $0xb] sm:$0x1] 0.0
  %114 = vst [vmem:[#allocation6 + $0xc] sm:$0x1] 0.0
  %115 = vst [vmem:[#allocation6 + $0xf] sm:$0x1] 0.0
  %116 = vst [vmem:[#allocation6 + $0x10] sm:$0x1] 0.0
  %117 = vst [vmem:[#allocation6 + $0x13] sm:$0x1] 0.0
  %118 = vst [vmem:[#allocation6 + $0x14] sm:$0x1] 0.0
  %119 = vst [vmem:[#allocation6 + $0x17] sm:$0x1] 0.0
  %120 = vst [vmem:[#allocation6 + $0x18] sm:$0x1] 0.0
  %121 = vst [vmem:[#allocation6 + $0x1b] sm:$0x1] 0.0
  %122 = vst [vmem:[#allocation6 + $0x1c] sm:$0x1] 0.0
  %123 = vst [vmem:[#allocation6 + $0x1f] sm:$0x1] 0.0
  %v124 = vld [vmem:[%s0] sm:$0xff]
  %v125 = vld [vmem:[%s0 + $0x8] sm:$0xff]
  %v126 = vld [vmem:[%s0 + $0x10] sm:$0xff]
  %v127 = vld [vmem:[%s0 + $0x18] sm:$0xff]
  %v128 = vld [vmem:[%s0 + $0x20] sm:$0xff]
  %v129 = vld [vmem:[%s0 + $0x28] sm:$0xff]
  %v130 = vld [vmem:[%s0 + $0x30] sm:$0xff]
  %v131 = vld [vmem:[%s0 + $0x38] sm:$0xff]
  %vm132 = vcmask 523264
  %133 = vst.msk [vmem:[#allocation2 + $0x1] sm:$0xff] %vm132, %v124
  %134 = vst.msk [vmem:[#allocation2 + $0x9] sm:$0xff] %vm132, %v125
  %135 = vst.msk [vmem:[#allocation2 + $0x11] sm:$0xff] %vm132, %v126
  %136 = vst.msk [vmem:[#allocation2 + $0x19] sm:$0xff] %vm132, %v127
  %137 = vst.msk [vmem:[#allocation2 + $0x21] sm:$0xff] %vm132, %v128
  %138 = vst.msk [vmem:[#allocation2 + $0x29] sm:$0xff] %vm132, %v129
  %139 = vst.msk [vmem:[#allocation2 + $0x31] sm:$0xff] %vm132, %v130
  %140 = vst.msk [vmem:[#allocation2 + $0x39] sm:$0xff] %vm132, %v131
  %v141 = vld [vmem:[%s0 + $0x40] sm:$0xff]
  %v142 = vld [vmem:[%s0 + $0x48] sm:$0xff]
  %v143 = vld [vmem:[%s0 + $0x50] sm:$0xff]
  %v144 = vld [vmem:[%s0 + $0x58] sm:$0xff]
  %v145 = vld [vmem:[%s0 + $0x60] sm:$0xff]
  %v146 = vld [vmem:[%s0 + $0x68] sm:$0xff]
  %v147 = vld [vmem:[%s0 + $0x70] sm:$0xff]
  %v148 = vld [vmem:[%s0 + $0x78] sm:$0xff]
  %149 = vst.msk [vmem:[#allocation2 + $0x43] sm:$0xff] %vm132, %v141
  %150 = vst.msk [vmem:[#allocation2 + $0x4b] sm:$0xff] %vm132, %v142
  %151 = vst.msk [vmem:[#allocation2 + $0x53] sm:$0xff] %vm132, %v143
  %152 = vst.msk [vmem:[#allocation2 + $0x5b] sm:$0xff] %vm132, %v144
  %153 = vst.msk [vmem:[#allocation2 + $0x63] sm:$0xff] %vm132, %v145
  %154 = vst.msk [vmem:[#allocation2 + $0x6b] sm:$0xff] %vm132, %v146
  %155 = vst.msk [vmem:[#allocation2 + $0x73] sm:$0xff] %vm132, %v147
  %156 = vst.msk [vmem:[#allocation2 + $0x7b] sm:$0xff] %vm132, %v148
  %v157 = vld [vmem:[%s0 + $0x80] sm:$0xff]
  %v158 = vld [vmem:[%s0 + $0x88] sm:$0xff]
  %v159 = vld [vmem:[%s0 + $0x90] sm:$0xff]
  %v160 = vld [vmem:[%s0 + $0x98] sm:$0xff]
  %v161 = vld [vmem:[%s0 + $0xa0] sm:$0xff]
  %v162 = vld [vmem:[%s0 + $0xa8] sm:$0xff]
  %v163 = vld [vmem:[%s0 + $0xb0] sm:$0xff]
  %v164 = vld [vmem:[%s0 + $0xb8] sm:$0xff]
  %165 = vst.msk [vmem:[#allocation2 + $0x85] sm:$0xff] %vm132, %v157
  %166 = vst.msk [vmem:[#allocation2 + $0x8d] sm:$0xff] %vm132, %v158
  %167 = vst.msk [vmem:[#allocation2 + $0x95] sm:$0xff] %vm132, %v159
  %168 = vst.msk [vmem:[#allocation2 + $0x9d] sm:$0xff] %vm132, %v160
  %169 = vst.msk [vmem:[#allocation2 + $0xa5] sm:$0xff] %vm132, %v161
  %170 = vst.msk [vmem:[#allocation2 + $0xad] sm:$0xff] %vm132, %v162
  %171 = vst.msk [vmem:[#allocation2 + $0xb5] sm:$0xff] %vm132, %v163
  %172 = vst.msk [vmem:[#allocation2 + $0xbd] sm:$0xff] %vm132, %v164
  %v173 = vld [vmem:[%s0 + $0xc0] sm:$0xff]
  %v174 = vld [vmem:[%s0 + $0xc8] sm:$0xff]
  %v175 = vld [vmem:[%s0 + $0xd0] sm:$0xff]
  %v176 = vld [vmem:[%s0 + $0xd8] sm:$0xff]
  %v177 = vld [vmem:[%s0 + $0xe0] sm:$0xff]
  %v178 = vld [vmem:[%s0 + $0xe8] sm:$0xff]
  %v179 = vld [vmem:[%s0 + $0xf0] sm:$0xff]
  %v180 = vld [vmem:[%s0 + $0xf8] sm:$0xff]
  %181 = vst.msk [vmem:[#allocation2 + $0xc7] sm:$0xff] %vm132, %v173
  %182 = vst.msk [vmem:[#allocation2 + $0xcf] sm:$0xff] %vm132, %v174
  %183 = vst.msk [vmem:[#allocation2 + $0xd7] sm:$0xff] %vm132, %v175
  %184 = vst.msk [vmem:[#allocation2 + $0xdf] sm:$0xff] %vm132, %v176
  %185 = vst.msk [vmem:[#allocation2 + $0xe7] sm:$0xff] %vm132, %v177
  %186 = vst.msk [vmem:[#allocation2 + $0xef] sm:$0xff] %vm132, %v178
  %187 = vst.msk [vmem:[#allocation2 + $0xf7] sm:$0xff] %vm132, %v179
  %188 = vst.msk [vmem:[#allocation2 + $0xff] sm:$0xff] %vm132, %v180
  %v189 = vld [vmem:[%s0 + $0x100] sm:$0xff]
  %v190 = vld [vmem:[%s0 + $0x108] sm:$0xff]
  %v191 = vld [vmem:[%s0 + $0x110] sm:$0xff]
  %v192 = vld [vmem:[%s0 + $0x118] sm:$0xff]
  %v193 = vld [vmem:[%s0 + $0x120] sm:$0xff]
  %v194 = vld [vmem:[%s0 + $0x128] sm:$0xff]
  %v195 = vld [vmem:[%s0 + $0x130] sm:$0xff]
  %v196 = vld [vmem:[%s0 + $0x138] sm:$0xff]
  %197 = vst.msk [vmem:[#allocation2 + $0x109] sm:$0xff] %vm132, %v189
  %198 = vst.msk [vmem:[#allocation2 + $0x111] sm:$0xff] %vm132, %v190
  %199 = vst.msk [vmem:[#allocation2 + $0x119] sm:$0xff] %vm132, %v191
  %200 = vst.msk [vmem:[#allocation2 + $0x121] sm:$0xff] %vm132, %v192
  %201 = vst.msk [vmem:[#allocation2 + $0x129] sm:$0xff] %vm132, %v193
  %202 = vst.msk [vmem:[#allocation2 + $0x131] sm:$0xff] %vm132, %v194
  %203 = vst.msk [vmem:[#allocation2 + $0x139] sm:$0xff] %vm132, %v195
  %204 = vst.msk [vmem:[#allocation2 + $0x141] sm:$0xff] %vm132, %v196
  %v205 = vld [vmem:[%s0 + $0x140] sm:$0xff]
  %v206 = vld [vmem:[%s0 + $0x148] sm:$0xff]
  %v207 = vld [vmem:[%s0 + $0x150] sm:$0xff]
  %v208 = vld [vmem:[%s0 + $0x158] sm:$0xff]
  %v209 = vld [vmem:[%s0 + $0x160] sm:$0xff]
  %v210 = vld [vmem:[%s0 + $0x168] sm:$0xff]
  %v211 = vld [vmem:[%s0 + $0x170] sm:$0xff]
  %v212 = vld [vmem:[%s0 + $0x178] sm:$0xff]
  %213 = vst.msk [vmem:[#allocation2 + $0x14b] sm:$0xff] %vm132, %v205
  %214 = vst.msk [vmem:[#allocation2 + $0x153] sm:$0xff] %vm132, %v206
  %215 = vst.msk [vmem:[#allocation2 + $0x15b] sm:$0xff] %vm132, %v207
  %216 = vst.msk [vmem:[#allocation2 + $0x163] sm:$0xff] %vm132, %v208
  %217 = vst.msk [vmem:[#allocation2 + $0x16b] sm:$0xff] %vm132, %v209
  %218 = vst.msk [vmem:[#allocation2 + $0x173] sm:$0xff] %vm132, %v210
  %219 = vst.msk [vmem:[#allocation2 + $0x17b] sm:$0xff] %vm132, %v211
  %220 = vst.msk [vmem:[#allocation2 + $0x183] sm:$0xff] %vm132, %v212
  %v221 = vld [vmem:[%s0 + $0x180] sm:$0xff]
  %v222 = vld [vmem:[%s0 + $0x188] sm:$0xff]
  %v223 = vld [vmem:[%s0 + $0x190] sm:$0xff]
  %v224 = vld [vmem:[%s0 + $0x198] sm:$0xff]
  %v225 = vld [vmem:[%s0 + $0x1a0] sm:$0xff]
  %v226 = vld [vmem:[%s0 + $0x1a8] sm:$0xff]
  %v227 = vld [vmem:[%s0 + $0x1b0] sm:$0xff]
  %v228 = vld [vmem:[%s0 + $0x1b8] sm:$0xff]
  %229 = vst.msk [vmem:[#allocation2 + $0x18d] sm:$0xff] %vm132, %v221
  %230 = vst.msk [vmem:[#allocation2 + $0x195] sm:$0xff] %vm132, %v222
  %231 = vst.msk [vmem:[#allocation2 + $0x19d] sm:$0xff] %vm132, %v223
  %232 = vst.msk [vmem:[#allocation2 + $0x1a5] sm:$0xff] %vm132, %v224
  %233 = vst.msk [vmem:[#allocation2 + $0x1ad] sm:$0xff] %vm132, %v225
  %234 = vst.msk [vmem:[#allocation2 + $0x1b5] sm:$0xff] %vm132, %v226
  %235 = vst.msk [vmem:[#allocation2 + $0x1bd] sm:$0xff] %vm132, %v227
  %236 = vst.msk [vmem:[#allocation2 + $0x1c5] sm:$0xff] %vm132, %v228
  %v237 = vld [vmem:[%s0 + $0x1c0] sm:$0xff]
  %v238 = vld [vmem:[%s0 + $0x1c8] sm:$0xff]
  %v239 = vld [vmem:[%s0 + $0x1d0] sm:$0xff]
  %v240 = vld [vmem:[%s0 + $0x1d8] sm:$0xff]
  %v241 = vld [vmem:[%s0 + $0x1e0] sm:$0xff]
  %v242 = vld [vmem:[%s0 + $0x1e8] sm:$0xff]
  %v243 = vld [vmem:[%s0 + $0x1f0] sm:$0xff]
  %v244 = vld [vmem:[%s0 + $0x1f8] sm:$0xff]
  %245 = vst.msk [vmem:[#allocation2 + $0x1cf] sm:$0xff] %vm132, %v237
  %246 = vst.msk [vmem:[#allocation2 + $0x1d7] sm:$0xff] %vm132, %v238
  %247 = vst.msk [vmem:[#allocation2 + $0x1df] sm:$0xff] %vm132, %v239
  %248 = vst.msk [vmem:[#allocation2 + $0x1e7] sm:$0xff] %vm132, %v240
  %249 = vst.msk [vmem:[#allocation2 + $0x1ef] sm:$0xff] %vm132, %v241
  %250 = vst.msk [vmem:[#allocation2 + $0x1f7] sm:$0xff] %vm132, %v242
  %251 = vst.msk [vmem:[#allocation2 + $0x1ff] sm:$0xff] %vm132, %v243
  %252 = vst.msk [vmem:[#allocation2 + $0x207] sm:$0xff] %vm132, %v244
  %v253 = vld [vmem:[#allocation2] ss:$2 sm:$0xff]
  %s254 = scalar_lea.vmem [#allocation2], 16
  %v255 = vld [vmem:[%s254] ss:$2 sm:$0xff]
  %s256 = scalar_lea.vmem [#allocation2], 32
  %v257 = vld [vmem:[%s256] ss:$2 sm:$0xff]
  %s258 = scalar_lea.vmem [#allocation2], 48
  %v259 = vld [vmem:[%s258] ss:$2 sm:$0xff]
  %s260 = scalar_lea.vmem [#allocation2], 64
  %v261 = vld [vmem:[%s260] ss:$2 sm:$0xff]
  %s262 = scalar_lea.vmem [#allocation2], 80
  %v263 = vld [vmem:[%s262] ss:$2 sm:$0xff]
  %s264 = scalar_lea.vmem [#allocation2], 96
  %v265 = vld [vmem:[%s264] ss:$2 sm:$0xff]
  %s266 = scalar_lea.vmem [#allocation2], 112
  %v267 = vld [vmem:[%s266] ss:$2 sm:$0xff]
  %s268 = scalar_lea.vmem [#allocation2], 128
  %v269 = vld [vmem:[%s268] ss:$2 sm:$0xff]
  %s270 = scalar_lea.vmem [#allocation2], 144
  %v271 = vld [vmem:[%s270] ss:$2 sm:$0xff]
  %s272 = scalar_lea.vmem [#allocation2], 160
  %v273 = vld [vmem:[%s272] ss:$2 sm:$0xff]
  %s274 = scalar_lea.vmem [#allocation2], 176
  %v275 = vld [vmem:[%s274] ss:$2 sm:$0xff]
  %s276 = scalar_lea.vmem [#allocation2], 192
  %v277 = vld [vmem:[%s276] ss:$2 sm:$0xff]
  %s278 = scalar_lea.vmem [#allocation2], 208
  %v279 = vld [vmem:[%s278] ss:$2 sm:$0xff]
  %s280 = scalar_lea.vmem [#allocation2], 224
  %v281 = vld [vmem:[%s280] ss:$2 sm:$0xff]
  %s282 = scalar_lea.vmem [#allocation2], 240
  %v283 = vld [vmem:[%s282] ss:$2 sm:$0xff]
  %s284 = scalar_lea.vmem [#allocation2], 256
  %v285 = vld [vmem:[%s284] ss:$2 sm:$0xff]
  %s286 = scalar_lea.vmem [#allocation2], 272
  %v287 = vld [vmem:[%s286] ss:$2 sm:$0xff]
  %s288 = scalar_lea.vmem [#allocation2], 288
  %v289 = vld [vmem:[%s288] ss:$2 sm:$0xff]
  %s290 = scalar_lea.vmem [#allocation2], 304
  %v291 = vld [vmem:[%s290] ss:$2 sm:$0xff]
  %s292 = scalar_lea.vmem [#allocation2], 320
  %v293 = vld [vmem:[%s292] ss:$2 sm:$0xff]
  %s294 = scalar_lea.vmem [#allocation2], 336
  %v295 = vld [vmem:[%s294] ss:$2 sm:$0xff]
  %s296 = scalar_lea.vmem [#allocation2], 352
  %v297 = vld [vmem:[%s296] ss:$2 sm:$0xff]
  %s298 = scalar_lea.vmem [#allocation2], 368
  %v299 = vld [vmem:[%s298] ss:$2 sm:$0xff]
  %s300 = scalar_lea.vmem [#allocation2], 384
  %v301 = vld [vmem:[%s300] ss:$2 sm:$0xff]
  %s302 = scalar_lea.vmem [#allocation2], 400
  %v303 = vld [vmem:[%s302] ss:$2 sm:$0xff]
  %s304 = scalar_lea.vmem [#allocation2], 416
  %v305 = vld [vmem:[%s304] ss:$2 sm:$0xff]
  %s306 = scalar_lea.vmem [#allocation2], 432
  %v307 = vld [vmem:[%s306] ss:$2 sm:$0xff]
  %s308 = scalar_lea.vmem [#allocation2], 448
  %v309 = vld [vmem:[%s308] ss:$2 sm:$0xff]
  %s310 = scalar_lea.vmem [#allocation2], 464
  %v311 = vld [vmem:[%s310] ss:$2 sm:$0xff]
  %s312 = scalar_lea.vmem [#allocation2], 480
  %v313 = vld [vmem:[%s312] ss:$2 sm:$0xff]
  %s314 = scalar_lea.vmem [#allocation2], 496
  %v315 = vld [vmem:[%s314] ss:$2 sm:$0xff]
  %s316 = scalar_lea.vmem [#allocation2], 512
  %v317 = vld [vmem:[%s316] ss:$2 sm:$0xff]
  %v318 = vpack.c.bf16 %v255, %v253
  %v319 = vpack.c.bf16 %v259, %v257
  %v320 = vpack.c.bf16 %v263, %v261
  %v321 = vpack.c.bf16 %v267, %v265
  %v322 = vpack.c.bf16 %v271, %v269
  %v323 = vpack.c.bf16 %v275, %v273
  %v324 = vpack.c.bf16 %v279, %v277
  %v325 = vpack.c.bf16 %v283, %v281
  %v326 = vpack.c.bf16 %v287, %v285
  %v327 = vpack.c.bf16 %v291, %v289
  %v328 = vpack.c.bf16 %v295, %v293
  %v329 = vpack.c.bf16 %v299, %v297
  %v330 = vpack.c.bf16 %v303, %v301
  %v331 = vpack.c.bf16 %v307, %v305
  %v332 = vpack.c.bf16 %v311, %v309
  %v333 = vpack.c.bf16 %v315, %v313
  %v334 = vpack.c.bf16 %v317, %v317
  %v335 = vld [vmem:[%s1] sm:$0xff]
  %v336 = vld [vmem:[%s1 + $0x8] sm:$0xff]
  %v337 = vld [vmem:[%s1 + $0x10] sm:$0xff]
  %v338 = vld [vmem:[%s1 + $0x18] sm:$0xff]
  %v339 = vld [vmem:[%s1 + $0x20] sm:$0xff]
  %v340 = vld [vmem:[%s1 + $0x28] sm:$0xff]
  %v341 = vld [vmem:[%s1 + $0x30] sm:$0xff]
  %v342 = vld [vmem:[%s1 + $0x38] sm:$0xff]
  %s343 = scalar_lea.vmem [#allocation2], 1
  %v344 = vld [vmem:[%s343] ss:$2 sm:$0xff]
  %s345 = scalar_lea.vmem [#allocation2], 17
  %v346 = vld [vmem:[%s345] ss:$2 sm:$0xff]
  %s347 = scalar_lea.vmem [#allocation2], 33
  %v348 = vld [vmem:[%s347] ss:$2 sm:$0xff]
  %s349 = scalar_lea.vmem [#allocation2], 49
  %v350 = vld [vmem:[%s349] ss:$2 sm:$0xff]
  %s351 = scalar_lea.vmem [#allocation2], 65
  %v352 = vld [vmem:[%s351] ss:$2 sm:$0xff]
  %s353 = scalar_lea.vmem [#allocation2], 81
  %v354 = vld [vmem:[%s353] ss:$2 sm:$0xff]
  %s355 = scalar_lea.vmem [#allocation2], 97
  %v356 = vld [vmem:[%s355] ss:$2 sm:$0xff]
  %s357 = scalar_lea.vmem [#allocation2], 113
  %v358 = vld [vmem:[%s357] ss:$2 sm:$0xff]
  %s359 = scalar_lea.vmem [#allocation2], 129
  %v360 = vld [vmem:[%s359] ss:$2 sm:$0xff]
  %s361 = scalar_lea.vmem [#allocation2], 145
  %v362 = vld [vmem:[%s361] ss:$2 sm:$0xff]
  %s363 = scalar_lea.vmem [#allocation2], 161
  %v364 = vld [vmem:[%s363] ss:$2 sm:$0xff]
  %s365 = scalar_lea.vmem [#allocation2], 177
  %v366 = vld [vmem:[%s365] ss:$2 sm:$0xff]
  %s367 = scalar_lea.vmem [#allocation2], 193
  %v368 = vld [vmem:[%s367] ss:$2 sm:$0xff]
  %s369 = scalar_lea.vmem [#allocation2], 209
  %v370 = vld [vmem:[%s369] ss:$2 sm:$0xff]
  %s371 = scalar_lea.vmem [#allocation2], 225
  %v372 = vld [vmem:[%s371] ss:$2 sm:$0xff]
  %s373 = scalar_lea.vmem [#allocation2], 241
  %v374 = vld [vmem:[%s373] ss:$2 sm:$0xff]
  %s375 = scalar_lea.vmem [#allocation2], 257
  %v376 = vld [vmem:[%s375] ss:$2 sm:$0xff]
  %s377 = scalar_lea.vmem [#allocation2], 273
  %v378 = vld [vmem:[%s377] ss:$2 sm:$0xff]
  %s379 = scalar_lea.vmem [#allocation2], 289
  %v380 = vld [vmem:[%s379] ss:$2 sm:$0xff]
  %s381 = scalar_lea.vmem [#allocation2], 305
  %v382 = vld [vmem:[%s381] ss:$2 sm:$0xff]
  %s383 = scalar_lea.vmem [#allocation2], 321
  %v384 = vld [vmem:[%s383] ss:$2 sm:$0xff]
  %s385 = scalar_lea.vmem [#allocation2], 337
  %v386 = vld [vmem:[%s385] ss:$2 sm:$0xff]
  %s387 = scalar_lea.vmem [#allocation2], 353
  %v388 = vld [vmem:[%s387] ss:$2 sm:$0xff]
  %s389 = scalar_lea.vmem [#allocation2], 369
  %v390 = vld [vmem:[%s389] ss:$2 sm:$0xff]
  %s391 = scalar_lea.vmem [#allocation2], 385
  %v392 = vld [vmem:[%s391] ss:$2 sm:$0xff]
  %s393 = scalar_lea.vmem [#allocation2], 401
  %v394 = vld [vmem:[%s393] ss:$2 sm:$0xff]
  %s395 = scalar_lea.vmem [#allocation2], 417
  %v396 = vld [vmem:[%s395] ss:$2 sm:$0xff]
  %s397 = scalar_lea.vmem [#allocation2], 433
  %v398 = vld [vmem:[%s397] ss:$2 sm:$0xff]
  %s399 = scalar_lea.vmem [#allocation2], 449
  %v400 = vld [vmem:[%s399] ss:$2 sm:$0xff]
  %s401 = scalar_lea.vmem [#allocation2], 465
  %v402 = vld [vmem:[%s401] ss:$2 sm:$0xff]
  %s403 = scalar_lea.vmem [#allocation2], 481
  %v404 = vld [vmem:[%s403] ss:$2 sm:$0xff]
  %s405 = scalar_lea.vmem [#allocation2], 497
  %v406 = vld [vmem:[%s405] ss:$2 sm:$0xff]
  %s407 = scalar_lea.vmem [#allocation2], 513
  %v408 = vld [vmem:[%s407] ss:$2 sm:$0xff]
  %v409 = vpack.c.bf16 %v346, %v344
  %v410 = vpack.c.bf16 %v350, %v348
  %v411 = vpack.c.bf16 %v354, %v352
  %v412 = vpack.c.bf16 %v358, %v356
  %v413 = vpack.c.bf16 %v362, %v360
  %v414 = vpack.c.bf16 %v366, %v364
  %v415 = vpack.c.bf16 %v370, %v368
  %v416 = vpack.c.bf16 %v374, %v372
  %v417 = vpack.c.bf16 %v378, %v376
  %v418 = vpack.c.bf16 %v382, %v380
  %v419 = vpack.c.bf16 %v386, %v384
  %v420 = vpack.c.bf16 %v390, %v388
  %v421 = vpack.c.bf16 %v394, %v392
  %v422 = vpack.c.bf16 %v398, %v396
  %v423 = vpack.c.bf16 %v402, %v400
  %v424 = vpack.c.bf16 %v406, %v404
  %v425 = vpack.c.bf16 %v408, %v408
  %s426 = scalar_lea.vmem %s1, 64
  %v427 = vld [vmem:[%s426] sm:$0xff]
  %v428 = vld [vmem:[%s426 + $0x8] sm:$0xff]
  %v429 = vld [vmem:[%s426 + $0x10] sm:$0xff]
  %v430 = vld [vmem:[%s426 + $0x18] sm:$0xff]
  %v431 = vld [vmem:[%s426 + $0x20] sm:$0xff]
  %v432 = vld [vmem:[%s426 + $0x28] sm:$0xff]
  %v433 = vld [vmem:[%s426 + $0x30] sm:$0xff]
  %v434 = vld [vmem:[%s426 + $0x38] sm:$0xff]
  %v443 = vunpack.c.l.b16 %v427
  %v444 = vunpack.c.h.b16 %v427
  %v445 = vunpack.c.l.b16 %v428
  %v446 = vunpack.c.h.b16 %v428
  %v447 = vunpack.c.l.b16 %v429
  %v448 = vunpack.c.h.b16 %v429
  %v449 = vunpack.c.l.b16 %v430
  %v450 = vunpack.c.h.b16 %v430
  %v451 = vunpack.c.l.b16 %v431
  %v452 = vunpack.c.h.b16 %v431
  %v453 = vunpack.c.l.b16 %v432
  %v454 = vunpack.c.h.b16 %v432
  %v455 = vunpack.c.l.b16 %v433
  %v456 = vunpack.c.h.b16 %v433
  %v457 = vunpack.c.l.b16 %v434
  %v458 = vunpack.c.h.b16 %v434
  %v459 = vpack.c.b16 %v445, %v443
  %v460 = vpack.c.b16 %v446, %v444
  %v461 = vpack.c.b16 %v449, %v447
  %v462 = vpack.c.b16 %v450, %v448
  %v463 = vpack.c.b16 %v453, %v451
  %v464 = vpack.c.b16 %v454, %v452
  %v465 = vpack.c.b16 %v457, %v455
  %v466 = vpack.c.b16 %v458, %v456
  %v476 = vsel %vm132, %v409, 0
  %v479 = vsel %vm132, %v410, 0
  %v482 = vsel %vm132, %v411, 0
  %v485 = vsel %vm132, %v412, 0
  %v488 = vsel %vm132, %v413, 0
  %v491 = vsel %vm132, %v414, 0
  %v494 = vsel %vm132, %v415, 0
  %v497 = vsel %vm132, %v416, 0
  %v500 = vsel %vm132, %v417, 0
  %v503 = vsel %vm132, %v418, 0
  %v506 = vsel %vm132, %v419, 0
  %v509 = vsel %vm132, %v420, 0
  %v512 = vsel %vm132, %v421, 0
  %v515 = vsel %vm132, %v422, 0
  %v518 = vsel %vm132, %v423, 0
  %v521 = vsel %vm132, %v424, 0
  %v524 = vsel %vm132, %v425, 0
  %526 = vmatprep.subr.bf16.mxu0 %v460
  %527 = vmatpush1.bf16.msra.mxu0 %v459
  %528 = vmatprep.subr.bf16.mxu0 %v462
  %529 = vmatpush1.bf16.msra.mxu0 %v461
  %530 = vmatprep.subr.bf16.mxu0 %v464
  %531 = vmatpush1.bf16.msra.mxu0 %v463
  %532 = vmatprep.subr.bf16.mxu0 %v466
  %533 = vmatpush1.bf16.msra.mxu0 %v465
  %534 = vmatprep.subr.bf16.mxu0 0
  %535 = vmatpush1.bf16.msra.mxu0 0
  %536 = vmatprep.subr.bf16.mxu0 0
  %537 = vmatpush1.bf16.msra.mxu0 0
  %538 = vmatprep.subr.bf16.mxu0 0
  %539 = vmatpush1.bf16.msra.mxu0 0
  %540 = vmatprep.subr.bf16.mxu0 0
  %541 = vmatpush1.bf16.msra.mxu0 0
  %542 = vmatprep.subr.bf16.mxu0 0
  %543 = vmatpush1.bf16.msra.mxu0 0
  %544 = vmatprep.subr.bf16.mxu0 0
  %545 = vmatpush1.bf16.msra.mxu0 0
  %546 = vmatprep.subr.bf16.mxu0 0
  %547 = vmatpush1.bf16.msra.mxu0 0
  %548 = vmatprep.subr.bf16.mxu0 0
  %549 = vmatpush1.bf16.msra.mxu0 0
  %550 = vmatprep.subr.bf16.mxu0 0
  %551 = vmatpush1.bf16.msra.mxu0 0
  %552 = vmatprep.subr.bf16.mxu0 0
  %553 = vmatpush1.bf16.msra.mxu0 0
  %554 = vmatprep.subr.bf16.mxu0 0
  %555 = vmatpush1.bf16.msra.mxu0 0
  %556 = vmatprep.subr.bf16.mxu0 0
  %557 = vmatpush1.bf16.msra.mxu0 0
  %558 = vmatprep.mubr.bf16.mxu0 0
  %559 = vmatmul.mubr.bf16.gmra.mrb[0].mxu0 %v476
  %v560 = vpop.f32.mrb[0].mxu0
  %v561 = vadd.f32 0.0, %v560
  %v562 = vpop.f32.mrb[0].mxu0
  %v563 = vadd.f32 0.0, %v562
  %v564 = vpop.f32.mrb[0].mxu0
  %v565 = vadd.f32 0.0, %v564
  %v566 = vpop.f32.mrb[0].mxu0
  %v567 = vadd.f32 0.0, %v566
  %568 = vmatprep.mubr.bf16.mxu0 0
  %569 = vmatmul.mubr.bf16.gmra.mrb[0].mxu0 %v479
  %v570 = vpop.f32.mrb[0].mxu0
  %v571 = vadd.f32 0.0, %v570
  %v572 = vpop.f32.mrb[0].mxu0
  %v573 = vadd.f32 0.0, %v572
  %v574 = vpop.f32.mrb[0].mxu0
  %v575 = vadd.f32 0.0, %v574
  %v576 = vpop.f32.mrb[0].mxu0
  %v577 = vadd.f32 0.0, %v576
  %578 = vmatprep.mubr.bf16.mxu0 0
  %579 = vmatmul.mubr.bf16.gmra.mrb[0].mxu0 %v482
  %v580 = vpop.f32.mrb[0].mxu0
  %v581 = vadd.f32 0.0, %v580
  %v582 = vpop.f32.mrb[0].mxu0
  %v583 = vadd.f32 0.0, %v582
  %v584 = vpop.f32.mrb[0].mxu0
  %v585 = vadd.f32 0.0, %v584
  %v586 = vpop.f32.mrb[0].mxu0
  %v587 = vadd.f32 0.0, %v586
  %588 = vmatprep.mubr.bf16.mxu0 0
  %589 = vmatmul.mubr.bf16.gmra.mrb[0].mxu0 %v485
  %v590 = vpop.f32.mrb[0].mxu0
  %v591 = vadd.f32 0.0, %v590
  %v592 = vpop.f32.mrb[0].mxu0
  %v593 = vadd.f32 0.0, %v592
  %v594 = vpop.f32.mrb[0].mxu0
  %v595 = vadd.f32 0.0, %v594
  %v596 = vpop.f32.mrb[0].mxu0
  %v597 = vadd.f32 0.0, %v596
  %598 = vmatprep.mubr.bf16.mxu0 0
  %599 = vmatmul.mubr.bf16.gmra.mrb[0].mxu0 %v488
  %v600 = vpop.f32.mrb[0].mxu0
  %v601 = vadd.f32 0.0, %v600
  %v602 = vpop.f32.mrb[0].mxu0
  %v603 = vadd.f32 0.0, %v602
  %v604 = vpop.f32.mrb[0].mxu0
  %v605 = vadd.f32 0.0, %v604
  %v606 = vpop.f32.mrb[0].mxu0
  %v607 = vadd.f32 0.0, %v606
  %608 = vmatprep.mubr.bf16.mxu0 0
  %609 = vmatmul.mubr.bf16.gmra.mrb[0].mxu0 %v491
  %v610 = vpop.f32.mrb[0].mxu0
  %v611 = vadd.f32 0.0, %v610
  %v612 = vpop.f32.mrb[0].mxu0
  %v613 = vadd.f32 0.0, %v612
  %v614 = vpop.f32.mrb[0].mxu0
  %v615 = vadd.f32 0.0, %v614
  %v616 = vpop.f32.mrb[0].mxu0
  %v617 = vadd.f32 0.0, %v616
  %618 = vmatprep.mubr.bf16.mxu0 0
  %619 = vmatmul.mubr.bf16.gmra.mrb[0].mxu0 %v494
  %v620 = vpop.f32.mrb[0].mxu0
  %v621 = vadd.f32 0.0, %v620
  %v622 = vpop.f32.mrb[0].mxu0
  %v623 = vadd.f32 0.0, %v622
  %v624 = vpop.f32.mrb[0].mxu0
  %v625 = vadd.f32 0.0, %v624
  %v626 = vpop.f32.mrb[0].mxu0
  %v627 = vadd.f32 0.0, %v626
  %628 = vmatprep.mubr.bf16.mxu0 0
  %629 = vmatmul.mubr.bf16.gmra.mrb[0].mxu0 %v497
  %v630 = vpop.f32.mrb[0].mxu0
  %v631 = vadd.f32 0.0, %v630
  %v632 = vpop.f32.mrb[0].mxu0
  %v633 = vadd.f32 0.0, %v632
  %v634 = vpop.f32.mrb[0].mxu0
  %v635 = vadd.f32 0.0, %v634
  %v636 = vpop.f32.mrb[0].mxu0
  %v637 = vadd.f32 0.0, %v636
  %638 = vmatprep.mubr.bf16.mxu0 0
  %639 = vmatmul.mubr.bf16.gmra.mrb[0].mxu0 %v500
  %v640 = vpop.f32.mrb[0].mxu0
  %v641 = vadd.f32 0.0, %v640
  %v642 = vpop.f32.mrb[0].mxu0
  %v643 = vadd.f32 0.0, %v642
  %v644 = vpop.f32.mrb[0].mxu0
  %v645 = vadd.f32 0.0, %v644
  %v646 = vpop.f32.mrb[0].mxu0
  %v647 = vadd.f32 0.0, %v646
  %648 = vmatprep.mubr.bf16.mxu0 0
  %649 = vmatmul.mubr.bf16.gmra.mrb[0].mxu0 %v503
  %v650 = vpop.f32.mrb[0].mxu0
  %v651 = vadd.f32 0.0, %v650
  %v652 = vpop.f32.mrb[0].mxu0
  %v653 = vadd.f32 0.0, %v652
  %v654 = vpop.f32.mrb[0].mxu0
  %v655 = vadd.f32 0.0, %v654
  %v656 = vpop.f32.mrb[0].mxu0
  %v657 = vadd.f32 0.0, %v656
  %658 = vmatprep.mubr.bf16.mxu0 0
  %659 = vmatmul.mubr.bf16.gmra.mrb[0].mxu0 %v506
  %v660 = vpop.f32.mrb[0].mxu0
  %v661 = vadd.f32 0.0, %v660
  %v662 = vpop.f32.mrb[0].mxu0
  %v663 = vadd.f32 0.0, %v662
  %v664 = vpop.f32.mrb[0].mxu0
  %v665 = vadd.f32 0.0, %v664
  %v666 = vpop.f32.mrb[0].mxu0
  %v667 = vadd.f32 0.0, %v666
  %668 = vmatprep.mubr.bf16.mxu0 0
  %669 = vmatmul.mubr.bf16.gmra.mrb[0].mxu0 %v509
  %v670 = vpop.f32.mrb[0].mxu0
  %v671 = vadd.f32 0.0, %v670
  %v672 = vpop.f32.mrb[0].mxu0
  %v673 = vadd.f32 0.0, %v672
  %v674 = vpop.f32.mrb[0].mxu0
  %v675 = vadd.f32 0.0, %v674
  %v676 = vpop.f32.mrb[0].mxu0
  %v677 = vadd.f32 0.0, %v676
  %678 = vmatprep.mubr.bf16.mxu0 0
  %679 = vmatmul.mubr.bf16.gmra.mrb[0].mxu0 %v512
  %v680 = vpop.f32.mrb[0].mxu0
  %v681 = vadd.f32 0.0, %v680
  %v682 = vpop.f32.mrb[0].mxu0
  %v683 = vadd.f32 0.0, %v682
  %v684 = vpop.f32.mrb[0].mxu0
  %v685 = vadd.f32 0.0, %v684
  %v686 = vpop.f32.mrb[0].mxu0
  %v687 = vadd.f32 0.0, %v686
  %688 = vmatprep.mubr.bf16.mxu0 0
  %689 = vmatmul.mubr.bf16.gmra.mrb[0].mxu0 %v515
  %v690 = vpop.f32.mrb[0].mxu0
  %v691 = vadd.f32 0.0, %v690
  %v692 = vpop.f32.mrb[0].mxu0
  %v693 = vadd.f32 0.0, %v692
  %v694 = vpop.f32.mrb[0].mxu0
  %v695 = vadd.f32 0.0, %v694
  %v696 = vpop.f32.mrb[0].mxu0
  %v697 = vadd.f32 0.0, %v696
  %698 = vmatprep.mubr.bf16.mxu0 0
  %699 = vmatmul.mubr.bf16.gmra.mrb[0].mxu0 %v518
  %v700 = vpop.f32.mrb[0].mxu0
  %v701 = vadd.f32 0.0, %v700
  %v702 = vpop.f32.mrb[0].mxu0
  %v703 = vadd.f32 0.0, %v702
  %v704 = vpop.f32.mrb[0].mxu0
  %v705 = vadd.f32 0.0, %v704
  %v706 = vpop.f32.mrb[0].mxu0
  %v707 = vadd.f32 0.0, %v706
  %708 = vmatprep.mubr.bf16.mxu0 0
  %709 = vmatmul.mubr.bf16.gmra.mrb[0].mxu0 %v521
  %v710 = vpop.f32.mrb[0].mxu0
  %v711 = vadd.f32 0.0, %v710
  %v712 = vpop.f32.mrb[0].mxu0
  %v713 = vadd.f32 0.0, %v712
  %v714 = vpop.f32.mrb[0].mxu0
  %v715 = vadd.f32 0.0, %v714
  %v716 = vpop.f32.mrb[0].mxu0
  %v717 = vadd.f32 0.0, %v716
  %718 = vmatprep.mubr.bf16.mxu0 0
  %719 = vmatmul.mubr.bf16.gmra.mrb[0].mxu0 %v524
  %v720 = vpop.f32.mrb[0].mxu0
  %v721 = vadd.f32 0.0, %v720
  %v722 = vpop.f32.mrb[0].mxu0
  %v723 = vadd.f32 0.0, %v722
  %v724 = vpop.f32.mrb[0].mxu0
  %v725 = vpop.f32.mrb[0].mxu0
  %726 = vdwg.mxu0
  %v735 = vunpack.c.l.b16 %v335
  %v736 = vunpack.c.h.b16 %v335
  %v737 = vunpack.c.l.b16 %v336
  %v738 = vunpack.c.h.b16 %v336
  %v739 = vunpack.c.l.b16 %v337
  %v740 = vunpack.c.h.b16 %v337
  %v741 = vunpack.c.l.b16 %v338
  %v742 = vunpack.c.h.b16 %v338
  %v743 = vunpack.c.l.b16 %v339
  %v744 = vunpack.c.h.b16 %v339
  %v745 = vunpack.c.l.b16 %v340
  %v746 = vunpack.c.h.b16 %v340
  %v747 = vunpack.c.l.b16 %v341
  %v748 = vunpack.c.h.b16 %v341
  %v749 = vunpack.c.l.b16 %v342
  %v750 = vunpack.c.h.b16 %v342
  %v751 = vpack.c.b16 %v737, %v735
  %v752 = vpack.c.b16 %v738, %v736
  %v753 = vpack.c.b16 %v741, %v739
  %v754 = vpack.c.b16 %v742, %v740
  %v755 = vpack.c.b16 %v745, %v743
  %v756 = vpack.c.b16 %v746, %v744
  %v757 = vpack.c.b16 %v749, %v747
  %v758 = vpack.c.b16 %v750, %v748
  %v768 = vsel %vm132, %v318, 0
  %v771 = vsel %vm132, %v319, 0
  %v774 = vsel %vm132, %v320, 0
  %v777 = vsel %vm132, %v321, 0
  %v780 = vsel %vm132, %v322, 0
  %v783 = vsel %vm132, %v323, 0
  %v786 = vsel %vm132, %v324, 0
  %v789 = vsel %vm132, %v325, 0
  %v792 = vsel %vm132, %v326, 0
  %v795 = vsel %vm132, %v327, 0
  %v798 = vsel %vm132, %v328, 0
  %v801 = vsel %vm132, %v329, 0
  %v804 = vsel %vm132, %v330, 0
  %v807 = vsel %vm132, %v331, 0
  %v810 = vsel %vm132, %v332, 0
  %v813 = vsel %vm132, %v333, 0
  %v816 = vsel %vm132, %v334, 0
  %818 = vmatprep.subr.bf16.mxu0 %v752
  %819 = vmatpush1.bf16.msra.mxu0 %v751
  %820 = vmatprep.subr.bf16.mxu0 %v754
  %821 = vmatpush1.bf16.msra.mxu0 %v753
  %822 = vmatprep.subr.bf16.mxu0 %v756
  %823 = vmatpush1.bf16.msra.mxu0 %v755
  %824 = vmatprep.subr.bf16.mxu0 %v758
  %825 = vmatpush1.bf16.msra.mxu0 %v757
  %826 = vmatprep.subr.bf16.mxu0 0
  %827 = vmatpush1.bf16.msra.mxu0 0
  %828 = vmatprep.subr.bf16.mxu0 0
  %829 = vmatpush1.bf16.msra.mxu0 0
  %830 = vmatprep.subr.bf16.mxu0 0
  %831 = vmatpush1.bf16.msra.mxu0 0
  %832 = vmatprep.subr.bf16.mxu0 0
  %833 = vmatpush1.bf16.msra.mxu0 0
  %834 = vmatprep.subr.bf16.mxu0 0
  %835 = vmatpush1.bf16.msra.mxu0 0
  %836 = vmatprep.subr.bf16.mxu0 0
  %837 = vmatpush1.bf16.msra.mxu0 0
  %838 = vmatprep.subr.bf16.mxu0 0
  %839 = vmatpush1.bf16.msra.mxu0 0
  %840 = vmatprep.subr.bf16.mxu0 0
  %841 = vmatpush1.bf16.msra.mxu0 0
  %842 = vmatprep.subr.bf16.mxu0 0
  %843 = vmatpush1.bf16.msra.mxu0 0
  %844 = vmatprep.subr.bf16.mxu0 0
  %845 = vmatpush1.bf16.msra.mxu0 0
  %846 = vmatprep.subr.bf16.mxu0 0
  %847 = vmatpush1.bf16.msra.mxu0 0
  %848 = vmatprep.subr.bf16.mxu0 0
  %849 = vmatpush1.bf16.msra.mxu0 0
  %850 = vmatprep.mubr.bf16.mxu0 0
  %851 = vmatmul.mubr.bf16.gmra.mrb[0].mxu0 %v768
  %v852 = vpop.f32.mrb[0].mxu0
  %v853 = vadd.f32 %v561, %v852
  %v854 = vpop.f32.mrb[0].mxu0
  %v855 = vadd.f32 %v563, %v854
  %v856 = vpop.f32.mrb[0].mxu0
  %v857 = vadd.f32 %v565, %v856
  %v858 = vpop.f32.mrb[0].mxu0
  %v859 = vadd.f32 %v567, %v858
  %860 = vmatprep.mubr.bf16.mxu0 0
  %861 = vmatmul.mubr.bf16.gmra.mrb[0].mxu0 %v771
  %v862 = vpop.f32.mrb[0].mxu0
  %v863 = vadd.f32 %v571, %v862
  %v864 = vpop.f32.mrb[0].mxu0
  %v865 = vadd.f32 %v573, %v864
  %v866 = vpop.f32.mrb[0].mxu0
  %v867 = vadd.f32 %v575, %v866
  %v868 = vpop.f32.mrb[0].mxu0
  %v869 = vadd.f32 %v577, %v868
  %870 = vmatprep.mubr.bf16.mxu0 0
  %871 = vmatmul.mubr.bf16.gmra.mrb[0].mxu0 %v774
  %v872 = vpop.f32.mrb[0].mxu0
  %v873 = vadd.f32 %v581, %v872
  %v874 = vpop.f32.mrb[0].mxu0
  %v875 = vadd.f32 %v583, %v874
  %v876 = vpop.f32.mrb[0].mxu0
  %v877 = vadd.f32 %v585, %v876
  %v878 = vpop.f32.mrb[0].mxu0
  %v879 = vadd.f32 %v587, %v878
  %880 = vmatprep.mubr.bf16.mxu0 0
  %881 = vmatmul.mubr.bf16.gmra.mrb[0].mxu0 %v777
  %v882 = vpop.f32.mrb[0].mxu0
  %v883 = vadd.f32 %v591, %v882
  %v884 = vpop.f32.mrb[0].mxu0
  %v885 = vadd.f32 %v593, %v884
  %v886 = vpop.f32.mrb[0].mxu0
  %v887 = vadd.f32 %v595, %v886
  %v888 = vpop.f32.mrb[0].mxu0
  %v889 = vadd.f32 %v597, %v888
  %890 = vmatprep.mubr.bf16.mxu0 0
  %891 = vmatmul.mubr.bf16.gmra.mrb[0].mxu0 %v780
  %v892 = vpop.f32.mrb[0].mxu0
  %v893 = vadd.f32 %v601, %v892
  %v894 = vpop.f32.mrb[0].mxu0
  %v895 = vadd.f32 %v603, %v894
  %v896 = vpop.f32.mrb[0].mxu0
  %v897 = vadd.f32 %v605, %v896
  %v898 = vpop.f32.mrb[0].mxu0
  %v899 = vadd.f32 %v607, %v898
  %900 = vmatprep.mubr.bf16.mxu0 0
  %901 = vmatmul.mubr.bf16.gmra.mrb[0].mxu0 %v783
  %v902 = vpop.f32.mrb[0].mxu0
  %v903 = vadd.f32 %v611, %v902
  %v904 = vpop.f32.mrb[0].mxu0
  %v905 = vadd.f32 %v613, %v904
  %v906 = vpop.f32.mrb[0].mxu0
  %v907 = vadd.f32 %v615, %v906
  %v908 = vpop.f32.mrb[0].mxu0
  %v909 = vadd.f32 %v617, %v908
  %910 = vmatprep.mubr.bf16.mxu0 0
  %911 = vmatmul.mubr.bf16.gmra.mrb[0].mxu0 %v786
  %v912 = vpop.f32.mrb[0].mxu0
  %v913 = vadd.f32 %v621, %v912
  %v914 = vpop.f32.mrb[0].mxu0
  %v915 = vadd.f32 %v623, %v914
  %v916 = vpop.f32.mrb[0].mxu0
  %v917 = vadd.f32 %v625, %v916
  %v918 = vpop.f32.mrb[0].mxu0
  %v919 = vadd.f32 %v627, %v918
  %920 = vmatprep.mubr.bf16.mxu0 0
  %921 = vmatmul.mubr.bf16.gmra.mrb[0].mxu0 %v789
  %v922 = vpop.f32.mrb[0].mxu0
  %v923 = vadd.f32 %v631, %v922
  %v924 = vpop.f32.mrb[0].mxu0
  %v925 = vadd.f32 %v633, %v924
  %v926 = vpop.f32.mrb[0].mxu0
  %v927 = vadd.f32 %v635, %v926
  %v928 = vpop.f32.mrb[0].mxu0
  %v929 = vadd.f32 %v637, %v928
  %930 = vmatprep.mubr.bf16.mxu0 0
  %931 = vmatmul.mubr.bf16.gmra.mrb[0].mxu0 %v792
  %v932 = vpop.f32.mrb[0].mxu0
  %v933 = vadd.f32 %v641, %v932
  %v934 = vpop.f32.mrb[0].mxu0
  %v935 = vadd.f32 %v643, %v934
  %v936 = vpop.f32.mrb[0].mxu0
  %v937 = vadd.f32 %v645, %v936
  %v938 = vpop.f32.mrb[0].mxu0
  %v939 = vadd.f32 %v647, %v938
  %940 = vmatprep.mubr.bf16.mxu0 0
  %941 = vmatmul.mubr.bf16.gmra.mrb[0].mxu0 %v795
  %v942 = vpop.f32.mrb[0].mxu0
  %v943 = vadd.f32 %v651, %v942
  %v944 = vpop.f32.mrb[0].mxu0
  %v945 = vadd.f32 %v653, %v944
  %v946 = vpop.f32.mrb[0].mxu0
  %v947 = vadd.f32 %v655, %v946
  %v948 = vpop.f32.mrb[0].mxu0
  %v949 = vadd.f32 %v657, %v948
  %950 = vmatprep.mubr.bf16.mxu0 0
  %951 = vmatmul.mubr.bf16.gmra.mrb[0].mxu0 %v798
  %v952 = vpop.f32.mrb[0].mxu0
  %v953 = vadd.f32 %v661, %v952
  %v954 = vpop.f32.mrb[0].mxu0
  %v955 = vadd.f32 %v663, %v954
  %v956 = vpop.f32.mrb[0].mxu0
  %v957 = vadd.f32 %v665, %v956
  %v958 = vpop.f32.mrb[0].mxu0
  %v959 = vadd.f32 %v667, %v958
  %960 = vmatprep.mubr.bf16.mxu0 0
  %961 = vmatmul.mubr.bf16.gmra.mrb[0].mxu0 %v801
  %v962 = vpop.f32.mrb[0].mxu0
  %v963 = vadd.f32 %v671, %v962
  %v964 = vpop.f32.mrb[0].mxu0
  %v965 = vadd.f32 %v673, %v964
  %v966 = vpop.f32.mrb[0].mxu0
  %v967 = vadd.f32 %v675, %v966
  %v968 = vpop.f32.mrb[0].mxu0
  %v969 = vadd.f32 %v677, %v968
  %970 = vmatprep.mubr.bf16.mxu0 0
  %971 = vmatmul.mubr.bf16.gmra.mrb[0].mxu0 %v804
  %v972 = vpop.f32.mrb[0].mxu0
  %v973 = vadd.f32 %v681, %v972
  %v974 = vpop.f32.mrb[0].mxu0
  %v975 = vadd.f32 %v683, %v974
  %v976 = vpop.f32.mrb[0].mxu0
  %v977 = vadd.f32 %v685, %v976
  %v978 = vpop.f32.mrb[0].mxu0
  %v979 = vadd.f32 %v687, %v978
  %980 = vmatprep.mubr.bf16.mxu0 0
  %981 = vmatmul.mubr.bf16.gmra.mrb[0].mxu0 %v807
  %v982 = vpop.f32.mrb[0].mxu0
  %v983 = vadd.f32 %v691, %v982
  %v984 = vpop.f32.mrb[0].mxu0
  %v985 = vadd.f32 %v693, %v984
  %v986 = vpop.f32.mrb[0].mxu0
  %v987 = vadd.f32 %v695, %v986
  %v988 = vpop.f32.mrb[0].mxu0
  %v989 = vadd.f32 %v697, %v988
  %990 = vmatprep.mubr.bf16.mxu0 0
  %991 = vmatmul.mubr.bf16.gmra.mrb[0].mxu0 %v810
  %v992 = vpop.f32.mrb[0].mxu0
  %v993 = vadd.f32 %v701, %v992
  %v994 = vpop.f32.mrb[0].mxu0
  %v995 = vadd.f32 %v703, %v994
  %v996 = vpop.f32.mrb[0].mxu0
  %v997 = vadd.f32 %v705, %v996
  %v998 = vpop.f32.mrb[0].mxu0
  %v999 = vadd.f32 %v707, %v998
  %1000 = vmatprep.mubr.bf16.mxu0 0
  %1001 = vmatmul.mubr.bf16.gmra.mrb[0].mxu0 %v813
  %v1002 = vpop.f32.mrb[0].mxu0
  %v1003 = vadd.f32 %v711, %v1002
  %v1004 = vpop.f32.mrb[0].mxu0
  %v1005 = vadd.f32 %v713, %v1004
  %v1006 = vpop.f32.mrb[0].mxu0
  %v1007 = vadd.f32 %v715, %v1006
  %v1008 = vpop.f32.mrb[0].mxu0
  %v1009 = vadd.f32 %v717, %v1008
  %1010 = vmatprep.mubr.bf16.mxu0 0
  %1011 = vmatmul.mubr.bf16.gmra.mrb[0].mxu0 %v816
  %v1012 = vpop.f32.mrb[0].mxu0
  %v1013 = vadd.f32 %v721, %v1012
  %v1014 = vpop.f32.mrb[0].mxu0
  %v1015 = vadd.f32 %v723, %v1014
  %v1016 = vpop.f32.mrb[0].mxu0
  %v1017 = vpop.f32.mrb[0].mxu0
  %1018 = vdwg.mxu0
  %s1019 = scalar_lea.vmem [#allocation2], 2
  %v1020 = vld [vmem:[%s1019] ss:$2 sm:$0xff]
  %s1021 = scalar_lea.vmem [#allocation2], 18
  %v1022 = vld [vmem:[%s1021] ss:$2 sm:$0xff]
  %s1023 = scalar_lea.vmem [#allocation2], 34
  %v1024 = vld [vmem:[%s1023] ss:$2 sm:$0xff]
  %s1025 = scalar_lea.vmem [#allocation2], 50
  %v1026 = vld [vmem:[%s1025] ss:$2 sm:$0xff]
  %s1027 = scalar_lea.vmem [#allocation2], 66
  %v1028 = vld [vmem:[%s1027] ss:$2 sm:$0xff]
  %s1029 = scalar_lea.vmem [#allocation2], 82
  %v1030 = vld [vmem:[%s1029] ss:$2 sm:$0xff]
  %s1031 = scalar_lea.vmem [#allocation2], 98
  %v1032 = vld [vmem:[%s1031] ss:$2 sm:$0xff]
  %s1033 = scalar_lea.vmem [#allocation2], 114
  %v1034 = vld [vmem:[%s1033] ss:$2 sm:$0xff]
  %s1035 = scalar_lea.vmem [#allocation2], 130
  %v1036 = vld [vmem:[%s1035] ss:$2 sm:$0xff]
  %s1037 = scalar_lea.vmem [#allocation2], 146
  %v1038 = vld [vmem:[%s1037] ss:$2 sm:$0xff]
  %s1039 = scalar_lea.vmem [#allocation2], 162
  %v1040 = vld [vmem:[%s1039] ss:$2 sm:$0xff]
  %s1041 = scalar_lea.vmem [#allocation2], 178
  %v1042 = vld [vmem:[%s1041] ss:$2 sm:$0xff]
  %s1043 = scalar_lea.vmem [#allocation2], 194
  %v1044 = vld [vmem:[%s1043] ss:$2 sm:$0xff]
  %s1045 = scalar_lea.vmem [#allocation2], 210
  %v1046 = vld [vmem:[%s1045] ss:$2 sm:$0xff]
  %s1047 = scalar_lea.vmem [#allocation2], 226
  %v1048 = vld [vmem:[%s1047] ss:$2 sm:$0xff]
  %s1049 = scalar_lea.vmem [#allocation2], 242
  %v1050 = vld [vmem:[%s1049] ss:$2 sm:$0xff]
  %s1051 = scalar_lea.vmem [#allocation2], 258
  %v1052 = vld [vmem:[%s1051] ss:$2 sm:$0xff]
  %s1053 = scalar_lea.vmem [#allocation2], 274
  %v1054 = vld [vmem:[%s1053] ss:$2 sm:$0xff]
  %s1055 = scalar_lea.vmem [#allocation2], 290
  %v1056 = vld [vmem:[%s1055] ss:$2 sm:$0xff]
  %s1057 = scalar_lea.vmem [#allocation2], 306
  %v1058 = vld [vmem:[%s1057] ss:$2 sm:$0xff]
  %s1059 = scalar_lea.vmem [#allocation2], 322
  %v1060 = vld [vmem:[%s1059] ss:$2 sm:$0xff]
  %s1061 = scalar_lea.vmem [#allocation2], 338
  %v1062 = vld [vmem:[%s1061] ss:$2 sm:$0xff]
  %s1063 = scalar_lea.vmem [#allocation2], 354
  %v1064 = vld [vmem:[%s1063] ss:$2 sm:$0xff]
  %s1065 = scalar_lea.vmem [#allocation2], 370
  %v1066 = vld [vmem:[%s1065] ss:$2 sm:$0xff]
  %s1067 = scalar_lea.vmem [#allocation2], 386
  %v1068 = vld [vmem:[%s1067] ss:$2 sm:$0xff]
  %s1069 = scalar_lea.vmem [#allocation2], 402
  %v1070 = vld [vmem:[%s1069] ss:$2 sm:$0xff]
  %s1071 = scalar_lea.vmem [#allocation2], 418
  %v1072 = vld [vmem:[%s1071] ss:$2 sm:$0xff]
  %s1073 = scalar_lea.vmem [#allocation2], 434
  %v1074 = vld [vmem:[%s1073] ss:$2 sm:$0xff]
  %s1075 = scalar_lea.vmem [#allocation2], 450
  %v1076 = vld [vmem:[%s1075] ss:$2 sm:$0xff]
  %s1077 = scalar_lea.vmem [#allocation2], 466
  %v1078 = vld [vmem:[%s1077] ss:$2 sm:$0xff]
  %s1079 = scalar_lea.vmem [#allocation2], 482
  %v1080 = vld [vmem:[%s1079] ss:$2 sm:$0xff]
  %s1081 = scalar_lea.vmem [#allocation2], 498
  %v1082 = vld [vmem:[%s1081] ss:$2 sm:$0xff]
  %s1083 = scalar_lea.vmem [#allocation2], 514
  %v1084 = vld [vmem:[%s1083] ss:$2 sm:$0xff]
  %v1085 = vpack.c.bf16 %v1022, %v1020
  %v1086 = vpack.c.bf16 %v1026, %v1024
  %v1087 = vpack.c.bf16 %v1030, %v1028
  %v1088 = vpack.c.bf16 %v1034, %v1032
  %v1089 = vpack.c.bf16 %v1038, %v1036
  %v1090 = vpack.c.bf16 %v1042, %v1040
  %v1091 = vpack.c.bf16 %v1046, %v1044
  %v1092 = vpack.c.bf16 %v1050, %v1048
  %v1093 = vpack.c.bf16 %v1054, %v1052
  %v1094 = vpack.c.bf16 %v1058, %v1056
  %v1095 = vpack.c.bf16 %v1062, %v1060
  %v1096 = vpack.c.bf16 %v1066, %v1064
  %v1097 = vpack.c.bf16 %v1070, %v1068
  %v1098 = vpack.c.bf16 %v1074, %v1072
  %v1099 = vpack.c.bf16 %v1078, %v1076
  %v1100 = vpack.c.bf16 %v1082, %v1080
  %v1101 = vpack.c.bf16 %v1084, %v1084
  %s1102 = scalar_lea.vmem %s1, 128
  %v1103 = vld [vmem:[%s1102] sm:$0xff]
  %v1104 = vld [vmem:[%s1102 + $0x8] sm:$0xff]
  %v1105 = vld [vmem:[%s1102 + $0x10] sm:$0xff]
  %v1106 = vld [vmem:[%s1102 + $0x18] sm:$0xff]
  %v1107 = vld [vmem:[%s1102 + $0x20] sm:$0xff]
  %v1108 = vld [vmem:[%s1102 + $0x28] sm:$0xff]
  %v1109 = vld [vmem:[%s1102 + $0x30] sm:$0xff]
  %v1110 = vld [vmem:[%s1102 + $0x38] sm:$0xff]
  %v1119 = vunpack.c.l.b16 %v1103
  %v1120 = vunpack.c.h.b16 %v1103
  %v1121 = vunpack.c.l.b16 %v1104
  %v1122 = vunpack.c.h.b16 %v1104
  %v1123 = vunpack.c.l.b16 %v1105
  %v1124 = vunpack.c.h.b16 %v1105
  %v1125 = vunpack.c.l.b16 %v1106
  %v1126 = vunpack.c.h.b16 %v1106
  %v1127 = vunpack.c.l.b16 %v1107
  %v1128 = vunpack.c.h.b16 %v1107
  %v1129 = vunpack.c.l.b16 %v1108
  %v1130 = vunpack.c.h.b16 %v1108
  %v1131 = vunpack.c.l.b16 %v1109
  %v1132 = vunpack.c.h.b16 %v1109
  %v1133 = vunpack.c.l.b16 %v1110
  %v1134 = vunpack.c.h.b16 %v1110
  %v1135 = vpack.c.b16 %v1121, %v1119
  %v1136 = vpack.c.b16 %v1122, %v1120
  %v1137 = vpack.c.b16 %v1125, %v1123
  %v1138 = vpack.c.b16 %v1126, %v1124
  %v1139 = vpack.c.b16 %v1129, %v1127
  %v1140 = vpack.c.b16 %v1130, %v1128
  %v1141 = vpack.c.b16 %v1133, %v1131
  %v1142 = vpack.c.b16 %v1134, %v1132
  %v1152 = vsel %vm132, %v1085, 0
  %v1155 = vsel %vm132, %v1086, 0
  %v1158 = vsel %vm132, %v1087, 0
  %v1161 = vsel %vm132, %v1088, 0
  %v1164 = vsel %vm132, %v1089, 0
  %v1167 = vsel %vm132, %v1090, 0
  %v1170 = vsel %vm132, %v1091, 0
  %v1173 = vsel %vm132, %v1092, 0
  %v1176 = vsel %vm132, %v1093, 0
  %v1179 = vsel %vm132, %v1094, 0
  %v1182 = vsel %vm132, %v1095, 0
  %v1185 = vsel %vm132, %v1096, 0
  %v1188 = vsel %vm132, %v1097, 0
  %v1191 = vsel %vm132, %v1098, 0
  %v1194 = vsel %vm132, %v1099, 0
  %v1197 = vsel %vm132, %v1100, 0
  %v1200 = vsel %vm132, %v1101, 0
  %1202 = vmatprep.subr.bf16.mxu0 %v1136
  %1203 = vmatpush1.bf16.msra.mxu0 %v1135
  %1204 = vmatprep.subr.bf16.mxu0 %v1138
  %1205 = vmatpush1.bf16.msra.mxu0 %v1137
  %1206 = vmatprep.subr.bf16.mxu0 %v1140
  %1207 = vmatpush1.bf16.msra.mxu0 %v1139
  %1208 = vmatprep.subr.bf16.mxu0 %v1142
  %1209 = vmatpush1.bf16.msra.mxu0 %v1141
  %1210 = vmatprep.subr.bf16.mxu0 0
  %1211 = vmatpush1.bf16.msra.mxu0 0
  %1212 = vmatprep.subr.bf16.mxu0 0
  %1213 = vmatpush1.bf16.msra.mxu0 0
  %1214 = vmatprep.subr.bf16.mxu0 0
  %1215 = vmatpush1.bf16.msra.mxu0 0
  %1216 = vmatprep.subr.bf16.mxu0 0
  %1217 = vmatpush1.bf16.msra.mxu0 0
  %1218 = vmatprep.subr.bf16.mxu0 0
  %1219 = vmatpush1.bf16.msra.mxu0 0
  %1220 = vmatprep.subr.bf16.mxu0 0
  %1221 = vmatpush1.bf16.msra.mxu0 0
  %1222 = vmatprep.subr.bf16.mxu0 0
  %1223 = vmatpush1.bf16.msra.mxu0 0
  %1224 = vmatprep.subr.bf16.mxu0 0
  %1225 = vmatpush1.bf16.msra.mxu0 0
  %1226 = vmatprep.subr.bf16.mxu0 0
  %1227 = vmatpush1.bf16.msra.mxu0 0
  %1228 = vmatprep.subr.bf16.mxu0 0
  %1229 = vmatpush1.bf16.msra.mxu0 0
  %1230 = vmatprep.subr.bf16.mxu0 0
  %1231 = vmatpush1.bf16.msra.mxu0 0
  %1232 = vmatprep.subr.bf16.mxu0 0
  %1233 = vmatpush1.bf16.msra.mxu0 0
  %1234 = vmatprep.mubr.bf16.mxu0 0
  %1235 = vmatmul.mubr.bf16.gmra.mrb[0].mxu0 %v1152
  %v1236 = vpop.f32.mrb[0].mxu0
  %v1237 = vadd.f32 0.0, %v1236
  %v1238 = vpop.f32.mrb[0].mxu0
  %v1239 = vadd.f32 0.0, %v1238
  %v1240 = vpop.f32.mrb[0].mxu0
  %v1241 = vadd.f32 0.0, %v1240
  %v1242 = vpop.f32.mrb[0].mxu0
  %v1243 = vadd.f32 0.0, %v1242
  %1244 = vmatprep.mubr.bf16.mxu0 0
  %1245 = vmatmul.mubr.bf16.gmra.mrb[0].mxu0 %v1155
  %v1246 = vpop.f32.mrb[0].mxu0
  %v1247 = vadd.f32 0.0, %v1246
  %v1248 = vpop.f32.mrb[0].mxu0
  %v1249 = vadd.f32 0.0, %v1248
  %v1250 = vpop.f32.mrb[0].mxu0
  %v1251 = vadd.f32 0.0, %v1250
  %v1252 = vpop.f32.mrb[0].mxu0
  %v1253 = vadd.f32 0.0, %v1252
  %1254 = vmatprep.mubr.bf16.mxu0 0
  %1255 = vmatmul.mubr.bf16.gmra.mrb[0].mxu0 %v1158
  %v1256 = vpop.f32.mrb[0].mxu0
  %v1257 = vadd.f32 0.0, %v1256
  %v1258 = vpop.f32.mrb[0].mxu0
  %v1259 = vadd.f32 0.0, %v1258
  %v1260 = vpop.f32.mrb[0].mxu0
  %v1261 = vadd.f32 0.0, %v1260
  %v1262 = vpop.f32.mrb[0].mxu0
  %v1263 = vadd.f32 0.0, %v1262
  %1264 = vmatprep.mubr.bf16.mxu0 0
  %1265 = vmatmul.mubr.bf16.gmra.mrb[0].mxu0 %v1161
  %v1266 = vpop.f32.mrb[0].mxu0
  %v1267 = vadd.f32 0.0, %v1266
  %v1268 = vpop.f32.mrb[0].mxu0
  %v1269 = vadd.f32 0.0, %v1268
  %v1270 = vpop.f32.mrb[0].mxu0
  %v1271 = vadd.f32 0.0, %v1270
  %v1272 = vpop.f32.mrb[0].mxu0
  %v1273 = vadd.f32 0.0, %v1272
  %1274 = vmatprep.mubr.bf16.mxu0 0
  %1275 = vmatmul.mubr.bf16.gmra.mrb[0].mxu0 %v1164
  %v1276 = vpop.f32.mrb[0].mxu0
  %v1277 = vadd.f32 0.0, %v1276
  %v1278 = vpop.f32.mrb[0].mxu0
  %v1279 = vadd.f32 0.0, %v1278
  %v1280 = vpop.f32.mrb[0].mxu0
  %v1281 = vadd.f32 0.0, %v1280
  %v1282 = vpop.f32.mrb[0].mxu0
  %v1283 = vadd.f32 0.0, %v1282
  %1284 = vmatprep.mubr.bf16.mxu0 0
  %1285 = vmatmul.mubr.bf16.gmra.mrb[0].mxu0 %v1167
  %v1286 = vpop.f32.mrb[0].mxu0
  %v1287 = vadd.f32 0.0, %v1286
  %v1288 = vpop.f32.mrb[0].mxu0
  %v1289 = vadd.f32 0.0, %v1288
  %v1290 = vpop.f32.mrb[0].mxu0
  %v1291 = vadd.f32 0.0, %v1290
  %v1292 = vpop.f32.mrb[0].mxu0
  %v1293 = vadd.f32 0.0, %v1292
  %1294 = vmatprep.mubr.bf16.mxu0 0
  %1295 = vmatmul.mubr.bf16.gmra.mrb[0].mxu0 %v1170
  %v1296 = vpop.f32.mrb[0].mxu0
  %v1297 = vadd.f32 0.0, %v1296
  %v1298 = vpop.f32.mrb[0].mxu0
  %v1299 = vadd.f32 0.0, %v1298
  %v1300 = vpop.f32.mrb[0].mxu0
  %v1301 = vadd.f32 0.0, %v1300
  %v1302 = vpop.f32.mrb[0].mxu0
  %v1303 = vadd.f32 0.0, %v1302
  %1304 = vmatprep.mubr.bf16.mxu0 0
  %1305 = vmatmul.mubr.bf16.gmra.mrb[0].mxu0 %v1173
  %v1306 = vpop.f32.mrb[0].mxu0
  %v1307 = vadd.f32 0.0, %v1306
  %v1308 = vpop.f32.mrb[0].mxu0
  %v1309 = vadd.f32 0.0, %v1308
  %v1310 = vpop.f32.mrb[0].mxu0
  %v1311 = vadd.f32 0.0, %v1310
  %v1312 = vpop.f32.mrb[0].mxu0
  %v1313 = vadd.f32 0.0, %v1312
  %1314 = vmatprep.mubr.bf16.mxu0 0
  %1315 = vmatmul.mubr.bf16.gmra.mrb[0].mxu0 %v1176
  %v1316 = vpop.f32.mrb[0].mxu0
  %v1317 = vadd.f32 0.0, %v1316
  %v1318 = vpop.f32.mrb[0].mxu0
  %v1319 = vadd.f32 0.0, %v1318
  %v1320 = vpop.f32.mrb[0].mxu0
  %v1321 = vadd.f32 0.0, %v1320
  %v1322 = vpop.f32.mrb[0].mxu0
  %v1323 = vadd.f32 0.0, %v1322
  %1324 = vmatprep.mubr.bf16.mxu0 0
  %1325 = vmatmul.mubr.bf16.gmra.mrb[0].mxu0 %v1179
  %v1326 = vpop.f32.mrb[0].mxu0
  %v1327 = vadd.f32 0.0, %v1326
  %v1328 = vpop.f32.mrb[0].mxu0
  %v1329 = vadd.f32 0.0, %v1328
  %v1330 = vpop.f32.mrb[0].mxu0
  %v1331 = vadd.f32 0.0, %v1330
  %v1332 = vpop.f32.mrb[0].mxu0
  %v1333 = vadd.f32 0.0, %v1332
  %1334 = vmatprep.mubr.bf16.mxu0 0
  %1335 = vmatmul.mubr.bf16.gmra.mrb[0].mxu0 %v1182
  %v1336 = vpop.f32.mrb[0].mxu0
  %v1337 = vadd.f32 0.0, %v1336
  %v1338 = vpop.f32.mrb[0].mxu0
  %v1339 = vadd.f32 0.0, %v1338
  %v1340 = vpop.f32.mrb[0].mxu0
  %v1341 = vadd.f32 0.0, %v1340
  %v1342 = vpop.f32.mrb[0].mxu0
  %v1343 = vadd.f32 0.0, %v1342
  %1344 = vmatprep.mubr.bf16.mxu0 0
  %1345 = vmatmul.mubr.bf16.gmra.mrb[0].mxu0 %v1185
  %v1346 = vpop.f32.mrb[0].mxu0
  %v1347 = vadd.f32 0.0, %v1346
  %v1348 = vpop.f32.mrb[0].mxu0
  %v1349 = vadd.f32 0.0, %v1348
  %v1350 = vpop.f32.mrb[0].mxu0
  %v1351 = vadd.f32 0.0, %v1350
  %v1352 = vpop.f32.mrb[0].mxu0
  %v1353 = vadd.f32 0.0, %v1352
  %1354 = vmatprep.mubr.bf16.mxu0 0
  %1355 = vmatmul.mubr.bf16.gmra.mrb[0].mxu0 %v1188
  %v1356 = vpop.f32.mrb[0].mxu0
  %v1357 = vadd.f32 0.0, %v1356
  %v1358 = vpop.f32.mrb[0].mxu0
  %v1359 = vadd.f32 0.0, %v1358
  %v1360 = vpop.f32.mrb[0].mxu0
  %v1361 = vadd.f32 0.0, %v1360
  %v1362 = vpop.f32.mrb[0].mxu0
  %v1363 = vadd.f32 0.0, %v1362
  %1364 = vmatprep.mubr.bf16.mxu0 0
  %1365 = vmatmul.mubr.bf16.gmra.mrb[0].mxu0 %v1191
  %v1366 = vpop.f32.mrb[0].mxu0
  %v1367 = vadd.f32 0.0, %v1366
  %v1368 = vpop.f32.mrb[0].mxu0
  %v1369 = vadd.f32 0.0, %v1368
  %v1370 = vpop.f32.mrb[0].mxu0
  %v1371 = vadd.f32 0.0, %v1370
  %v1372 = vpop.f32.mrb[0].mxu0
  %v1373 = vadd.f32 0.0, %v1372
  %1374 = vmatprep.mubr.bf16.mxu0 0
  %1375 = vmatmul.mubr.bf16.gmra.mrb[0].mxu0 %v1194
  %v1376 = vpop.f32.mrb[0].mxu0
  %v1377 = vadd.f32 0.0, %v1376
  %v1378 = vpop.f32.mrb[0].mxu0
  %v1379 = vadd.f32 0.0, %v1378
  %v1380 = vpop.f32.mrb[0].mxu0
  %v1381 = vadd.f32 0.0, %v1380
  %v1382 = vpop.f32.mrb[0].mxu0
  %v1383 = vadd.f32 0.0, %v1382
  %1384 = vmatprep.mubr.bf16.mxu0 0
  %1385 = vmatmul.mubr.bf16.gmra.mrb[0].mxu0 %v1197
  %v1386 = vpop.f32.mrb[0].mxu0
  %v1387 = vadd.f32 0.0, %v1386
  %v1388 = vpop.f32.mrb[0].mxu0
  %v1389 = vadd.f32 0.0, %v1388
  %v1390 = vpop.f32.mrb[0].mxu0
  %v1391 = vadd.f32 0.0, %v1390
  %v1392 = vpop.f32.mrb[0].mxu0
  %v1393 = vadd.f32 0.0, %v1392
  %1394 = vmatprep.mubr.bf16.mxu0 0
  %1395 = vmatmul.mubr.bf16.gmra.mrb[0].mxu0 %v1200
  %v1396 = vpop.f32.mrb[0].mxu0
  %v1397 = vadd.f32 0.0, %v1396
  %v1398 = vpop.f32.mrb[0].mxu0
  %v1399 = vadd.f32 0.0, %v1398
  %v1400 = vpop.f32.mrb[0].mxu0
  %v1401 = vpop.f32.mrb[0].mxu0
  %1402 = vdwg.mxu0
  %v1403 = vadd.f32 %v853, %v1237
  %v1404 = vadd.f32 %v855, %v1239
  %v1405 = vadd.f32 %v857, %v1241
  %v1406 = vadd.f32 %v859, %v1243
  %v1407 = vadd.f32 %v863, %v1247
  %v1408 = vadd.f32 %v865, %v1249
  %v1409 = vadd.f32 %v867, %v1251
  %v1410 = vadd.f32 %v869, %v1253
  %v1411 = vadd.f32 %v873, %v1257
  %v1412 = vadd.f32 %v875, %v1259
  %v1413 = vadd.f32 %v877, %v1261
  %v1414 = vadd.f32 %v879, %v1263
  %v1415 = vadd.f32 %v883, %v1267
  %v1416 = vadd.f32 %v885, %v1269
  %v1417 = vadd.f32 %v887, %v1271
  %v1418 = vadd.f32 %v889, %v1273
  %v1419 = vadd.f32 %v893, %v1277
  %v1420 = vadd.f32 %v895, %v1279
  %v1421 = vadd.f32 %v897, %v1281
  %v1422 = vadd.f32 %v899, %v1283
  %v1423 = vadd.f32 %v903, %v1287
  %v1424 = vadd.f32 %v905, %v1289
  %v1425 = vadd.f32 %v907, %v1291
  %v1426 = vadd.f32 %v909, %v1293
  %v1427 = vadd.f32 %v913, %v1297
  %v1428 = vadd.f32 %v915, %v1299
  %v1429 = vadd.f32 %v917, %v1301
  %v1430 = vadd.f32 %v919, %v1303
  %v1431 = vadd.f32 %v923, %v1307
  %v1432 = vadd.f32 %v925, %v1309
  %v1433 = vadd.f32 %v927, %v1311
  %v1434 = vadd.f32 %v929, %v1313
  %v1435 = vadd.f32 %v933, %v1317
  %v1436 = vadd.f32 %v935, %v1319
  %v1437 = vadd.f32 %v937, %v1321
  %v1438 = vadd.f32 %v939, %v1323
  %v1439 = vadd.f32 %v943, %v1327
  %v1440 = vadd.f32 %v945, %v1329
  %v1441 = vadd.f32 %v947, %v1331
  %v1442 = vadd.f32 %v949, %v1333
  %v1443 = vadd.f32 %v953, %v1337
  %v1444 = vadd.f32 %v955, %v1339
  %v1445 = vadd.f32 %v957, %v1341
  %v1446 = vadd.f32 %v959, %v1343
  %v1447 = vadd.f32 %v963, %v1347
  %v1448 = vadd.f32 %v965, %v1349
  %v1449 = vadd.f32 %v967, %v1351
  %v1450 = vadd.f32 %v969, %v1353
  %v1451 = vadd.f32 %v973, %v1357
  %v1452 = vadd.f32 %v975, %v1359
  %v1453 = vadd.f32 %v977, %v1361
  %v1454 = vadd.f32 %v979, %v1363
  %v1455 = vadd.f32 %v983, %v1367
  %v1456 = vadd.f32 %v985, %v1369
  %v1457 = vadd.f32 %v987, %v1371
  %v1458 = vadd.f32 %v989, %v1373
  %v1459 = vadd.f32 %v993, %v1377
  %v1460 = vadd.f32 %v995, %v1379
  %v1461 = vadd.f32 %v997, %v1381
  %v1462 = vadd.f32 %v999, %v1383
  %v1463 = vadd.f32 %v1003, %v1387
  %v1464 = vadd.f32 %v1005, %v1389
  %v1465 = vadd.f32 %v1007, %v1391
  %v1466 = vadd.f32 %v1009, %v1393
  %v1467 = vadd.f32 %v1013, %v1397
  %v1468 = vadd.f32 %v1015, %v1399
  %v1469 = vmax.f32 %v1403, %v1404
  %v1470 = vmax.f32 %v1405, %v1406
  %v1471 = vmax.f32 %v1407, %v1408
  %v1472 = vmax.f32 %v1409, %v1410
  %v1473 = vmax.f32 %v1411, %v1412
  %v1474 = vmax.f32 %v1413, %v1414
  %v1475 = vmax.f32 %v1415, %v1416
  %v1476 = vmax.f32 %v1417, %v1418
  %v1477 = vmax.f32 %v1419, %v1420
  %v1478 = vmax.f32 %v1421, %v1422
  %v1479 = vmax.f32 %v1423, %v1424
  %v1480 = vmax.f32 %v1425, %v1426
  %v1481 = vmax.f32 %v1427, %v1428
  %v1482 = vmax.f32 %v1429, %v1430
  %v1483 = vmax.f32 %v1431, %v1432
  %v1484 = vmax.f32 %v1433, %v1434
  %v1485 = vmax.f32 %v1435, %v1436
  %v1486 = vmax.f32 %v1437, %v1438
  %v1487 = vmax.f32 %v1439, %v1440
  %v1488 = vmax.f32 %v1441, %v1442
  %v1489 = vmax.f32 %v1443, %v1444
  %v1490 = vmax.f32 %v1445, %v1446
  %v1491 = vmax.f32 %v1447, %v1448
  %v1492 = vmax.f32 %v1449, %v1450
  %v1493 = vmax.f32 %v1451, %v1452
  %v1494 = vmax.f32 %v1453, %v1454
  %v1495 = vmax.f32 %v1455, %v1456
  %v1496 = vmax.f32 %v1457, %v1458
  %v1497 = vmax.f32 %v1459, %v1460
  %v1498 = vmax.f32 %v1461, %v1462
  %v1499 = vmax.f32 %v1463, %v1464
  %v1500 = vmax.f32 %v1465, %v1466
  %v1501 = vmax.f32 %v1467, %v1468
  %v1502 = vld [vmem:[%s2] sm:$0x1]
  %v1504 = vlaneseq
  %v1505 = vshrl.u32 %v1504, 7
  %v1506 = vsub.s32 0, %v1505
  %v1507 = vrot.slane %v1502, %v1506
  %v1509 = vadd.f32 %v1469, %v1507
  %v1510 = vadd.f32 %v1470, %v1507
  %v1511 = vadd.f32 %v1471, %v1507
  %v1512 = vadd.f32 %v1472, %v1507
  %v1513 = vadd.f32 %v1473, %v1507
  %v1514 = vadd.f32 %v1474, %v1507
  %v1515 = vadd.f32 %v1475, %v1507
  %v1516 = vadd.f32 %v1476, %v1507
  %v1517 = vadd.f32 %v1477, %v1507
  %v1518 = vadd.f32 %v1478, %v1507
  %v1519 = vadd.f32 %v1479, %v1507
  %v1520 = vadd.f32 %v1480, %v1507
  %v1521 = vadd.f32 %v1481, %v1507
  %v1522 = vadd.f32 %v1482, %v1507
  %v1523 = vadd.f32 %v1483, %v1507
  %v1524 = vadd.f32 %v1484, %v1507
  %v1525 = vadd.f32 %v1485, %v1507
  %v1526 = vadd.f32 %v1486, %v1507
  %v1527 = vadd.f32 %v1487, %v1507
  %v1528 = vadd.f32 %v1488, %v1507
  %v1529 = vadd.f32 %v1489, %v1507
  %v1530 = vadd.f32 %v1490, %v1507
  %v1531 = vadd.f32 %v1491, %v1507
  %v1532 = vadd.f32 %v1492, %v1507
  %v1533 = vadd.f32 %v1493, %v1507
  %v1534 = vadd.f32 %v1494, %v1507
  %v1535 = vadd.f32 %v1495, %v1507
  %v1536 = vadd.f32 %v1496, %v1507
  %v1537 = vadd.f32 %v1497, %v1507
  %v1538 = vadd.f32 %v1498, %v1507
  %v1539 = vadd.f32 %v1499, %v1507
  %v1540 = vadd.f32 %v1500, %v1507
  %v1541 = vadd.f32 %v1501, %v1507
  %v1542 = vmax.f32 %v1509, 0.0
  %v1543 = vmax.f32 %v1510, 0.0
  %v1544 = vmax.f32 %v1511, 0.0
  %v1545 = vmax.f32 %v1512, 0.0
  %v1546 = vmax.f32 %v1513, 0.0
  %v1547 = vmax.f32 %v1514, 0.0
  %v1548 = vmax.f32 %v1515, 0.0
  %v1549 = vmax.f32 %v1516, 0.0
  %v1550 = vmax.f32 %v1517, 0.0
  %v1551 = vmax.f32 %v1518, 0.0
  %v1552 = vmax.f32 %v1519, 0.0
  %v1553 = vmax.f32 %v1520, 0.0
  %v1554 = vmax.f32 %v1521, 0.0
  %v1555 = vmax.f32 %v1522, 0.0
  %v1556 = vmax.f32 %v1523, 0.0
  %v1557 = vmax.f32 %v1524, 0.0
  %v1558 = vmax.f32 %v1525, 0.0
  %v1559 = vmax.f32 %v1526, 0.0
  %v1560 = vmax.f32 %v1527, 0.0
  %v1561 = vmax.f32 %v1528, 0.0
  %v1562 = vmax.f32 %v1529, 0.0
  %v1563 = vmax.f32 %v1530, 0.0
  %v1564 = vmax.f32 %v1531, 0.0
  %v1565 = vmax.f32 %v1532, 0.0
  %v1566 = vmax.f32 %v1533, 0.0
  %v1567 = vmax.f32 %v1534, 0.0
  %v1568 = vmax.f32 %v1535, 0.0
  %v1569 = vmax.f32 %v1536, 0.0
  %v1570 = vmax.f32 %v1537, 0.0
  %v1571 = vmax.f32 %v1538, 0.0
  %v1572 = vmax.f32 %v1539, 0.0
  %v1573 = vmax.f32 %v1540, 0.0
  %v1574 = vmax.f32 %v1541, 0.0
  %1575 = vst [vmem:[#allocation8] sm:$0xff] %v1542
  %1576 = vst [vmem:[#allocation8 + $0x8] sm:$0xff] %v1543
  %1577 = vst [vmem:[#allocation8 + $0x10] sm:$0xff] %v1544
  %1578 = vst [vmem:[#allocation8 + $0x18] sm:$0xff] %v1545
  %1579 = vst [vmem:[#allocation8 + $0x20] sm:$0xff] %v1546
  %1580 = vst [vmem:[#allocation8 + $0x28] sm:$0xff] %v1547
  %1581 = vst [vmem:[#allocation8 + $0x30] sm:$0xff] %v1548
  %1582 = vst [vmem:[#allocation8 + $0x38] sm:$0xff] %v1549
  %1583 = vst [vmem:[#allocation8 + $0x40] sm:$0xff] %v1550
  %1584 = vst [vmem:[#allocation8 + $0x48] sm:$0xff] %v1551
  %1585 = vst [vmem:[#allocation8 + $0x50] sm:$0xff] %v1552
  %1586 = vst [vmem:[#allocation8 + $0x58] sm:$0xff] %v1553
  %1587 = vst [vmem:[#allocation8 + $0x60] sm:$0xff] %v1554
  %1588 = vst [vmem:[#allocation8 + $0x68] sm:$0xff] %v1555
  %1589 = vst [vmem:[#allocation8 + $0x70] sm:$0xff] %v1556
  %1590 = vst [vmem:[#allocation8 + $0x78] sm:$0xff] %v1557
  %1591 = vst [vmem:[#allocation8 + $0x80] sm:$0xff] %v1558
  %1592 = vst [vmem:[#allocation8 + $0x88] sm:$0xff] %v1559
  %1593 = vst [vmem:[#allocation8 + $0x90] sm:$0xff] %v1560
  %1594 = vst [vmem:[#allocation8 + $0x98] sm:$0xff] %v1561
  %1595 = vst [vmem:[#allocation8 + $0xa0] sm:$0xff] %v1562
  %1596 = vst [vmem:[#allocation8 + $0xa8] sm:$0xff] %v1563
  %1597 = vst [vmem:[#allocation8 + $0xb0] sm:$0xff] %v1564
  %1598 = vst [vmem:[#allocation8 + $0xb8] sm:$0xff] %v1565
  %1599 = vst [vmem:[#allocation8 + $0xc0] sm:$0xff] %v1566
  %1600 = vst [vmem:[#allocation8 + $0xc8] sm:$0xff] %v1567
  %1601 = vst [vmem:[#allocation8 + $0xd0] sm:$0xff] %v1568
  %1602 = vst [vmem:[#allocation8 + $0xd8] sm:$0xff] %v1569
  %1603 = vst [vmem:[#allocation8 + $0xe0] sm:$0xff] %v1570
  %1604 = vst [vmem:[#allocation8 + $0xe8] sm:$0xff] %v1571
  %1605 = vst [vmem:[#allocation8 + $0xf0] sm:$0xff] %v1572
  %1606 = vst [vmem:[#allocation8 + $0xf8] sm:$0xff] %v1573
  %1607 = vst [vmem:[#allocation8 + $0x100] sm:$0xff] %v1574
  %v1608 = vld [vmem:[#allocation8] ss:$2 sm:$0xff]
  %s1609 = scalar_lea.vmem [#allocation8], 16
  %v1610 = vld [vmem:[%s1609] ss:$2 sm:$0xff]
  %s1611 = scalar_lea.vmem [#allocation8], 1
  %v1612 = vld [vmem:[%s1611] ss:$2 sm:$0xff]
  %s1613 = scalar_lea.vmem [#allocation8], 17
  %v1614 = vld [vmem:[%s1613] ss:$2 sm:$0xff]
  %v1615 = vmax.f32 %v1608, %v1612
  %v1616 = vmax.f32 %v1610, %v1614
  %1617 = vst [vmem:[#allocation3 + $0x1] sm:$0xff] %v1615
  %1618 = vst [vmem:[#allocation3 + $0x9] sm:$0xff] %v1616
  %s1619 = scalar_lea.vmem [#allocation8], 33
  %v1620 = vld [vmem:[%s1619] ss:$2 sm:$0xff]
  %s1621 = scalar_lea.vmem [#allocation8], 49
  %v1622 = vld [vmem:[%s1621] ss:$2 sm:$0xff]
  %s1623 = scalar_lea.vmem [#allocation8], 34
  %v1624 = vld [vmem:[%s1623] ss:$2 sm:$0xff]
  %s1625 = scalar_lea.vmem [#allocation8], 50
  %v1626 = vld [vmem:[%s1625] ss:$2 sm:$0xff]
  %v1627 = vmax.f32 %v1620, %v1624
  %v1628 = vmax.f32 %v1622, %v1626
  %1629 = vst [vmem:[#allocation3 + $0x13] sm:$0xff] %v1627
  %1630 = vst [vmem:[#allocation3 + $0x1b] sm:$0xff] %v1628
  %s1631 = scalar_lea.vmem [#allocation8], 66
  %v1632 = vld [vmem:[%s1631] ss:$2 sm:$0xff]
  %s1633 = scalar_lea.vmem [#allocation8], 82
  %v1634 = vld [vmem:[%s1633] ss:$2 sm:$0xff]
  %s1635 = scalar_lea.vmem [#allocation8], 67
  %v1636 = vld [vmem:[%s1635] ss:$2 sm:$0xff]
  %s1637 = scalar_lea.vmem [#allocation8], 83
  %v1638 = vld [vmem:[%s1637] ss:$2 sm:$0xff]
  %v1639 = vmax.f32 %v1632, %v1636
  %v1640 = vmax.f32 %v1634, %v1638
  %1641 = vst [vmem:[#allocation3 + $0x25] sm:$0xff] %v1639
  %1642 = vst [vmem:[#allocation3 + $0x2d] sm:$0xff] %v1640
  %s1643 = scalar_lea.vmem [#allocation8], 99
  %v1644 = vld [vmem:[%s1643] ss:$2 sm:$0xff]
  %s1645 = scalar_lea.vmem [#allocation8], 115
  %v1646 = vld [vmem:[%s1645] ss:$2 sm:$0xff]
  %s1647 = scalar_lea.vmem [#allocation8], 100
  %v1648 = vld [vmem:[%s1647] ss:$2 sm:$0xff]
  %s1649 = scalar_lea.vmem [#allocation8], 116
  %v1650 = vld [vmem:[%s1649] ss:$2 sm:$0xff]
  %v1651 = vmax.f32 %v1644, %v1648
  %v1652 = vmax.f32 %v1646, %v1650
  %1653 = vst [vmem:[#allocation3 + $0x37] sm:$0xff] %v1651
  %1654 = vst [vmem:[#allocation3 + $0x3f] sm:$0xff] %v1652
  %s1655 = scalar_lea.vmem [#allocation8], 132
  %v1656 = vld [vmem:[%s1655] ss:$2 sm:$0xff]
  %s1657 = scalar_lea.vmem [#allocation8], 148
  %v1658 = vld [vmem:[%s1657] ss:$2 sm:$0xff]
  %s1659 = scalar_lea.vmem [#allocation8], 133
  %v1660 = vld [vmem:[%s1659] ss:$2 sm:$0xff]
  %s1661 = scalar_lea.vmem [#allocation8], 149
  %v1662 = vld [vmem:[%s1661] ss:$2 sm:$0xff]
  %v1663 = vmax.f32 %v1656, %v1660
  %v1664 = vmax.f32 %v1658, %v1662
  %1665 = vst [vmem:[#allocation3 + $0x49] sm:$0xff] %v1663
  %1666 = vst [vmem:[#allocation3 + $0x51] sm:$0xff] %v1664
  %s1667 = scalar_lea.vmem [#allocation8], 165
  %v1668 = vld [vmem:[%s1667] ss:$2 sm:$0xff]
  %s1669 = scalar_lea.vmem [#allocation8], 181
  %v1670 = vld [vmem:[%s1669] ss:$2 sm:$0xff]
  %s1671 = scalar_lea.vmem [#allocation8], 166
  %v1672 = vld [vmem:[%s1671] ss:$2 sm:$0xff]
  %s1673 = scalar_lea.vmem [#allocation8], 182
  %v1674 = vld [vmem:[%s1673] ss:$2 sm:$0xff]
  %v1675 = vmax.f32 %v1668, %v1672
  %v1676 = vmax.f32 %v1670, %v1674
  %1677 = vst [vmem:[#allocation3 + $0x5b] sm:$0xff] %v1675
  %1678 = vst [vmem:[#allocation3 + $0x63] sm:$0xff] %v1676
  %s1679 = scalar_lea.vmem [#allocation8], 198
  %v1680 = vld [vmem:[%s1679] ss:$2 sm:$0xff]
  %s1681 = scalar_lea.vmem [#allocation8], 214
  %v1682 = vld [vmem:[%s1681] ss:$2 sm:$0xff]
  %s1683 = scalar_lea.vmem [#allocation8], 199
  %v1684 = vld [vmem:[%s1683] ss:$2 sm:$0xff]
  %s1685 = scalar_lea.vmem [#allocation8], 215
  %v1686 = vld [vmem:[%s1685] ss:$2 sm:$0xff]
  %v1687 = vmax.f32 %v1680, %v1684
  %v1688 = vmax.f32 %v1682, %v1686
  %1689 = vst [vmem:[#allocation3 + $0x6d] sm:$0xff] %v1687
  %1690 = vst [vmem:[#allocation3 + $0x75] sm:$0xff] %v1688
  %s1691 = scalar_lea.vmem [#allocation8], 231
  %v1692 = vld [vmem:[%s1691] ss:$2 sm:$0xff]
  %s1693 = scalar_lea.vmem [#allocation8], 247
  %v1694 = vld [vmem:[%s1693] ss:$2 sm:$0xff]
  %s1695 = scalar_lea.vmem [#allocation8], 232
  %v1696 = vld [vmem:[%s1695] ss:$2 sm:$0xff]
  %s1697 = scalar_lea.vmem [#allocation8], 248
  %v1698 = vld [vmem:[%s1697] ss:$2 sm:$0xff]
  %v1699 = vmax.f32 %v1692, %v1696
  %v1700 = vmax.f32 %v1694, %v1698
  %1701 = vst [vmem:[#allocation3 + $0x7f] sm:$0xff] %v1699
  %1702 = vst [vmem:[#allocation3 + $0x87] sm:$0xff] %v1700
  %v1703 = vld [vmem:[#allocation3] sm:$0xff]
  %v1704 = vld [vmem:[#allocation3 + $0x8] sm:$0xff]
  %v1705 = vld [vmem:[#allocation3 + $0x10] sm:$0xff]
  %v1706 = vld [vmem:[#allocation3 + $0x18] sm:$0xff]
  %v1707 = vld [vmem:[#allocation3 + $0x20] sm:$0xff]
  %v1708 = vld [vmem:[#allocation3 + $0x28] sm:$0xff]
  %v1709 = vld [vmem:[#allocation3 + $0x30] sm:$0xff]
  %v1710 = vld [vmem:[#allocation3 + $0x38] sm:$0xff]
  %v1711 = vld [vmem:[#allocation3 + $0x40] sm:$0xff]
  %v1712 = vld [vmem:[#allocation3 + $0x48] sm:$0xff]
  %v1713 = vld [vmem:[#allocation3 + $0x50] sm:$0xff]
  %v1714 = vld [vmem:[#allocation3 + $0x58] sm:$0xff]
  %v1715 = vld [vmem:[#allocation3 + $0x60] sm:$0xff]
  %v1716 = vld [vmem:[#allocation3 + $0x68] sm:$0xff]
  %v1717 = vld [vmem:[#allocation3 + $0x70] sm:$0xff]
  %v1718 = vld [vmem:[#allocation3 + $0x78] sm:$0xff]
  %v1719 = vld [vmem:[#allocation3 + $0x80] sm:$0xff]
  %v1720 = vld [vmem:[#allocation3 + $0x88] sm:$0x3f]
  %v1721 = vpack.c.bf16 %v1704, %v1703
  %v1722 = vpack.c.bf16 %v1706, %v1705
  %v1723 = vpack.c.bf16 %v1708, %v1707
  %v1724 = vpack.c.bf16 %v1710, %v1709
  %v1725 = vpack.c.bf16 %v1712, %v1711
  %v1726 = vpack.c.bf16 %v1714, %v1713
  %v1727 = vpack.c.bf16 %v1716, %v1715
  %v1728 = vpack.c.bf16 %v1718, %v1717
  %v1729 = vpack.c.bf16 %v1720, %v1719
  %v1730 = vld [vmem:[%s3] sm:$0xff]
  %v1731 = vld [vmem:[%s3 + $0x8] sm:$0xff]
  %v1732 = vld [vmem:[%s3 + $0x10] sm:$0xff]
  %v1733 = vld [vmem:[%s3 + $0x18] sm:$0xff]
  %v1734 = vld [vmem:[%s3 + $0x20] sm:$0xff]
  %v1735 = vld [vmem:[%s3 + $0x28] sm:$0xff]
  %v1736 = vld [vmem:[%s3 + $0x30] sm:$0xff]
  %v1737 = vld [vmem:[%s3 + $0x38] sm:$0xff]
  %v1738 = vld [vmem:[%s3 + $0x40] sm:$0xff]
  %v1739 = vld [vmem:[%s3 + $0x48] sm:$0xff]
  %v1740 = vld [vmem:[%s3 + $0x50] sm:$0xff]
  %v1741 = vld [vmem:[%s3 + $0x58] sm:$0xff]
  %v1742 = vld [vmem:[%s3 + $0x60] sm:$0xff]
  %v1743 = vld [vmem:[%s3 + $0x68] sm:$0xff]
  %v1744 = vld [vmem:[%s3 + $0x70] sm:$0xff]
  %v1745 = vld [vmem:[%s3 + $0x78] sm:$0xff]
  %v1746 = vld [vmem:[#allocation3 + $0x1] sm:$0xff]
  %v1747 = vld [vmem:[#allocation3 + $0x9] sm:$0xff]
  %v1748 = vld [vmem:[#allocation3 + $0x11] sm:$0xff]
  %v1749 = vld [vmem:[#allocation3 + $0x19] sm:$0xff]
  %v1750 = vld [vmem:[#allocation3 + $0x21] sm:$0xff]
  %v1751 = vld [vmem:[#allocation3 + $0x29] sm:$0xff]
  %v1752 = vld [vmem:[#allocation3 + $0x31] sm:$0xff]
  %v1753 = vld [vmem:[#allocation3 + $0x39] sm:$0xff]
  %v1754 = vld [vmem:[#allocation3 + $0x41] sm:$0xff]
  %v1755 = vld [vmem:[#allocation3 + $0x49] sm:$0xff]
  %v1756 = vld [vmem:[#allocation3 + $0x51] sm:$0xff]
  %v1757 = vld [vmem:[#allocation3 + $0x59] sm:$0xff]
  %v1758 = vld [vmem:[#allocation3 + $0x61] sm:$0xff]
  %v1759 = vld [vmem:[#allocation3 + $0x69] sm:$0xff]
  %v1760 = vld [vmem:[#allocation3 + $0x71] sm:$0xff]
  %v1761 = vld [vmem:[#allocation3 + $0x79] sm:$0xff]
  %v1762 = vld [vmem:[#allocation3 + $0x81] sm:$0xff]
  %v1763 = vld [vmem:[#allocation3 + $0x89] sm:$0x3f]
  %v1764 = vpack.c.bf16 %v1747, %v1746
  %v1765 = vpack.c.bf16 %v1749, %v1748
  %v1766 = vpack.c.bf16 %v1751, %v1750
  %v1767 = vpack.c.bf16 %v1753, %v1752
  %v1768 = vpack.c.bf16 %v1755, %v1754
  %v1769 = vpack.c.bf16 %v1757, %v1756
  %v1770 = vpack.c.bf16 %v1759, %v1758
  %v1771 = vpack.c.bf16 %v1761, %v1760
  %v1772 = vpack.c.bf16 %v1763, %v1762
  %s1773 = scalar_lea.vmem %s3, 128
  %v1774 = vld [vmem:[%s1773] sm:$0xff]
  %v1775 = vld [vmem:[%s1773 + $0x8] sm:$0xff]
  %v1776 = vld [vmem:[%s1773 + $0x10] sm:$0xff]
  %v1777 = vld [vmem:[%s1773 + $0x18] sm:$0xff]
  %v1778 = vld [vmem:[%s1773 + $0x20] sm:$0xff]
  %v1779 = vld [vmem:[%s1773 + $0x28] sm:$0xff]
  %v1780 = vld [vmem:[%s1773 + $0x30] sm:$0xff]
  %v1781 = vld [vmem:[%s1773 + $0x38] sm:$0xff]
  %v1782 = vld [vmem:[%s1773 + $0x40] sm:$0xff]
  %v1783 = vld [vmem:[%s1773 + $0x48] sm:$0xff]
  %v1784 = vld [vmem:[%s1773 + $0x50] sm:$0xff]
  %v1785 = vld [vmem:[%s1773 + $0x58] sm:$0xff]
  %v1786 = vld [vmem:[%s1773 + $0x60] sm:$0xff]
  %v1787 = vld [vmem:[%s1773 + $0x68] sm:$0xff]
  %v1788 = vld [vmem:[%s1773 + $0x70] sm:$0xff]
  %v1789 = vld [vmem:[%s1773 + $0x78] sm:$0xff]
  %v1806 = vunpack.c.l.b16 %v1774
  %v1807 = vunpack.c.h.b16 %v1774
  %v1808 = vunpack.c.l.b16 %v1775
  %v1809 = vunpack.c.h.b16 %v1775
  %v1810 = vunpack.c.l.b16 %v1776
  %v1811 = vunpack.c.h.b16 %v1776
  %v1812 = vunpack.c.l.b16 %v1777
  %v1813 = vunpack.c.h.b16 %v1777
  %v1814 = vunpack.c.l.b16 %v1778
  %v1815 = vunpack.c.h.b16 %v1778
  %v1816 = vunpack.c.l.b16 %v1779
  %v1817 = vunpack.c.h.b16 %v1779
  %v1818 = vunpack.c.l.b16 %v1780
  %v1819 = vunpack.c.h.b16 %v1780
  %v1820 = vunpack.c.l.b16 %v1781
  %v1821 = vunpack.c.h.b16 %v1781
  %v1822 = vunpack.c.l.b16 %v1782
  %v1823 = vunpack.c.h.b16 %v1782
  %v1824 = vunpack.c.l.b16 %v1783
  %v1825 = vunpack.c.h.b16 %v1783
  %v1826 = vunpack.c.l.b16 %v1784
  %v1827 = vunpack.c.h.b16 %v1784
  %v1828 = vunpack.c.l.b16 %v1785
  %v1829 = vunpack.c.h.b16 %v1785
  %v1830 = vunpack.c.l.b16 %v1786
  %v1831 = vunpack.c.h.b16 %v1786
  %v1832 = vunpack.c.l.b16 %v1787
  %v1833 = vunpack.c.h.b16 %v1787
  %v1834 = vunpack.c.l.b16 %v1788
  %v1835 = vunpack.c.h.b16 %v1788
  %v1836 = vunpack.c.l.b16 %v1789
  %v1837 = vunpack.c.h.b16 %v1789
  %v1838 = vpack.c.b16 %v1808, %v1806
  %v1839 = vpack.c.b16 %v1809, %v1807
  %v1840 = vpack.c.b16 %v1812, %v1810
  %v1841 = vpack.c.b16 %v1813, %v1811
  %v1842 = vpack.c.b16 %v1816, %v1814
  %v1843 = vpack.c.b16 %v1817, %v1815
  %v1844 = vpack.c.b16 %v1820, %v1818
  %v1845 = vpack.c.b16 %v1821, %v1819
  %v1846 = vpack.c.b16 %v1824, %v1822
  %v1847 = vpack.c.b16 %v1825, %v1823
  %v1848 = vpack.c.b16 %v1828, %v1826
  %v1849 = vpack.c.b16 %v1829, %v1827
  %v1850 = vpack.c.b16 %v1832, %v1830
  %v1851 = vpack.c.b16 %v1833, %v1831
  %v1852 = vpack.c.b16 %v1836, %v1834
  %v1853 = vpack.c.b16 %v1837, %v1835
  %1870 = vmatprep.subr.bf16.mxu0 %v1839
  %1871 = vmatpush1.bf16.msra.mxu0 %v1838
  %1872 = vmatprep.subr.bf16.mxu0 %v1841
  %1873 = vmatpush1.bf16.msra.mxu0 %v1840
  %1874 = vmatprep.subr.bf16.mxu0 %v1843
  %1875 = vmatpush1.bf16.msra.mxu0 %v1842
  %1876 = vmatprep.subr.bf16.mxu0 %v1845
  %1877 = vmatpush1.bf16.msra.mxu0 %v1844
  %1878 = vmatprep.subr.bf16.mxu0 %v1847
  %1879 = vmatpush1.bf16.msra.mxu0 %v1846
  %1880 = vmatprep.subr.bf16.mxu0 %v1849
  %1881 = vmatpush1.bf16.msra.mxu0 %v1848
  %1882 = vmatprep.subr.bf16.mxu0 %v1851
  %1883 = vmatpush1.bf16.msra.mxu0 %v1850
  %1884 = vmatprep.subr.bf16.mxu0 %v1853
  %1885 = vmatpush1.bf16.msra.mxu0 %v1852
  %1886 = vmatprep.subr.bf16.mxu0 0
  %1887 = vmatpush1.bf16.msra.mxu0 0
  %1888 = vmatprep.subr.bf16.mxu0 0
  %1889 = vmatpush1.bf16.msra.mxu0 0
  %1890 = vmatprep.subr.bf16.mxu0 0
  %1891 = vmatpush1.bf16.msra.mxu0 0
  %1892 = vmatprep.subr.bf16.mxu0 0
  %1893 = vmatpush1.bf16.msra.mxu0 0
  %1894 = vmatprep.subr.bf16.mxu0 0
  %1895 = vmatpush1.bf16.msra.mxu0 0
  %1896 = vmatprep.subr.bf16.mxu0 0
  %1897 = vmatpush1.bf16.msra.mxu0 0
  %1898 = vmatprep.subr.bf16.mxu0 0
  %1899 = vmatpush1.bf16.msra.mxu0 0
  %1900 = vmatprep.subr.bf16.mxu0 0
  %1901 = vmatpush1.bf16.msra.mxu0 0
  %1902 = vmatprep.mubr.bf16.mxu0 0
  %1903 = vmatmul.mubr.bf16.gmra.mrb[0].mxu0 %v1764
  %v1904 = vpop.f32.mrb[0].mxu0
  %v1905 = vadd.f32 0.0, %v1904
  %v1906 = vpop.f32.mrb[0].mxu0
  %v1907 = vadd.f32 0.0, %v1906
  %v1908 = vpop.f32.mrb[0].mxu0
  %v1909 = vadd.f32 0.0, %v1908
  %v1910 = vpop.f32.mrb[0].mxu0
  %v1911 = vadd.f32 0.0, %v1910
  %1912 = vmatprep.mubr.bf16.mxu0 0
  %1913 = vmatmul.mubr.bf16.gmra.mrb[0].mxu0 %v1765
  %v1914 = vpop.f32.mrb[0].mxu0
  %v1915 = vadd.f32 0.0, %v1914
  %v1916 = vpop.f32.mrb[0].mxu0
  %v1917 = vadd.f32 0.0, %v1916
  %v1918 = vpop.f32.mrb[0].mxu0
  %v1919 = vadd.f32 0.0, %v1918
  %v1920 = vpop.f32.mrb[0].mxu0
  %v1921 = vadd.f32 0.0, %v1920
  %1922 = vmatprep.mubr.bf16.mxu0 0
  %1923 = vmatmul.mubr.bf16.gmra.mrb[0].mxu0 %v1766
  %v1924 = vpop.f32.mrb[0].mxu0
  %v1925 = vadd.f32 0.0, %v1924
  %v1926 = vpop.f32.mrb[0].mxu0
  %v1927 = vadd.f32 0.0, %v1926
  %v1928 = vpop.f32.mrb[0].mxu0
  %v1929 = vadd.f32 0.0, %v1928
  %v1930 = vpop.f32.mrb[0].mxu0
  %v1931 = vadd.f32 0.0, %v1930
  %1932 = vmatprep.mubr.bf16.mxu0 0
  %1933 = vmatmul.mubr.bf16.gmra.mrb[0].mxu0 %v1767
  %v1934 = vpop.f32.mrb[0].mxu0
  %v1935 = vadd.f32 0.0, %v1934
  %v1936 = vpop.f32.mrb[0].mxu0
  %v1937 = vadd.f32 0.0, %v1936
  %v1938 = vpop.f32.mrb[0].mxu0
  %v1939 = vadd.f32 0.0, %v1938
  %v1940 = vpop.f32.mrb[0].mxu0
  %v1941 = vadd.f32 0.0, %v1940
  %1942 = vmatprep.mubr.bf16.mxu0 0
  %1943 = vmatmul.mubr.bf16.gmra.mrb[0].mxu0 %v1768
  %v1944 = vpop.f32.mrb[0].mxu0
  %v1945 = vadd.f32 0.0, %v1944
  %v1946 = vpop.f32.mrb[0].mxu0
  %v1947 = vadd.f32 0.0, %v1946
  %v1948 = vpop.f32.mrb[0].mxu0
  %v1949 = vadd.f32 0.0, %v1948
  %v1950 = vpop.f32.mrb[0].mxu0
  %v1951 = vadd.f32 0.0, %v1950
  %1952 = vmatprep.mubr.bf16.mxu0 0
  %1953 = vmatmul.mubr.bf16.gmra.mrb[0].mxu0 %v1769
  %v1954 = vpop.f32.mrb[0].mxu0
  %v1955 = vadd.f32 0.0, %v1954
  %v1956 = vpop.f32.mrb[0].mxu0
  %v1957 = vadd.f32 0.0, %v1956
  %v1958 = vpop.f32.mrb[0].mxu0
  %v1959 = vadd.f32 0.0, %v1958
  %v1960 = vpop.f32.mrb[0].mxu0
  %v1961 = vadd.f32 0.0, %v1960
  %1962 = vmatprep.mubr.bf16.mxu0 0
  %1963 = vmatmul.mubr.bf16.gmra.mrb[0].mxu0 %v1770
  %v1964 = vpop.f32.mrb[0].mxu0
  %v1965 = vadd.f32 0.0, %v1964
  %v1966 = vpop.f32.mrb[0].mxu0
  %v1967 = vadd.f32 0.0, %v1966
  %v1968 = vpop.f32.mrb[0].mxu0
  %v1969 = vadd.f32 0.0, %v1968
  %v1970 = vpop.f32.mrb[0].mxu0
  %v1971 = vadd.f32 0.0, %v1970
  %1972 = vmatprep.mubr.bf16.mxu0 0
  %1973 = vmatmul.mubr.bf16.gmra.mrb[0].mxu0 %v1771
  %v1974 = vpop.f32.mrb[0].mxu0
  %v1975 = vadd.f32 0.0, %v1974
  %v1976 = vpop.f32.mrb[0].mxu0
  %v1977 = vadd.f32 0.0, %v1976
  %v1978 = vpop.f32.mrb[0].mxu0
  %v1979 = vadd.f32 0.0, %v1978
  %v1980 = vpop.f32.mrb[0].mxu0
  %v1981 = vadd.f32 0.0, %v1980
  %1982 = vmatprep.mubr.bf16.mxu0 0
  %1983 = vmatmul.mubr.bf16.gmra.mrb[0].mxu0 %v1772
  %v1984 = vpop.f32.mrb[0].mxu0
  %v1985 = vadd.f32 0.0, %v1984
  %v1986 = vpop.f32.mrb[0].mxu0
  %v1987 = vadd.f32 0.0, %v1986
  %v1988 = vpop.f32.mrb[0].mxu0
  %v1989 = vadd.f32 0.0, %v1988
  %v1990 = vpop.f32.mrb[0].mxu0
  %v1991 = vadd.f32 0.0, %v1990
  %1992 = vdwg.mxu0
  %v2009 = vunpack.c.l.b16 %v1730
  %v2010 = vunpack.c.h.b16 %v1730
  %v2011 = vunpack.c.l.b16 %v1731
  %v2012 = vunpack.c.h.b16 %v1731
  %v2013 = vunpack.c.l.b16 %v1732
  %v2014 = vunpack.c.h.b16 %v1732
  %v2015 = vunpack.c.l.b16 %v1733
  %v2016 = vunpack.c.h.b16 %v1733
  %v2017 = vunpack.c.l.b16 %v1734
  %v2018 = vunpack.c.h.b16 %v1734
  %v2019 = vunpack.c.l.b16 %v1735
  %v2020 = vunpack.c.h.b16 %v1735
  %v2021 = vunpack.c.l.b16 %v1736
  %v2022 = vunpack.c.h.b16 %v1736
  %v2023 = vunpack.c.l.b16 %v1737
  %v2024 = vunpack.c.h.b16 %v1737
  %v2025 = vunpack.c.l.b16 %v1738
  %v2026 = vunpack.c.h.b16 %v1738
  %v2027 = vunpack.c.l.b16 %v1739
  %v2028 = vunpack.c.h.b16 %v1739
  %v2029 = vunpack.c.l.b16 %v1740
  %v2030 = vunpack.c.h.b16 %v1740
  %v2031 = vunpack.c.l.b16 %v1741
  %v2032 = vunpack.c.h.b16 %v1741
  %v2033 = vunpack.c.l.b16 %v1742
  %v2034 = vunpack.c.h.b16 %v1742
  %v2035 = vunpack.c.l.b16 %v1743
  %v2036 = vunpack.c.h.b16 %v1743
  %v2037 = vunpack.c.l.b16 %v1744
  %v2038 = vunpack.c.h.b16 %v1744
  %v2039 = vunpack.c.l.b16 %v1745
  %v2040 = vunpack.c.h.b16 %v1745
  %v2041 = vpack.c.b16 %v2011, %v2009
  %v2042 = vpack.c.b16 %v2012, %v2010
  %v2043 = vpack.c.b16 %v2015, %v2013
  %v2044 = vpack.c.b16 %v2016, %v2014
  %v2045 = vpack.c.b16 %v2019, %v2017
  %v2046 = vpack.c.b16 %v2020, %v2018
  %v2047 = vpack.c.b16 %v2023, %v2021
  %v2048 = vpack.c.b16 %v2024, %v2022
  %v2049 = vpack.c.b16 %v2027, %v2025
  %v2050 = vpack.c.b16 %v2028, %v2026
  %v2051 = vpack.c.b16 %v2031, %v2029
  %v2052 = vpack.c.b16 %v2032, %v2030
  %v2053 = vpack.c.b16 %v2035, %v2033
  %v2054 = vpack.c.b16 %v2036, %v2034
  %v2055 = vpack.c.b16 %v2039, %v2037
  %v2056 = vpack.c.b16 %v2040, %v2038
  %2073 = vmatprep.subr.bf16.mxu0 %v2042
  %2074 = vmatpush1.bf16.msra.mxu0 %v2041
  %2075 = vmatprep.subr.bf16.mxu0 %v2044
  %2076 = vmatpush1.bf16.msra.mxu0 %v2043
  %2077 = vmatprep.subr.bf16.mxu0 %v2046
  %2078 = vmatpush1.bf16.msra.mxu0 %v2045
  %2079 = vmatprep.subr.bf16.mxu0 %v2048
  %2080 = vmatpush1.bf16.msra.mxu0 %v2047
  %2081 = vmatprep.subr.bf16.mxu0 %v2050
  %2082 = vmatpush1.bf16.msra.mxu0 %v2049
  %2083 = vmatprep.subr.bf16.mxu0 %v2052
  %2084 = vmatpush1.bf16.msra.mxu0 %v2051
  %2085 = vmatprep.subr.bf16.mxu0 %v2054
  %2086 = vmatpush1.bf16.msra.mxu0 %v2053
  %2087 = vmatprep.subr.bf16.mxu0 %v2056
  %2088 = vmatpush1.bf16.msra.mxu0 %v2055
  %2089 = vmatprep.subr.bf16.mxu0 0
  %2090 = vmatpush1.bf16.msra.mxu0 0
  %2091 = vmatprep.subr.bf16.mxu0 0
  %2092 = vmatpush1.bf16.msra.mxu0 0
  %2093 = vmatprep.subr.bf16.mxu0 0
  %2094 = vmatpush1.bf16.msra.mxu0 0
  %2095 = vmatprep.subr.bf16.mxu0 0
  %2096 = vmatpush1.bf16.msra.mxu0 0
  %2097 = vmatprep.subr.bf16.mxu0 0
  %2098 = vmatpush1.bf16.msra.mxu0 0
  %2099 = vmatprep.subr.bf16.mxu0 0
  %2100 = vmatpush1.bf16.msra.mxu0 0
  %2101 = vmatprep.subr.bf16.mxu0 0
  %2102 = vmatpush1.bf16.msra.mxu0 0
  %2103 = vmatprep.subr.bf16.mxu0 0
  %2104 = vmatpush1.bf16.msra.mxu0 0
  %2105 = vmatprep.mubr.bf16.mxu0 0
  %2106 = vmatmul.mubr.bf16.gmra.mrb[0].mxu0 %v1721
  %v2107 = vpop.f32.mrb[0].mxu0
  %v2108 = vadd.f32 %v1905, %v2107
  %v2109 = vpop.f32.mrb[0].mxu0
  %v2110 = vadd.f32 %v1907, %v2109
  %v2111 = vpop.f32.mrb[0].mxu0
  %v2112 = vadd.f32 %v1909, %v2111
  %v2113 = vpop.f32.mrb[0].mxu0
  %v2114 = vadd.f32 %v1911, %v2113
  %2115 = vmatprep.mubr.bf16.mxu0 0
  %2116 = vmatmul.mubr.bf16.gmra.mrb[0].mxu0 %v1722
  %v2117 = vpop.f32.mrb[0].mxu0
  %v2118 = vadd.f32 %v1915, %v2117
  %v2119 = vpop.f32.mrb[0].mxu0
  %v2120 = vadd.f32 %v1917, %v2119
  %v2121 = vpop.f32.mrb[0].mxu0
  %v2122 = vadd.f32 %v1919, %v2121
  %v2123 = vpop.f32.mrb[0].mxu0
  %v2124 = vadd.f32 %v1921, %v2123
  %2125 = vmatprep.mubr.bf16.mxu0 0
  %2126 = vmatmul.mubr.bf16.gmra.mrb[0].mxu0 %v1723
  %v2127 = vpop.f32.mrb[0].mxu0
  %v2128 = vadd.f32 %v1925, %v2127
  %v2129 = vpop.f32.mrb[0].mxu0
  %v2130 = vadd.f32 %v1927, %v2129
  %v2131 = vpop.f32.mrb[0].mxu0
  %v2132 = vadd.f32 %v1929, %v2131
  %v2133 = vpop.f32.mrb[0].mxu0
  %v2134 = vadd.f32 %v1931, %v2133
  %2135 = vmatprep.mubr.bf16.mxu0 0
  %2136 = vmatmul.mubr.bf16.gmra.mrb[0].mxu0 %v1724
  %v2137 = vpop.f32.mrb[0].mxu0
  %v2138 = vadd.f32 %v1935, %v2137
  %v2139 = vpop.f32.mrb[0].mxu0
  %v2140 = vadd.f32 %v1937, %v2139
  %v2141 = vpop.f32.mrb[0].mxu0
  %v2142 = vadd.f32 %v1939, %v2141
  %v2143 = vpop.f32.mrb[0].mxu0
  %v2144 = vadd.f32 %v1941, %v2143
  %2145 = vmatprep.mubr.bf16.mxu0 0
  %2146 = vmatmul.mubr.bf16.gmra.mrb[0].mxu0 %v1725
  %v2147 = vpop.f32.mrb[0].mxu0
  %v2148 = vadd.f32 %v1945, %v2147
  %v2149 = vpop.f32.mrb[0].mxu0
  %v2150 = vadd.f32 %v1947, %v2149
  %v2151 = vpop.f32.mrb[0].mxu0
  %v2152 = vadd.f32 %v1949, %v2151
  %v2153 = vpop.f32.mrb[0].mxu0
  %v2154 = vadd.f32 %v1951, %v2153
  %2155 = vmatprep.mubr.bf16.mxu0 0
  %2156 = vmatmul.mubr.bf16.gmra.mrb[0].mxu0 %v1726
  %v2157 = vpop.f32.mrb[0].mxu0
  %v2158 = vadd.f32 %v1955, %v2157
  %v2159 = vpop.f32.mrb[0].mxu0
  %v2160 = vadd.f32 %v1957, %v2159
  %v2161 = vpop.f32.mrb[0].mxu0
  %v2162 = vadd.f32 %v1959, %v2161
  %v2163 = vpop.f32.mrb[0].mxu0
  %v2164 = vadd.f32 %v1961, %v2163
  %2165 = vmatprep.mubr.bf16.mxu0 0
  %2166 = vmatmul.mubr.bf16.gmra.mrb[0].mxu0 %v1727
  %v2167 = vpop.f32.mrb[0].mxu0
  %v2168 = vadd.f32 %v1965, %v2167
  %v2169 = vpop.f32.mrb[0].mxu0
  %v2170 = vadd.f32 %v1967, %v2169
  %v2171 = vpop.f32.mrb[0].mxu0
  %v2172 = vadd.f32 %v1969, %v2171
  %v2173 = vpop.f32.mrb[0].mxu0
  %v2174 = vadd.f32 %v1971, %v2173
  %2175 = vmatprep.mubr.bf16.mxu0 0
  %2176 = vmatmul.mubr.bf16.gmra.mrb[0].mxu0 %v1728
  %v2177 = vpop.f32.mrb[0].mxu0
  %v2178 = vadd.f32 %v1975, %v2177
  %v2179 = vpop.f32.mrb[0].mxu0
  %v2180 = vadd.f32 %v1977, %v2179
  %v2181 = vpop.f32.mrb[0].mxu0
  %v2182 = vadd.f32 %v1979, %v2181
  %v2183 = vpop.f32.mrb[0].mxu0
  %v2184 = vadd.f32 %v1981, %v2183
  %2185 = vmatprep.mubr.bf16.mxu0 0
  %2186 = vmatmul.mubr.bf16.gmra.mrb[0].mxu0 %v1729
  %v2187 = vpop.f32.mrb[0].mxu0
  %v2188 = vadd.f32 %v1985, %v2187
  %v2189 = vpop.f32.mrb[0].mxu0
  %v2190 = vadd.f32 %v1987, %v2189
  %v2191 = vpop.f32.mrb[0].mxu0
  %v2192 = vadd.f32 %v1989, %v2191
  %v2193 = vpop.f32.mrb[0].mxu0
  %v2194 = vadd.f32 %v1991, %v2193
  %2195 = vdwg.mxu0
  %v2196 = vld [vmem:[#allocation3 + $0x2] sm:$0xff]
  %v2197 = vld [vmem:[#allocation3 + $0xa] sm:$0xff]
  %v2198 = vld [vmem:[#allocation3 + $0x12] sm:$0xff]
  %v2199 = vld [vmem:[#allocation3 + $0x1a] sm:$0xff]
  %v2200 = vld [vmem:[#allocation3 + $0x22] sm:$0xff]
  %v2201 = vld [vmem:[#allocation3 + $0x2a] sm:$0xff]
  %v2202 = vld [vmem:[#allocation3 + $0x32] sm:$0xff]
  %v2203 = vld [vmem:[#allocation3 + $0x3a] sm:$0xff]
  %v2204 = vld [vmem:[#allocation3 + $0x42] sm:$0xff]
  %v2205 = vld [vmem:[#allocation3 + $0x4a] sm:$0xff]
  %v2206 = vld [vmem:[#allocation3 + $0x52] sm:$0xff]
  %v2207 = vld [vmem:[#allocation3 + $0x5a] sm:$0xff]
  %v2208 = vld [vmem:[#allocation3 + $0x62] sm:$0xff]
  %v2209 = vld [vmem:[#allocation3 + $0x6a] sm:$0xff]
  %v2210 = vld [vmem:[#allocation3 + $0x72] sm:$0xff]
  %v2211 = vld [vmem:[#allocation3 + $0x7a] sm:$0xff]
  %v2212 = vld [vmem:[#allocation3 + $0x82] sm:$0xff]
  %v2213 = vld [vmem:[#allocation3 + $0x8a] sm:$0x3f]
  %v2214 = vpack.c.bf16 %v2197, %v2196
  %v2215 = vpack.c.bf16 %v2199, %v2198
  %v2216 = vpack.c.bf16 %v2201, %v2200
  %v2217 = vpack.c.bf16 %v2203, %v2202
  %v2218 = vpack.c.bf16 %v2205, %v2204
  %v2219 = vpack.c.bf16 %v2207, %v2206
  %v2220 = vpack.c.bf16 %v2209, %v2208
  %v2221 = vpack.c.bf16 %v2211, %v2210
  %v2222 = vpack.c.bf16 %v2213, %v2212
  %s2223 = scalar_lea.vmem %s3, 256
  %v2224 = vld [vmem:[%s2223] sm:$0xff]
  %v2225 = vld [vmem:[%s2223 + $0x8] sm:$0xff]
  %v2226 = vld [vmem:[%s2223 + $0x10] sm:$0xff]
  %v2227 = vld [vmem:[%s2223 + $0x18] sm:$0xff]
  %v2228 = vld [vmem:[%s2223 + $0x20] sm:$0xff]
  %v2229 = vld [vmem:[%s2223 + $0x28] sm:$0xff]
  %v2230 = vld [vmem:[%s2223 + $0x30] sm:$0xff]
  %v2231 = vld [vmem:[%s2223 + $0x38] sm:$0xff]
  %v2232 = vld [vmem:[%s2223 + $0x40] sm:$0xff]
  %v2233 = vld [vmem:[%s2223 + $0x48] sm:$0xff]
  %v2234 = vld [vmem:[%s2223 + $0x50] sm:$0xff]
  %v2235 = vld [vmem:[%s2223 + $0x58] sm:$0xff]
  %v2236 = vld [vmem:[%s2223 + $0x60] sm:$0xff]
  %v2237 = vld [vmem:[%s2223 + $0x68] sm:$0xff]
  %v2238 = vld [vmem:[%s2223 + $0x70] sm:$0xff]
  %v2239 = vld [vmem:[%s2223 + $0x78] sm:$0xff]
  %v2256 = vunpack.c.l.b16 %v2224
  %v2257 = vunpack.c.h.b16 %v2224
  %v2258 = vunpack.c.l.b16 %v2225
  %v2259 = vunpack.c.h.b16 %v2225
  %v2260 = vunpack.c.l.b16 %v2226
  %v2261 = vunpack.c.h.b16 %v2226
  %v2262 = vunpack.c.l.b16 %v2227
  %v2263 = vunpack.c.h.b16 %v2227
  %v2264 = vunpack.c.l.b16 %v2228
  %v2265 = vunpack.c.h.b16 %v2228
  %v2266 = vunpack.c.l.b16 %v2229
  %v2267 = vunpack.c.h.b16 %v2229
  %v2268 = vunpack.c.l.b16 %v2230
  %v2269 = vunpack.c.h.b16 %v2230
  %v2270 = vunpack.c.l.b16 %v2231
  %v2271 = vunpack.c.h.b16 %v2231
  %v2272 = vunpack.c.l.b16 %v2232
  %v2273 = vunpack.c.h.b16 %v2232
  %v2274 = vunpack.c.l.b16 %v2233
  %v2275 = vunpack.c.h.b16 %v2233
  %v2276 = vunpack.c.l.b16 %v2234
  %v2277 = vunpack.c.h.b16 %v2234
  %v2278 = vunpack.c.l.b16 %v2235
  %v2279 = vunpack.c.h.b16 %v2235
  %v2280 = vunpack.c.l.b16 %v2236
  %v2281 = vunpack.c.h.b16 %v2236
  %v2282 = vunpack.c.l.b16 %v2237
  %v2283 = vunpack.c.h.b16 %v2237
  %v2284 = vunpack.c.l.b16 %v2238
  %v2285 = vunpack.c.h.b16 %v2238
  %v2286 = vunpack.c.l.b16 %v2239
  %v2287 = vunpack.c.h.b16 %v2239
  %v2288 = vpack.c.b16 %v2258, %v2256
  %v2289 = vpack.c.b16 %v2259, %v2257
  %v2290 = vpack.c.b16 %v2262, %v2260
  %v2291 = vpack.c.b16 %v2263, %v2261
  %v2292 = vpack.c.b16 %v2266, %v2264
  %v2293 = vpack.c.b16 %v2267, %v2265
  %v2294 = vpack.c.b16 %v2270, %v2268
  %v2295 = vpack.c.b16 %v2271, %v2269
  %v2296 = vpack.c.b16 %v2274, %v2272
  %v2297 = vpack.c.b16 %v2275, %v2273
  %v2298 = vpack.c.b16 %v2278, %v2276
  %v2299 = vpack.c.b16 %v2279, %v2277
  %v2300 = vpack.c.b16 %v2282, %v2280
  %v2301 = vpack.c.b16 %v2283, %v2281
  %v2302 = vpack.c.b16 %v2286, %v2284
  %v2303 = vpack.c.b16 %v2287, %v2285
  %2320 = vmatprep.subr.bf16.mxu0 %v2289
  %2321 = vmatpush1.bf16.msra.mxu0 %v2288
  %2322 = vmatprep.subr.bf16.mxu0 %v2291
  %2323 = vmatpush1.bf16.msra.mxu0 %v2290
  %2324 = vmatprep.subr.bf16.mxu0 %v2293
  %2325 = vmatpush1.bf16.msra.mxu0 %v2292
  %2326 = vmatprep.subr.bf16.mxu0 %v2295
  %2327 = vmatpush1.bf16.msra.mxu0 %v2294
  %2328 = vmatprep.subr.bf16.mxu0 %v2297
  %2329 = vmatpush1.bf16.msra.mxu0 %v2296
  %2330 = vmatprep.subr.bf16.mxu0 %v2299
  %2331 = vmatpush1.bf16.msra.mxu0 %v2298
  %2332 = vmatprep.subr.bf16.mxu0 %v2301
  %2333 = vmatpush1.bf16.msra.mxu0 %v2300
  %2334 = vmatprep.subr.bf16.mxu0 %v2303
  %2335 = vmatpush1.bf16.msra.mxu0 %v2302
  %2336 = vmatprep.subr.bf16.mxu0 0
  %2337 = vmatpush1.bf16.msra.mxu0 0
  %2338 = vmatprep.subr.bf16.mxu0 0
  %2339 = vmatpush1.bf16.msra.mxu0 0
  %2340 = vmatprep.subr.bf16.mxu0 0
  %2341 = vmatpush1.bf16.msra.mxu0 0
  %2342 = vmatprep.subr.bf16.mxu0 0
  %2343 = vmatpush1.bf16.msra.mxu0 0
  %2344 = vmatprep.subr.bf16.mxu0 0
  %2345 = vmatpush1.bf16.msra.mxu0 0
  %2346 = vmatprep.subr.bf16.mxu0 0
  %2347 = vmatpush1.bf16.msra.mxu0 0
  %2348 = vmatprep.subr.bf16.mxu0 0
  %2349 = vmatpush1.bf16.msra.mxu0 0
  %2350 = vmatprep.subr.bf16.mxu0 0
  %2351 = vmatpush1.bf16.msra.mxu0 0
  %2352 = vmatprep.mubr.bf16.mxu0 0
  %2353 = vmatmul.mubr.bf16.gmra.mrb[0].mxu0 %v2214
  %v2354 = vpop.f32.mrb[0].mxu0
  %v2355 = vadd.f32 0.0, %v2354
  %v2356 = vpop.f32.mrb[0].mxu0
  %v2357 = vadd.f32 0.0, %v2356
  %v2358 = vpop.f32.mrb[0].mxu0
  %v2359 = vadd.f32 0.0, %v2358
  %v2360 = vpop.f32.mrb[0].mxu0
  %v2361 = vadd.f32 0.0, %v2360
  %2362 = vmatprep.mubr.bf16.mxu0 0
  %2363 = vmatmul.mubr.bf16.gmra.mrb[0].mxu0 %v2215
  %v2364 = vpop.f32.mrb[0].mxu0
  %v2365 = vadd.f32 0.0, %v2364
  %v2366 = vpop.f32.mrb[0].mxu0
  %v2367 = vadd.f32 0.0, %v2366
  %v2368 = vpop.f32.mrb[0].mxu0
  %v2369 = vadd.f32 0.0, %v2368
  %v2370 = vpop.f32.mrb[0].mxu0
  %v2371 = vadd.f32 0.0, %v2370
  %2372 = vmatprep.mubr.bf16.mxu0 0
  %2373 = vmatmul.mubr.bf16.gmra.mrb[0].mxu0 %v2216
  %v2374 = vpop.f32.mrb[0].mxu0
  %v2375 = vadd.f32 0.0, %v2374
  %v2376 = vpop.f32.mrb[0].mxu0
  %v2377 = vadd.f32 0.0, %v2376
  %v2378 = vpop.f32.mrb[0].mxu0
  %v2379 = vadd.f32 0.0, %v2378
  %v2380 = vpop.f32.mrb[0].mxu0
  %v2381 = vadd.f32 0.0, %v2380
  %2382 = vmatprep.mubr.bf16.mxu0 0
  %2383 = vmatmul.mubr.bf16.gmra.mrb[0].mxu0 %v2217
  %v2384 = vpop.f32.mrb[0].mxu0
  %v2385 = vadd.f32 0.0, %v2384
  %v2386 = vpop.f32.mrb[0].mxu0
  %v2387 = vadd.f32 0.0, %v2386
  %v2388 = vpop.f32.mrb[0].mxu0
  %v2389 = vadd.f32 0.0, %v2388
  %v2390 = vpop.f32.mrb[0].mxu0
  %v2391 = vadd.f32 0.0, %v2390
  %2392 = vmatprep.mubr.bf16.mxu0 0
  %2393 = vmatmul.mubr.bf16.gmra.mrb[0].mxu0 %v2218
  %v2394 = vpop.f32.mrb[0].mxu0
  %v2395 = vadd.f32 0.0, %v2394
  %v2396 = vpop.f32.mrb[0].mxu0
  %v2397 = vadd.f32 0.0, %v2396
  %v2398 = vpop.f32.mrb[0].mxu0
  %v2399 = vadd.f32 0.0, %v2398
  %v2400 = vpop.f32.mrb[0].mxu0
  %v2401 = vadd.f32 0.0, %v2400
  %2402 = vmatprep.mubr.bf16.mxu0 0
  %2403 = vmatmul.mubr.bf16.gmra.mrb[0].mxu0 %v2219
  %v2404 = vpop.f32.mrb[0].mxu0
  %v2405 = vadd.f32 0.0, %v2404
  %v2406 = vpop.f32.mrb[0].mxu0
  %v2407 = vadd.f32 0.0, %v2406
  %v2408 = vpop.f32.mrb[0].mxu0
  %v2409 = vadd.f32 0.0, %v2408
  %v2410 = vpop.f32.mrb[0].mxu0
  %v2411 = vadd.f32 0.0, %v2410
  %2412 = vmatprep.mubr.bf16.mxu0 0
  %2413 = vmatmul.mubr.bf16.gmra.mrb[0].mxu0 %v2220
  %v2414 = vpop.f32.mrb[0].mxu0
  %v2415 = vadd.f32 0.0, %v2414
  %v2416 = vpop.f32.mrb[0].mxu0
  %v2417 = vadd.f32 0.0, %v2416
  %v2418 = vpop.f32.mrb[0].mxu0
  %v2419 = vadd.f32 0.0, %v2418
  %v2420 = vpop.f32.mrb[0].mxu0
  %v2421 = vadd.f32 0.0, %v2420
  %2422 = vmatprep.mubr.bf16.mxu0 0
  %2423 = vmatmul.mubr.bf16.gmra.mrb[0].mxu0 %v2221
  %v2424 = vpop.f32.mrb[0].mxu0
  %v2425 = vadd.f32 0.0, %v2424
  %v2426 = vpop.f32.mrb[0].mxu0
  %v2427 = vadd.f32 0.0, %v2426
  %v2428 = vpop.f32.mrb[0].mxu0
  %v2429 = vadd.f32 0.0, %v2428
  %v2430 = vpop.f32.mrb[0].mxu0
  %v2431 = vadd.f32 0.0, %v2430
  %2432 = vmatprep.mubr.bf16.mxu0 0
  %2433 = vmatmul.mubr.bf16.gmra.mrb[0].mxu0 %v2222
  %v2434 = vpop.f32.mrb[0].mxu0
  %v2435 = vadd.f32 0.0, %v2434
  %v2436 = vpop.f32.mrb[0].mxu0
  %v2437 = vadd.f32 0.0, %v2436
  %v2438 = vpop.f32.mrb[0].mxu0
  %v2439 = vadd.f32 0.0, %v2438
  %v2440 = vpop.f32.mrb[0].mxu0
  %v2441 = vadd.f32 0.0, %v2440
  %2442 = vdwg.mxu0
  %v2443 = vadd.f32 %v2108, %v2355
  %v2444 = vadd.f32 %v2110, %v2357
  %v2445 = vadd.f32 %v2112, %v2359
  %v2446 = vadd.f32 %v2114, %v2361
  %v2447 = vadd.f32 %v2118, %v2365
  %v2448 = vadd.f32 %v2120, %v2367
  %v2449 = vadd.f32 %v2122, %v2369
  %v2450 = vadd.f32 %v2124, %v2371
  %v2451 = vadd.f32 %v2128, %v2375
  %v2452 = vadd.f32 %v2130, %v2377
  %v2453 = vadd.f32 %v2132, %v2379
  %v2454 = vadd.f32 %v2134, %v2381
  %v2455 = vadd.f32 %v2138, %v2385
  %v2456 = vadd.f32 %v2140, %v2387
  %v2457 = vadd.f32 %v2142, %v2389
  %v2458 = vadd.f32 %v2144, %v2391
  %v2459 = vadd.f32 %v2148, %v2395
  %v2460 = vadd.f32 %v2150, %v2397
  %v2461 = vadd.f32 %v2152, %v2399
  %v2462 = vadd.f32 %v2154, %v2401
  %v2463 = vadd.f32 %v2158, %v2405
  %v2464 = vadd.f32 %v2160, %v2407
  %v2465 = vadd.f32 %v2162, %v2409
  %v2466 = vadd.f32 %v2164, %v2411
  %v2467 = vadd.f32 %v2168, %v2415
  %v2468 = vadd.f32 %v2170, %v2417
  %v2469 = vadd.f32 %v2172, %v2419
  %v2470 = vadd.f32 %v2174, %v2421
  %v2471 = vadd.f32 %v2178, %v2425
  %v2472 = vadd.f32 %v2180, %v2427
  %v2473 = vadd.f32 %v2182, %v2429
  %v2474 = vadd.f32 %v2184, %v2431
  %v2475 = vadd.f32 %v2188, %v2435
  %v2476 = vadd.f32 %v2190, %v2437
  %v2477 = vadd.f32 %v2192, %v2439
  %v2478 = vadd.f32 %v2194, %v2441
  %v2479 = vmax.f32 %v2443, %v2444
  %v2480 = vmax.f32 %v2445, %v2446
  %v2481 = vmax.f32 %v2447, %v2448
  %v2482 = vmax.f32 %v2449, %v2450
  %v2483 = vmax.f32 %v2451, %v2452
  %v2484 = vmax.f32 %v2453, %v2454
  %v2485 = vmax.f32 %v2455, %v2456
  %v2486 = vmax.f32 %v2457, %v2458
  %v2487 = vmax.f32 %v2459, %v2460
  %v2488 = vmax.f32 %v2461, %v2462
  %v2489 = vmax.f32 %v2463, %v2464
  %v2490 = vmax.f32 %v2465, %v2466
  %v2491 = vmax.f32 %v2467, %v2468
  %v2492 = vmax.f32 %v2469, %v2470
  %v2493 = vmax.f32 %v2471, %v2472
  %v2494 = vmax.f32 %v2473, %v2474
  %v2495 = vmax.f32 %v2475, %v2476
  %v2496 = vmax.f32 %v2477, %v2478
  %v2497 = vld [vmem:[%s4] sm:$0x1]
  %v2499 = vlaneseq
  %v2500 = vshrl.u32 %v2499, 7
  %v2501 = vsub.s32 0, %v2500
  %v2502 = vrot.slane %v2497, %v2501
  %v2504 = vadd.f32 %v2479, %v2502
  %v2505 = vadd.f32 %v2480, %v2502
  %v2506 = vadd.f32 %v2481, %v2502
  %v2507 = vadd.f32 %v2482, %v2502
  %v2508 = vadd.f32 %v2483, %v2502
  %v2509 = vadd.f32 %v2484, %v2502
  %v2510 = vadd.f32 %v2485, %v2502
  %v2511 = vadd.f32 %v2486, %v2502
  %v2512 = vadd.f32 %v2487, %v2502
  %v2513 = vadd.f32 %v2488, %v2502
  %v2514 = vadd.f32 %v2489, %v2502
  %v2515 = vadd.f32 %v2490, %v2502
  %v2516 = vadd.f32 %v2491, %v2502
  %v2517 = vadd.f32 %v2492, %v2502
  %v2518 = vadd.f32 %v2493, %v2502
  %v2519 = vadd.f32 %v2494, %v2502
  %v2520 = vadd.f32 %v2495, %v2502
  %v2521 = vadd.f32 %v2496, %v2502
  %v2522 = vmax.f32 %v2504, 0.0
  %v2523 = vmax.f32 %v2505, 0.0
  %v2524 = vmax.f32 %v2506, 0.0
  %v2525 = vmax.f32 %v2507, 0.0
  %v2526 = vmax.f32 %v2508, 0.0
  %v2527 = vmax.f32 %v2509, 0.0
  %v2528 = vmax.f32 %v2510, 0.0
  %v2529 = vmax.f32 %v2511, 0.0
  %v2530 = vmax.f32 %v2512, 0.0
  %v2531 = vmax.f32 %v2513, 0.0
  %v2532 = vmax.f32 %v2514, 0.0
  %v2533 = vmax.f32 %v2515, 0.0
  %v2534 = vmax.f32 %v2516, 0.0
  %v2535 = vmax.f32 %v2517, 0.0
  %v2536 = vmax.f32 %v2518, 0.0
  %v2537 = vmax.f32 %v2519, 0.0
  %v2538 = vmax.f32 %v2520, 0.0
  %v2539 = vmax.f32 %v2521, 0.0
  %2540 = vst [vmem:[#allocation8] sm:$0xff] %v2522
  %2541 = vst [vmem:[#allocation8 + $0x8] sm:$0xff] %v2523
  %2542 = vst [vmem:[#allocation8 + $0x10] sm:$0xff] %v2524
  %2543 = vst [vmem:[#allocation8 + $0x18] sm:$0xff] %v2525
  %2544 = vst [vmem:[#allocation8 + $0x20] sm:$0xff] %v2526
  %2545 = vst [vmem:[#allocation8 + $0x28] sm:$0xff] %v2527
  %2546 = vst [vmem:[#allocation8 + $0x30] sm:$0xff] %v2528
  %2547 = vst [vmem:[#allocation8 + $0x38] sm:$0xff] %v2529
  %2548 = vst [vmem:[#allocation8 + $0x40] sm:$0xff] %v2530
  %2549 = vst [vmem:[#allocation8 + $0x48] sm:$0xff] %v2531
  %2550 = vst [vmem:[#allocation8 + $0x50] sm:$0xff] %v2532
  %2551 = vst [vmem:[#allocation8 + $0x58] sm:$0xff] %v2533
  %2552 = vst [vmem:[#allocation8 + $0x60] sm:$0xff] %v2534
  %2553 = vst [vmem:[#allocation8 + $0x68] sm:$0xff] %v2535
  %2554 = vst [vmem:[#allocation8 + $0x70] sm:$0xff] %v2536
  %2555 = vst [vmem:[#allocation8 + $0x78] sm:$0xff] %v2537
  %2556 = vst [vmem:[#allocation8 + $0x80] sm:$0xff] %v2538
  %2557 = vst [vmem:[#allocation8 + $0x88] sm:$0x3f] %v2539
  %v2558 = vld [vmem:[#allocation8] ss:$2 sm:$0xff]
  %v2559 = vld [vmem:[%s1611] ss:$2 sm:$0xff]
  %v2560 = vmax.f32 %v2558, %v2559
  %2561 = vst [vmem:[#allocation4 + $0x1] sm:$0xff] %v2560
  %s2562 = scalar_lea.vmem [#allocation8], 18
  %v2563 = vld [vmem:[%s2562] ss:$2 sm:$0xff]
  %s2564 = scalar_lea.vmem [#allocation8], 19
  %v2565 = vld [vmem:[%s2564] ss:$2 sm:$0xff]
  %v2566 = vmax.f32 %v2563, %v2565
  %2567 = vst [vmem:[#allocation4 + $0xb] sm:$0xff] %v2566
  %s2568 = scalar_lea.vmem [#allocation8], 36
  %v2569 = vld [vmem:[%s2568] ss:$2 sm:$0xff]
  %s2570 = scalar_lea.vmem [#allocation8], 37
  %v2571 = vld [vmem:[%s2570] ss:$2 sm:$0xff]
  %v2572 = vmax.f32 %v2569, %v2571
  %2573 = vst [vmem:[#allocation4 + $0x15] sm:$0xff] %v2572
  %s2574 = scalar_lea.vmem [#allocation8], 54
  %v2575 = vld [vmem:[%s2574] ss:$2 sm:$0xff]
  %s2576 = scalar_lea.vmem [#allocation8], 55
  %v2577 = vld [vmem:[%s2576] ss:$2 sm:$0xff]
  %v2578 = vmax.f32 %v2575, %v2577
  %2579 = vst [vmem:[#allocation4 + $0x1f] sm:$0xff] %v2578
  %s2580 = scalar_lea.vmem [#allocation8], 72
  %v2581 = vld [vmem:[%s2580] ss:$2 sm:$0xff]
  %s2582 = scalar_lea.vmem [#allocation8], 73
  %v2583 = vld [vmem:[%s2582] ss:$2 sm:$0xff]
  %v2584 = vmax.f32 %v2581, %v2583
  %2585 = vst [vmem:[#allocation4 + $0x29] sm:$0xff] %v2584
  %s2586 = scalar_lea.vmem [#allocation8], 90
  %v2587 = vld [vmem:[%s2586] ss:$2 sm:$0xff]
  %s2588 = scalar_lea.vmem [#allocation8], 91
  %v2589 = vld [vmem:[%s2588] ss:$2 sm:$0xff]
  %v2590 = vmax.f32 %v2587, %v2589
  %2591 = vst [vmem:[#allocation4 + $0x33] sm:$0xff] %v2590
  %s2592 = scalar_lea.vmem [#allocation8], 108
  %v2593 = vld [vmem:[%s2592] ss:$2 sm:$0xff]
  %s2594 = scalar_lea.vmem [#allocation8], 109
  %v2595 = vld [vmem:[%s2594] ss:$2 sm:$0xff]
  %v2596 = vmax.f32 %v2593, %v2595
  %2597 = vst [vmem:[#allocation4 + $0x3d] sm:$0xff] %v2596
  %s2598 = scalar_lea.vmem [#allocation8], 126
  %v2599 = vld [vmem:[%s2598] ss:$2 sm:$0xff]
  %s2600 = scalar_lea.vmem [#allocation8], 127
  %v2601 = vld [vmem:[%s2600] ss:$2 sm:$0xff]
  %v2602 = vmax.f32 %v2599, %v2601
  %2603 = vst [vmem:[#allocation4 + $0x47] sm:$0xff] %v2602
  %v2604 = vld [vmem:[#allocation4] sm:$0xff]
  %v2605 = vld [vmem:[#allocation4 + $0x8] sm:$0xff]
  %v2606 = vld [vmem:[#allocation4 + $0x10] sm:$0xff]
  %v2607 = vld [vmem:[#allocation4 + $0x18] sm:$0xff]
  %v2608 = vld [vmem:[#allocation4 + $0x20] sm:$0xff]
  %v2609 = vld [vmem:[#allocation4 + $0x28] sm:$0xff]
  %v2610 = vld [vmem:[#allocation4 + $0x30] sm:$0xff]
  %v2611 = vld [vmem:[#allocation4 + $0x38] sm:$0xff]
  %v2612 = vld [vmem:[#allocation4 + $0x40] sm:$0xff]
  %v2613 = vld [vmem:[#allocation4 + $0x48] sm:$0x3f]
  %v2614 = vpack.c.bf16 %v2605, %v2604
  %v2615 = vpack.c.bf16 %v2607, %v2606
  %v2616 = vpack.c.bf16 %v2609, %v2608
  %v2617 = vpack.c.bf16 %v2611, %v2610
  %v2618 = vpack.c.bf16 %v2613, %v2612
  %v2619 = vld [vmem:[%s5] sm:$0xff]
  %v2620 = vld [vmem:[%s5 + $0x8] sm:$0xff]
  %v2621 = vld [vmem:[%s5 + $0x10] sm:$0xff]
  %v2622 = vld [vmem:[%s5 + $0x18] sm:$0xff]
  %v2623 = vld [vmem:[%s5 + $0x20] sm:$0xff]
  %v2624 = vld [vmem:[%s5 + $0x28] sm:$0xff]
  %v2625 = vld [vmem:[%s5 + $0x30] sm:$0xff]
  %v2626 = vld [vmem:[%s5 + $0x38] sm:$0xff]
  %v2627 = vld [vmem:[%s5 + $0x40] sm:$0xff]
  %v2628 = vld [vmem:[%s5 + $0x48] sm:$0xff]
  %v2629 = vld [vmem:[%s5 + $0x50] sm:$0xff]
  %v2630 = vld [vmem:[%s5 + $0x58] sm:$0xff]
  %v2631 = vld [vmem:[%s5 + $0x60] sm:$0xff]
  %v2632 = vld [vmem:[%s5 + $0x68] sm:$0xff]
  %v2633 = vld [vmem:[%s5 + $0x70] sm:$0xff]
  %v2634 = vld [vmem:[%s5 + $0x78] sm:$0xff]
  %v2635 = vld [vmem:[#allocation4 + $0x1] sm:$0xff]
  %v2636 = vld [vmem:[#allocation4 + $0x9] sm:$0xff]
  %v2637 = vld [vmem:[#allocation4 + $0x11] sm:$0xff]
  %v2638 = vld [vmem:[#allocation4 + $0x19] sm:$0xff]
  %v2639 = vld [vmem:[#allocation4 + $0x21] sm:$0xff]
  %v2640 = vld [vmem:[#allocation4 + $0x29] sm:$0xff]
  %v2641 = vld [vmem:[#allocation4 + $0x31] sm:$0xff]
  %v2642 = vld [vmem:[#allocation4 + $0x39] sm:$0xff]
  %v2643 = vld [vmem:[#allocation4 + $0x41] sm:$0xff]
  %v2644 = vld [vmem:[#allocation4 + $0x49] sm:$0x3f]
  %v2645 = vpack.c.bf16 %v2636, %v2635
  %v2646 = vpack.c.bf16 %v2638, %v2637
  %v2647 = vpack.c.bf16 %v2640, %v2639
  %v2648 = vpack.c.bf16 %v2642, %v2641
  %v2649 = vpack.c.bf16 %v2644, %v2643
  %s2650 = scalar_lea.vmem %s5, 128
  %v2651 = vld [vmem:[%s2650] sm:$0xff]
  %v2652 = vld [vmem:[%s2650 + $0x8] sm:$0xff]
  %v2653 = vld [vmem:[%s2650 + $0x10] sm:$0xff]
  %v2654 = vld [vmem:[%s2650 + $0x18] sm:$0xff]
  %v2655 = vld [vmem:[%s2650 + $0x20] sm:$0xff]
  %v2656 = vld [vmem:[%s2650 + $0x28] sm:$0xff]
  %v2657 = vld [vmem:[%s2650 + $0x30] sm:$0xff]
  %v2658 = vld [vmem:[%s2650 + $0x38] sm:$0xff]
  %v2659 = vld [vmem:[%s2650 + $0x40] sm:$0xff]
  %v2660 = vld [vmem:[%s2650 + $0x48] sm:$0xff]
  %v2661 = vld [vmem:[%s2650 + $0x50] sm:$0xff]
  %v2662 = vld [vmem:[%s2650 + $0x58] sm:$0xff]
  %v2663 = vld [vmem:[%s2650 + $0x60] sm:$0xff]
  %v2664 = vld [vmem:[%s2650 + $0x68] sm:$0xff]
  %v2665 = vld [vmem:[%s2650 + $0x70] sm:$0xff]
  %v2666 = vld [vmem:[%s2650 + $0x78] sm:$0xff]
  %v2683 = vunpack.c.l.b16 %v2651
  %v2684 = vunpack.c.h.b16 %v2651
  %v2685 = vunpack.c.l.b16 %v2652
  %v2686 = vunpack.c.h.b16 %v2652
  %v2687 = vunpack.c.l.b16 %v2653
  %v2688 = vunpack.c.h.b16 %v2653
  %v2689 = vunpack.c.l.b16 %v2654
  %v2690 = vunpack.c.h.b16 %v2654
  %v2691 = vunpack.c.l.b16 %v2655
  %v2692 = vunpack.c.h.b16 %v2655
  %v2693 = vunpack.c.l.b16 %v2656
  %v2694 = vunpack.c.h.b16 %v2656
  %v2695 = vunpack.c.l.b16 %v2657
  %v2696 = vunpack.c.h.b16 %v2657
  %v2697 = vunpack.c.l.b16 %v2658
  %v2698 = vunpack.c.h.b16 %v2658
  %v2699 = vunpack.c.l.b16 %v2659
  %v2700 = vunpack.c.h.b16 %v2659
  %v2701 = vunpack.c.l.b16 %v2660
  %v2702 = vunpack.c.h.b16 %v2660
  %v2703 = vunpack.c.l.b16 %v2661
  %v2704 = vunpack.c.h.b16 %v2661
  %v2705 = vunpack.c.l.b16 %v2662
  %v2706 = vunpack.c.h.b16 %v2662
  %v2707 = vunpack.c.l.b16 %v2663
  %v2708 = vunpack.c.h.b16 %v2663
  %v2709 = vunpack.c.l.b16 %v2664
  %v2710 = vunpack.c.h.b16 %v2664
  %v2711 = vunpack.c.l.b16 %v2665
  %v2712 = vunpack.c.h.b16 %v2665
  %v2713 = vunpack.c.l.b16 %v2666
  %v2714 = vunpack.c.h.b16 %v2666
  %v2715 = vpack.c.b16 %v2685, %v2683
  %v2716 = vpack.c.b16 %v2686, %v2684
  %v2717 = vpack.c.b16 %v2689, %v2687
  %v2718 = vpack.c.b16 %v2690, %v2688
  %v2719 = vpack.c.b16 %v2693, %v2691
  %v2720 = vpack.c.b16 %v2694, %v2692
  %v2721 = vpack.c.b16 %v2697, %v2695
  %v2722 = vpack.c.b16 %v2698, %v2696
  %v2723 = vpack.c.b16 %v2701, %v2699
  %v2724 = vpack.c.b16 %v2702, %v2700
  %v2725 = vpack.c.b16 %v2705, %v2703
  %v2726 = vpack.c.b16 %v2706, %v2704
  %v2727 = vpack.c.b16 %v2709, %v2707
  %v2728 = vpack.c.b16 %v2710, %v2708
  %v2729 = vpack.c.b16 %v2713, %v2711
  %v2730 = vpack.c.b16 %v2714, %v2712
  %2747 = vmatprep.subr.bf16.mxu0 %v2716
  %2748 = vmatpush1.bf16.msra.mxu0 %v2715
  %2749 = vmatprep.subr.bf16.mxu0 %v2718
  %2750 = vmatpush1.bf16.msra.mxu0 %v2717
  %2751 = vmatprep.subr.bf16.mxu0 %v2720
  %2752 = vmatpush1.bf16.msra.mxu0 %v2719
  %2753 = vmatprep.subr.bf16.mxu0 %v2722
  %2754 = vmatpush1.bf16.msra.mxu0 %v2721
  %2755 = vmatprep.subr.bf16.mxu0 %v2724
  %2756 = vmatpush1.bf16.msra.mxu0 %v2723
  %2757 = vmatprep.subr.bf16.mxu0 %v2726
  %2758 = vmatpush1.bf16.msra.mxu0 %v2725
  %2759 = vmatprep.subr.bf16.mxu0 %v2728
  %2760 = vmatpush1.bf16.msra.mxu0 %v2727
  %2761 = vmatprep.subr.bf16.mxu0 %v2730
  %2762 = vmatpush1.bf16.msra.mxu0 %v2729
  %2763 = vmatprep.subr.bf16.mxu0 0
  %2764 = vmatpush1.bf16.msra.mxu0 0
  %2765 = vmatprep.subr.bf16.mxu0 0
  %2766 = vmatpush1.bf16.msra.mxu0 0
  %2767 = vmatprep.subr.bf16.mxu0 0
  %2768 = vmatpush1.bf16.msra.mxu0 0
  %2769 = vmatprep.subr.bf16.mxu0 0
  %2770 = vmatpush1.bf16.msra.mxu0 0
  %2771 = vmatprep.subr.bf16.mxu0 0
  %2772 = vmatpush1.bf16.msra.mxu0 0
  %2773 = vmatprep.subr.bf16.mxu0 0
  %2774 = vmatpush1.bf16.msra.mxu0 0
  %2775 = vmatprep.subr.bf16.mxu0 0
  %2776 = vmatpush1.bf16.msra.mxu0 0
  %2777 = vmatprep.subr.bf16.mxu0 0
  %2778 = vmatpush1.bf16.msra.mxu0 0
  %2779 = vmatprep.mubr.bf16.mxu0 0
  %2780 = vmatmul.mubr.bf16.gmra.mrb[0].mxu0 %v2645
  %v2781 = vpop.f32.mrb[0].mxu0
  %v2782 = vadd.f32 0.0, %v2781
  %v2783 = vpop.f32.mrb[0].mxu0
  %v2784 = vadd.f32 0.0, %v2783
  %v2785 = vpop.f32.mrb[0].mxu0
  %v2786 = vadd.f32 0.0, %v2785
  %v2787 = vpop.f32.mrb[0].mxu0
  %v2788 = vadd.f32 0.0, %v2787
  %2789 = vmatprep.mubr.bf16.mxu0 0
  %2790 = vmatmul.mubr.bf16.gmra.mrb[0].mxu0 %v2646
  %v2791 = vpop.f32.mrb[0].mxu0
  %v2792 = vadd.f32 0.0, %v2791
  %v2793 = vpop.f32.mrb[0].mxu0
  %v2794 = vadd.f32 0.0, %v2793
  %v2795 = vpop.f32.mrb[0].mxu0
  %v2796 = vadd.f32 0.0, %v2795
  %v2797 = vpop.f32.mrb[0].mxu0
  %v2798 = vadd.f32 0.0, %v2797
  %2799 = vmatprep.mubr.bf16.mxu0 0
  %2800 = vmatmul.mubr.bf16.gmra.mrb[0].mxu0 %v2647
  %v2801 = vpop.f32.mrb[0].mxu0
  %v2802 = vadd.f32 0.0, %v2801
  %v2803 = vpop.f32.mrb[0].mxu0
  %v2804 = vadd.f32 0.0, %v2803
  %v2805 = vpop.f32.mrb[0].mxu0
  %v2806 = vadd.f32 0.0, %v2805
  %v2807 = vpop.f32.mrb[0].mxu0
  %v2808 = vadd.f32 0.0, %v2807
  %2809 = vmatprep.mubr.bf16.mxu0 0
  %2810 = vmatmul.mubr.bf16.gmra.mrb[0].mxu0 %v2648
  %v2811 = vpop.f32.mrb[0].mxu0
  %v2812 = vadd.f32 0.0, %v2811
  %v2813 = vpop.f32.mrb[0].mxu0
  %v2814 = vadd.f32 0.0, %v2813
  %v2815 = vpop.f32.mrb[0].mxu0
  %v2816 = vadd.f32 0.0, %v2815
  %v2817 = vpop.f32.mrb[0].mxu0
  %v2818 = vadd.f32 0.0, %v2817
  %2819 = vmatprep.mubr.bf16.mxu0 0
  %2820 = vmatmul.mubr.bf16.gmra.mrb[0].mxu0 %v2649
  %v2821 = vpop.f32.mrb[0].mxu0
  %v2822 = vadd.f32 0.0, %v2821
  %v2823 = vpop.f32.mrb[0].mxu0
  %v2824 = vadd.f32 0.0, %v2823
  %v2825 = vpop.f32.mrb[0].mxu0
  %v2826 = vadd.f32 0.0, %v2825
  %v2827 = vpop.f32.mrb[0].mxu0
  %v2828 = vadd.f32 0.0, %v2827
  %2829 = vdwg.mxu0
  %v2846 = vunpack.c.l.b16 %v2619
  %v2847 = vunpack.c.h.b16 %v2619
  %v2848 = vunpack.c.l.b16 %v2620
  %v2849 = vunpack.c.h.b16 %v2620
  %v2850 = vunpack.c.l.b16 %v2621
  %v2851 = vunpack.c.h.b16 %v2621
  %v2852 = vunpack.c.l.b16 %v2622
  %v2853 = vunpack.c.h.b16 %v2622
  %v2854 = vunpack.c.l.b16 %v2623
  %v2855 = vunpack.c.h.b16 %v2623
  %v2856 = vunpack.c.l.b16 %v2624
  %v2857 = vunpack.c.h.b16 %v2624
  %v2858 = vunpack.c.l.b16 %v2625
  %v2859 = vunpack.c.h.b16 %v2625
  %v2860 = vunpack.c.l.b16 %v2626
  %v2861 = vunpack.c.h.b16 %v2626
  %v2862 = vunpack.c.l.b16 %v2627
  %v2863 = vunpack.c.h.b16 %v2627
  %v2864 = vunpack.c.l.b16 %v2628
  %v2865 = vunpack.c.h.b16 %v2628
  %v2866 = vunpack.c.l.b16 %v2629
  %v2867 = vunpack.c.h.b16 %v2629
  %v2868 = vunpack.c.l.b16 %v2630
  %v2869 = vunpack.c.h.b16 %v2630
  %v2870 = vunpack.c.l.b16 %v2631
  %v2871 = vunpack.c.h.b16 %v2631
  %v2872 = vunpack.c.l.b16 %v2632
  %v2873 = vunpack.c.h.b16 %v2632
  %v2874 = vunpack.c.l.b16 %v2633
  %v2875 = vunpack.c.h.b16 %v2633
  %v2876 = vunpack.c.l.b16 %v2634
  %v2877 = vunpack.c.h.b16 %v2634
  %v2878 = vpack.c.b16 %v2848, %v2846
  %v2879 = vpack.c.b16 %v2849, %v2847
  %v2880 = vpack.c.b16 %v2852, %v2850
  %v2881 = vpack.c.b16 %v2853, %v2851
  %v2882 = vpack.c.b16 %v2856, %v2854
  %v2883 = vpack.c.b16 %v2857, %v2855
  %v2884 = vpack.c.b16 %v2860, %v2858
  %v2885 = vpack.c.b16 %v2861, %v2859
  %v2886 = vpack.c.b16 %v2864, %v2862
  %v2887 = vpack.c.b16 %v2865, %v2863
  %v2888 = vpack.c.b16 %v2868, %v2866
  %v2889 = vpack.c.b16 %v2869, %v2867
  %v2890 = vpack.c.b16 %v2872, %v2870
  %v2891 = vpack.c.b16 %v2873, %v2871
  %v2892 = vpack.c.b16 %v2876, %v2874
  %v2893 = vpack.c.b16 %v2877, %v2875
  %2910 = vmatprep.subr.bf16.mxu0 %v2879
  %2911 = vmatpush1.bf16.msra.mxu0 %v2878
  %2912 = vmatprep.subr.bf16.mxu0 %v2881
  %2913 = vmatpush1.bf16.msra.mxu0 %v2880
  %2914 = vmatprep.subr.bf16.mxu0 %v2883
  %2915 = vmatpush1.bf16.msra.mxu0 %v2882
  %2916 = vmatprep.subr.bf16.mxu0 %v2885
  %2917 = vmatpush1.bf16.msra.mxu0 %v2884
  %2918 = vmatprep.subr.bf16.mxu0 %v2887
  %2919 = vmatpush1.bf16.msra.mxu0 %v2886
  %2920 = vmatprep.subr.bf16.mxu0 %v2889
  %2921 = vmatpush1.bf16.msra.mxu0 %v2888
  %2922 = vmatprep.subr.bf16.mxu0 %v2891
  %2923 = vmatpush1.bf16.msra.mxu0 %v2890
  %2924 = vmatprep.subr.bf16.mxu0 %v2893
  %2925 = vmatpush1.bf16.msra.mxu0 %v2892
  %2926 = vmatprep.subr.bf16.mxu0 0
  %2927 = vmatpush1.bf16.msra.mxu0 0
  %2928 = vmatprep.subr.bf16.mxu0 0
  %2929 = vmatpush1.bf16.msra.mxu0 0
  %2930 = vmatprep.subr.bf16.mxu0 0
  %2931 = vmatpush1.bf16.msra.mxu0 0
  %2932 = vmatprep.subr.bf16.mxu0 0
  %2933 = vmatpush1.bf16.msra.mxu0 0
  %2934 = vmatprep.subr.bf16.mxu0 0
  %2935 = vmatpush1.bf16.msra.mxu0 0
  %2936 = vmatprep.subr.bf16.mxu0 0
  %2937 = vmatpush1.bf16.msra.mxu0 0
  %2938 = vmatprep.subr.bf16.mxu0 0
  %2939 = vmatpush1.bf16.msra.mxu0 0
  %2940 = vmatprep.subr.bf16.mxu0 0
  %2941 = vmatpush1.bf16.msra.mxu0 0
  %2942 = vmatprep.mubr.bf16.mxu0 0
  %2943 = vmatmul.mubr.bf16.gmra.mrb[0].mxu0 %v2614
  %v2944 = vpop.f32.mrb[0].mxu0
  %v2945 = vadd.f32 %v2782, %v2944
  %v2946 = vpop.f32.mrb[0].mxu0
  %v2947 = vadd.f32 %v2784, %v2946
  %v2948 = vpop.f32.mrb[0].mxu0
  %v2949 = vadd.f32 %v2786, %v2948
  %v2950 = vpop.f32.mrb[0].mxu0
  %v2951 = vadd.f32 %v2788, %v2950
  %2952 = vmatprep.mubr.bf16.mxu0 0
  %2953 = vmatmul.mubr.bf16.gmra.mrb[0].mxu0 %v2615
  %v2954 = vpop.f32.mrb[0].mxu0
  %v2955 = vadd.f32 %v2792, %v2954
  %v2956 = vpop.f32.mrb[0].mxu0
  %v2957 = vadd.f32 %v2794, %v2956
  %v2958 = vpop.f32.mrb[0].mxu0
  %v2959 = vadd.f32 %v2796, %v2958
  %v2960 = vpop.f32.mrb[0].mxu0
  %v2961 = vadd.f32 %v2798, %v2960
  %2962 = vmatprep.mubr.bf16.mxu0 0
  %2963 = vmatmul.mubr.bf16.gmra.mrb[0].mxu0 %v2616
  %v2964 = vpop.f32.mrb[0].mxu0
  %v2965 = vadd.f32 %v2802, %v2964
  %v2966 = vpop.f32.mrb[0].mxu0
  %v2967 = vadd.f32 %v2804, %v2966
  %v2968 = vpop.f32.mrb[0].mxu0
  %v2969 = vadd.f32 %v2806, %v2968
  %v2970 = vpop.f32.mrb[0].mxu0
  %v2971 = vadd.f32 %v2808, %v2970
  %2972 = vmatprep.mubr.bf16.mxu0 0
  %2973 = vmatmul.mubr.bf16.gmra.mrb[0].mxu0 %v2617
  %v2974 = vpop.f32.mrb[0].mxu0
  %v2975 = vadd.f32 %v2812, %v2974
  %v2976 = vpop.f32.mrb[0].mxu0
  %v2977 = vadd.f32 %v2814, %v2976
  %v2978 = vpop.f32.mrb[0].mxu0
  %v2979 = vadd.f32 %v2816, %v2978
  %v2980 = vpop.f32.mrb[0].mxu0
  %v2981 = vadd.f32 %v2818, %v2980
  %2982 = vmatprep.mubr.bf16.mxu0 0
  %2983 = vmatmul.mubr.bf16.gmra.mrb[0].mxu0 %v2618
  %v2984 = vpop.f32.mrb[0].mxu0
  %v2985 = vadd.f32 %v2822, %v2984
  %v2986 = vpop.f32.mrb[0].mxu0
  %v2987 = vadd.f32 %v2824, %v2986
  %v2988 = vpop.f32.mrb[0].mxu0
  %v2989 = vadd.f32 %v2826, %v2988
  %v2990 = vpop.f32.mrb[0].mxu0
  %v2991 = vadd.f32 %v2828, %v2990
  %2992 = vdwg.mxu0
  %v2993 = vld [vmem:[#allocation4 + $0x2] sm:$0xff]
  %v2994 = vld [vmem:[#allocation4 + $0xa] sm:$0xff]
  %v2995 = vld [vmem:[#allocation4 + $0x12] sm:$0xff]
  %v2996 = vld [vmem:[#allocation4 + $0x1a] sm:$0xff]
  %v2997 = vld [vmem:[#allocation4 + $0x22] sm:$0xff]
  %v2998 = vld [vmem:[#allocation4 + $0x2a] sm:$0xff]
  %v2999 = vld [vmem:[#allocation4 + $0x32] sm:$0xff]
  %v3000 = vld [vmem:[#allocation4 + $0x3a] sm:$0xff]
  %v3001 = vld [vmem:[#allocation4 + $0x42] sm:$0xff]
  %v3002 = vld [vmem:[#allocation4 + $0x4a] sm:$0x3f]
  %v3003 = vpack.c.bf16 %v2994, %v2993
  %v3004 = vpack.c.bf16 %v2996, %v2995
  %v3005 = vpack.c.bf16 %v2998, %v2997
  %v3006 = vpack.c.bf16 %v3000, %v2999
  %v3007 = vpack.c.bf16 %v3002, %v3001
  %s3008 = scalar_lea.vmem %s5, 256
  %v3009 = vld [vmem:[%s3008] sm:$0xff]
  %v3010 = vld [vmem:[%s3008 + $0x8] sm:$0xff]
  %v3011 = vld [vmem:[%s3008 + $0x10] sm:$0xff]
  %v3012 = vld [vmem:[%s3008 + $0x18] sm:$0xff]
  %v3013 = vld [vmem:[%s3008 + $0x20] sm:$0xff]
  %v3014 = vld [vmem:[%s3008 + $0x28] sm:$0xff]
  %v3015 = vld [vmem:[%s3008 + $0x30] sm:$0xff]
  %v3016 = vld [vmem:[%s3008 + $0x38] sm:$0xff]
  %v3017 = vld [vmem:[%s3008 + $0x40] sm:$0xff]
  %v3018 = vld [vmem:[%s3008 + $0x48] sm:$0xff]
  %v3019 = vld [vmem:[%s3008 + $0x50] sm:$0xff]
  %v3020 = vld [vmem:[%s3008 + $0x58] sm:$0xff]
  %v3021 = vld [vmem:[%s3008 + $0x60] sm:$0xff]
  %v3022 = vld [vmem:[%s3008 + $0x68] sm:$0xff]
  %v3023 = vld [vmem:[%s3008 + $0x70] sm:$0xff]
  %v3024 = vld [vmem:[%s3008 + $0x78] sm:$0xff]
  %v3041 = vunpack.c.l.b16 %v3009
  %v3042 = vunpack.c.h.b16 %v3009
  %v3043 = vunpack.c.l.b16 %v3010
  %v3044 = vunpack.c.h.b16 %v3010
  %v3045 = vunpack.c.l.b16 %v3011
  %v3046 = vunpack.c.h.b16 %v3011
  %v3047 = vunpack.c.l.b16 %v3012
  %v3048 = vunpack.c.h.b16 %v3012
  %v3049 = vunpack.c.l.b16 %v3013
  %v3050 = vunpack.c.h.b16 %v3013
  %v3051 = vunpack.c.l.b16 %v3014
  %v3052 = vunpack.c.h.b16 %v3014
  %v3053 = vunpack.c.l.b16 %v3015
  %v3054 = vunpack.c.h.b16 %v3015
  %v3055 = vunpack.c.l.b16 %v3016
  %v3056 = vunpack.c.h.b16 %v3016
  %v3057 = vunpack.c.l.b16 %v3017
  %v3058 = vunpack.c.h.b16 %v3017
  %v3059 = vunpack.c.l.b16 %v3018
  %v3060 = vunpack.c.h.b16 %v3018
  %v3061 = vunpack.c.l.b16 %v3019
  %v3062 = vunpack.c.h.b16 %v3019
  %v3063 = vunpack.c.l.b16 %v3020
  %v3064 = vunpack.c.h.b16 %v3020
  %v3065 = vunpack.c.l.b16 %v3021
  %v3066 = vunpack.c.h.b16 %v3021
  %v3067 = vunpack.c.l.b16 %v3022
  %v3068 = vunpack.c.h.b16 %v3022
  %v3069 = vunpack.c.l.b16 %v3023
  %v3070 = vunpack.c.h.b16 %v3023
  %v3071 = vunpack.c.l.b16 %v3024
  %v3072 = vunpack.c.h.b16 %v3024
  %v3073 = vpack.c.b16 %v3043, %v3041
  %v3074 = vpack.c.b16 %v3044, %v3042
  %v3075 = vpack.c.b16 %v3047, %v3045
  %v3076 = vpack.c.b16 %v3048, %v3046
  %v3077 = vpack.c.b16 %v3051, %v3049
  %v3078 = vpack.c.b16 %v3052, %v3050
  %v3079 = vpack.c.b16 %v3055, %v3053
  %v3080 = vpack.c.b16 %v3056, %v3054
  %v3081 = vpack.c.b16 %v3059, %v3057
  %v3082 = vpack.c.b16 %v3060, %v3058
  %v3083 = vpack.c.b16 %v3063, %v3061
  %v3084 = vpack.c.b16 %v3064, %v3062
  %v3085 = vpack.c.b16 %v3067, %v3065
  %v3086 = vpack.c.b16 %v3068, %v3066
  %v3087 = vpack.c.b16 %v3071, %v3069
  %v3088 = vpack.c.b16 %v3072, %v3070
  %3105 = vmatprep.subr.bf16.mxu0 %v3074
  %3106 = vmatpush1.bf16.msra.mxu0 %v3073
  %3107 = vmatprep.subr.bf16.mxu0 %v3076
  %3108 = vmatpush1.bf16.msra.mxu0 %v3075
  %3109 = vmatprep.subr.bf16.mxu0 %v3078
  %3110 = vmatpush1.bf16.msra.mxu0 %v3077
  %3111 = vmatprep.subr.bf16.mxu0 %v3080
  %3112 = vmatpush1.bf16.msra.mxu0 %v3079
  %3113 = vmatprep.subr.bf16.mxu0 %v3082
  %3114 = vmatpush1.bf16.msra.mxu0 %v3081
  %3115 = vmatprep.subr.bf16.mxu0 %v3084
  %3116 = vmatpush1.bf16.msra.mxu0 %v3083
  %3117 = vmatprep.subr.bf16.mxu0 %v3086
  %3118 = vmatpush1.bf16.msra.mxu0 %v3085
  %3119 = vmatprep.subr.bf16.mxu0 %v3088
  %3120 = vmatpush1.bf16.msra.mxu0 %v3087
  %3121 = vmatprep.subr.bf16.mxu0 0
  %3122 = vmatpush1.bf16.msra.mxu0 0
  %3123 = vmatprep.subr.bf16.mxu0 0
  %3124 = vmatpush1.bf16.msra.mxu0 0
  %3125 = vmatprep.subr.bf16.mxu0 0
  %3126 = vmatpush1.bf16.msra.mxu0 0
  %3127 = vmatprep.subr.bf16.mxu0 0
  %3128 = vmatpush1.bf16.msra.mxu0 0
  %3129 = vmatprep.subr.bf16.mxu0 0
  %3130 = vmatpush1.bf16.msra.mxu0 0
  %3131 = vmatprep.subr.bf16.mxu0 0
  %3132 = vmatpush1.bf16.msra.mxu0 0
  %3133 = vmatprep.subr.bf16.mxu0 0
  %3134 = vmatpush1.bf16.msra.mxu0 0
  %3135 = vmatprep.subr.bf16.mxu0 0
  %3136 = vmatpush1.bf16.msra.mxu0 0
  %3137 = vmatprep.mubr.bf16.mxu0 0
  %3138 = vmatmul.mubr.bf16.gmra.mrb[0].mxu0 %v3003
  %v3139 = vpop.f32.mrb[0].mxu0
  %v3140 = vadd.f32 0.0, %v3139
  %v3141 = vpop.f32.mrb[0].mxu0
  %v3142 = vadd.f32 0.0, %v3141
  %v3143 = vpop.f32.mrb[0].mxu0
  %v3144 = vadd.f32 0.0, %v3143
  %v3145 = vpop.f32.mrb[0].mxu0
  %v3146 = vadd.f32 0.0, %v3145
  %3147 = vmatprep.mubr.bf16.mxu0 0
  %3148 = vmatmul.mubr.bf16.gmra.mrb[0].mxu0 %v3004
  %v3149 = vpop.f32.mrb[0].mxu0
  %v3150 = vadd.f32 0.0, %v3149
  %v3151 = vpop.f32.mrb[0].mxu0
  %v3152 = vadd.f32 0.0, %v3151
  %v3153 = vpop.f32.mrb[0].mxu0
  %v3154 = vadd.f32 0.0, %v3153
  %v3155 = vpop.f32.mrb[0].mxu0
  %v3156 = vadd.f32 0.0, %v3155
  %3157 = vmatprep.mubr.bf16.mxu0 0
  %3158 = vmatmul.mubr.bf16.gmra.mrb[0].mxu0 %v3005
  %v3159 = vpop.f32.mrb[0].mxu0
  %v3160 = vadd.f32 0.0, %v3159
  %v3161 = vpop.f32.mrb[0].mxu0
  %v3162 = vadd.f32 0.0, %v3161
  %v3163 = vpop.f32.mrb[0].mxu0
  %v3164 = vadd.f32 0.0, %v3163
  %v3165 = vpop.f32.mrb[0].mxu0
  %v3166 = vadd.f32 0.0, %v3165
  %3167 = vmatprep.mubr.bf16.mxu0 0
  %3168 = vmatmul.mubr.bf16.gmra.mrb[0].mxu0 %v3006
  %v3169 = vpop.f32.mrb[0].mxu0
  %v3170 = vadd.f32 0.0, %v3169
  %v3171 = vpop.f32.mrb[0].mxu0
  %v3172 = vadd.f32 0.0, %v3171
  %v3173 = vpop.f32.mrb[0].mxu0
  %v3174 = vadd.f32 0.0, %v3173
  %v3175 = vpop.f32.mrb[0].mxu0
  %v3176 = vadd.f32 0.0, %v3175
  %3177 = vmatprep.mubr.bf16.mxu0 0
  %3178 = vmatmul.mubr.bf16.gmra.mrb[0].mxu0 %v3007
  %v3179 = vpop.f32.mrb[0].mxu0
  %v3180 = vadd.f32 0.0, %v3179
  %v3181 = vpop.f32.mrb[0].mxu0
  %v3182 = vadd.f32 0.0, %v3181
  %v3183 = vpop.f32.mrb[0].mxu0
  %v3184 = vadd.f32 0.0, %v3183
  %v3185 = vpop.f32.mrb[0].mxu0
  %v3186 = vadd.f32 0.0, %v3185
  %3187 = vdwg.mxu0
  %v3188 = vadd.f32 %v2945, %v3140
  %v3189 = vadd.f32 %v2947, %v3142
  %v3190 = vadd.f32 %v2949, %v3144
  %v3191 = vadd.f32 %v2951, %v3146
  %v3192 = vadd.f32 %v2955, %v3150
  %v3193 = vadd.f32 %v2957, %v3152
  %v3194 = vadd.f32 %v2959, %v3154
  %v3195 = vadd.f32 %v2961, %v3156
  %v3196 = vadd.f32 %v2965, %v3160
  %v3197 = vadd.f32 %v2967, %v3162
  %v3198 = vadd.f32 %v2969, %v3164
  %v3199 = vadd.f32 %v2971, %v3166
  %v3200 = vadd.f32 %v2975, %v3170
  %v3201 = vadd.f32 %v2977, %v3172
  %v3202 = vadd.f32 %v2979, %v3174
  %v3203 = vadd.f32 %v2981, %v3176
  %v3204 = vadd.f32 %v2985, %v3180
  %v3205 = vadd.f32 %v2987, %v3182
  %v3206 = vadd.f32 %v2989, %v3184
  %v3207 = vadd.f32 %v2991, %v3186
  %v3208 = vmax.f32 %v3188, %v3189
  %v3209 = vmax.f32 %v3190, %v3191
  %v3210 = vmax.f32 %v3192, %v3193
  %v3211 = vmax.f32 %v3194, %v3195
  %v3212 = vmax.f32 %v3196, %v3197
  %v3213 = vmax.f32 %v3198, %v3199
  %v3214 = vmax.f32 %v3200, %v3201
  %v3215 = vmax.f32 %v3202, %v3203
  %v3216 = vmax.f32 %v3204, %v3205
  %v3217 = vmax.f32 %v3206, %v3207
  %v3218 = vld [vmem:[%s6] sm:$0x1]
  %v3220 = vlaneseq
  %v3221 = vshrl.u32 %v3220, 7
  %v3222 = vsub.s32 0, %v3221
  %v3223 = vrot.slane %v3218, %v3222
  %v3225 = vadd.f32 %v3208, %v3223
  %v3226 = vadd.f32 %v3209, %v3223
  %v3227 = vadd.f32 %v3210, %v3223
  %v3228 = vadd.f32 %v3211, %v3223
  %v3229 = vadd.f32 %v3212, %v3223
  %v3230 = vadd.f32 %v3213, %v3223
  %v3231 = vadd.f32 %v3214, %v3223
  %v3232 = vadd.f32 %v3215, %v3223
  %v3233 = vadd.f32 %v3216, %v3223
  %v3234 = vadd.f32 %v3217, %v3223
  %v3235 = vmax.f32 %v3225, 0.0
  %v3236 = vmax.f32 %v3226, 0.0
  %v3237 = vmax.f32 %v3227, 0.0
  %v3238 = vmax.f32 %v3228, 0.0
  %v3239 = vmax.f32 %v3229, 0.0
  %v3240 = vmax.f32 %v3230, 0.0
  %v3241 = vmax.f32 %v3231, 0.0
  %v3242 = vmax.f32 %v3232, 0.0
  %v3243 = vmax.f32 %v3233, 0.0
  %v3244 = vmax.f32 %v3234, 0.0
  %3245 = vst [vmem:[#allocation8] sm:$0xff] %v3235
  %3246 = vst [vmem:[#allocation8 + $0x8] sm:$0xff] %v3236
  %3247 = vst [vmem:[#allocation8 + $0x10] sm:$0xff] %v3237
  %3248 = vst [vmem:[#allocation8 + $0x18] sm:$0xff] %v3238
  %3249 = vst [vmem:[#allocation8 + $0x20] sm:$0xff] %v3239
  %3250 = vst [vmem:[#allocation8 + $0x28] sm:$0xff] %v3240
  %3251 = vst [vmem:[#allocation8 + $0x30] sm:$0xff] %v3241
  %3252 = vst [vmem:[#allocation8 + $0x38] sm:$0xff] %v3242
  %3253 = vst [vmem:[#allocation8 + $0x40] sm:$0xff] %v3243
  %3254 = vst [vmem:[#allocation8 + $0x48] sm:$0x3f] %v3244
  %v3255 = vld [vmem:[#allocation8] ss:$2 sm:$0xf]
  %v3256 = vld [vmem:[%s1611] ss:$2 sm:$0xf]
  %v3257 = vmax.f32 %v3255, %v3256
  %3258 = vst [vmem:[#allocation5 + $0x1] sm:$0xf] %v3257
  %s3259 = scalar_lea.vmem [#allocation8], 10
  %v3260 = vld [vmem:[%s3259] ss:$2 sm:$0xf]
  %s3261 = scalar_lea.vmem [#allocation8], 11
  %v3262 = vld [vmem:[%s3261] ss:$2 sm:$0xf]
  %v3263 = vmax.f32 %v3260, %v3262
  %3264 = vst [vmem:[#allocation5 + $0x7] sm:$0xf] %v3263
  %s3265 = scalar_lea.vmem [#allocation8], 20
  %v3266 = vld [vmem:[%s3265] ss:$2 sm:$0xf]
  %s3267 = scalar_lea.vmem [#allocation8], 21
  %v3268 = vld [vmem:[%s3267] ss:$2 sm:$0xf]
  %v3269 = vmax.f32 %v3266, %v3268
  %3270 = vst [vmem:[#allocation5 + $0xd] sm:$0xf] %v3269
  %s3271 = scalar_lea.vmem [#allocation8], 30
  %v3272 = vld [vmem:[%s3271] ss:$2 sm:$0xf]
  %s3273 = scalar_lea.vmem [#allocation8], 31
  %v3274 = vld [vmem:[%s3273] ss:$2 sm:$0xf]
  %v3275 = vmax.f32 %v3272, %v3274
  %3276 = vst [vmem:[#allocation5 + $0x13] sm:$0xf] %v3275
  %s3277 = scalar_lea.vmem [#allocation8], 40
  %v3278 = vld [vmem:[%s3277] ss:$2 sm:$0xf]
  %s3279 = scalar_lea.vmem [#allocation8], 41
  %v3280 = vld [vmem:[%s3279] ss:$2 sm:$0xf]
  %v3281 = vmax.f32 %v3278, %v3280
  %3282 = vst [vmem:[#allocation5 + $0x19] sm:$0xf] %v3281
  %v3283 = vld [vmem:[%s1625] ss:$2 sm:$0xf]
  %s3284 = scalar_lea.vmem [#allocation8], 51
  %v3285 = vld [vmem:[%s3284] ss:$2 sm:$0xf]
  %v3286 = vmax.f32 %v3283, %v3285
  %3287 = vst [vmem:[#allocation5 + $0x1f] sm:$0xf] %v3286
  %s3288 = scalar_lea.vmem [#allocation8], 60
  %v3289 = vld [vmem:[%s3288] ss:$2 sm:$0xf]
  %s3290 = scalar_lea.vmem [#allocation8], 61
  %v3291 = vld [vmem:[%s3290] ss:$2 sm:$0xf]
  %v3292 = vmax.f32 %v3289, %v3291
  %3293 = vst [vmem:[#allocation5 + $0x25] sm:$0xf] %v3292
  %s3294 = scalar_lea.vmem [#allocation8], 70
  %v3295 = vld [vmem:[%s3294] ss:$2 sm:$0xf]
  %s3296 = scalar_lea.vmem [#allocation8], 71
  %v3297 = vld [vmem:[%s3296] ss:$2 sm:$0xf]
  %v3298 = vmax.f32 %v3295, %v3297
  %3299 = vst [vmem:[#allocation5 + $0x2b] sm:$0xf] %v3298
  %v3300 = vld [vmem:[#allocation5] sm:$0xff]
  %v3301 = vld [vmem:[#allocation5 + $0x8] sm:$0xff]
  %v3302 = vld [vmem:[#allocation5 + $0x10] sm:$0xff]
  %v3303 = vld [vmem:[#allocation5 + $0x18] sm:$0xff]
  %v3304 = vld [vmem:[#allocation5 + $0x20] sm:$0xff]
  %v3305 = vld [vmem:[#allocation5 + $0x28] sm:$0x3f]
  %v3306 = vpack.c.bf16 %v3301, %v3300
  %v3307 = vpack.c.bf16 %v3303, %v3302
  %v3308 = vpack.c.bf16 %v3305, %v3304
  %v3309 = vld [vmem:[%s7] sm:$0xff]
  %v3310 = vld [vmem:[%s7 + $0x8] sm:$0xff]
  %v3311 = vld [vmem:[%s7 + $0x10] sm:$0xff]
  %v3312 = vld [vmem:[%s7 + $0x18] sm:$0xff]
  %v3313 = vld [vmem:[%s7 + $0x20] sm:$0xff]
  %v3314 = vld [vmem:[%s7 + $0x28] sm:$0xff]
  %v3315 = vld [vmem:[%s7 + $0x30] sm:$0xff]
  %v3316 = vld [vmem:[%s7 + $0x38] sm:$0xff]
  %v3317 = vld [vmem:[%s7 + $0x40] sm:$0xff]
  %v3318 = vld [vmem:[%s7 + $0x48] sm:$0xff]
  %v3319 = vld [vmem:[%s7 + $0x50] sm:$0xff]
  %v3320 = vld [vmem:[%s7 + $0x58] sm:$0xff]
  %v3321 = vld [vmem:[%s7 + $0x60] sm:$0xff]
  %v3322 = vld [vmem:[%s7 + $0x68] sm:$0xff]
  %v3323 = vld [vmem:[%s7 + $0x70] sm:$0xff]
  %v3324 = vld [vmem:[%s7 + $0x78] sm:$0xff]
  %v3325 = vld [vmem:[#allocation5 + $0x1] sm:$0xff]
  %v3326 = vld [vmem:[#allocation5 + $0x9] sm:$0xff]
  %v3327 = vld [vmem:[#allocation5 + $0x11] sm:$0xff]
  %v3328 = vld [vmem:[#allocation5 + $0x19] sm:$0xff]
  %v3329 = vld [vmem:[#allocation5 + $0x21] sm:$0xff]
  %v3330 = vld [vmem:[#allocation5 + $0x29] sm:$0x3f]
  %v3331 = vpack.c.bf16 %v3326, %v3325
  %v3332 = vpack.c.bf16 %v3328, %v3327
  %v3333 = vpack.c.bf16 %v3330, %v3329
  %s3334 = scalar_lea.vmem %s7, 128
  %v3335 = vld [vmem:[%s3334] sm:$0xff]
  %v3336 = vld [vmem:[%s3334 + $0x8] sm:$0xff]
  %v3337 = vld [vmem:[%s3334 + $0x10] sm:$0xff]
  %v3338 = vld [vmem:[%s3334 + $0x18] sm:$0xff]
  %v3339 = vld [vmem:[%s3334 + $0x20] sm:$0xff]
  %v3340 = vld [vmem:[%s3334 + $0x28] sm:$0xff]
  %v3341 = vld [vmem:[%s3334 + $0x30] sm:$0xff]
  %v3342 = vld [vmem:[%s3334 + $0x38] sm:$0xff]
  %v3343 = vld [vmem:[%s3334 + $0x40] sm:$0xff]
  %v3344 = vld [vmem:[%s3334 + $0x48] sm:$0xff]
  %v3345 = vld [vmem:[%s3334 + $0x50] sm:$0xff]
  %v3346 = vld [vmem:[%s3334 + $0x58] sm:$0xff]
  %v3347 = vld [vmem:[%s3334 + $0x60] sm:$0xff]
  %v3348 = vld [vmem:[%s3334 + $0x68] sm:$0xff]
  %v3349 = vld [vmem:[%s3334 + $0x70] sm:$0xff]
  %v3350 = vld [vmem:[%s3334 + $0x78] sm:$0xff]
  %v3367 = vunpack.c.l.b16 %v3335
  %v3368 = vunpack.c.h.b16 %v3335
  %v3369 = vunpack.c.l.b16 %v3336
  %v3370 = vunpack.c.h.b16 %v3336
  %v3371 = vunpack.c.l.b16 %v3337
  %v3372 = vunpack.c.h.b16 %v3337
  %v3373 = vunpack.c.l.b16 %v3338
  %v3374 = vunpack.c.h.b16 %v3338
  %v3375 = vunpack.c.l.b16 %v3339
  %v3376 = vunpack.c.h.b16 %v3339
  %v3377 = vunpack.c.l.b16 %v3340
  %v3378 = vunpack.c.h.b16 %v3340
  %v3379 = vunpack.c.l.b16 %v3341
  %v3380 = vunpack.c.h.b16 %v3341
  %v3381 = vunpack.c.l.b16 %v3342
  %v3382 = vunpack.c.h.b16 %v3342
  %v3383 = vunpack.c.l.b16 %v3343
  %v3384 = vunpack.c.h.b16 %v3343
  %v3385 = vunpack.c.l.b16 %v3344
  %v3386 = vunpack.c.h.b16 %v3344
  %v3387 = vunpack.c.l.b16 %v3345
  %v3388 = vunpack.c.h.b16 %v3345
  %v3389 = vunpack.c.l.b16 %v3346
  %v3390 = vunpack.c.h.b16 %v3346
  %v3391 = vunpack.c.l.b16 %v3347
  %v3392 = vunpack.c.h.b16 %v3347
  %v3393 = vunpack.c.l.b16 %v3348
  %v3394 = vunpack.c.h.b16 %v3348
  %v3395 = vunpack.c.l.b16 %v3349
  %v3396 = vunpack.c.h.b16 %v3349
  %v3397 = vunpack.c.l.b16 %v3350
  %v3398 = vunpack.c.h.b16 %v3350
  %v3399 = vpack.c.b16 %v3369, %v3367
  %v3400 = vpack.c.b16 %v3370, %v3368
  %v3401 = vpack.c.b16 %v3373, %v3371
  %v3402 = vpack.c.b16 %v3374, %v3372
  %v3403 = vpack.c.b16 %v3377, %v3375
  %v3404 = vpack.c.b16 %v3378, %v3376
  %v3405 = vpack.c.b16 %v3381, %v3379
  %v3406 = vpack.c.b16 %v3382, %v3380
  %v3407 = vpack.c.b16 %v3385, %v3383
  %v3408 = vpack.c.b16 %v3386, %v3384
  %v3409 = vpack.c.b16 %v3389, %v3387
  %v3410 = vpack.c.b16 %v3390, %v3388
  %v3411 = vpack.c.b16 %v3393, %v3391
  %v3412 = vpack.c.b16 %v3394, %v3392
  %v3413 = vpack.c.b16 %v3397, %v3395
  %v3414 = vpack.c.b16 %v3398, %v3396
  %3431 = vmatprep.subr.bf16.mxu0 %v3400
  %3432 = vmatpush1.bf16.msra.mxu0 %v3399
  %3433 = vmatprep.subr.bf16.mxu0 %v3402
  %3434 = vmatpush1.bf16.msra.mxu0 %v3401
  %3435 = vmatprep.subr.bf16.mxu0 %v3404
  %3436 = vmatpush1.bf16.msra.mxu0 %v3403
  %3437 = vmatprep.subr.bf16.mxu0 %v3406
  %3438 = vmatpush1.bf16.msra.mxu0 %v3405
  %3439 = vmatprep.subr.bf16.mxu0 %v3408
  %3440 = vmatpush1.bf16.msra.mxu0 %v3407
  %3441 = vmatprep.subr.bf16.mxu0 %v3410
  %3442 = vmatpush1.bf16.msra.mxu0 %v3409
  %3443 = vmatprep.subr.bf16.mxu0 %v3412
  %3444 = vmatpush1.bf16.msra.mxu0 %v3411
  %3445 = vmatprep.subr.bf16.mxu0 %v3414
  %3446 = vmatpush1.bf16.msra.mxu0 %v3413
  %3447 = vmatprep.subr.bf16.mxu0 0
  %3448 = vmatpush1.bf16.msra.mxu0 0
  %3449 = vmatprep.subr.bf16.mxu0 0
  %3450 = vmatpush1.bf16.msra.mxu0 0
  %3451 = vmatprep.subr.bf16.mxu0 0
  %3452 = vmatpush1.bf16.msra.mxu0 0
  %3453 = vmatprep.subr.bf16.mxu0 0
  %3454 = vmatpush1.bf16.msra.mxu0 0
  %3455 = vmatprep.subr.bf16.mxu0 0
  %3456 = vmatpush1.bf16.msra.mxu0 0
  %3457 = vmatprep.subr.bf16.mxu0 0
  %3458 = vmatpush1.bf16.msra.mxu0 0
  %3459 = vmatprep.subr.bf16.mxu0 0
  %3460 = vmatpush1.bf16.msra.mxu0 0
  %3461 = vmatprep.subr.bf16.mxu0 0
  %3462 = vmatpush1.bf16.msra.mxu0 0
  %3463 = vmatprep.mubr.bf16.mxu0 0
  %3464 = vmatmul.mubr.bf16.gmra.mrb[0].mxu0 %v3331
  %v3465 = vpop.f32.mrb[0].mxu0
  %v3466 = vadd.f32 0.0, %v3465
  %v3467 = vpop.f32.mrb[0].mxu0
  %v3468 = vadd.f32 0.0, %v3467
  %v3469 = vpop.f32.mrb[0].mxu0
  %v3470 = vadd.f32 0.0, %v3469
  %v3471 = vpop.f32.mrb[0].mxu0
  %v3472 = vadd.f32 0.0, %v3471
  %3473 = vmatprep.mubr.bf16.mxu0 0
  %3474 = vmatmul.mubr.bf16.gmra.mrb[0].mxu0 %v3332
  %v3475 = vpop.f32.mrb[0].mxu0
  %v3476 = vadd.f32 0.0, %v3475
  %v3477 = vpop.f32.mrb[0].mxu0
  %v3478 = vadd.f32 0.0, %v3477
  %v3479 = vpop.f32.mrb[0].mxu0
  %v3480 = vadd.f32 0.0, %v3479
  %v3481 = vpop.f32.mrb[0].mxu0
  %v3482 = vadd.f32 0.0, %v3481
  %3483 = vmatprep.mubr.bf16.mxu0 0
  %3484 = vmatmul.mubr.bf16.gmra.mrb[0].mxu0 %v3333
  %v3485 = vpop.f32.mrb[0].mxu0
  %v3486 = vadd.f32 0.0, %v3485
  %v3487 = vpop.f32.mrb[0].mxu0
  %v3488 = vadd.f32 0.0, %v3487
  %v3489 = vpop.f32.mrb[0].mxu0
  %v3490 = vadd.f32 0.0, %v3489
  %v3491 = vpop.f32.mrb[0].mxu0
  %v3492 = vadd.f32 0.0, %v3491
  %3493 = vdwg.mxu0
  %v3510 = vunpack.c.l.b16 %v3309
  %v3511 = vunpack.c.h.b16 %v3309
  %v3512 = vunpack.c.l.b16 %v3310
  %v3513 = vunpack.c.h.b16 %v3310
  %v3514 = vunpack.c.l.b16 %v3311
  %v3515 = vunpack.c.h.b16 %v3311
  %v3516 = vunpack.c.l.b16 %v3312
  %v3517 = vunpack.c.h.b16 %v3312
  %v3518 = vunpack.c.l.b16 %v3313
  %v3519 = vunpack.c.h.b16 %v3313
  %v3520 = vunpack.c.l.b16 %v3314
  %v3521 = vunpack.c.h.b16 %v3314
  %v3522 = vunpack.c.l.b16 %v3315
  %v3523 = vunpack.c.h.b16 %v3315
  %v3524 = vunpack.c.l.b16 %v3316
  %v3525 = vunpack.c.h.b16 %v3316
  %v3526 = vunpack.c.l.b16 %v3317
  %v3527 = vunpack.c.h.b16 %v3317
  %v3528 = vunpack.c.l.b16 %v3318
  %v3529 = vunpack.c.h.b16 %v3318
  %v3530 = vunpack.c.l.b16 %v3319
  %v3531 = vunpack.c.h.b16 %v3319
  %v3532 = vunpack.c.l.b16 %v3320
  %v3533 = vunpack.c.h.b16 %v3320
  %v3534 = vunpack.c.l.b16 %v3321
  %v3535 = vunpack.c.h.b16 %v3321
  %v3536 = vunpack.c.l.b16 %v3322
  %v3537 = vunpack.c.h.b16 %v3322
  %v3538 = vunpack.c.l.b16 %v3323
  %v3539 = vunpack.c.h.b16 %v3323
  %v3540 = vunpack.c.l.b16 %v3324
  %v3541 = vunpack.c.h.b16 %v3324
  %v3542 = vpack.c.b16 %v3512, %v3510
  %v3543 = vpack.c.b16 %v3513, %v3511
  %v3544 = vpack.c.b16 %v3516, %v3514
  %v3545 = vpack.c.b16 %v3517, %v3515
  %v3546 = vpack.c.b16 %v3520, %v3518
  %v3547 = vpack.c.b16 %v3521, %v3519
  %v3548 = vpack.c.b16 %v3524, %v3522
  %v3549 = vpack.c.b16 %v3525, %v3523
  %v3550 = vpack.c.b16 %v3528, %v3526
  %v3551 = vpack.c.b16 %v3529, %v3527
  %v3552 = vpack.c.b16 %v3532, %v3530
  %v3553 = vpack.c.b16 %v3533, %v3531
  %v3554 = vpack.c.b16 %v3536, %v3534
  %v3555 = vpack.c.b16 %v3537, %v3535
  %v3556 = vpack.c.b16 %v3540, %v3538
  %v3557 = vpack.c.b16 %v3541, %v3539
  %3574 = vmatprep.subr.bf16.mxu0 %v3543
  %3575 = vmatpush1.bf16.msra.mxu0 %v3542
  %3576 = vmatprep.subr.bf16.mxu0 %v3545
  %3577 = vmatpush1.bf16.msra.mxu0 %v3544
  %3578 = vmatprep.subr.bf16.mxu0 %v3547
  %3579 = vmatpush1.bf16.msra.mxu0 %v3546
  %3580 = vmatprep.subr.bf16.mxu0 %v3549
  %3581 = vmatpush1.bf16.msra.mxu0 %v3548
  %3582 = vmatprep.subr.bf16.mxu0 %v3551
  %3583 = vmatpush1.bf16.msra.mxu0 %v3550
  %3584 = vmatprep.subr.bf16.mxu0 %v3553
  %3585 = vmatpush1.bf16.msra.mxu0 %v3552
  %3586 = vmatprep.subr.bf16.mxu0 %v3555
  %3587 = vmatpush1.bf16.msra.mxu0 %v3554
  %3588 = vmatprep.subr.bf16.mxu0 %v3557
  %3589 = vmatpush1.bf16.msra.mxu0 %v3556
  %3590 = vmatprep.subr.bf16.mxu0 0
  %3591 = vmatpush1.bf16.msra.mxu0 0
  %3592 = vmatprep.subr.bf16.mxu0 0
  %3593 = vmatpush1.bf16.msra.mxu0 0
  %3594 = vmatprep.subr.bf16.mxu0 0
  %3595 = vmatpush1.bf16.msra.mxu0 0
  %3596 = vmatprep.subr.bf16.mxu0 0
  %3597 = vmatpush1.bf16.msra.mxu0 0
  %3598 = vmatprep.subr.bf16.mxu0 0
  %3599 = vmatpush1.bf16.msra.mxu0 0
  %3600 = vmatprep.subr.bf16.mxu0 0
  %3601 = vmatpush1.bf16.msra.mxu0 0
  %3602 = vmatprep.subr.bf16.mxu0 0
  %3603 = vmatpush1.bf16.msra.mxu0 0
  %3604 = vmatprep.subr.bf16.mxu0 0
  %3605 = vmatpush1.bf16.msra.mxu0 0
  %3606 = vmatprep.mubr.bf16.mxu0 0
  %3607 = vmatmul.mubr.bf16.gmra.mrb[0].mxu0 %v3306
  %v3608 = vpop.f32.mrb[0].mxu0
  %v3609 = vadd.f32 %v3466, %v3608
  %v3610 = vpop.f32.mrb[0].mxu0
  %v3611 = vadd.f32 %v3468, %v3610
  %v3612 = vpop.f32.mrb[0].mxu0
  %v3613 = vadd.f32 %v3470, %v3612
  %v3614 = vpop.f32.mrb[0].mxu0
  %v3615 = vadd.f32 %v3472, %v3614
  %3616 = vmatprep.mubr.bf16.mxu0 0
  %3617 = vmatmul.mubr.bf16.gmra.mrb[0].mxu0 %v3307
  %v3618 = vpop.f32.mrb[0].mxu0
  %v3619 = vadd.f32 %v3476, %v3618
  %v3620 = vpop.f32.mrb[0].mxu0
  %v3621 = vadd.f32 %v3478, %v3620
  %v3622 = vpop.f32.mrb[0].mxu0
  %v3623 = vadd.f32 %v3480, %v3622
  %v3624 = vpop.f32.mrb[0].mxu0
  %v3625 = vadd.f32 %v3482, %v3624
  %3626 = vmatprep.mubr.bf16.mxu0 0
  %3627 = vmatmul.mubr.bf16.gmra.mrb[0].mxu0 %v3308
  %v3628 = vpop.f32.mrb[0].mxu0
  %v3629 = vadd.f32 %v3486, %v3628
  %v3630 = vpop.f32.mrb[0].mxu0
  %v3631 = vadd.f32 %v3488, %v3630
  %v3632 = vpop.f32.mrb[0].mxu0
  %v3633 = vadd.f32 %v3490, %v3632
  %v3634 = vpop.f32.mrb[0].mxu0
  %v3635 = vadd.f32 %v3492, %v3634
  %3636 = vdwg.mxu0
  %v3637 = vld [vmem:[#allocation5 + $0x2] sm:$0xff]
  %v3638 = vld [vmem:[#allocation5 + $0xa] sm:$0xff]
  %v3639 = vld [vmem:[#allocation5 + $0x12] sm:$0xff]
  %v3640 = vld [vmem:[#allocation5 + $0x1a] sm:$0xff]
  %v3641 = vld [vmem:[#allocation5 + $0x22] sm:$0xff]
  %v3642 = vld [vmem:[#allocation5 + $0x2a] sm:$0x3f]
  %v3643 = vpack.c.bf16 %v3638, %v3637
  %v3644 = vpack.c.bf16 %v3640, %v3639
  %v3645 = vpack.c.bf16 %v3642, %v3641
  %s3646 = scalar_lea.vmem %s7, 256
  %v3647 = vld [vmem:[%s3646] sm:$0xff]
  %v3648 = vld [vmem:[%s3646 + $0x8] sm:$0xff]
  %v3649 = vld [vmem:[%s3646 + $0x10] sm:$0xff]
  %v3650 = vld [vmem:[%s3646 + $0x18] sm:$0xff]
  %v3651 = vld [vmem:[%s3646 + $0x20] sm:$0xff]
  %v3652 = vld [vmem:[%s3646 + $0x28] sm:$0xff]
  %v3653 = vld [vmem:[%s3646 + $0x30] sm:$0xff]
  %v3654 = vld [vmem:[%s3646 + $0x38] sm:$0xff]
  %v3655 = vld [vmem:[%s3646 + $0x40] sm:$0xff]
  %v3656 = vld [vmem:[%s3646 + $0x48] sm:$0xff]
  %v3657 = vld [vmem:[%s3646 + $0x50] sm:$0xff]
  %v3658 = vld [vmem:[%s3646 + $0x58] sm:$0xff]
  %v3659 = vld [vmem:[%s3646 + $0x60] sm:$0xff]
  %v3660 = vld [vmem:[%s3646 + $0x68] sm:$0xff]
  %v3661 = vld [vmem:[%s3646 + $0x70] sm:$0xff]
  %v3662 = vld [vmem:[%s3646 + $0x78] sm:$0xff]
  %v3679 = vunpack.c.l.b16 %v3647
  %v3680 = vunpack.c.h.b16 %v3647
  %v3681 = vunpack.c.l.b16 %v3648
  %v3682 = vunpack.c.h.b16 %v3648
  %v3683 = vunpack.c.l.b16 %v3649
  %v3684 = vunpack.c.h.b16 %v3649
  %v3685 = vunpack.c.l.b16 %v3650
  %v3686 = vunpack.c.h.b16 %v3650
  %v3687 = vunpack.c.l.b16 %v3651
  %v3688 = vunpack.c.h.b16 %v3651
  %v3689 = vunpack.c.l.b16 %v3652
  %v3690 = vunpack.c.h.b16 %v3652
  %v3691 = vunpack.c.l.b16 %v3653
  %v3692 = vunpack.c.h.b16 %v3653
  %v3693 = vunpack.c.l.b16 %v3654
  %v3694 = vunpack.c.h.b16 %v3654
  %v3695 = vunpack.c.l.b16 %v3655
  %v3696 = vunpack.c.h.b16 %v3655
  %v3697 = vunpack.c.l.b16 %v3656
  %v3698 = vunpack.c.h.b16 %v3656
  %v3699 = vunpack.c.l.b16 %v3657
  %v3700 = vunpack.c.h.b16 %v3657
  %v3701 = vunpack.c.l.b16 %v3658
  %v3702 = vunpack.c.h.b16 %v3658
  %v3703 = vunpack.c.l.b16 %v3659
  %v3704 = vunpack.c.h.b16 %v3659
  %v3705 = vunpack.c.l.b16 %v3660
  %v3706 = vunpack.c.h.b16 %v3660
  %v3707 = vunpack.c.l.b16 %v3661
  %v3708 = vunpack.c.h.b16 %v3661
  %v3709 = vunpack.c.l.b16 %v3662
  %v3710 = vunpack.c.h.b16 %v3662
  %v3711 = vpack.c.b16 %v3681, %v3679
  %v3712 = vpack.c.b16 %v3682, %v3680
  %v3713 = vpack.c.b16 %v3685, %v3683
  %v3714 = vpack.c.b16 %v3686, %v3684
  %v3715 = vpack.c.b16 %v3689, %v3687
  %v3716 = vpack.c.b16 %v3690, %v3688
  %v3717 = vpack.c.b16 %v3693, %v3691
  %v3718 = vpack.c.b16 %v3694, %v3692
  %v3719 = vpack.c.b16 %v3697, %v3695
  %v3720 = vpack.c.b16 %v3698, %v3696
  %v3721 = vpack.c.b16 %v3701, %v3699
  %v3722 = vpack.c.b16 %v3702, %v3700
  %v3723 = vpack.c.b16 %v3705, %v3703
  %v3724 = vpack.c.b16 %v3706, %v3704
  %v3725 = vpack.c.b16 %v3709, %v3707
  %v3726 = vpack.c.b16 %v3710, %v3708
  %3743 = vmatprep.subr.bf16.mxu0 %v3712
  %3744 = vmatpush1.bf16.msra.mxu0 %v3711
  %3745 = vmatprep.subr.bf16.mxu0 %v3714
  %3746 = vmatpush1.bf16.msra.mxu0 %v3713
  %3747 = vmatprep.subr.bf16.mxu0 %v3716
  %3748 = vmatpush1.bf16.msra.mxu0 %v3715
  %3749 = vmatprep.subr.bf16.mxu0 %v3718
  %3750 = vmatpush1.bf16.msra.mxu0 %v3717
  %3751 = vmatprep.subr.bf16.mxu0 %v3720
  %3752 = vmatpush1.bf16.msra.mxu0 %v3719
  %3753 = vmatprep.subr.bf16.mxu0 %v3722
  %3754 = vmatpush1.bf16.msra.mxu0 %v3721
  %3755 = vmatprep.subr.bf16.mxu0 %v3724
  %3756 = vmatpush1.bf16.msra.mxu0 %v3723
  %3757 = vmatprep.subr.bf16.mxu0 %v3726
  %3758 = vmatpush1.bf16.msra.mxu0 %v3725
  %3759 = vmatprep.subr.bf16.mxu0 0
  %3760 = vmatpush1.bf16.msra.mxu0 0
  %3761 = vmatprep.subr.bf16.mxu0 0
  %3762 = vmatpush1.bf16.msra.mxu0 0
  %3763 = vmatprep.subr.bf16.mxu0 0
  %3764 = vmatpush1.bf16.msra.mxu0 0
  %3765 = vmatprep.subr.bf16.mxu0 0
  %3766 = vmatpush1.bf16.msra.mxu0 0
  %3767 = vmatprep.subr.bf16.mxu0 0
  %3768 = vmatpush1.bf16.msra.mxu0 0
  %3769 = vmatprep.subr.bf16.mxu0 0
  %3770 = vmatpush1.bf16.msra.mxu0 0
  %3771 = vmatprep.subr.bf16.mxu0 0
  %3772 = vmatpush1.bf16.msra.mxu0 0
  %3773 = vmatprep.subr.bf16.mxu0 0
  %3774 = vmatpush1.bf16.msra.mxu0 0
  %3775 = vmatprep.mubr.bf16.mxu0 0
  %3776 = vmatmul.mubr.bf16.gmra.mrb[0].mxu0 %v3643
  %v3777 = vpop.f32.mrb[0].mxu0
  %v3778 = vadd.f32 0.0, %v3777
  %v3779 = vpop.f32.mrb[0].mxu0
  %v3780 = vadd.f32 0.0, %v3779
  %v3781 = vpop.f32.mrb[0].mxu0
  %v3782 = vadd.f32 0.0, %v3781
  %v3783 = vpop.f32.mrb[0].mxu0
  %v3784 = vadd.f32 0.0, %v3783
  %3785 = vmatprep.mubr.bf16.mxu0 0
  %3786 = vmatmul.mubr.bf16.gmra.mrb[0].mxu0 %v3644
  %v3787 = vpop.f32.mrb[0].mxu0
  %v3788 = vadd.f32 0.0, %v3787
  %v3789 = vpop.f32.mrb[0].mxu0
  %v3790 = vadd.f32 0.0, %v3789
  %v3791 = vpop.f32.mrb[0].mxu0
  %v3792 = vadd.f32 0.0, %v3791
  %v3793 = vpop.f32.mrb[0].mxu0
  %v3794 = vadd.f32 0.0, %v3793
  %3795 = vmatprep.mubr.bf16.mxu0 0
  %3796 = vmatmul.mubr.bf16.gmra.mrb[0].mxu0 %v3645
  %v3797 = vpop.f32.mrb[0].mxu0
  %v3798 = vadd.f32 0.0, %v3797
  %v3799 = vpop.f32.mrb[0].mxu0
  %v3800 = vadd.f32 0.0, %v3799
  %v3801 = vpop.f32.mrb[0].mxu0
  %v3802 = vadd.f32 0.0, %v3801
  %v3803 = vpop.f32.mrb[0].mxu0
  %v3804 = vadd.f32 0.0, %v3803
  %3805 = vdwg.mxu0
  %v3806 = vadd.f32 %v3609, %v3778
  %v3807 = vadd.f32 %v3611, %v3780
  %v3808 = vadd.f32 %v3613, %v3782
  %v3809 = vadd.f32 %v3615, %v3784
  %v3810 = vadd.f32 %v3619, %v3788
  %v3811 = vadd.f32 %v3621, %v3790
  %v3812 = vadd.f32 %v3623, %v3792
  %v3813 = vadd.f32 %v3625, %v3794
  %v3814 = vadd.f32 %v3629, %v3798
  %v3815 = vadd.f32 %v3631, %v3800
  %v3816 = vadd.f32 %v3633, %v3802
  %v3817 = vadd.f32 %v3635, %v3804
  %v3818 = vmax.f32 %v3806, %v3807
  %v3819 = vmax.f32 %v3808, %v3809
  %v3820 = vmax.f32 %v3810, %v3811
  %v3821 = vmax.f32 %v3812, %v3813
  %v3822 = vmax.f32 %v3814, %v3815
  %v3823 = vmax.f32 %v3816, %v3817
  %v3824 = vld [vmem:[%s8] sm:$0x1]
  %v3826 = vlaneseq
  %v3827 = vshrl.u32 %v3826, 7
  %v3828 = vsub.s32 0, %v3827
  %v3829 = vrot.slane %v3824, %v3828
  %v3831 = vadd.f32 %v3818, %v3829
  %v3832 = vadd.f32 %v3819, %v3829
  %v3833 = vadd.f32 %v3820, %v3829
  %v3834 = vadd.f32 %v3821, %v3829
  %v3835 = vadd.f32 %v3822, %v3829
  %v3836 = vadd.f32 %v3823, %v3829
  %v3837 = vmax.f32 %v3831, 0.0
  %v3838 = vmax.f32 %v3832, 0.0
  %v3839 = vmax.f32 %v3833, 0.0
  %v3840 = vmax.f32 %v3834, 0.0
  %v3841 = vmax.f32 %v3835, 0.0
  %v3842 = vmax.f32 %v3836, 0.0
  %3843 = vst [vmem:[#allocation8] sm:$0xff] %v3837
  %3844 = vst [vmem:[#allocation8 + $0x8] sm:$0xff] %v3838
  %3845 = vst [vmem:[#allocation8 + $0x10] sm:$0xff] %v3839
  %3846 = vst [vmem:[#allocation8 + $0x18] sm:$0xff] %v3840
  %3847 = vst [vmem:[#allocation8 + $0x20] sm:$0xff] %v3841
  %3848 = vst [vmem:[#allocation8 + $0x28] sm:$0x3f] %v3842
  %v3849 = vld [vmem:[#allocation8] ss:$2 sm:$0x3]
  %v3850 = vld [vmem:[%s1611] ss:$2 sm:$0x3]
  %v3851 = vmax.f32 %v3849, %v3850
  %3852 = vst [vmem:[#allocation6 + $0x1] sm:$0x3] %v3851
  %s3853 = scalar_lea.vmem [#allocation8], 6
  %v3854 = vld [vmem:[%s3853] ss:$2 sm:$0x3]
  %s3855 = scalar_lea.vmem [#allocation8], 7
  %v3856 = vld [vmem:[%s3855] ss:$2 sm:$0x3]
  %v3857 = vmax.f32 %v3854, %v3856
  %3858 = vst [vmem:[#allocation6 + $0x5] sm:$0x3] %v3857
  %s3859 = scalar_lea.vmem [#allocation8], 12
  %v3860 = vld [vmem:[%s3859] ss:$2 sm:$0x3]
  %s3861 = scalar_lea.vmem [#allocation8], 13
  %v3862 = vld [vmem:[%s3861] ss:$2 sm:$0x3]
  %v3863 = vmax.f32 %v3860, %v3862
  %3864 = vst [vmem:[#allocation6 + $0x9] sm:$0x3] %v3863
  %v3865 = vld [vmem:[%s2562] ss:$2 sm:$0x3]
  %v3866 = vld [vmem:[%s2564] ss:$2 sm:$0x3]
  %v3867 = vmax.f32 %v3865, %v3866
  %3868 = vst [vmem:[#allocation6 + $0xd] sm:$0x3] %v3867
  %s3869 = scalar_lea.vmem [#allocation8], 24
  %v3870 = vld [vmem:[%s3869] ss:$2 sm:$0x3]
  %s3871 = scalar_lea.vmem [#allocation8], 25
  %v3872 = vld [vmem:[%s3871] ss:$2 sm:$0x3]
  %v3873 = vmax.f32 %v3870, %v3872
  %3874 = vst [vmem:[#allocation6 + $0x11] sm:$0x3] %v3873
  %v3875 = vld [vmem:[%s3271] ss:$2 sm:$0x3]
  %v3876 = vld [vmem:[%s3273] ss:$2 sm:$0x3]
  %v3877 = vmax.f32 %v3875, %v3876
  %3878 = vst [vmem:[#allocation6 + $0x15] sm:$0x3] %v3877
  %v3879 = vld [vmem:[%s2568] ss:$2 sm:$0x3]
  %v3880 = vld [vmem:[%s2570] ss:$2 sm:$0x3]
  %v3881 = vmax.f32 %v3879, %v3880
  %3882 = vst [vmem:[#allocation6 + $0x19] sm:$0x3] %v3881
  %s3883 = scalar_lea.vmem [#allocation8], 42
  %v3884 = vld [vmem:[%s3883] ss:$2 sm:$0x3]
  %s3885 = scalar_lea.vmem [#allocation8], 43
  %v3886 = vld [vmem:[%s3885] ss:$2 sm:$0x3]
  %v3887 = vmax.f32 %v3884, %v3886
  %3888 = vst [vmem:[#allocation6 + $0x1d] sm:$0x3] %v3887
  %v3889 = vld [vmem:[#allocation6] sm:$0xff]
  %v3890 = vld [vmem:[#allocation6 + $0x8] sm:$0xff]
  %v3891 = vld [vmem:[#allocation6 + $0x10] sm:$0xff]
  %v3892 = vld [vmem:[#allocation6 + $0x18] sm:$0x3f]
  %v3893 = vpack.c.bf16 %v3890, %v3889
  %v3894 = vpack.c.bf16 %v3892, %v3891
  %v3895 = vld [vmem:[%s9] sm:$0xff]
  %v3896 = vld [vmem:[%s9 + $0x8] sm:$0xff]
  %v3897 = vld [vmem:[%s9 + $0x10] sm:$0xff]
  %v3898 = vld [vmem:[%s9 + $0x18] sm:$0xff]
  %v3899 = vld [vmem:[%s9 + $0x20] sm:$0xff]
  %v3900 = vld [vmem:[%s9 + $0x28] sm:$0xff]
  %v3901 = vld [vmem:[%s9 + $0x30] sm:$0xff]
  %v3902 = vld [vmem:[%s9 + $0x38] sm:$0xff]
  %v3903 = vld [vmem:[%s9 + $0x40] sm:$0xff]
  %v3904 = vld [vmem:[%s9 + $0x48] sm:$0xff]
  %v3905 = vld [vmem:[%s9 + $0x50] sm:$0xff]
  %v3906 = vld [vmem:[%s9 + $0x58] sm:$0xff]
  %v3907 = vld [vmem:[%s9 + $0x60] sm:$0xff]
  %v3908 = vld [vmem:[%s9 + $0x68] sm:$0xff]
  %v3909 = vld [vmem:[%s9 + $0x70] sm:$0xff]
  %v3910 = vld [vmem:[%s9 + $0x78] sm:$0xff]
  %v3911 = vld [vmem:[#allocation6 + $0x1] sm:$0xff]
  %v3912 = vld [vmem:[#allocation6 + $0x9] sm:$0xff]
  %v3913 = vld [vmem:[#allocation6 + $0x11] sm:$0xff]
  %v3914 = vld [vmem:[#allocation6 + $0x19] sm:$0x3f]
  %v3915 = vpack.c.bf16 %v3912, %v3911
  %v3916 = vpack.c.bf16 %v3914, %v3913
  %s3917 = scalar_lea.vmem %s9, 128
  %v3918 = vld [vmem:[%s3917] sm:$0xff]
  %v3919 = vld [vmem:[%s3917 + $0x8] sm:$0xff]
  %v3920 = vld [vmem:[%s3917 + $0x10] sm:$0xff]
  %v3921 = vld [vmem:[%s3917 + $0x18] sm:$0xff]
  %v3922 = vld [vmem:[%s3917 + $0x20] sm:$0xff]
  %v3923 = vld [vmem:[%s3917 + $0x28] sm:$0xff]
  %v3924 = vld [vmem:[%s3917 + $0x30] sm:$0xff]
  %v3925 = vld [vmem:[%s3917 + $0x38] sm:$0xff]
  %v3926 = vld [vmem:[%s3917 + $0x40] sm:$0xff]
  %v3927 = vld [vmem:[%s3917 + $0x48] sm:$0xff]
  %v3928 = vld [vmem:[%s3917 + $0x50] sm:$0xff]
  %v3929 = vld [vmem:[%s3917 + $0x58] sm:$0xff]
  %v3930 = vld [vmem:[%s3917 + $0x60] sm:$0xff]
  %v3931 = vld [vmem:[%s3917 + $0x68] sm:$0xff]
  %v3932 = vld [vmem:[%s3917 + $0x70] sm:$0xff]
  %v3933 = vld [vmem:[%s3917 + $0x78] sm:$0xff]
  %v3950 = vunpack.c.l.b16 %v3918
  %v3951 = vunpack.c.h.b16 %v3918
  %v3952 = vunpack.c.l.b16 %v3919
  %v3953 = vunpack.c.h.b16 %v3919
  %v3954 = vunpack.c.l.b16 %v3920
  %v3955 = vunpack.c.h.b16 %v3920
  %v3956 = vunpack.c.l.b16 %v3921
  %v3957 = vunpack.c.h.b16 %v3921
  %v3958 = vunpack.c.l.b16 %v3922
  %v3959 = vunpack.c.h.b16 %v3922
  %v3960 = vunpack.c.l.b16 %v3923
  %v3961 = vunpack.c.h.b16 %v3923
  %v3962 = vunpack.c.l.b16 %v3924
  %v3963 = vunpack.c.h.b16 %v3924
  %v3964 = vunpack.c.l.b16 %v3925
  %v3965 = vunpack.c.h.b16 %v3925
  %v3966 = vunpack.c.l.b16 %v3926
  %v3967 = vunpack.c.h.b16 %v3926
  %v3968 = vunpack.c.l.b16 %v3927
  %v3969 = vunpack.c.h.b16 %v3927
  %v3970 = vunpack.c.l.b16 %v3928
  %v3971 = vunpack.c.h.b16 %v3928
  %v3972 = vunpack.c.l.b16 %v3929
  %v3973 = vunpack.c.h.b16 %v3929
  %v3974 = vunpack.c.l.b16 %v3930
  %v3975 = vunpack.c.h.b16 %v3930
  %v3976 = vunpack.c.l.b16 %v3931
  %v3977 = vunpack.c.h.b16 %v3931
  %v3978 = vunpack.c.l.b16 %v3932
  %v3979 = vunpack.c.h.b16 %v3932
  %v3980 = vunpack.c.l.b16 %v3933
  %v3981 = vunpack.c.h.b16 %v3933
  %v3982 = vpack.c.b16 %v3952, %v3950
  %v3983 = vpack.c.b16 %v3953, %v3951
  %v3984 = vpack.c.b16 %v3956, %v3954
  %v3985 = vpack.c.b16 %v3957, %v3955
  %v3986 = vpack.c.b16 %v3960, %v3958
  %v3987 = vpack.c.b16 %v3961, %v3959
  %v3988 = vpack.c.b16 %v3964, %v3962
  %v3989 = vpack.c.b16 %v3965, %v3963
  %v3990 = vpack.c.b16 %v3968, %v3966
  %v3991 = vpack.c.b16 %v3969, %v3967
  %v3992 = vpack.c.b16 %v3972, %v3970
  %v3993 = vpack.c.b16 %v3973, %v3971
  %v3994 = vpack.c.b16 %v3976, %v3974
  %v3995 = vpack.c.b16 %v3977, %v3975
  %v3996 = vpack.c.b16 %v3980, %v3978
  %v3997 = vpack.c.b16 %v3981, %v3979
  %4014 = vmatprep.subr.bf16.mxu0 %v3983
  %4015 = vmatpush1.bf16.msra.mxu0 %v3982
  %4016 = vmatprep.subr.bf16.mxu0 %v3985
  %4017 = vmatpush1.bf16.msra.mxu0 %v3984
  %4018 = vmatprep.subr.bf16.mxu0 %v3987
  %4019 = vmatpush1.bf16.msra.mxu0 %v3986
  %4020 = vmatprep.subr.bf16.mxu0 %v3989
  %4021 = vmatpush1.bf16.msra.mxu0 %v3988
  %4022 = vmatprep.subr.bf16.mxu0 %v3991
  %4023 = vmatpush1.bf16.msra.mxu0 %v3990
  %4024 = vmatprep.subr.bf16.mxu0 %v3993
  %4025 = vmatpush1.bf16.msra.mxu0 %v3992
  %4026 = vmatprep.subr.bf16.mxu0 %v3995
  %4027 = vmatpush1.bf16.msra.mxu0 %v3994
  %4028 = vmatprep.subr.bf16.mxu0 %v3997
  %4029 = vmatpush1.bf16.msra.mxu0 %v3996
  %4030 = vmatprep.subr.bf16.mxu0 0
  %4031 = vmatpush1.bf16.msra.mxu0 0
  %4032 = vmatprep.subr.bf16.mxu0 0
  %4033 = vmatpush1.bf16.msra.mxu0 0
  %4034 = vmatprep.subr.bf16.mxu0 0
  %4035 = vmatpush1.bf16.msra.mxu0 0
  %4036 = vmatprep.subr.bf16.mxu0 0
  %4037 = vmatpush1.bf16.msra.mxu0 0
  %4038 = vmatprep.subr.bf16.mxu0 0
  %4039 = vmatpush1.bf16.msra.mxu0 0
  %4040 = vmatprep.subr.bf16.mxu0 0
  %4041 = vmatpush1.bf16.msra.mxu0 0
  %4042 = vmatprep.subr.bf16.mxu0 0
  %4043 = vmatpush1.bf16.msra.mxu0 0
  %4044 = vmatprep.subr.bf16.mxu0 0
  %4045 = vmatpush1.bf16.msra.mxu0 0
  %4046 = vmatprep.mubr.bf16.mxu0 0
  %4047 = vmatmul.mubr.bf16.gmra.mrb[0].mxu0 %v3915
  %v4048 = vpop.f32.mrb[0].mxu0
  %v4049 = vadd.f32 0.0, %v4048
  %v4050 = vpop.f32.mrb[0].mxu0
  %v4051 = vadd.f32 0.0, %v4050
  %v4052 = vpop.f32.mrb[0].mxu0
  %v4053 = vadd.f32 0.0, %v4052
  %v4054 = vpop.f32.mrb[0].mxu0
  %v4055 = vadd.f32 0.0, %v4054
  %4056 = vmatprep.mubr.bf16.mxu0 0
  %4057 = vmatmul.mubr.bf16.gmra.mrb[0].mxu0 %v3916
  %v4058 = vpop.f32.mrb[0].mxu0
  %v4059 = vadd.f32 0.0, %v4058
  %v4060 = vpop.f32.mrb[0].mxu0
  %v4061 = vadd.f32 0.0, %v4060
  %v4062 = vpop.f32.mrb[0].mxu0
  %v4063 = vadd.f32 0.0, %v4062
  %v4064 = vpop.f32.mrb[0].mxu0
  %v4065 = vadd.f32 0.0, %v4064
  %4066 = vdwg.mxu0
  %v4083 = vunpack.c.l.b16 %v3895
  %v4084 = vunpack.c.h.b16 %v3895
  %v4085 = vunpack.c.l.b16 %v3896
  %v4086 = vunpack.c.h.b16 %v3896
  %v4087 = vunpack.c.l.b16 %v3897
  %v4088 = vunpack.c.h.b16 %v3897
  %v4089 = vunpack.c.l.b16 %v3898
  %v4090 = vunpack.c.h.b16 %v3898
  %v4091 = vunpack.c.l.b16 %v3899
  %v4092 = vunpack.c.h.b16 %v3899
  %v4093 = vunpack.c.l.b16 %v3900
  %v4094 = vunpack.c.h.b16 %v3900
  %v4095 = vunpack.c.l.b16 %v3901
  %v4096 = vunpack.c.h.b16 %v3901
  %v4097 = vunpack.c.l.b16 %v3902
  %v4098 = vunpack.c.h.b16 %v3902
  %v4099 = vunpack.c.l.b16 %v3903
  %v4100 = vunpack.c.h.b16 %v3903
  %v4101 = vunpack.c.l.b16 %v3904
  %v4102 = vunpack.c.h.b16 %v3904
  %v4103 = vunpack.c.l.b16 %v3905
  %v4104 = vunpack.c.h.b16 %v3905
  %v4105 = vunpack.c.l.b16 %v3906
  %v4106 = vunpack.c.h.b16 %v3906
  %v4107 = vunpack.c.l.b16 %v3907
  %v4108 = vunpack.c.h.b16 %v3907
  %v4109 = vunpack.c.l.b16 %v3908
  %v4110 = vunpack.c.h.b16 %v3908
  %v4111 = vunpack.c.l.b16 %v3909
  %v4112 = vunpack.c.h.b16 %v3909
  %v4113 = vunpack.c.l.b16 %v3910
  %v4114 = vunpack.c.h.b16 %v3910
  %v4115 = vpack.c.b16 %v4085, %v4083
  %v4116 = vpack.c.b16 %v4086, %v4084
  %v4117 = vpack.c.b16 %v4089, %v4087
  %v4118 = vpack.c.b16 %v4090, %v4088
  %v4119 = vpack.c.b16 %v4093, %v4091
  %v4120 = vpack.c.b16 %v4094, %v4092
  %v4121 = vpack.c.b16 %v4097, %v4095
  %v4122 = vpack.c.b16 %v4098, %v4096
  %v4123 = vpack.c.b16 %v4101, %v4099
  %v4124 = vpack.c.b16 %v4102, %v4100
  %v4125 = vpack.c.b16 %v4105, %v4103
  %v4126 = vpack.c.b16 %v4106, %v4104
  %v4127 = vpack.c.b16 %v4109, %v4107
  %v4128 = vpack.c.b16 %v4110, %v4108
  %v4129 = vpack.c.b16 %v4113, %v4111
  %v4130 = vpack.c.b16 %v4114, %v4112
  %4147 = vmatprep.subr.bf16.mxu0 %v4116
  %4148 = vmatpush1.bf16.msra.mxu0 %v4115
  %4149 = vmatprep.subr.bf16.mxu0 %v4118
  %4150 = vmatpush1.bf16.msra.mxu0 %v4117
  %4151 = vmatprep.subr.bf16.mxu0 %v4120
  %4152 = vmatpush1.bf16.msra.mxu0 %v4119
  %4153 = vmatprep.subr.bf16.mxu0 %v4122
  %4154 = vmatpush1.bf16.msra.mxu0 %v4121
  %4155 = vmatprep.subr.bf16.mxu0 %v4124
  %4156 = vmatpush1.bf16.msra.mxu0 %v4123
  %4157 = vmatprep.subr.bf16.mxu0 %v4126
  %4158 = vmatpush1.bf16.msra.mxu0 %v4125
  %4159 = vmatprep.subr.bf16.mxu0 %v4128
  %4160 = vmatpush1.bf16.msra.mxu0 %v4127
  %4161 = vmatprep.subr.bf16.mxu0 %v4130
  %4162 = vmatpush1.bf16.msra.mxu0 %v4129
  %4163 = vmatprep.subr.bf16.mxu0 0
  %4164 = vmatpush1.bf16.msra.mxu0 0
  %4165 = vmatprep.subr.bf16.mxu0 0
  %4166 = vmatpush1.bf16.msra.mxu0 0
  %4167 = vmatprep.subr.bf16.mxu0 0
  %4168 = vmatpush1.bf16.msra.mxu0 0
  %4169 = vmatprep.subr.bf16.mxu0 0
  %4170 = vmatpush1.bf16.msra.mxu0 0
  %4171 = vmatprep.subr.bf16.mxu0 0
  %4172 = vmatpush1.bf16.msra.mxu0 0
  %4173 = vmatprep.subr.bf16.mxu0 0
  %4174 = vmatpush1.bf16.msra.mxu0 0
  %4175 = vmatprep.subr.bf16.mxu0 0
  %4176 = vmatpush1.bf16.msra.mxu0 0
  %4177 = vmatprep.subr.bf16.mxu0 0
  %4178 = vmatpush1.bf16.msra.mxu0 0
  %4179 = vmatprep.mubr.bf16.mxu0 0
  %4180 = vmatmul.mubr.bf16.gmra.mrb[0].mxu0 %v3893
  %v4181 = vpop.f32.mrb[0].mxu0
  %v4182 = vadd.f32 %v4049, %v4181
  %v4183 = vpop.f32.mrb[0].mxu0
  %v4184 = vadd.f32 %v4051, %v4183
  %v4185 = vpop.f32.mrb[0].mxu0
  %v4186 = vadd.f32 %v4053, %v4185
  %v4187 = vpop.f32.mrb[0].mxu0
  %v4188 = vadd.f32 %v4055, %v4187
  %4189 = vmatprep.mubr.bf16.mxu0 0
  %4190 = vmatmul.mubr.bf16.gmra.mrb[0].mxu0 %v3894
  %v4191 = vpop.f32.mrb[0].mxu0
  %v4192 = vadd.f32 %v4059, %v4191
  %v4193 = vpop.f32.mrb[0].mxu0
  %v4194 = vadd.f32 %v4061, %v4193
  %v4195 = vpop.f32.mrb[0].mxu0
  %v4196 = vadd.f32 %v4063, %v4195
  %v4197 = vpop.f32.mrb[0].mxu0
  %v4198 = vadd.f32 %v4065, %v4197
  %4199 = vdwg.mxu0
  %v4200 = vld [vmem:[#allocation6 + $0x2] sm:$0xff]
  %v4201 = vld [vmem:[#allocation6 + $0xa] sm:$0xff]
  %v4202 = vld [vmem:[#allocation6 + $0x12] sm:$0xff]
  %v4203 = vld [vmem:[#allocation6 + $0x1a] sm:$0x3f]
  %v4204 = vpack.c.bf16 %v4201, %v4200
  %v4205 = vpack.c.bf16 %v4203, %v4202
  %s4206 = scalar_lea.vmem %s9, 256
  %v4207 = vld [vmem:[%s4206] sm:$0xff]
  %v4208 = vld [vmem:[%s4206 + $0x8] sm:$0xff]
  %v4209 = vld [vmem:[%s4206 + $0x10] sm:$0xff]
  %v4210 = vld [vmem:[%s4206 + $0x18] sm:$0xff]
  %v4211 = vld [vmem:[%s4206 + $0x20] sm:$0xff]
  %v4212 = vld [vmem:[%s4206 + $0x28] sm:$0xff]
  %v4213 = vld [vmem:[%s4206 + $0x30] sm:$0xff]
  %v4214 = vld [vmem:[%s4206 + $0x38] sm:$0xff]
  %v4215 = vld [vmem:[%s4206 + $0x40] sm:$0xff]
  %v4216 = vld [vmem:[%s4206 + $0x48] sm:$0xff]
  %v4217 = vld [vmem:[%s4206 + $0x50] sm:$0xff]
  %v4218 = vld [vmem:[%s4206 + $0x58] sm:$0xff]
  %v4219 = vld [vmem:[%s4206 + $0x60] sm:$0xff]
  %v4220 = vld [vmem:[%s4206 + $0x68] sm:$0xff]
  %v4221 = vld [vmem:[%s4206 + $0x70] sm:$0xff]
  %v4222 = vld [vmem:[%s4206 + $0x78] sm:$0xff]
  %v4239 = vunpack.c.l.b16 %v4207
  %v4240 = vunpack.c.h.b16 %v4207
  %v4241 = vunpack.c.l.b16 %v4208
  %v4242 = vunpack.c.h.b16 %v4208
  %v4243 = vunpack.c.l.b16 %v4209
  %v4244 = vunpack.c.h.b16 %v4209
  %v4245 = vunpack.c.l.b16 %v4210
  %v4246 = vunpack.c.h.b16 %v4210
  %v4247 = vunpack.c.l.b16 %v4211
  %v4248 = vunpack.c.h.b16 %v4211
  %v4249 = vunpack.c.l.b16 %v4212
  %v4250 = vunpack.c.h.b16 %v4212
  %v4251 = vunpack.c.l.b16 %v4213
  %v4252 = vunpack.c.h.b16 %v4213
  %v4253 = vunpack.c.l.b16 %v4214
  %v4254 = vunpack.c.h.b16 %v4214
  %v4255 = vunpack.c.l.b16 %v4215
  %v4256 = vunpack.c.h.b16 %v4215
  %v4257 = vunpack.c.l.b16 %v4216
  %v4258 = vunpack.c.h.b16 %v4216
  %v4259 = vunpack.c.l.b16 %v4217
  %v4260 = vunpack.c.h.b16 %v4217
  %v4261 = vunpack.c.l.b16 %v4218
  %v4262 = vunpack.c.h.b16 %v4218
  %v4263 = vunpack.c.l.b16 %v4219
  %v4264 = vunpack.c.h.b16 %v4219
  %v4265 = vunpack.c.l.b16 %v4220
  %v4266 = vunpack.c.h.b16 %v4220
  %v4267 = vunpack.c.l.b16 %v4221
  %v4268 = vunpack.c.h.b16 %v4221
  %v4269 = vunpack.c.l.b16 %v4222
  %v4270 = vunpack.c.h.b16 %v4222
  %v4271 = vpack.c.b16 %v4241, %v4239
  %v4272 = vpack.c.b16 %v4242, %v4240
  %v4273 = vpack.c.b16 %v4245, %v4243
  %v4274 = vpack.c.b16 %v4246, %v4244
  %v4275 = vpack.c.b16 %v4249, %v4247
  %v4276 = vpack.c.b16 %v4250, %v4248
  %v4277 = vpack.c.b16 %v4253, %v4251
  %v4278 = vpack.c.b16 %v4254, %v4252
  %v4279 = vpack.c.b16 %v4257, %v4255
  %v4280 = vpack.c.b16 %v4258, %v4256
  %v4281 = vpack.c.b16 %v4261, %v4259
  %v4282 = vpack.c.b16 %v4262, %v4260
  %v4283 = vpack.c.b16 %v4265, %v4263
  %v4284 = vpack.c.b16 %v4266, %v4264
  %v4285 = vpack.c.b16 %v4269, %v4267
  %v4286 = vpack.c.b16 %v4270, %v4268
  %4303 = vmatprep.subr.bf16.mxu0 %v4272
  %4304 = vmatpush1.bf16.msra.mxu0 %v4271
  %4305 = vmatprep.subr.bf16.mxu0 %v4274
  %4306 = vmatpush1.bf16.msra.mxu0 %v4273
  %4307 = vmatprep.subr.bf16.mxu0 %v4276
  %4308 = vmatpush1.bf16.msra.mxu0 %v4275
  %4309 = vmatprep.subr.bf16.mxu0 %v4278
  %4310 = vmatpush1.bf16.msra.mxu0 %v4277
  %4311 = vmatprep.subr.bf16.mxu0 %v4280
  %4312 = vmatpush1.bf16.msra.mxu0 %v4279
  %4313 = vmatprep.subr.bf16.mxu0 %v4282
  %4314 = vmatpush1.bf16.msra.mxu0 %v4281
  %4315 = vmatprep.subr.bf16.mxu0 %v4284
  %4316 = vmatpush1.bf16.msra.mxu0 %v4283
  %4317 = vmatprep.subr.bf16.mxu0 %v4286
  %4318 = vmatpush1.bf16.msra.mxu0 %v4285
  %4319 = vmatprep.subr.bf16.mxu0 0
  %4320 = vmatpush1.bf16.msra.mxu0 0
  %4321 = vmatprep.subr.bf16.mxu0 0
  %4322 = vmatpush1.bf16.msra.mxu0 0
  %4323 = vmatprep.subr.bf16.mxu0 0
  %4324 = vmatpush1.bf16.msra.mxu0 0
  %4325 = vmatprep.subr.bf16.mxu0 0
  %4326 = vmatpush1.bf16.msra.mxu0 0
  %4327 = vmatprep.subr.bf16.mxu0 0
  %4328 = vmatpush1.bf16.msra.mxu0 0
  %4329 = vmatprep.subr.bf16.mxu0 0
  %4330 = vmatpush1.bf16.msra.mxu0 0
  %4331 = vmatprep.subr.bf16.mxu0 0
  %4332 = vmatpush1.bf16.msra.mxu0 0
  %4333 = vmatprep.subr.bf16.mxu0 0
  %4334 = vmatpush1.bf16.msra.mxu0 0
  %4335 = vmatprep.mubr.bf16.mxu0 0
  %4336 = vmatmul.mubr.bf16.gmra.mrb[0].mxu0 %v4204
  %v4337 = vpop.f32.mrb[0].mxu0
  %v4338 = vadd.f32 0.0, %v4337
  %v4339 = vpop.f32.mrb[0].mxu0
  %v4340 = vadd.f32 0.0, %v4339
  %v4341 = vpop.f32.mrb[0].mxu0
  %v4342 = vadd.f32 0.0, %v4341
  %v4343 = vpop.f32.mrb[0].mxu0
  %v4344 = vadd.f32 0.0, %v4343
  %4345 = vmatprep.mubr.bf16.mxu0 0
  %4346 = vmatmul.mubr.bf16.gmra.mrb[0].mxu0 %v4205
  %v4347 = vpop.f32.mrb[0].mxu0
  %v4348 = vadd.f32 0.0, %v4347
  %v4349 = vpop.f32.mrb[0].mxu0
  %v4350 = vadd.f32 0.0, %v4349
  %v4351 = vpop.f32.mrb[0].mxu0
  %v4352 = vadd.f32 0.0, %v4351
  %v4353 = vpop.f32.mrb[0].mxu0
  %v4354 = vadd.f32 0.0, %v4353
  %4355 = vdwg.mxu0
  %v4356 = vadd.f32 %v4182, %v4338
  %v4357 = vadd.f32 %v4184, %v4340
  %v4358 = vadd.f32 %v4186, %v4342
  %v4359 = vadd.f32 %v4188, %v4344
  %v4360 = vadd.f32 %v4192, %v4348
  %v4361 = vadd.f32 %v4194, %v4350
  %v4362 = vadd.f32 %v4196, %v4352
  %v4363 = vadd.f32 %v4198, %v4354
  %v4364 = vmax.f32 %v4356, %v4357
  %v4365 = vmax.f32 %v4358, %v4359
  %v4366 = vmax.f32 %v4360, %v4361
  %v4367 = vmax.f32 %v4362, %v4363
  %v4368 = vld [vmem:[%s10] sm:$0x1]
  %v4370 = vlaneseq
  %v4371 = vshrl.u32 %v4370, 7
  %v4372 = vsub.s32 0, %v4371
  %v4373 = vrot.slane %v4368, %v4372
  %v4375 = vadd.f32 %v4364, %v4373
  %v4376 = vadd.f32 %v4365, %v4373
  %v4377 = vadd.f32 %v4366, %v4373
  %v4378 = vadd.f32 %v4367, %v4373
  %v4379 = vmax.f32 %v4375, 0.0
  %v4380 = vmax.f32 %v4376, 0.0
  %v4381 = vmax.f32 %v4377, 0.0
  %v4382 = vmax.f32 %v4378, 0.0
  %4383 = vst [vmem:[#allocation8] sm:$0xff] %v4379
  %4384 = vst [vmem:[#allocation8 + $0x8] sm:$0xff] %v4380
  %4385 = vst [vmem:[#allocation8 + $0x10] sm:$0xff] %v4381
  %4386 = vst [vmem:[#allocation8 + $0x18] sm:$0x3f] %v4382
  %v4387 = vld [vmem:[#allocation8] sm:$0x1]
  %v4388 = vld [vmem:[#allocation8 + $0x1] sm:$0x1]
  %v4389 = vmax.f32 %v4387, %v4388
  %4390 = vst [vmem:[#allocation7] sm:$0x1] %v4389
  %v4391 = vld [vmem:[#allocation8 + $0x4] sm:$0x1]
  %v4392 = vld [vmem:[#allocation8 + $0x5] sm:$0x1]
  %v4393 = vmax.f32 %v4391, %v4392
  %4394 = vst [vmem:[#allocation7 + $0x1] sm:$0x1] %v4393
  %v4395 = vld [vmem:[#allocation8 + $0x8] sm:$0x1]
  %v4396 = vld [vmem:[#allocation8 + $0x9] sm:$0x1]
  %v4397 = vmax.f32 %v4395, %v4396
  %4398 = vst [vmem:[#allocation7 + $0x2] sm:$0x1] %v4397
  %v4399 = vld [vmem:[#allocation8 + $0xc] sm:$0x1]
  %v4400 = vld [vmem:[#allocation8 + $0xd] sm:$0x1]
  %v4401 = vmax.f32 %v4399, %v4400
  %4402 = vst [vmem:[#allocation7 + $0x3] sm:$0x1] %v4401
  %v4403 = vld [vmem:[#allocation8 + $0x10] sm:$0x1]
  %v4404 = vld [vmem:[#allocation8 + $0x11] sm:$0x1]
  %v4405 = vmax.f32 %v4403, %v4404
  %4406 = vst [vmem:[#allocation7 + $0x4] sm:$0x1] %v4405
  %v4407 = vld [vmem:[#allocation8 + $0x14] sm:$0x1]
  %v4408 = vld [vmem:[#allocation8 + $0x15] sm:$0x1]
  %v4409 = vmax.f32 %v4407, %v4408
  %4410 = vst [vmem:[#allocation7 + $0x5] sm:$0x1] %v4409
  %v4411 = vld [vmem:[#allocation8 + $0x18] sm:$0x1]
  %v4412 = vld [vmem:[#allocation8 + $0x19] sm:$0x1]
  %v4413 = vmax.f32 %v4411, %v4412
  %4414 = vst [vmem:[#allocation7 + $0x6] sm:$0x1] %v4413
  %v4415 = vld [vmem:[#allocation8 + $0x1c] sm:$0x1]
  %v4416 = vld [vmem:[#allocation8 + $0x1d] sm:$0x1]
  %v4417 = vmax.f32 %v4415, %v4416
  %4418 = vst [vmem:[#allocation7 + $0x7] sm:$0x1] %v4417
  %v4419 = vld [vmem:[#allocation7] sm:$0xff]
  %v4420 = vpack.c.bf16 %v4419, %v4419
  %v4421 = vld [vmem:[%s11] sm:$0xf]
  %v4422 = vld [vmem:[%s11 + $0x4] sm:$0xf]
  %v4423 = vld [vmem:[%s11 + $0x8] sm:$0xf]
  %v4424 = vld [vmem:[%s11 + $0xc] sm:$0xf]
  %v4425 = vld [vmem:[%s11 + $0x10] sm:$0xf]
  %v4426 = vld [vmem:[%s11 + $0x14] sm:$0xf]
  %v4427 = vld [vmem:[%s11 + $0x18] sm:$0xf]
  %v4428 = vld [vmem:[%s11 + $0x1c] sm:$0xf]
  %v4429 = vld [vmem:[%s11 + $0x20] sm:$0xf]
  %v4430 = vld [vmem:[%s11 + $0x24] sm:$0xf]
  %v4431 = vld [vmem:[%s11 + $0x28] sm:$0xf]
  %v4432 = vld [vmem:[%s11 + $0x2c] sm:$0xf]
  %v4433 = vld [vmem:[%s11 + $0x30] sm:$0xf]
  %v4434 = vld [vmem:[%s11 + $0x34] sm:$0xf]
  %v4435 = vld [vmem:[%s11 + $0x38] sm:$0xf]
  %v4436 = vld [vmem:[%s11 + $0x3c] sm:$0xf]
  %v4437 = vld [vmem:[%s12] sm:$0x1]
  %v4439 = vlaneseq
  %v4440 = vshrl.u32 %v4439, 7
  %v4441 = vsub.s32 0, %v4440
  %v4442 = vrot.slane %v4437, %v4441
  %v4460 = vunpack.c.l.b16 %v4421
  %v4461 = vunpack.c.l.b16 %v4422
  %v4462 = vunpack.c.l.b16 %v4423
  %v4463 = vunpack.c.l.b16 %v4424
  %v4464 = vunpack.c.l.b16 %v4425
  %v4465 = vunpack.c.l.b16 %v4426
  %v4466 = vunpack.c.l.b16 %v4427
  %v4467 = vunpack.c.l.b16 %v4428
  %v4468 = vunpack.c.l.b16 %v4429
  %v4469 = vunpack.c.l.b16 %v4430
  %v4470 = vunpack.c.l.b16 %v4431
  %v4471 = vunpack.c.l.b16 %v4432
  %v4472 = vunpack.c.l.b16 %v4433
  %v4473 = vunpack.c.l.b16 %v4434
  %v4474 = vunpack.c.l.b16 %v4435
  %v4475 = vunpack.c.l.b16 %v4436
  %v4476 = vpack.c.b16 %v4461, %v4460
  %v4477 = vpack.c.b16 %v4463, %v4462
  %v4478 = vpack.c.b16 %v4465, %v4464
  %v4479 = vpack.c.b16 %v4467, %v4466
  %v4480 = vpack.c.b16 %v4469, %v4468
  %v4481 = vpack.c.b16 %v4471, %v4470
  %v4482 = vpack.c.b16 %v4473, %v4472
  %v4483 = vpack.c.b16 %v4475, %v4474
  %4492 = vmatprep.subr.bf16.mxu0 0
  %4493 = vmatpush1.bf16.msra.mxu0 %v4476
  %4494 = vmatprep.subr.bf16.mxu0 0
  %4495 = vmatpush1.bf16.msra.mxu0 %v4477
  %4496 = vmatprep.subr.bf16.mxu0 0
  %4497 = vmatpush1.bf16.msra.mxu0 %v4478
  %4498 = vmatprep.subr.bf16.mxu0 0
  %4499 = vmatpush1.bf16.msra.mxu0 %v4479
  %4500 = vmatprep.subr.bf16.mxu0 0
  %4501 = vmatpush1.bf16.msra.mxu0 %v4480
  %4502 = vmatprep.subr.bf16.mxu0 0
  %4503 = vmatpush1.bf16.msra.mxu0 %v4481
  %4504 = vmatprep.subr.bf16.mxu0 0
  %4505 = vmatpush1.bf16.msra.mxu0 %v4482
  %4506 = vmatprep.subr.bf16.mxu0 0
  %4507 = vmatpush1.bf16.msra.mxu0 %v4483
  %4508 = vmatprep.subr.bf16.mxu0 0
  %4509 = vmatpush1.bf16.msra.mxu0 0
  %4510 = vmatprep.subr.bf16.mxu0 0
  %4511 = vmatpush1.bf16.msra.mxu0 0
  %4512 = vmatprep.subr.bf16.mxu0 0
  %4513 = vmatpush1.bf16.msra.mxu0 0
  %4514 = vmatprep.subr.bf16.mxu0 0
  %4515 = vmatpush1.bf16.msra.mxu0 0
  %4516 = vmatprep.subr.bf16.mxu0 0
  %4517 = vmatpush1.bf16.msra.mxu0 0
  %4518 = vmatprep.subr.bf16.mxu0 0
  %4519 = vmatpush1.bf16.msra.mxu0 0
  %4520 = vmatprep.subr.bf16.mxu0 0
  %4521 = vmatpush1.bf16.msra.mxu0 0
  %4522 = vmatprep.subr.bf16.mxu0 0
  %4523 = vmatpush1.bf16.msra.mxu0 0
  %4524 = vmatprep.mubr.bf16.mxu0 0
  %4525 = vmatmul.mubr.bf16.gmra.mrb[0].mxu0 %v4420
  %v4526 = vpop.f32.mrb[0].mxu0
  %v4527 = vadd.f32 %v4442, %v4526
  %v4528 = vpop.f32.mrb[0].mxu0
  %v4529 = vpop.f32.mrb[0].mxu0
  %v4530 = vpop.f32.mrb[0].mxu0
  %4531 = vdwg.mxu0
  %v4532 = vmax.f32 %v4527, 0.0
  %v4533 = vpack.c.bf16 %v4532, %v4532
  %v4534 = vld [vmem:[%s13] sm:$0xf]
  %v4535 = vld [vmem:[%s13 + $0x4] sm:$0xf]
  %v4536 = vld [vmem:[%s13 + $0x8] sm:$0xf]
  %v4537 = vld [vmem:[%s13 + $0xc] sm:$0xf]
  %v4538 = vld [vmem:[%s13 + $0x10] sm:$0xf]
  %v4539 = vld [vmem:[%s13 + $0x14] sm:$0xf]
  %v4540 = vld [vmem:[%s13 + $0x18] sm:$0xf]
  %v4541 = vld [vmem:[%s13 + $0x1c] sm:$0xf]
  %v4542 = vld [vmem:[%s13 + $0x20] sm:$0xf]
  %v4543 = vld [vmem:[%s13 + $0x24] sm:$0xf]
  %v4544 = vld [vmem:[%s13 + $0x28] sm:$0xf]
  %v4545 = vld [vmem:[%s13 + $0x2c] sm:$0xf]
  %v4546 = vld [vmem:[%s13 + $0x30] sm:$0xf]
  %v4547 = vld [vmem:[%s13 + $0x34] sm:$0xf]
  %v4548 = vld [vmem:[%s13 + $0x38] sm:$0xf]
  %v4549 = vld [vmem:[%s13 + $0x3c] sm:$0xf]
  %v4550 = vld [vmem:[%s14] sm:$0x1]
  %v4552 = vlaneseq
  %v4553 = vshrl.u32 %v4552, 7
  %v4554 = vsub.s32 0, %v4553
  %v4555 = vrot.slane %v4550, %v4554
  %v4573 = vunpack.c.l.b16 %v4534
  %v4574 = vunpack.c.l.b16 %v4535
  %v4575 = vunpack.c.l.b16 %v4536
  %v4576 = vunpack.c.l.b16 %v4537
  %v4577 = vunpack.c.l.b16 %v4538
  %v4578 = vunpack.c.l.b16 %v4539
  %v4579 = vunpack.c.l.b16 %v4540
  %v4580 = vunpack.c.l.b16 %v4541
  %v4581 = vunpack.c.l.b16 %v4542
  %v4582 = vunpack.c.l.b16 %v4543
  %v4583 = vunpack.c.l.b16 %v4544
  %v4584 = vunpack.c.l.b16 %v4545
  %v4585 = vunpack.c.l.b16 %v4546
  %v4586 = vunpack.c.l.b16 %v4547
  %v4587 = vunpack.c.l.b16 %v4548
  %v4588 = vunpack.c.l.b16 %v4549
  %v4589 = vpack.c.b16 %v4574, %v4573
  %v4590 = vpack.c.b16 %v4576, %v4575
  %v4591 = vpack.c.b16 %v4578, %v4577
  %v4592 = vpack.c.b16 %v4580, %v4579
  %v4593 = vpack.c.b16 %v4582, %v4581
  %v4594 = vpack.c.b16 %v4584, %v4583
  %v4595 = vpack.c.b16 %v4586, %v4585
  %v4596 = vpack.c.b16 %v4588, %v4587
  %4605 = vmatprep.subr.bf16.mxu0 0
  %4606 = vmatpush1.bf16.msra.mxu0 %v4589
  %4607 = vmatprep.subr.bf16.mxu0 0
  %4608 = vmatpush1.bf16.msra.mxu0 %v4590
  %4609 = vmatprep.subr.bf16.mxu0 0
  %4610 = vmatpush1.bf16.msra.mxu0 %v4591
  %4611 = vmatprep.subr.bf16.mxu0 0
  %4612 = vmatpush1.bf16.msra.mxu0 %v4592
  %4613 = vmatprep.subr.bf16.mxu0 0
  %4614 = vmatpush1.bf16.msra.mxu0 %v4593
  %4615 = vmatprep.subr.bf16.mxu0 0
  %4616 = vmatpush1.bf16.msra.mxu0 %v4594
  %4617 = vmatprep.subr.bf16.mxu0 0
  %4618 = vmatpush1.bf16.msra.mxu0 %v4595
  %4619 = vmatprep.subr.bf16.mxu0 0
  %4620 = vmatpush1.bf16.msra.mxu0 %v4596
  %4621 = vmatprep.subr.bf16.mxu0 0
  %4622 = vmatpush1.bf16.msra.mxu0 0
  %4623 = vmatprep.subr.bf16.mxu0 0
  %4624 = vmatpush1.bf16.msra.mxu0 0
  %4625 = vmatprep.subr.bf16.mxu0 0
  %4626 = vmatpush1.bf16.msra.mxu0 0
  %4627 = vmatprep.subr.bf16.mxu0 0
  %4628 = vmatpush1.bf16.msra.mxu0 0
  %4629 = vmatprep.subr.bf16.mxu0 0
  %4630 = vmatpush1.bf16.msra.mxu0 0
  %4631 = vmatprep.subr.bf16.mxu0 0
  %4632 = vmatpush1.bf16.msra.mxu0 0
  %4633 = vmatprep.subr.bf16.mxu0 0
  %4634 = vmatpush1.bf16.msra.mxu0 0
  %4635 = vmatprep.subr.bf16.mxu0 0
  %4636 = vmatpush1.bf16.msra.mxu0 0
  %4637 = vmatprep.mubr.bf16.mxu0 0
  %4638 = vmatmul.mubr.bf16.gmra.mrb[0].mxu0 %v4533
  %v4639 = vpop.f32.mrb[0].mxu0
  %v4640 = vadd.f32 %v4555, %v4639
  %v4641 = vpop.f32.mrb[0].mxu0
  %v4642 = vpop.f32.mrb[0].mxu0
  %v4643 = vpop.f32.mrb[0].mxu0
  %4644 = vdwg.mxu0
  %4645 = vst [vmem:[%s15] sm:$0xff] %v4640
  // Predicated region
  $region62: #{_lambda_.1} parent=0 // pred_check
    _
  $region63: #{_lambda_.1} parent=0 // pred_check_branch
    %4647 = sbr.rel (0) target = $region65
  $region64: #{_lambda_.1} parent=0 // pred_region
    _
  $region65: #{_lambda_.1} parent=0 // pred_fallthru
    _
  // Predicated region
  $region66: #{_lambda_.1} parent=0 // pred_check
    _
  $region67: #{_lambda_.1} parent=0 // pred_check_branch
    %4649 = sbr.rel (0) target = $region69
  $region68: #{_lambda_.1} parent=0 // pred_region
    _
  $region69: #{_lambda_.1} parent=0 // pred_fallthru
    _

</llo_original>
